<compile_context>
chip_gen: v6e
topology: v6e:2x2x1
jax: 0.10.0
libtpu: 0.0.40
codegen_flags: <defaults>
</compile_context>

<pallas_src>
import functools

import jax
import jax.numpy as jnp
from jax.experimental import pallas as pl
from jax.experimental.pallas import tpu as pltpu

# ----------------------------- configuration --------------------------------
D        = 64          # synthetic roberta hidden size (real RoBERTa-base: 768)
H        = 4           # attention heads
HD       = D // H
FFN      = 4 * D
VOCAB    = 100
NUM_FEAT = 32          # num_feature_dims in the module
PROJ     = 128         # feature_projection output
C1, C2, C3 = 256, 128, 1   # classifier dims (exact from the module)
OUT_PAD  = 128         # lane-dense logits slab width (col 0 is the real logit)
LN_EPS   = 1e-5
MAX_POS  = 512


def _layernorm(x, g, b):
    # f32 math on purpose (v5e VPU/EUP have no bf16)
    mu  = jnp.mean(x, axis=-1, keepdims=True)
    var = jnp.mean((x - mu) ** 2, axis=-1, keepdims=True)
    return (x - mu) * jax.lax.rsqrt(var + LN_EPS) * g + b


# ------------------------- fused forward kernel ------------------------------
def fused_kernel(emb_ref, mask_ref, feat_ref,
                 ln_e_g_ref, ln_e_b_ref,
                 wq_ref, wk_ref, wv_ref, bq_ref, bk_ref, bv_ref,
                 wo_ref, bo_ref,
                 ln1_g_ref, ln1_b_ref,
                 w1_ref, b1_ref, w2_ref, b2_ref,
                 ln2_g_ref, ln2_b_ref,
                 wf_ref, bf_ref,
                 w1a_ref, w1b_ref, bc1_ref,
                 wc2_ref, bc2_ref, wc3_ref, bc3_ref,
                 out_ref):
    TB, S, _D = emb_ref.shape          # batch tile, seq, hidden (static)
    R = TB * S                         # flattened encoder rows

    # ---------------- synthetic encoder layer (flattened [TB*S, D]) ----------
    x = emb_ref[...].reshape(R, _D)                          # f32
    x = _layernorm(x, ln_e_g_ref[...], ln_e_b_ref[...])
    xb = x.astype(jnp.bfloat16)

    # three lane-aligned [D, D] projections (bf16 in, f32 acc)
    q = jnp.dot(xb, wq_ref[...], preferred_element_type=jnp.float32) + bq_ref[...]
    k = jnp.dot(xb, wk_ref[...], preferred_element_type=jnp.float32) + bk_ref[...]
    v = jnp.dot(xb, wv_ref[...], preferred_element_type=jnp.float32) + bv_ref[...]
    q3 = q.reshape(TB, S, _D)                                # f32 [TB, S, D]
    k3 = k.reshape(TB, S, _D)
    v3 = v.reshape(TB, S, _D)

    # additive attention mask (1 -> keep, 0 -> -1e9); hoisted out of head loop
    neg = ((1.0 - mask_ref[...]) * -1e9)[:, None, :]         # [TB, 1, S]
    scale = 1.0 / (HD ** 0.5)

    # per-head attention, batched across the TB samples (3-D einsums only)
    ctx_parts = []
    for hh in range(H):
        lo = hh * HD
        q_h = q3[:, :, lo:lo + HD].astype(jnp.bfloat16)      # [TB, S, HD]
        k_h = k3[:, :, lo:lo + HD].astype(jnp.bfloat16)
        v_h = v3[:, :, lo:lo + HD].astype(jnp.bfloat16)
        s = jnp.einsum('bqd,bkd->bqk', q_h, k_h,
                       preferred_element_type=jnp.float32) * scale   # [TB, S, S]
        s = s + neg
        s = s - jnp.max(s, axis=-1, keepdims=True)
        p = jnp.exp(s)
        p = p * pl.reciprocal(jnp.sum(p, axis=-1, keepdims=True), approx=True)
        ctx_parts.append(jnp.einsum('bqk,bkd->bqd', p.astype(jnp.bfloat16), v_h,
                                    preferred_element_type=jnp.float32))
    ctx = jnp.concatenate(ctx_parts, axis=-1).reshape(R, _D)          # [TB*S, D]

    attn_out = jnp.dot(ctx.astype(jnp.bfloat16), wo_ref[...],
                       preferred_element_type=jnp.float32) + bo_ref[...]
    x = _layernorm(x + attn_out, ln1_g_ref[...], ln1_b_ref[...])

    h1 = jnp.dot(x.astype(jnp.bfloat16), w1_ref[...],
                 preferred_element_type=jnp.float32) + b1_ref[...]
    # TODO(synk): RoBERTa uses exact (erf) GELU; tanh approximation used here.
    h1 = jax.nn.gelu(h1, approximate=True)
    ffn_out = jnp.dot(h1.astype(jnp.bfloat16), w2_ref[...],
                      preferred_element_type=jnp.float32) + b2_ref[...]
    x = _layernorm(x + ffn_out, ln2_g_ref[...], ln2_b_ref[...])

    # -------- head: CLS pool + feature proj + classifier (batched over TB) ----
    cls = x.reshape(TB, S, _D)[:, 0, :]                      # [TB, D]  CLS rows
    feat = feat_ref[...]                                     # [TB, NUM_FEAT]

    fp = jnp.dot(feat.astype(jnp.bfloat16), wf_ref[...],
                 preferred_element_type=jnp.float32) + bf_ref[...]
    fp = jnp.maximum(fp, 0.0)                                # relu(feature_proj)

    # concat([cls, fp]) @ W1  ==  cls @ W1a + fp @ W1b   (W1 pre-split at init)
    h = (jnp.dot(cls.astype(jnp.bfloat16), w1a_ref[...],
                 preferred_element_type=jnp.float32)
         + jnp.dot(fp.astype(jnp.bfloat16), w1b_ref[...],
                   preferred_element_type=jnp.float32)
         + bc1_ref[...])
    h = jnp.maximum(h, 0.0)                                  # ReLU (dropout=id)
    h = jnp.dot(h.astype(jnp.bfloat16), wc2_ref[...],
                preferred_element_type=jnp.float32) + bc2_ref[...]
    h = jnp.maximum(h, 0.0)                                  # ReLU (dropout=id)
    # lane-dense, sublane-full [TB, 128] logits slab; only column 0 is real
    out_ref[...] = jnp.dot(h.astype(jnp.bfloat16), wc3_ref[...],
                           preferred_element_type=jnp.float32) + bc3_ref[...]


# ------------------------------ wrapper --------------------------------------
def _rep_spec(arr):
    """Whole-array block, same block every grid step (weights -> no re-DMA)."""
    nd = arr.ndim
    return pl.BlockSpec(arr.shape, lambda b, _nd=nd: (0,) * _nd)


def run_model(emb, attn_mask, features, p, *, tb=16):
    B, S, _ = emb.shape
    tb = min(tb, B)
    assert B % tb == 0, "batch must be a multiple of the batch tile"

    mask2 = attn_mask.astype(jnp.float32)        # [B, S]
    feat2 = features.astype(jnp.float32)         # [B, NUM_FEAT]

    weights = (p['ln_e_g'], p['ln_e_b'],
               p['wq'], p['wk'], p['wv'], p['bq'], p['bk'], p['bv'],
               p['wo'], p['bo'],
               p['ln1_g'], p['ln1_b'],
               p['w_ffn1'], p['b_ffn1'], p['w_ffn2'], p['b_ffn2'],
               p['ln2_g'], p['ln2_b'],
               p['w_feat'], p['b_feat'],
               p['w_c1a'], p['w_c1b'], p['b_c1'],
               p['w_c2'], p['b_c2'], p['w_c3'], p['b_c3'])

    in_specs = ([pl.BlockSpec((tb, S, D),       lambda b: (b, 0, 0)),   # emb
                 pl.BlockSpec((tb, S),          lambda b: (b, 0)),      # mask
                 pl.BlockSpec((tb, NUM_FEAT),   lambda b: (b, 0))]      # features
                + [_rep_spec(w) for w in weights])

    out = pl.pallas_call(
        fused_kernel,
        out_shape=jax.ShapeDtypeStruct((B, OUT_PAD), jnp.float32),
        grid=(B // tb,),
        in_specs=in_specs,
        out_specs=pl.BlockSpec((tb, OUT_PAD), lambda b: (b, 0)),
        # batch-tile axis is independent across steps -> megacore sharding on
        # v7x; on v5e/v6e it is just the sequential grid loop.
        compiler_params=pltpu.CompilerParams(
            dimension_semantics=("parallel",)),
    )(emb, mask2, feat2, *weights)
    return out[:, :C3]                                       # [B, 1]


# ------------------------------ parameters ----------------------------------
def init_params(key):
    ks = iter(jax.random.split(key, 40))
    nrm  = lambda k, shp, s=0.02: (s * jax.random.normal(k, shp)).astype(jnp.float32)
    bf   = lambda a: a.astype(jnp.bfloat16)
    ones  = lambda d: jnp.ones((1, d), jnp.float32)
    zeros = lambda d: jnp.zeros((1, d), jnp.float32)

    w_c3 = jnp.zeros((C2, OUT_PAD), jnp.float32).at[:, :C3].set(
        nrm(next(ks), (C2, C3)))

    p = {
        # synthetic backbone (embeddings used in the JAX-side gather)
        'tok_emb': nrm(next(ks), (VOCAB, D)),
        'pos_emb': nrm(next(ks), (MAX_POS, D)),
        'ln_e_g': ones(D), 'ln_e_b': zeros(D),
        'wq': bf(nrm(next(ks), (D, D))),
        'wk': bf(nrm(next(ks), (D, D))),
        'wv': bf(nrm(next(ks), (D, D))),
        'bq': zeros(D), 'bk': zeros(D), 'bv': zeros(D),
        'wo': bf(nrm(next(ks), (D, D))), 'bo': zeros(D),
        'ln1_g': ones(D), 'ln1_b': zeros(D),
        'w_ffn1': bf(nrm(next(ks), (D, FFN))), 'b_ffn1': zeros(FFN),
        'w_ffn2': bf(nrm(next(ks), (FFN, D))), 'b_ffn2': zeros(D),
        'ln2_g': ones(D), 'ln2_b': zeros(D),
        # feature projection (32 -> 128)
        'w_feat': bf(nrm(next(ks), (NUM_FEAT, PROJ))), 'b_feat': zeros(PROJ),
        # classifier: (D + 128) -> 256 -> 128 -> 1   (w_c1 pre-split at init)
        'w_c1a': bf(nrm(next(ks), (D, C1))),
        'w_c1b': bf(nrm(next(ks), (PROJ, C1))),
        'b_c1': zeros(C1),
        'w_c2': bf(nrm(next(ks), (C1, C2))), 'b_c2': zeros(C2),
        'w_c3': bf(w_c3),                    'b_c3': jnp.zeros((1, OUT_PAD), jnp.float32),
    }
    return p


# -------------------------------- forward -----------------------------------
@jax.jit
def forward(params, input_ids, attention_mask, features):
    B, S = input_ids.shape
    # TODO(synk): embedding gather kept in plain XLA; could be fused via
    # PrefetchScalarGridSpec + per-row DMA gather for realistic D/S.
    emb = params['tok_emb'][input_ids] + params['pos_emb'][:S][None, :, :]
    logits = run_model(emb, attention_mask.astype(jnp.float32),
                       features, params)                     # [B, 1]
    return logits


# --------------------------------- main --------------------------------------
if __name__ == "__main__":
    B, S = 32, 8          # small shapes; TB=16 -> grid=(2,), 128-row MXU slabs
    key = jax.random.PRNGKey(0)
    k_ids, k_feat, k_par = jax.random.split(key, 3)

    input_ids = jax.random.randint(k_ids, (B, S), 0, VOCAB, dtype=jnp.int32)
    attention_mask = jnp.ones((B, S), jnp.float32)
    attention_mask = attention_mask.at[1, 6:].set(0.0).at[5, 4:].set(0.0)
    features = jax.random.normal(k_feat, (B, NUM_FEAT), dtype=jnp.float32)

    params = init_params(k_par)

    logits = forward(params, input_ids, attention_mask, features)
    jax.block_until_ready(logits)
    assert logits.shape == (B, 1) and logits.dtype == jnp.float32
    assert bool(jnp.all(jnp.isfinite(logits)))
    print("KERNEL_OK")
</pallas_src>

<mosaic_0001>
module attributes {stable_mosaic.version = 11 : i64} {
  func.func @fused_kernel(%arg0: i32, %arg1: memref<16x8x64xf32, #tpu.memory_space<vmem>>, %arg2: memref<16x8xf32, #tpu.memory_space<vmem>>, %arg3: memref<16x32xf32, #tpu.memory_space<vmem>>, %arg4: memref<1x64xf32, #tpu.memory_space<vmem>>, %arg5: memref<1x64xf32, #tpu.memory_space<vmem>>, %arg6: memref<64x64xbf16, #tpu.memory_space<vmem>>, %arg7: memref<64x64xbf16, #tpu.memory_space<vmem>>, %arg8: memref<64x64xbf16, #tpu.memory_space<vmem>>, %arg9: memref<1x64xf32, #tpu.memory_space<vmem>>, %arg10: memref<1x64xf32, #tpu.memory_space<vmem>>, %arg11: memref<1x64xf32, #tpu.memory_space<vmem>>, %arg12: memref<64x64xbf16, #tpu.memory_space<vmem>>, %arg13: memref<1x64xf32, #tpu.memory_space<vmem>>, %arg14: memref<1x64xf32, #tpu.memory_space<vmem>>, %arg15: memref<1x64xf32, #tpu.memory_space<vmem>>, %arg16: memref<64x256xbf16, #tpu.memory_space<vmem>>, %arg17: memref<1x256xf32, #tpu.memory_space<vmem>>, %arg18: memref<256x64xbf16, #tpu.memory_space<vmem>>, %arg19: memref<1x64xf32, #tpu.memory_space<vmem>>, %arg20: memref<1x64xf32, #tpu.memory_space<vmem>>, %arg21: memref<1x64xf32, #tpu.memory_space<vmem>>, %arg22: memref<32x128xbf16, #tpu.memory_space<vmem>>, %arg23: memref<1x128xf32, #tpu.memory_space<vmem>>, %arg24: memref<64x256xbf16, #tpu.memory_space<vmem>>, %arg25: memref<128x256xbf16, #tpu.memory_space<vmem>>, %arg26: memref<1x256xf32, #tpu.memory_space<vmem>>, %arg27: memref<256x128xbf16, #tpu.memory_space<vmem>>, %arg28: memref<1x128xf32, #tpu.memory_space<vmem>>, %arg29: memref<128x128xbf16, #tpu.memory_space<vmem>>, %arg30: memref<1x128xf32, #tpu.memory_space<vmem>>, %arg31: memref<16x128xf32, #tpu.memory_space<vmem>>) attributes {dimension_semantics = [#tpu.dimension_semantics<parallel>], iteration_bounds = array<i64: 2>, scalar_prefetch = 0 : i64, scratch_operands = 0 : i64, tpu.core_type = #tpu.core_type<tc>, window_params = [{transform_indices = @transform_0, window_bounds = array<i64: 16, 8, 64>}, {transform_indices = @transform_1, window_bounds = array<i64: 16, 8>}, {transform_indices = @transform_2, window_bounds = array<i64: 16, 32>}, {pipeline_mode = #tpu.pipeline_mode<synchronous>, transform_indices = @transform_3, window_bounds = array<i64: 1, 64>}, {pipeline_mode = #tpu.pipeline_mode<synchronous>, transform_indices = @transform_4, window_bounds = array<i64: 1, 64>}, {pipeline_mode = #tpu.pipeline_mode<synchronous>, transform_indices = @transform_5, window_bounds = array<i64: 64, 64>}, {pipeline_mode = #tpu.pipeline_mode<synchronous>, transform_indices = @transform_6, window_bounds = array<i64: 64, 64>}, {pipeline_mode = #tpu.pipeline_mode<synchronous>, transform_indices = @transform_7, window_bounds = array<i64: 64, 64>}, {pipeline_mode = #tpu.pipeline_mode<synchronous>, transform_indices = @transform_8, window_bounds = array<i64: 1, 64>}, {pipeline_mode = #tpu.pipeline_mode<synchronous>, transform_indices = @transform_9, window_bounds = array<i64: 1, 64>}, {pipeline_mode = #tpu.pipeline_mode<synchronous>, transform_indices = @transform_10, window_bounds = array<i64: 1, 64>}, {pipeline_mode = #tpu.pipeline_mode<synchronous>, transform_indices = @transform_11, window_bounds = array<i64: 64, 64>}, {pipeline_mode = #tpu.pipeline_mode<synchronous>, transform_indices = @transform_12, window_bounds = array<i64: 1, 64>}, {pipeline_mode = #tpu.pipeline_mode<synchronous>, transform_indices = @transform_13, window_bounds = array<i64: 1, 64>}, {pipeline_mode = #tpu.pipeline_mode<synchronous>, transform_indices = @transform_14, window_bounds = array<i64: 1, 64>}, {pipeline_mode = #tpu.pipeline_mode<synchronous>, transform_indices = @transform_15, window_bounds = array<i64: 64, 256>}, {pipeline_mode = #tpu.pipeline_mode<synchronous>, transform_indices = @transform_16, window_bounds = array<i64: 1, 256>}, {pipeline_mode = #tpu.pipeline_mode<synchronous>, transform_indices = @transform_17, window_bounds = array<i64: 256, 64>}, {pipeline_mode = #tpu.pipeline_mode<synchronous>, transform_indices = @transform_18, window_bounds = array<i64: 1, 64>}, {pipeline_mode = #tpu.pipeline_mode<synchronous>, transform_indices = @transform_19, window_bounds = array<i64: 1, 64>}, {pipeline_mode = #tpu.pipeline_mode<synchronous>, transform_indices = @transform_20, window_bounds = array<i64: 1, 64>}, {pipeline_mode = #tpu.pipeline_mode<synchronous>, transform_indices = @transform_21, window_bounds = array<i64: 32, 128>}, {pipeline_mode = #tpu.pipeline_mode<synchronous>, transform_indices = @transform_22, window_bounds = array<i64: 1, 128>}, {pipeline_mode = #tpu.pipeline_mode<synchronous>, transform_indices = @transform_23, window_bounds = array<i64: 64, 256>}, {pipeline_mode = #tpu.pipeline_mode<synchronous>, transform_indices = @transform_24, window_bounds = array<i64: 128, 256>}, {pipeline_mode = #tpu.pipeline_mode<synchronous>, transform_indices = @transform_25, window_bounds = array<i64: 1, 256>}, {pipeline_mode = #tpu.pipeline_mode<synchronous>, transform_indices = @transform_26, window_bounds = array<i64: 256, 128>}, {pipeline_mode = #tpu.pipeline_mode<synchronous>, transform_indices = @transform_27, window_bounds = array<i64: 1, 128>}, {pipeline_mode = #tpu.pipeline_mode<synchronous>, transform_indices = @transform_28, window_bounds = array<i64: 128, 128>}, {pipeline_mode = #tpu.pipeline_mode<synchronous>, transform_indices = @transform_29, window_bounds = array<i64: 1, 128>}, {transform_indices = @transform_30, window_bounds = array<i64: 16, 128>}]} {
    %c0 = arith.constant 0 : index
    %c0_0 = arith.constant 0 : index
    %c0_1 = arith.constant 0 : index
    %0 = vector.load %arg1[%c0, %c0_0, %c0_1] : memref<16x8x64xf32, #tpu.memory_space<vmem>>, vector<16x8x64xf32>
    %1 = vector.shape_cast %0 : vector<16x8x64xf32> to vector<128x64xf32>
    %c0_2 = arith.constant 0 : index
    %c0_3 = arith.constant 0 : index
    %2 = vector.load %arg4[%c0_2, %c0_3] : memref<1x64xf32, #tpu.memory_space<vmem>>, vector<1x64xf32>
    %c0_4 = arith.constant 0 : index
    %c0_5 = arith.constant 0 : index
    %3 = vector.load %arg5[%c0_4, %c0_5] : memref<1x64xf32, #tpu.memory_space<vmem>>, vector<1x64xf32>
    %cst = arith.constant dense<0.000000e+00> : vector<128xf32>
    %4 = vector.multi_reduction <add>, %1, %cst [1] : vector<128x64xf32> to vector<128xf32>
    %5 = vector.shape_cast %4 : vector<128xf32> to vector<128x1xf32>
    %cst_6 = arith.constant 6.400000e+01 : f32
    %6 = vector.broadcast %cst_6 : f32 to vector<128x1xf32>
    %7 = arith.divf %5, %6 : vector<128x1xf32>
    %8 = vector.broadcast %7 : vector<128x1xf32> to vector<128x64xf32>
    %9 = arith.subf %1, %8 : vector<128x64xf32>
    %10 = arith.mulf %9, %9 : vector<128x64xf32>
    %cst_7 = arith.constant dense<0.000000e+00> : vector<128xf32>
    %11 = vector.multi_reduction <add>, %10, %cst_7 [1] : vector<128x64xf32> to vector<128xf32>
    %12 = vector.shape_cast %11 : vector<128xf32> to vector<128x1xf32>
    %cst_8 = arith.constant 6.400000e+01 : f32
    %13 = vector.broadcast %cst_8 : f32 to vector<128x1xf32>
    %14 = arith.divf %12, %13 : vector<128x1xf32>
    %15 = vector.broadcast %7 : vector<128x1xf32> to vector<128x64xf32>
    %16 = arith.subf %1, %15 : vector<128x64xf32>
    %cst_9 = arith.constant 9.99999974E-6 : f32
    %17 = vector.broadcast %cst_9 : f32 to vector<128x1xf32>
    %18 = arith.addf %14, %17 : vector<128x1xf32>
    %19 = math.rsqrt %18 : vector<128x1xf32>
    %20 = vector.broadcast %19 : vector<128x1xf32> to vector<128x64xf32>
    %21 = arith.mulf %16, %20 : vector<128x64xf32>
    %22 = vector.broadcast %2 : vector<1x64xf32> to vector<128x64xf32>
    %23 = arith.mulf %21, %22 : vector<128x64xf32>
    %24 = vector.broadcast %3 : vector<1x64xf32> to vector<128x64xf32>
    %25 = arith.addf %23, %24 : vector<128x64xf32>
    %26 = arith.truncf %25 : vector<128x64xf32> to vector<128x64xbf16>
    %c0_10 = arith.constant 0 : index
    %c0_11 = arith.constant 0 : index
    %27 = vector.load %arg6[%c0_10, %c0_11] : memref<64x64xbf16, #tpu.memory_space<vmem>>, vector<64x64xbf16>
    %cst_12 = arith.constant dense<0.000000e+00> : vector<128x64xf32>
    %28 = tpu.matmul %26, %27, %cst_12 {dimension_numbers = #tpu.dot_dimension_numbers<[1], [0], [0], [1], [0, 0, 1, 1], [], []>} : vector<128x64xbf16>, vector<64x64xbf16>, vector<128x64xf32> -> vector<128x64xf32>
    %c0_13 = arith.constant 0 : index
    %c0_14 = arith.constant 0 : index
    %29 = vector.load %arg9[%c0_13, %c0_14] : memref<1x64xf32, #tpu.memory_space<vmem>>, vector<1x64xf32>
    %30 = vector.broadcast %29 : vector<1x64xf32> to vector<128x64xf32>
    %31 = arith.addf %28, %30 : vector<128x64xf32>
    %c0_15 = arith.constant 0 : index
    %c0_16 = arith.constant 0 : index
    %32 = vector.load %arg7[%c0_15, %c0_16] : memref<64x64xbf16, #tpu.memory_space<vmem>>, vector<64x64xbf16>
    %cst_17 = arith.constant dense<0.000000e+00> : vector<128x64xf32>
    %33 = tpu.matmul %26, %32, %cst_17 {dimension_numbers = #tpu.dot_dimension_numbers<[1], [0], [0], [1], [0, 0, 1, 1], [], []>} : vector<128x64xbf16>, vector<64x64xbf16>, vector<128x64xf32> -> vector<128x64xf32>
    %c0_18 = arith.constant 0 : index
    %c0_19 = arith.constant 0 : index
    %34 = vector.load %arg10[%c0_18, %c0_19] : memref<1x64xf32, #tpu.memory_space<vmem>>, vector<1x64xf32>
    %35 = vector.broadcast %34 : vector<1x64xf32> to vector<128x64xf32>
    %36 = arith.addf %33, %35 : vector<128x64xf32>
    %c0_20 = arith.constant 0 : index
    %c0_21 = arith.constant 0 : index
    %37 = vector.load %arg8[%c0_20, %c0_21] : memref<64x64xbf16, #tpu.memory_space<vmem>>, vector<64x64xbf16>
    %cst_22 = arith.constant dense<0.000000e+00> : vector<128x64xf32>
    %38 = tpu.matmul %26, %37, %cst_22 {dimension_numbers = #tpu.dot_dimension_numbers<[1], [0], [0], [1], [0, 0, 1, 1], [], []>} : vector<128x64xbf16>, vector<64x64xbf16>, vector<128x64xf32> -> vector<128x64xf32>
    %c0_23 = arith.constant 0 : index
    %c0_24 = arith.constant 0 : index
    %39 = vector.load %arg11[%c0_23, %c0_24] : memref<1x64xf32, #tpu.memory_space<vmem>>, vector<1x64xf32>
    %40 = vector.broadcast %39 : vector<1x64xf32> to vector<128x64xf32>
    %41 = arith.addf %38, %40 : vector<128x64xf32>
    %42 = vector.shape_cast %31 : vector<128x64xf32> to vector<16x8x64xf32>
    %43 = vector.shape_cast %36 : vector<128x64xf32> to vector<16x8x64xf32>
    %44 = vector.shape_cast %41 : vector<128x64xf32> to vector<16x8x64xf32>
    %c0_25 = arith.constant 0 : index
    %c0_26 = arith.constant 0 : index
    %45 = vector.load %arg2[%c0_25, %c0_26] : memref<16x8xf32, #tpu.memory_space<vmem>>, vector<16x8xf32>
    %cst_27 = arith.constant 1.000000e+00 : f32
    %46 = vector.broadcast %cst_27 : f32 to vector<16x8xf32>
    %47 = arith.subf %46, %45 : vector<16x8xf32>
    %cst_28 = arith.constant -1.000000e+09 : f32
    %48 = vector.broadcast %cst_28 : f32 to vector<16x8xf32>
    %49 = arith.mulf %47, %48 : vector<16x8xf32>
    %50 = vector.shape_cast %49 : vector<16x8xf32> to vector<16x1x8xf32>
    %51 = vector.extract_strided_slice %42 {offsets = [0, 0, 0], sizes = [16, 8, 16], strides = [1, 1, 1]} : vector<16x8x64xf32> to vector<16x8x16xf32>
    %52 = arith.truncf %51 : vector<16x8x16xf32> to vector<16x8x16xbf16>
    %53 = vector.extract_strided_slice %43 {offsets = [0, 0, 0], sizes = [16, 8, 16], strides = [1, 1, 1]} : vector<16x8x64xf32> to vector<16x8x16xf32>
    %54 = arith.truncf %53 : vector<16x8x16xf32> to vector<16x8x16xbf16>
    %55 = vector.extract_strided_slice %44 {offsets = [0, 0, 0], sizes = [16, 8, 16], strides = [1, 1, 1]} : vector<16x8x64xf32> to vector<16x8x16xf32>
    %56 = arith.truncf %55 : vector<16x8x16xf32> to vector<16x8x16xbf16>
    "tpu.trace_start"() <{level = 10 : i32, message = "bqd,bkd->bqk"}> : () -> ()
    %cst_29 = arith.constant dense<0.000000e+00> : vector<16x8x8xf32>
    %57 = tpu.matmul %52, %54, %cst_29 {dimension_numbers = #tpu.dot_dimension_numbers<[2], [2], [1], [1], [0, 0, 0, 1, 1, 1], [0], [0]>} : vector<16x8x16xbf16>, vector<16x8x16xbf16>, vector<16x8x8xf32> -> vector<16x8x8xf32>
    "tpu.trace_stop"() : () -> ()
    %cst_30 = arith.constant 2.500000e-01 : f32
    %58 = vector.broadcast %cst_30 : f32 to vector<16x8x8xf32>
    %59 = arith.mulf %57, %58 : vector<16x8x8xf32>
    %60 = vector.broadcast %50 : vector<16x1x8xf32> to vector<16x8x8xf32>
    %61 = arith.addf %59, %60 : vector<16x8x8xf32>
    %cst_31 = arith.constant dense<0xFF800000> : vector<16x8xf32>
    %62 = vector.multi_reduction <maximumf>, %61, %cst_31 [2] : vector<16x8x8xf32> to vector<16x8xf32>
    %63 = vector.shape_cast %62 : vector<16x8xf32> to vector<16x8x1xf32>
    %64 = vector.broadcast %63 : vector<16x8x1xf32> to vector<16x8x8xf32>
    %65 = arith.subf %61, %64 : vector<16x8x8xf32>
    %66 = math.exp %65 : vector<16x8x8xf32>
    %cst_32 = arith.constant dense<0.000000e+00> : vector<16x8xf32>
    %67 = vector.multi_reduction <add>, %66, %cst_32 [2] : vector<16x8x8xf32> to vector<16x8xf32>
    %68 = vector.shape_cast %67 : vector<16x8xf32> to vector<16x8x1xf32>
    %69 = tpu.reciprocal %68 {approx = true} : vector<16x8x1xf32> -> vector<16x8x1xf32>
    %70 = vector.broadcast %69 : vector<16x8x1xf32> to vector<16x8x8xf32>
    %71 = arith.mulf %66, %70 : vector<16x8x8xf32>
    %72 = arith.truncf %71 : vector<16x8x8xf32> to vector<16x8x8xbf16>
    "tpu.trace_start"() <{level = 10 : i32, message = "bqk,bkd->bqd"}> : () -> ()
    %cst_33 = arith.constant dense<0.000000e+00> : vector<16x8x16xf32>
    %73 = tpu.matmul %72, %56, %cst_33 {dimension_numbers = #tpu.dot_dimension_numbers<[2], [1], [1], [2], [0, 0, 0, 1, 1, 2], [0], [0]>} : vector<16x8x8xbf16>, vector<16x8x16xbf16>, vector<16x8x16xf32> -> vector<16x8x16xf32>
    "tpu.trace_stop"() : () -> ()
    %74 = vector.extract_strided_slice %42 {offsets = [0, 0, 16], sizes = [16, 8, 16], strides = [1, 1, 1]} : vector<16x8x64xf32> to vector<16x8x16xf32>
    %75 = arith.truncf %74 : vector<16x8x16xf32> to vector<16x8x16xbf16>
    %76 = vector.extract_strided_slice %43 {offsets = [0, 0, 16], sizes = [16, 8, 16], strides = [1, 1, 1]} : vector<16x8x64xf32> to vector<16x8x16xf32>
    %77 = arith.truncf %76 : vector<16x8x16xf32> to vector<16x8x16xbf16>
    %78 = vector.extract_strided_slice %44 {offsets = [0, 0, 16], sizes = [16, 8, 16], strides = [1, 1, 1]} : vector<16x8x64xf32> to vector<16x8x16xf32>
    %79 = arith.truncf %78 : vector<16x8x16xf32> to vector<16x8x16xbf16>
    "tpu.trace_start"() <{level = 10 : i32, message = "bqd,bkd->bqk"}> : () -> ()
    %cst_34 = arith.constant dense<0.000000e+00> : vector<16x8x8xf32>
    %80 = tpu.matmul %75, %77, %cst_34 {dimension_numbers = #tpu.dot_dimension_numbers<[2], [2], [1], [1], [0, 0, 0, 1, 1, 1], [0], [0]>} : vector<16x8x16xbf16>, vector<16x8x16xbf16>, vector<16x8x8xf32> -> vector<16x8x8xf32>
    "tpu.trace_stop"() : () -> ()
    %cst_35 = arith.constant 2.500000e-01 : f32
    %81 = vector.broadcast %cst_35 : f32 to vector<16x8x8xf32>
    %82 = arith.mulf %80, %81 : vector<16x8x8xf32>
    %83 = vector.broadcast %50 : vector<16x1x8xf32> to vector<16x8x8xf32>
    %84 = arith.addf %82, %83 : vector<16x8x8xf32>
    %cst_36 = arith.constant dense<0xFF800000> : vector<16x8xf32>
    %85 = vector.multi_reduction <maximumf>, %84, %cst_36 [2] : vector<16x8x8xf32> to vector<16x8xf32>
    %86 = vector.shape_cast %85 : vector<16x8xf32> to vector<16x8x1xf32>
    %87 = vector.broadcast %86 : vector<16x8x1xf32> to vector<16x8x8xf32>
    %88 = arith.subf %84, %87 : vector<16x8x8xf32>
    %89 = math.exp %88 : vector<16x8x8xf32>
    %cst_37 = arith.constant dense<0.000000e+00> : vector<16x8xf32>
    %90 = vector.multi_reduction <add>, %89, %cst_37 [2] : vector<16x8x8xf32> to vector<16x8xf32>
    %91 = vector.shape_cast %90 : vector<16x8xf32> to vector<16x8x1xf32>
    %92 = tpu.reciprocal %91 {approx = true} : vector<16x8x1xf32> -> vector<16x8x1xf32>
    %93 = vector.broadcast %92 : vector<16x8x1xf32> to vector<16x8x8xf32>
    %94 = arith.mulf %89, %93 : vector<16x8x8xf32>
    %95 = arith.truncf %94 : vector<16x8x8xf32> to vector<16x8x8xbf16>
    "tpu.trace_start"() <{level = 10 : i32, message = "bqk,bkd->bqd"}> : () -> ()
    %cst_38 = arith.constant dense<0.000000e+00> : vector<16x8x16xf32>
    %96 = tpu.matmul %95, %79, %cst_38 {dimension_numbers = #tpu.dot_dimension_numbers<[2], [1], [1], [2], [0, 0, 0, 1, 1, 2], [0], [0]>} : vector<16x8x8xbf16>, vector<16x8x16xbf16>, vector<16x8x16xf32> -> vector<16x8x16xf32>
    "tpu.trace_stop"() : () -> ()
    %97 = vector.extract_strided_slice %42 {offsets = [0, 0, 32], sizes = [16, 8, 16], strides = [1, 1, 1]} : vector<16x8x64xf32> to vector<16x8x16xf32>
    %98 = arith.truncf %97 : vector<16x8x16xf32> to vector<16x8x16xbf16>
    %99 = vector.extract_strided_slice %43 {offsets = [0, 0, 32], sizes = [16, 8, 16], strides = [1, 1, 1]} : vector<16x8x64xf32> to vector<16x8x16xf32>
    %100 = arith.truncf %99 : vector<16x8x16xf32> to vector<16x8x16xbf16>
    %101 = vector.extract_strided_slice %44 {offsets = [0, 0, 32], sizes = [16, 8, 16], strides = [1, 1, 1]} : vector<16x8x64xf32> to vector<16x8x16xf32>
    %102 = arith.truncf %101 : vector<16x8x16xf32> to vector<16x8x16xbf16>
    "tpu.trace_start"() <{level = 10 : i32, message = "bqd,bkd->bqk"}> : () -> ()
    %cst_39 = arith.constant dense<0.000000e+00> : vector<16x8x8xf32>
    %103 = tpu.matmul %98, %100, %cst_39 {dimension_numbers = #tpu.dot_dimension_numbers<[2], [2], [1], [1], [0, 0, 0, 1, 1, 1], [0], [0]>} : vector<16x8x16xbf16>, vector<16x8x16xbf16>, vector<16x8x8xf32> -> vector<16x8x8xf32>
    "tpu.trace_stop"() : () -> ()
    %cst_40 = arith.constant 2.500000e-01 : f32
    %104 = vector.broadcast %cst_40 : f32 to vector<16x8x8xf32>
    %105 = arith.mulf %103, %104 : vector<16x8x8xf32>
    %106 = vector.broadcast %50 : vector<16x1x8xf32> to vector<16x8x8xf32>
    %107 = arith.addf %105, %106 : vector<16x8x8xf32>
    %cst_41 = arith.constant dense<0xFF800000> : vector<16x8xf32>
    %108 = vector.multi_reduction <maximumf>, %107, %cst_41 [2] : vector<16x8x8xf32> to vector<16x8xf32>
    %109 = vector.shape_cast %108 : vector<16x8xf32> to vector<16x8x1xf32>
    %110 = vector.broadcast %109 : vector<16x8x1xf32> to vector<16x8x8xf32>
    %111 = arith.subf %107, %110 : vector<16x8x8xf32>
    %112 = math.exp %111 : vector<16x8x8xf32>
    %cst_42 = arith.constant dense<0.000000e+00> : vector<16x8xf32>
    %113 = vector.multi_reduction <add>, %112, %cst_42 [2] : vector<16x8x8xf32> to vector<16x8xf32>
    %114 = vector.shape_cast %113 : vector<16x8xf32> to vector<16x8x1xf32>
    %115 = tpu.reciprocal %114 {approx = true} : vector<16x8x1xf32> -> vector<16x8x1xf32>
    %116 = vector.broadcast %115 : vector<16x8x1xf32> to vector<16x8x8xf32>
    %117 = arith.mulf %112, %116 : vector<16x8x8xf32>
    %118 = arith.truncf %117 : vector<16x8x8xf32> to vector<16x8x8xbf16>
    "tpu.trace_start"() <{level = 10 : i32, message = "bqk,bkd->bqd"}> : () -> ()
    %cst_43 = arith.constant dense<0.000000e+00> : vector<16x8x16xf32>
    %119 = tpu.matmul %118, %102, %cst_43 {dimension_numbers = #tpu.dot_dimension_numbers<[2], [1], [1], [2], [0, 0, 0, 1, 1, 2], [0], [0]>} : vector<16x8x8xbf16>, vector<16x8x16xbf16>, vector<16x8x16xf32> -> vector<16x8x16xf32>
    "tpu.trace_stop"() : () -> ()
    %120 = vector.extract_strided_slice %42 {offsets = [0, 0, 48], sizes = [16, 8, 16], strides = [1, 1, 1]} : vector<16x8x64xf32> to vector<16x8x16xf32>
    %121 = arith.truncf %120 : vector<16x8x16xf32> to vector<16x8x16xbf16>
    %122 = vector.extract_strided_slice %43 {offsets = [0, 0, 48], sizes = [16, 8, 16], strides = [1, 1, 1]} : vector<16x8x64xf32> to vector<16x8x16xf32>
    %123 = arith.truncf %122 : vector<16x8x16xf32> to vector<16x8x16xbf16>
    %124 = vector.extract_strided_slice %44 {offsets = [0, 0, 48], sizes = [16, 8, 16], strides = [1, 1, 1]} : vector<16x8x64xf32> to vector<16x8x16xf32>
    %125 = arith.truncf %124 : vector<16x8x16xf32> to vector<16x8x16xbf16>
    "tpu.trace_start"() <{level = 10 : i32, message = "bqd,bkd->bqk"}> : () -> ()
    %cst_44 = arith.constant dense<0.000000e+00> : vector<16x8x8xf32>
    %126 = tpu.matmul %121, %123, %cst_44 {dimension_numbers = #tpu.dot_dimension_numbers<[2], [2], [1], [1], [0, 0, 0, 1, 1, 1], [0], [0]>} : vector<16x8x16xbf16>, vector<16x8x16xbf16>, vector<16x8x8xf32> -> vector<16x8x8xf32>
    "tpu.trace_stop"() : () -> ()
    %cst_45 = arith.constant 2.500000e-01 : f32
    %127 = vector.broadcast %cst_45 : f32 to vector<16x8x8xf32>
    %128 = arith.mulf %126, %127 : vector<16x8x8xf32>
    %129 = vector.broadcast %50 : vector<16x1x8xf32> to vector<16x8x8xf32>
    %130 = arith.addf %128, %129 : vector<16x8x8xf32>
    %cst_46 = arith.constant dense<0xFF800000> : vector<16x8xf32>
    %131 = vector.multi_reduction <maximumf>, %130, %cst_46 [2] : vector<16x8x8xf32> to vector<16x8xf32>
    %132 = vector.shape_cast %131 : vector<16x8xf32> to vector<16x8x1xf32>
    %133 = vector.broadcast %132 : vector<16x8x1xf32> to vector<16x8x8xf32>
    %134 = arith.subf %130, %133 : vector<16x8x8xf32>
    %135 = math.exp %134 : vector<16x8x8xf32>
    %cst_47 = arith.constant dense<0.000000e+00> : vector<16x8xf32>
    %136 = vector.multi_reduction <add>, %135, %cst_47 [2] : vector<16x8x8xf32> to vector<16x8xf32>
    %137 = vector.shape_cast %136 : vector<16x8xf32> to vector<16x8x1xf32>
    %138 = tpu.reciprocal %137 {approx = true} : vector<16x8x1xf32> -> vector<16x8x1xf32>
    %139 = vector.broadcast %138 : vector<16x8x1xf32> to vector<16x8x8xf32>
    %140 = arith.mulf %135, %139 : vector<16x8x8xf32>
    %141 = arith.truncf %140 : vector<16x8x8xf32> to vector<16x8x8xbf16>
    "tpu.trace_start"() <{level = 10 : i32, message = "bqk,bkd->bqd"}> : () -> ()
    %cst_48 = arith.constant dense<0.000000e+00> : vector<16x8x16xf32>
    %142 = tpu.matmul %141, %125, %cst_48 {dimension_numbers = #tpu.dot_dimension_numbers<[2], [1], [1], [2], [0, 0, 0, 1, 1, 2], [0], [0]>} : vector<16x8x8xbf16>, vector<16x8x16xbf16>, vector<16x8x16xf32> -> vector<16x8x16xf32>
    "tpu.trace_stop"() : () -> ()
    %143 = tpu.concatenate %73, %96, %119, %142 in 2 : vector<16x8x16xf32>, vector<16x8x16xf32>, vector<16x8x16xf32>, vector<16x8x16xf32> -> vector<16x8x64xf32>
    %144 = vector.shape_cast %143 : vector<16x8x64xf32> to vector<128x64xf32>
    %145 = arith.truncf %144 : vector<128x64xf32> to vector<128x64xbf16>
    %c0_49 = arith.constant 0 : index
    %c0_50 = arith.constant 0 : index
    %146 = vector.load %arg12[%c0_49, %c0_50] : memref<64x64xbf16, #tpu.memory_space<vmem>>, vector<64x64xbf16>
    %cst_51 = arith.constant dense<0.000000e+00> : vector<128x64xf32>
    %147 = tpu.matmul %145, %146, %cst_51 {dimension_numbers = #tpu.dot_dimension_numbers<[1], [0], [0], [1], [0, 0, 1, 1], [], []>} : vector<128x64xbf16>, vector<64x64xbf16>, vector<128x64xf32> -> vector<128x64xf32>
    %c0_52 = arith.constant 0 : index
    %c0_53 = arith.constant 0 : index
    %148 = vector.load %arg13[%c0_52, %c0_53] : memref<1x64xf32, #tpu.memory_space<vmem>>, vector<1x64xf32>
    %149 = vector.broadcast %148 : vector<1x64xf32> to vector<128x64xf32>
    %150 = arith.addf %147, %149 : vector<128x64xf32>
    %151 = arith.addf %25, %150 : vector<128x64xf32>
    %c0_54 = arith.constant 0 : index
    %c0_55 = arith.constant 0 : index
    %152 = vector.load %arg14[%c0_54, %c0_55] : memref<1x64xf32, #tpu.memory_space<vmem>>, vector<1x64xf32>
    %c0_56 = arith.constant 0 : index
    %c0_57 = arith.constant 0 : index
    %153 = vector.load %arg15[%c0_56, %c0_57] : memref<1x64xf32, #tpu.memory_space<vmem>>, vector<1x64xf32>
    %cst_58 = arith.constant dense<0.000000e+00> : vector<128xf32>
    %154 = vector.multi_reduction <add>, %151, %cst_58 [1] : vector<128x64xf32> to vector<128xf32>
    %155 = vector.shape_cast %154 : vector<128xf32> to vector<128x1xf32>
    %cst_59 = arith.constant 6.400000e+01 : f32
    %156 = vector.broadcast %cst_59 : f32 to vector<128x1xf32>
    %157 = arith.divf %155, %156 : vector<128x1xf32>
    %158 = vector.broadcast %157 : vector<128x1xf32> to vector<128x64xf32>
    %159 = arith.subf %151, %158 : vector<128x64xf32>
    %160 = arith.mulf %159, %159 : vector<128x64xf32>
    %cst_60 = arith.constant dense<0.000000e+00> : vector<128xf32>
    %161 = vector.multi_reduction <add>, %160, %cst_60 [1] : vector<128x64xf32> to vector<128xf32>
    %162 = vector.shape_cast %161 : vector<128xf32> to vector<128x1xf32>
    %cst_61 = arith.constant 6.400000e+01 : f32
    %163 = vector.broadcast %cst_61 : f32 to vector<128x1xf32>
    %164 = arith.divf %162, %163 : vector<128x1xf32>
    %165 = vector.broadcast %157 : vector<128x1xf32> to vector<128x64xf32>
    %166 = arith.subf %151, %165 : vector<128x64xf32>
    %cst_62 = arith.constant 9.99999974E-6 : f32
    %167 = vector.broadcast %cst_62 : f32 to vector<128x1xf32>
    %168 = arith.addf %164, %167 : vector<128x1xf32>
    %169 = math.rsqrt %168 : vector<128x1xf32>
    %170 = vector.broadcast %169 : vector<128x1xf32> to vector<128x64xf32>
    %171 = arith.mulf %166, %170 : vector<128x64xf32>
    %172 = vector.broadcast %152 : vector<1x64xf32> to vector<128x64xf32>
    %173 = arith.mulf %171, %172 : vector<128x64xf32>
    %174 = vector.broadcast %153 : vector<1x64xf32> to vector<128x64xf32>
    %175 = arith.addf %173, %174 : vector<128x64xf32>
    %176 = arith.truncf %175 : vector<128x64xf32> to vector<128x64xbf16>
    %c0_63 = arith.constant 0 : index
    %c0_64 = arith.constant 0 : index
    %177 = vector.load %arg16[%c0_63, %c0_64] : memref<64x256xbf16, #tpu.memory_space<vmem>>, vector<64x256xbf16>
    %cst_65 = arith.constant dense<0.000000e+00> : vector<128x256xf32>
    %178 = tpu.matmul %176, %177, %cst_65 {dimension_numbers = #tpu.dot_dimension_numbers<[1], [0], [0], [1], [0, 0, 1, 1], [], []>} : vector<128x64xbf16>, vector<64x256xbf16>, vector<128x256xf32> -> vector<128x256xf32>
    %c0_66 = arith.constant 0 : index
    %c0_67 = arith.constant 0 : index
    %179 = vector.load %arg17[%c0_66, %c0_67] : memref<1x256xf32, #tpu.memory_space<vmem>>, vector<1x256xf32>
    %180 = vector.broadcast %179 : vector<1x256xf32> to vector<128x256xf32>
    %181 = arith.addf %178, %180 : vector<128x256xf32>
    %182 = arith.mulf %181, %181 : vector<128x256xf32>
    %183 = arith.mulf %181, %182 : vector<128x256xf32>
    %cst_68 = arith.constant 4.471500e-02 : f32
    %184 = vector.broadcast %cst_68 : f32 to vector<128x256xf32>
    %185 = arith.mulf %184, %183 : vector<128x256xf32>
    %186 = arith.addf %181, %185 : vector<128x256xf32>
    %cst_69 = arith.constant 0.797884583 : f32
    %187 = vector.broadcast %cst_69 : f32 to vector<128x256xf32>
    %188 = arith.mulf %187, %186 : vector<128x256xf32>
    %189 = math.tanh %188 : vector<128x256xf32>
    %cst_70 = arith.constant 1.000000e+00 : f32
    %190 = vector.broadcast %cst_70 : f32 to vector<128x256xf32>
    %191 = arith.addf %190, %189 : vector<128x256xf32>
    %cst_71 = arith.constant 5.000000e-01 : f32
    %192 = vector.broadcast %cst_71 : f32 to vector<128x256xf32>
    %193 = arith.mulf %192, %191 : vector<128x256xf32>
    %194 = arith.mulf %181, %193 : vector<128x256xf32>
    %195 = arith.truncf %194 : vector<128x256xf32> to vector<128x256xbf16>
    %c0_72 = arith.constant 0 : index
    %c0_73 = arith.constant 0 : index
    %196 = vector.load %arg18[%c0_72, %c0_73] : memref<256x64xbf16, #tpu.memory_space<vmem>>, vector<256x64xbf16>
    %cst_74 = arith.constant dense<0.000000e+00> : vector<128x64xf32>
    %197 = tpu.matmul %195, %196, %cst_74 {dimension_numbers = #tpu.dot_dimension_numbers<[1], [0], [0], [1], [0, 0, 1, 1], [], []>} : vector<128x256xbf16>, vector<256x64xbf16>, vector<128x64xf32> -> vector<128x64xf32>
    %c0_75 = arith.constant 0 : index
    %c0_76 = arith.constant 0 : index
    %198 = vector.load %arg19[%c0_75, %c0_76] : memref<1x64xf32, #tpu.memory_space<vmem>>, vector<1x64xf32>
    %199 = vector.broadcast %198 : vector<1x64xf32> to vector<128x64xf32>
    %200 = arith.addf %197, %199 : vector<128x64xf32>
    %201 = arith.addf %175, %200 : vector<128x64xf32>
    %c0_77 = arith.constant 0 : index
    %c0_78 = arith.constant 0 : index
    %202 = vector.load %arg20[%c0_77, %c0_78] : memref<1x64xf32, #tpu.memory_space<vmem>>, vector<1x64xf32>
    %c0_79 = arith.constant 0 : index
    %c0_80 = arith.constant 0 : index
    %203 = vector.load %arg21[%c0_79, %c0_80] : memref<1x64xf32, #tpu.memory_space<vmem>>, vector<1x64xf32>
    %cst_81 = arith.constant dense<0.000000e+00> : vector<128xf32>
    %204 = vector.multi_reduction <add>, %201, %cst_81 [1] : vector<128x64xf32> to vector<128xf32>
    %205 = vector.shape_cast %204 : vector<128xf32> to vector<128x1xf32>
    %cst_82 = arith.constant 6.400000e+01 : f32
    %206 = vector.broadcast %cst_82 : f32 to vector<128x1xf32>
    %207 = arith.divf %205, %206 : vector<128x1xf32>
    %208 = vector.broadcast %207 : vector<128x1xf32> to vector<128x64xf32>
    %209 = arith.subf %201, %208 : vector<128x64xf32>
    %210 = arith.mulf %209, %209 : vector<128x64xf32>
    %cst_83 = arith.constant dense<0.000000e+00> : vector<128xf32>
    %211 = vector.multi_reduction <add>, %210, %cst_83 [1] : vector<128x64xf32> to vector<128xf32>
    %212 = vector.shape_cast %211 : vector<128xf32> to vector<128x1xf32>
    %cst_84 = arith.constant 6.400000e+01 : f32
    %213 = vector.broadcast %cst_84 : f32 to vector<128x1xf32>
    %214 = arith.divf %212, %213 : vector<128x1xf32>
    %215 = vector.broadcast %207 : vector<128x1xf32> to vector<128x64xf32>
    %216 = arith.subf %201, %215 : vector<128x64xf32>
    %cst_85 = arith.constant 9.99999974E-6 : f32
    %217 = vector.broadcast %cst_85 : f32 to vector<128x1xf32>
    %218 = arith.addf %214, %217 : vector<128x1xf32>
    %219 = math.rsqrt %218 : vector<128x1xf32>
    %220 = vector.broadcast %219 : vector<128x1xf32> to vector<128x64xf32>
    %221 = arith.mulf %216, %220 : vector<128x64xf32>
    %222 = vector.broadcast %202 : vector<1x64xf32> to vector<128x64xf32>
    %223 = arith.mulf %221, %222 : vector<128x64xf32>
    %224 = vector.broadcast %203 : vector<1x64xf32> to vector<128x64xf32>
    %225 = arith.addf %223, %224 : vector<128x64xf32>
    %226 = vector.shape_cast %225 : vector<128x64xf32> to vector<16x8x64xf32>
    %227 = vector.extract_strided_slice %226 {offsets = [0, 0, 0], sizes = [16, 1, 64], strides = [1, 1, 1]} : vector<16x8x64xf32> to vector<16x1x64xf32>
    %228 = vector.shape_cast %227 : vector<16x1x64xf32> to vector<16x64xf32>
    %c0_86 = arith.constant 0 : index
    %c0_87 = arith.constant 0 : index
    %229 = vector.load %arg3[%c0_86, %c0_87] : memref<16x32xf32, #tpu.memory_space<vmem>>, vector<16x32xf32>
    %230 = arith.truncf %229 : vector<16x32xf32> to vector<16x32xbf16>
    %c0_88 = arith.constant 0 : index
    %c0_89 = arith.constant 0 : index
    %231 = vector.load %arg22[%c0_88, %c0_89] : memref<32x128xbf16, #tpu.memory_space<vmem>>, vector<32x128xbf16>
    %cst_90 = arith.constant dense<0.000000e+00> : vector<16x128xf32>
    %232 = tpu.matmul %230, %231, %cst_90 {dimension_numbers = #tpu.dot_dimension_numbers<[1], [0], [0], [1], [0, 0, 1, 1], [], []>} : vector<16x32xbf16>, vector<32x128xbf16>, vector<16x128xf32> -> vector<16x128xf32>
    %c0_91 = arith.constant 0 : index
    %c0_92 = arith.constant 0 : index
    %233 = vector.load %arg23[%c0_91, %c0_92] : memref<1x128xf32, #tpu.memory_space<vmem>>, vector<1x128xf32>
    %234 = vector.broadcast %233 : vector<1x128xf32> to vector<16x128xf32>
    %235 = arith.addf %232, %234 : vector<16x128xf32>
    %cst_93 = arith.constant 0.000000e+00 : f32
    %236 = vector.broadcast %cst_93 : f32 to vector<16x128xf32>
    %237 = arith.maximumf %235, %236 : vector<16x128xf32>
    %238 = arith.truncf %228 : vector<16x64xf32> to vector<16x64xbf16>
    %c0_94 = arith.constant 0 : index
    %c0_95 = arith.constant 0 : index
    %239 = vector.load %arg24[%c0_94, %c0_95] : memref<64x256xbf16, #tpu.memory_space<vmem>>, vector<64x256xbf16>
    %cst_96 = arith.constant dense<0.000000e+00> : vector<16x256xf32>
    %240 = tpu.matmul %238, %239, %cst_96 {dimension_numbers = #tpu.dot_dimension_numbers<[1], [0], [0], [1], [0, 0, 1, 1], [], []>} : vector<16x64xbf16>, vector<64x256xbf16>, vector<16x256xf32> -> vector<16x256xf32>
    %241 = arith.truncf %237 : vector<16x128xf32> to vector<16x128xbf16>
    %c0_97 = arith.constant 0 : index
    %c0_98 = arith.constant 0 : index
    %242 = vector.load %arg25[%c0_97, %c0_98] : memref<128x256xbf16, #tpu.memory_space<vmem>>, vector<128x256xbf16>
    %cst_99 = arith.constant dense<0.000000e+00> : vector<16x256xf32>
    %243 = tpu.matmul %241, %242, %cst_99 {dimension_numbers = #tpu.dot_dimension_numbers<[1], [0], [0], [1], [0, 0, 1, 1], [], []>} : vector<16x128xbf16>, vector<128x256xbf16>, vector<16x256xf32> -> vector<16x256xf32>
    %244 = arith.addf %240, %243 : vector<16x256xf32>
    %c0_100 = arith.constant 0 : index
    %c0_101 = arith.constant 0 : index
    %245 = vector.load %arg26[%c0_100, %c0_101] : memref<1x256xf32, #tpu.memory_space<vmem>>, vector<1x256xf32>
    %246 = vector.broadcast %245 : vector<1x256xf32> to vector<16x256xf32>
    %247 = arith.addf %244, %246 : vector<16x256xf32>
    %cst_102 = arith.constant 0.000000e+00 : f32
    %248 = vector.broadcast %cst_102 : f32 to vector<16x256xf32>
    %249 = arith.maximumf %247, %248 : vector<16x256xf32>
    %250 = arith.truncf %249 : vector<16x256xf32> to vector<16x256xbf16>
    %c0_103 = arith.constant 0 : index
    %c0_104 = arith.constant 0 : index
    %251 = vector.load %arg27[%c0_103, %c0_104] : memref<256x128xbf16, #tpu.memory_space<vmem>>, vector<256x128xbf16>
    %cst_105 = arith.constant dense<0.000000e+00> : vector<16x128xf32>
    %252 = tpu.matmul %250, %251, %cst_105 {dimension_numbers = #tpu.dot_dimension_numbers<[1], [0], [0], [1], [0, 0, 1, 1], [], []>} : vector<16x256xbf16>, vector<256x128xbf16>, vector<16x128xf32> -> vector<16x128xf32>
    %c0_106 = arith.constant 0 : index
    %c0_107 = arith.constant 0 : index
    %253 = vector.load %arg28[%c0_106, %c0_107] : memref<1x128xf32, #tpu.memory_space<vmem>>, vector<1x128xf32>
    %254 = vector.broadcast %253 : vector<1x128xf32> to vector<16x128xf32>
    %255 = arith.addf %252, %254 : vector<16x128xf32>
    %cst_108 = arith.constant 0.000000e+00 : f32
    %256 = vector.broadcast %cst_108 : f32 to vector<16x128xf32>
    %257 = arith.maximumf %255, %256 : vector<16x128xf32>
    %258 = arith.truncf %257 : vector<16x128xf32> to vector<16x128xbf16>
    %c0_109 = arith.constant 0 : index
    %c0_110 = arith.constant 0 : index
    %259 = vector.load %arg29[%c0_109, %c0_110] : memref<128x128xbf16, #tpu.memory_space<vmem>>, vector<128x128xbf16>
    %cst_111 = arith.constant dense<0.000000e+00> : vector<16x128xf32>
    %260 = tpu.matmul %258, %259, %cst_111 {dimension_numbers = #tpu.dot_dimension_numbers<[1], [0], [0], [1], [0, 0, 1, 1], [], []>} : vector<16x128xbf16>, vector<128x128xbf16>, vector<16x128xf32> -> vector<16x128xf32>
    %c0_112 = arith.constant 0 : index
    %c0_113 = arith.constant 0 : index
    %261 = vector.load %arg30[%c0_112, %c0_113] : memref<1x128xf32, #tpu.memory_space<vmem>>, vector<1x128xf32>
    %262 = vector.broadcast %261 : vector<1x128xf32> to vector<16x128xf32>
    %263 = arith.addf %260, %262 : vector<16x128xf32>
    %c0_114 = arith.constant 0 : index
    %c0_115 = arith.constant 0 : index
    %264 = vector.load %arg31[%c0_114, %c0_115] : memref<16x128xf32, #tpu.memory_space<vmem>>, vector<16x128xf32>
    tpu.vector_store %arg31[%c0_114, %c0_115], %263 {strides = array<i32>} : memref<16x128xf32, #tpu.memory_space<vmem>>, vector<16x128xf32>,
    return
  }
  func.func @transform_0(%arg0: i32) -> (i32, i32, i32) {
    %c0_i32 = arith.constant 0 : i32
    %c0_i32_0 = arith.constant 0 : i32
    %c0_i32_1 = arith.constant 0 : i32
    return %arg0, %c0_i32, %c0_i32_0 : i32, i32, i32
  }
  func.func @transform_1(%arg0: i32) -> (i32, i32) {
    %c0_i32 = arith.constant 0 : i32
    %c0_i32_0 = arith.constant 0 : i32
    return %arg0, %c0_i32 : i32, i32
  }
  func.func @transform_2(%arg0: i32) -> (i32, i32) {
    %c0_i32 = arith.constant 0 : i32
    %c0_i32_0 = arith.constant 0 : i32
    return %arg0, %c0_i32 : i32, i32
  }
  func.func @transform_3(%arg0: i32) -> (i32, i32) {
    %c0_i32 = arith.constant 0 : i32
    %c0_i32_0 = arith.constant 0 : i32
    %c0_i32_1 = arith.constant 0 : i32
    return %c0_i32, %c0_i32_0 : i32, i32
  }
  func.func @transform_4(%arg0: i32) -> (i32, i32) {
    %c0_i32 = arith.constant 0 : i32
    %c0_i32_0 = arith.constant 0 : i32
    %c0_i32_1 = arith.constant 0 : i32
    return %c0_i32, %c0_i32_0 : i32, i32
  }
  func.func @transform_5(%arg0: i32) -> (i32, i32) {
    %c0_i32 = arith.constant 0 : i32
    %c0_i32_0 = arith.constant 0 : i32
    %c0_i32_1 = arith.constant 0 : i32
    return %c0_i32, %c0_i32_0 : i32, i32
  }
  func.func @transform_6(%arg0: i32) -> (i32, i32) {
    %c0_i32 = arith.constant 0 : i32
    %c0_i32_0 = arith.constant 0 : i32
    %c0_i32_1 = arith.constant 0 : i32
    return %c0_i32, %c0_i32_0 : i32, i32
  }
  func.func @transform_7(%arg0: i32) -> (i32, i32) {
    %c0_i32 = arith.constant 0 : i32
    %c0_i32_0 = arith.constant 0 : i32
    %c0_i32_1 = arith.constant 0 : i32
    return %c0_i32, %c0_i32_0 : i32, i32
  }
  func.func @transform_8(%arg0: i32) -> (i32, i32) {
    %c0_i32 = arith.constant 0 : i32
    %c0_i32_0 = arith.constant 0 : i32
    %c0_i32_1 = arith.constant 0 : i32
    return %c0_i32, %c0_i32_0 : i32, i32
  }
  func.func @transform_9(%arg0: i32) -> (i32, i32) {
    %c0_i32 = arith.constant 0 : i32
    %c0_i32_0 = arith.constant 0 : i32
    %c0_i32_1 = arith.constant 0 : i32
    return %c0_i32, %c0_i32_0 : i32, i32
  }
  func.func @transform_10(%arg0: i32) -> (i32, i32) {
    %c0_i32 = arith.constant 0 : i32
    %c0_i32_0 = arith.constant 0 : i32
    %c0_i32_1 = arith.constant 0 : i32
    return %c0_i32, %c0_i32_0 : i32, i32
  }
  func.func @transform_11(%arg0: i32) -> (i32, i32) {
    %c0_i32 = arith.constant 0 : i32
    %c0_i32_0 = arith.constant 0 : i32
    %c0_i32_1 = arith.constant 0 : i32
    return %c0_i32, %c0_i32_0 : i32, i32
  }
  func.func @transform_12(%arg0: i32) -> (i32, i32) {
    %c0_i32 = arith.constant 0 : i32
    %c0_i32_0 = arith.constant 0 : i32
    %c0_i32_1 = arith.constant 0 : i32
    return %c0_i32, %c0_i32_0 : i32, i32
  }
  func.func @transform_13(%arg0: i32) -> (i32, i32) {
    %c0_i32 = arith.constant 0 : i32
    %c0_i32_0 = arith.constant 0 : i32
    %c0_i32_1 = arith.constant 0 : i32
    return %c0_i32, %c0_i32_0 : i32, i32
  }
  func.func @transform_14(%arg0: i32) -> (i32, i32) {
    %c0_i32 = arith.constant 0 : i32
    %c0_i32_0 = arith.constant 0 : i32
    %c0_i32_1 = arith.constant 0 : i32
    return %c0_i32, %c0_i32_0 : i32, i32
  }
  func.func @transform_15(%arg0: i32) -> (i32, i32) {
    %c0_i32 = arith.constant 0 : i32
    %c0_i32_0 = arith.constant 0 : i32
    %c0_i32_1 = arith.constant 0 : i32
    return %c0_i32, %c0_i32_0 : i32, i32
  }
  func.func @transform_16(%arg0: i32) -> (i32, i32) {
    %c0_i32 = arith.constant 0 : i32
    %c0_i32_0 = arith.constant 0 : i32
    %c0_i32_1 = arith.constant 0 : i32
    return %c0_i32, %c0_i32_0 : i32, i32
  }
  func.func @transform_17(%arg0: i32) -> (i32, i32) {
    %c0_i32 = arith.constant 0 : i32
    %c0_i32_0 = arith.constant 0 : i32
    %c0_i32_1 = arith.constant 0 : i32
    return %c0_i32, %c0_i32_0 : i32, i32
  }
  func.func @transform_18(%arg0: i32) -> (i32, i32) {
    %c0_i32 = arith.constant 0 : i32
    %c0_i32_0 = arith.constant 0 : i32
    %c0_i32_1 = arith.constant 0 : i32
    return %c0_i32, %c0_i32_0 : i32, i32
  }
  func.func @transform_19(%arg0: i32) -> (i32, i32) {
    %c0_i32 = arith.constant 0 : i32
    %c0_i32_0 = arith.constant 0 : i32
    %c0_i32_1 = arith.constant 0 : i32
    return %c0_i32, %c0_i32_0 : i32, i32
  }
  func.func @transform_20(%arg0: i32) -> (i32, i32) {
    %c0_i32 = arith.constant 0 : i32
    %c0_i32_0 = arith.constant 0 : i32
    %c0_i32_1 = arith.constant 0 : i32
    return %c0_i32, %c0_i32_0 : i32, i32
  }
  func.func @transform_21(%arg0: i32) -> (i32, i32) {
    %c0_i32 = arith.constant 0 : i32
    %c0_i32_0 = arith.constant 0 : i32
    %c0_i32_1 = arith.constant 0 : i32
    return %c0_i32, %c0_i32_0 : i32, i32
  }
  func.func @transform_22(%arg0: i32) -> (i32, i32) {
    %c0_i32 = arith.constant 0 : i32
    %c0_i32_0 = arith.constant 0 : i32
    %c0_i32_1 = arith.constant 0 : i32
    return %c0_i32, %c0_i32_0 : i32, i32
  }
  func.func @transform_23(%arg0: i32) -> (i32, i32) {
    %c0_i32 = arith.constant 0 : i32
    %c0_i32_0 = arith.constant 0 : i32
    %c0_i32_1 = arith.constant 0 : i32
    return %c0_i32, %c0_i32_0 : i32, i32
  }
  func.func @transform_24(%arg0: i32) -> (i32, i32) {
    %c0_i32 = arith.constant 0 : i32
    %c0_i32_0 = arith.constant 0 : i32
    %c0_i32_1 = arith.constant 0 : i32
    return %c0_i32, %c0_i32_0 : i32, i32
  }
  func.func @transform_25(%arg0: i32) -> (i32, i32) {
    %c0_i32 = arith.constant 0 : i32
    %c0_i32_0 = arith.constant 0 : i32
    %c0_i32_1 = arith.constant 0 : i32
    return %c0_i32, %c0_i32_0 : i32, i32
  }
  func.func @transform_26(%arg0: i32) -> (i32, i32) {
    %c0_i32 = arith.constant 0 : i32
    %c0_i32_0 = arith.constant 0 : i32
    %c0_i32_1 = arith.constant 0 : i32
    return %c0_i32, %c0_i32_0 : i32, i32
  }
  func.func @transform_27(%arg0: i32) -> (i32, i32) {
    %c0_i32 = arith.constant 0 : i32
    %c0_i32_0 = arith.constant 0 : i32
    %c0_i32_1 = arith.constant 0 : i32
    return %c0_i32, %c0_i32_0 : i32, i32
  }
  func.func @transform_28(%arg0: i32) -> (i32, i32) {
    %c0_i32 = arith.constant 0 : i32
    %c0_i32_0 = arith.constant 0 : i32
    %c0_i32_1 = arith.constant 0 : i32
    return %c0_i32, %c0_i32_0 : i32, i32
  }
  func.func @transform_29(%arg0: i32) -> (i32, i32) {
    %c0_i32 = arith.constant 0 : i32
    %c0_i32_0 = arith.constant 0 : i32
    %c0_i32_1 = arith.constant 0 : i32
    return %c0_i32, %c0_i32_0 : i32, i32
  }
  func.func @transform_30(%arg0: i32) -> (i32, i32) {
    %c0_i32 = arith.constant 0 : i32
    %c0_i32_0 = arith.constant 0 : i32
    return %arg0, %c0_i32 : i32, i32
  }
}

</mosaic_0001>

<llo_original>
// kernel: forward.1
$region0: #{forward.1}
  #allocation0 [shape = 'u32[]', space=smem, size = 0x4, offset = 0x4, fixed_abs, tag = 'smem constant byte address 0x4 - core index']
  #allocation1 [shape = 'u32[144,128]{1,0:T(1,128)}', space=vmem, size = 0x12000, scoped, tag = 'internal scratch']
  %s0 = inlined_call_operand.smem [shape: u32[31], index: -1, kind: input, shape index: {}]
  %s1 = sld [smem:[%s0]]
  %s2 = scalar_lea.smem %s0, 1
  %s3 = sld [smem:[%s2]]
  %s4 = scalar_lea.smem %s0, 2
  %s5 = sld [smem:[%s4]]
  %s6 = scalar_lea.smem %s0, 3
  %s7 = sld [smem:[%s6]]
  %s8 = scalar_lea.smem %s0, 4
  %s9 = sld [smem:[%s8]]
  %s10 = scalar_lea.smem %s0, 5
  %s11 = sld [smem:[%s10]]
  %s12 = scalar_lea.smem %s0, 6
  %s13 = sld [smem:[%s12]]
  %s14 = scalar_lea.smem %s0, 7
  %s15 = sld [smem:[%s14]]
  %s16 = scalar_lea.smem %s0, 8
  %s17 = sld [smem:[%s16]]
  %s18 = scalar_lea.smem %s0, 9
  %s19 = sld [smem:[%s18]]
  %s20 = scalar_lea.smem %s0, 10
  %s21 = sld [smem:[%s20]]
  %s22 = scalar_lea.smem %s0, 11
  %s23 = sld [smem:[%s22]]
  %s24 = scalar_lea.smem %s0, 12
  %s25 = sld [smem:[%s24]]
  %s26 = scalar_lea.smem %s0, 13
  %s27 = sld [smem:[%s26]]
  %s28 = scalar_lea.smem %s0, 14
  %s29 = sld [smem:[%s28]]
  %s30 = scalar_lea.smem %s0, 15
  %s31 = sld [smem:[%s30]]
  %s32 = scalar_lea.smem %s0, 16
  %s33 = sld [smem:[%s32]]
  %s34 = scalar_lea.smem %s0, 17
  %s35 = sld [smem:[%s34]]
  %s36 = scalar_lea.smem %s0, 18
  %s37 = sld [smem:[%s36]]
  %s38 = scalar_lea.smem %s0, 19
  %s39 = sld [smem:[%s38]]
  %s40 = scalar_lea.smem %s0, 20
  %s41 = sld [smem:[%s40]]
  %s42 = scalar_lea.smem %s0, 21
  %s43 = sld [smem:[%s42]]
  %s44 = scalar_lea.smem %s0, 22
  %s45 = sld [smem:[%s44]]
  %s46 = scalar_lea.smem %s0, 23
  %s47 = sld [smem:[%s46]]
  %s48 = scalar_lea.smem %s0, 24
  %s49 = sld [smem:[%s48]]
  %s50 = scalar_lea.smem %s0, 25
  %s51 = sld [smem:[%s50]]
  %s52 = scalar_lea.smem %s0, 26
  %s53 = sld [smem:[%s52]]
  %s54 = scalar_lea.smem %s0, 27
  %s55 = sld [smem:[%s54]]
  %s56 = scalar_lea.smem %s0, 28
  %s57 = sld [smem:[%s56]]
  %s58 = scalar_lea.smem %s0, 29
  %s59 = sld [smem:[%s58]]
  %s60 = scalar_lea.smem %s0, 30
  %s61 = sld [smem:[%s60]]
  %s62 = sld [smem:[#allocation0]]
  $region153: #{forward.1} parent=0
    _
  %s64 = ssub.s32 1, %s62
  %s65 = scalar_select 0, %s64, %s62
  loop: start=0, step=1, limit=4
  $region2: #{forward.1} parent=0 // loop_pre_header
    _
  $region3: #{forward.1} parent=0 // loop_header
    %s67 = sphi 0, %s71
    %p68 = scmp.ge.s32.totalorder %s67, 4
    %s77 = sphi 0, %s79
    %s80 = sphi 0, %s77
    %s81 = sphi 0, %s80
    %s97 = sphi 0, %s81
    %s103 = sphi 0, %s105
    %s106 = sphi 0, %s103
    %s107 = sphi 0, %s106
    %s123 = sphi 0, %s107
    %s129 = sphi 0, %s131
    %s132 = sphi 0, %s129
    %s133 = sphi 0, %s132
    %s149 = sphi 0, %s133
    %s153 = sphi 0, %s153
    %s155 = sphi 0, %s153
    %s156 = sphi 0, %s155
    %s170 = sphi 0, %s156
    %s174 = sphi 0, %s174
    %s176 = sphi 0, %s174
    %s177 = sphi 0, %s176
    %s191 = sphi 0, %s177
    %s195 = sphi 0, %s195
    %s197 = sphi 0, %s195
    %s198 = sphi 0, %s197
    %s212 = sphi 0, %s198
    %s216 = sphi 0, %s216
    %s218 = sphi 0, %s216
    %s219 = sphi 0, %s218
    %s233 = sphi 0, %s219
    %s237 = sphi 0, %s237
    %s239 = sphi 0, %s237
    %s240 = sphi 0, %s239
    %s254 = sphi 0, %s240
    %s258 = sphi 0, %s258
    %s260 = sphi 0, %s258
    %s261 = sphi 0, %s260
    %s275 = sphi 0, %s261
    %s279 = sphi 0, %s279
    %s281 = sphi 0, %s279
    %s282 = sphi 0, %s281
    %s296 = sphi 0, %s282
    %s300 = sphi 0, %s300
    %s302 = sphi 0, %s300
    %s303 = sphi 0, %s302
    %s317 = sphi 0, %s303
    %s321 = sphi 0, %s321
    %s323 = sphi 0, %s321
    %s324 = sphi 0, %s323
    %s338 = sphi 0, %s324
    %s342 = sphi 0, %s342
    %s344 = sphi 0, %s342
    %s345 = sphi 0, %s344
    %s359 = sphi 0, %s345
    %s363 = sphi 0, %s363
    %s365 = sphi 0, %s363
    %s366 = sphi 0, %s365
    %s380 = sphi 0, %s366
    %s384 = sphi 0, %s384
    %s386 = sphi 0, %s384
    %s387 = sphi 0, %s386
    %s401 = sphi 0, %s387
    %s405 = sphi 0, %s405
    %s407 = sphi 0, %s405
    %s408 = sphi 0, %s407
    %s422 = sphi 0, %s408
    %s426 = sphi 0, %s426
    %s428 = sphi 0, %s426
    %s429 = sphi 0, %s428
    %s443 = sphi 0, %s429
    %s447 = sphi 0, %s447
    %s449 = sphi 0, %s447
    %s450 = sphi 0, %s449
    %s464 = sphi 0, %s450
    %s468 = sphi 0, %s468
    %s470 = sphi 0, %s468
    %s471 = sphi 0, %s470
    %s485 = sphi 0, %s471
    %s489 = sphi 0, %s489
    %s491 = sphi 0, %s489
    %s492 = sphi 0, %s491
    %s506 = sphi 0, %s492
    %s510 = sphi 0, %s510
    %s512 = sphi 0, %s510
    %s513 = sphi 0, %s512
    %s527 = sphi 0, %s513
    %s531 = sphi 0, %s531
    %s533 = sphi 0, %s531
    %s534 = sphi 0, %s533
    %s548 = sphi 0, %s534
    %s552 = sphi 0, %s552
    %s554 = sphi 0, %s552
    %s555 = sphi 0, %s554
    %s569 = sphi 0, %s555
    %s573 = sphi 0, %s573
    %s575 = sphi 0, %s573
    %s576 = sphi 0, %s575
    %s590 = sphi 0, %s576
    %s594 = sphi 0, %s594
    %s596 = sphi 0, %s594
    %s597 = sphi 0, %s596
    %s611 = sphi 0, %s597
    %s615 = sphi 0, %s615
    %s617 = sphi 0, %s615
    %s618 = sphi 0, %s617
    %s632 = sphi 0, %s618
    %s636 = sphi 0, %s636
    %s638 = sphi 0, %s636
    %s639 = sphi 0, %s638
    %s653 = sphi 0, %s639
    %s657 = sphi 0, %s657
    %s659 = sphi 0, %s657
    %s660 = sphi 0, %s659
    %s674 = sphi 0, %s660
    %s678 = sphi 0, %s678
    %s680 = sphi 0, %s678
    %s681 = sphi 0, %s680
    %s695 = sphi 0, %s681
    %s699 = sphi 0, %s699
    %s701 = sphi 0, %s699
    %s702 = sphi 0, %s701
    %s716 = sphi 0, %s702
    %s722 = sphi 0, %s724
    %s725 = sphi 0, %s722
    %s726 = sphi 0, %s725
    %s742 = sphi 0, %s726
  $region4: #{forward.1} parent=0 // loop_header_branch
    %70 = sbr.rel (%p68) target = $region8
  $region5: #{forward.1} parent=0 // loop_body
    %s72 = ssub.s32 %s67, 1
    %s73 = ssub.s32 %s67, 2
    %s74 = sadd.s32 %s67, 1
    %s75 = ssub.s32 %s67, %s74
    %p76 = scmp.eq.s32.totalorder %s75, 0
    %s78 = sadd.s32 %s77, 1
    %s79 = scalar_select %p76, %s77, %s78
    %p82 = pneg %p76
    %p83 = scmp.eq.s32.totalorder %s67, 1
    %p84 = por %p82, %p83
    %p85 = scmp.ne.s32.totalorder %s77, %s80
    %p86 = scmp.eq.s32.totalorder %s67, 0
    %p87 = por %p85, %p86
    %p88 = scmp.ne.s32.totalorder %s77, %s80
    %p89 = scmp.eq.s32.totalorder %s72, 1
    %p90 = por %p88, %p89
    %p91 = scmp.ne.s32.totalorder %s80, %s81
    %p92 = scmp.eq.s32.totalorder %s72, 0
    %p93 = por %p91, %p92
    %p94 = scmp.ne.s32.totalorder %s80, %s81
    %p95 = scmp.eq.s32.totalorder %s73, 1
    %p96 = por %p94, %p95
    %p98 = scmp.ne.s32.totalorder %s81, %s97
    %p99 = scmp.eq.s32.totalorder %s73, 0
    %p100 = por %p98, %p99
    %s101 = ssub.s32 %s67, %s74
    %p102 = scmp.eq.s32.totalorder %s101, 0
    %s104 = sadd.s32 %s103, 1
    %s105 = scalar_select %p102, %s103, %s104
    %p108 = pneg %p102
    %p109 = scmp.eq.s32.totalorder %s67, 1
    %p110 = por %p108, %p109
    %p111 = scmp.ne.s32.totalorder %s103, %s106
    %p112 = scmp.eq.s32.totalorder %s67, 0
    %p113 = por %p111, %p112
    %p114 = scmp.ne.s32.totalorder %s103, %s106
    %p115 = scmp.eq.s32.totalorder %s72, 1
    %p116 = por %p114, %p115
    %p117 = scmp.ne.s32.totalorder %s106, %s107
    %p118 = scmp.eq.s32.totalorder %s72, 0
    %p119 = por %p117, %p118
    %p120 = scmp.ne.s32.totalorder %s106, %s107
    %p121 = scmp.eq.s32.totalorder %s73, 1
    %p122 = por %p120, %p121
    %p124 = scmp.ne.s32.totalorder %s107, %s123
    %p125 = scmp.eq.s32.totalorder %s73, 0
    %p126 = por %p124, %p125
    %s127 = ssub.s32 %s67, %s74
    %p128 = scmp.eq.s32.totalorder %s127, 0
    %s130 = sadd.s32 %s129, 1
    %s131 = scalar_select %p128, %s129, %s130
    %p134 = pneg %p128
    %p135 = scmp.eq.s32.totalorder %s67, 1
    %p136 = por %p134, %p135
    %p137 = scmp.ne.s32.totalorder %s129, %s132
    %p138 = scmp.eq.s32.totalorder %s67, 0
    %p139 = por %p137, %p138
    %p140 = scmp.ne.s32.totalorder %s129, %s132
    %p141 = scmp.eq.s32.totalorder %s72, 1
    %p142 = por %p140, %p141
    %p143 = scmp.ne.s32.totalorder %s132, %s133
    %p144 = scmp.eq.s32.totalorder %s72, 0
    %p145 = por %p143, %p144
    %p146 = scmp.ne.s32.totalorder %s132, %s133
    %p147 = scmp.eq.s32.totalorder %s73, 1
    %p148 = por %p146, %p147
    %p150 = scmp.ne.s32.totalorder %s133, %s149
    %p151 = scmp.eq.s32.totalorder %s73, 0
    %p152 = por %p150, %p151
    %s154 = sadd.s32 %s153, 1
    %p157 = scmp.eq.s32.totalorder %s67, 1
    %p158 = scmp.ne.s32.totalorder %s153, %s155
    %p159 = scmp.eq.s32.totalorder %s67, 0
    %p160 = por %p158, %p159
    %p161 = scmp.ne.s32.totalorder %s153, %s155
    %p162 = scmp.eq.s32.totalorder %s72, 1
    %p163 = por %p161, %p162
    %p164 = scmp.ne.s32.totalorder %s155, %s156
    %p165 = scmp.eq.s32.totalorder %s72, 0
    %p166 = por %p164, %p165
    %p167 = scmp.ne.s32.totalorder %s155, %s156
    %p168 = scmp.eq.s32.totalorder %s73, 1
    %p169 = por %p167, %p168
    %p171 = scmp.ne.s32.totalorder %s156, %s170
    %p172 = scmp.eq.s32.totalorder %s73, 0
    %p173 = por %p171, %p172
    %s175 = sadd.s32 %s174, 1
    %p178 = scmp.eq.s32.totalorder %s67, 1
    %p179 = scmp.ne.s32.totalorder %s174, %s176
    %p180 = scmp.eq.s32.totalorder %s67, 0
    %p181 = por %p179, %p180
    %p182 = scmp.ne.s32.totalorder %s174, %s176
    %p183 = scmp.eq.s32.totalorder %s72, 1
    %p184 = por %p182, %p183
    %p185 = scmp.ne.s32.totalorder %s176, %s177
    %p186 = scmp.eq.s32.totalorder %s72, 0
    %p187 = por %p185, %p186
    %p188 = scmp.ne.s32.totalorder %s176, %s177
    %p189 = scmp.eq.s32.totalorder %s73, 1
    %p190 = por %p188, %p189
    %p192 = scmp.ne.s32.totalorder %s177, %s191
    %p193 = scmp.eq.s32.totalorder %s73, 0
    %p194 = por %p192, %p193
    %s196 = sadd.s32 %s195, 1
    %p199 = scmp.eq.s32.totalorder %s67, 1
    %p200 = scmp.ne.s32.totalorder %s195, %s197
    %p201 = scmp.eq.s32.totalorder %s67, 0
    %p202 = por %p200, %p201
    %p203 = scmp.ne.s32.totalorder %s195, %s197
    %p204 = scmp.eq.s32.totalorder %s72, 1
    %p205 = por %p203, %p204
    %p206 = scmp.ne.s32.totalorder %s197, %s198
    %p207 = scmp.eq.s32.totalorder %s72, 0
    %p208 = por %p206, %p207
    %p209 = scmp.ne.s32.totalorder %s197, %s198
    %p210 = scmp.eq.s32.totalorder %s73, 1
    %p211 = por %p209, %p210
    %p213 = scmp.ne.s32.totalorder %s198, %s212
    %p214 = scmp.eq.s32.totalorder %s73, 0
    %p215 = por %p213, %p214
    %s217 = sadd.s32 %s216, 1
    %p220 = scmp.eq.s32.totalorder %s67, 1
    %p221 = scmp.ne.s32.totalorder %s216, %s218
    %p222 = scmp.eq.s32.totalorder %s67, 0
    %p223 = por %p221, %p222
    %p224 = scmp.ne.s32.totalorder %s216, %s218
    %p225 = scmp.eq.s32.totalorder %s72, 1
    %p226 = por %p224, %p225
    %p227 = scmp.ne.s32.totalorder %s218, %s219
    %p228 = scmp.eq.s32.totalorder %s72, 0
    %p229 = por %p227, %p228
    %p230 = scmp.ne.s32.totalorder %s218, %s219
    %p231 = scmp.eq.s32.totalorder %s73, 1
    %p232 = por %p230, %p231
    %p234 = scmp.ne.s32.totalorder %s219, %s233
    %p235 = scmp.eq.s32.totalorder %s73, 0
    %p236 = por %p234, %p235
    %s238 = sadd.s32 %s237, 1
    %p241 = scmp.eq.s32.totalorder %s67, 1
    %p242 = scmp.ne.s32.totalorder %s237, %s239
    %p243 = scmp.eq.s32.totalorder %s67, 0
    %p244 = por %p242, %p243
    %p245 = scmp.ne.s32.totalorder %s237, %s239
    %p246 = scmp.eq.s32.totalorder %s72, 1
    %p247 = por %p245, %p246
    %p248 = scmp.ne.s32.totalorder %s239, %s240
    %p249 = scmp.eq.s32.totalorder %s72, 0
    %p250 = por %p248, %p249
    %p251 = scmp.ne.s32.totalorder %s239, %s240
    %p252 = scmp.eq.s32.totalorder %s73, 1
    %p253 = por %p251, %p252
    %p255 = scmp.ne.s32.totalorder %s240, %s254
    %p256 = scmp.eq.s32.totalorder %s73, 0
    %p257 = por %p255, %p256
    %s259 = sadd.s32 %s258, 1
    %p262 = scmp.eq.s32.totalorder %s67, 1
    %p263 = scmp.ne.s32.totalorder %s258, %s260
    %p264 = scmp.eq.s32.totalorder %s67, 0
    %p265 = por %p263, %p264
    %p266 = scmp.ne.s32.totalorder %s258, %s260
    %p267 = scmp.eq.s32.totalorder %s72, 1
    %p268 = por %p266, %p267
    %p269 = scmp.ne.s32.totalorder %s260, %s261
    %p270 = scmp.eq.s32.totalorder %s72, 0
    %p271 = por %p269, %p270
    %p272 = scmp.ne.s32.totalorder %s260, %s261
    %p273 = scmp.eq.s32.totalorder %s73, 1
    %p274 = por %p272, %p273
    %p276 = scmp.ne.s32.totalorder %s261, %s275
    %p277 = scmp.eq.s32.totalorder %s73, 0
    %p278 = por %p276, %p277
    %s280 = sadd.s32 %s279, 1
    %p283 = scmp.eq.s32.totalorder %s67, 1
    %p284 = scmp.ne.s32.totalorder %s279, %s281
    %p285 = scmp.eq.s32.totalorder %s67, 0
    %p286 = por %p284, %p285
    %p287 = scmp.ne.s32.totalorder %s279, %s281
    %p288 = scmp.eq.s32.totalorder %s72, 1
    %p289 = por %p287, %p288
    %p290 = scmp.ne.s32.totalorder %s281, %s282
    %p291 = scmp.eq.s32.totalorder %s72, 0
    %p292 = por %p290, %p291
    %p293 = scmp.ne.s32.totalorder %s281, %s282
    %p294 = scmp.eq.s32.totalorder %s73, 1
    %p295 = por %p293, %p294
    %p297 = scmp.ne.s32.totalorder %s282, %s296
    %p298 = scmp.eq.s32.totalorder %s73, 0
    %p299 = por %p297, %p298
    %s301 = sadd.s32 %s300, 1
    %p304 = scmp.eq.s32.totalorder %s67, 1
    %p305 = scmp.ne.s32.totalorder %s300, %s302
    %p306 = scmp.eq.s32.totalorder %s67, 0
    %p307 = por %p305, %p306
    %p308 = scmp.ne.s32.totalorder %s300, %s302
    %p309 = scmp.eq.s32.totalorder %s72, 1
    %p310 = por %p308, %p309
    %p311 = scmp.ne.s32.totalorder %s302, %s303
    %p312 = scmp.eq.s32.totalorder %s72, 0
    %p313 = por %p311, %p312
    %p314 = scmp.ne.s32.totalorder %s302, %s303
    %p315 = scmp.eq.s32.totalorder %s73, 1
    %p316 = por %p314, %p315
    %p318 = scmp.ne.s32.totalorder %s303, %s317
    %p319 = scmp.eq.s32.totalorder %s73, 0
    %p320 = por %p318, %p319
    %s322 = sadd.s32 %s321, 1
    %p325 = scmp.eq.s32.totalorder %s67, 1
    %p326 = scmp.ne.s32.totalorder %s321, %s323
    %p327 = scmp.eq.s32.totalorder %s67, 0
    %p328 = por %p326, %p327
    %p329 = scmp.ne.s32.totalorder %s321, %s323
    %p330 = scmp.eq.s32.totalorder %s72, 1
    %p331 = por %p329, %p330
    %p332 = scmp.ne.s32.totalorder %s323, %s324
    %p333 = scmp.eq.s32.totalorder %s72, 0
    %p334 = por %p332, %p333
    %p335 = scmp.ne.s32.totalorder %s323, %s324
    %p336 = scmp.eq.s32.totalorder %s73, 1
    %p337 = por %p335, %p336
    %p339 = scmp.ne.s32.totalorder %s324, %s338
    %p340 = scmp.eq.s32.totalorder %s73, 0
    %p341 = por %p339, %p340
    %s343 = sadd.s32 %s342, 1
    %p346 = scmp.eq.s32.totalorder %s67, 1
    %p347 = scmp.ne.s32.totalorder %s342, %s344
    %p348 = scmp.eq.s32.totalorder %s67, 0
    %p349 = por %p347, %p348
    %p350 = scmp.ne.s32.totalorder %s342, %s344
    %p351 = scmp.eq.s32.totalorder %s72, 1
    %p352 = por %p350, %p351
    %p353 = scmp.ne.s32.totalorder %s344, %s345
    %p354 = scmp.eq.s32.totalorder %s72, 0
    %p355 = por %p353, %p354
    %p356 = scmp.ne.s32.totalorder %s344, %s345
    %p357 = scmp.eq.s32.totalorder %s73, 1
    %p358 = por %p356, %p357
    %p360 = scmp.ne.s32.totalorder %s345, %s359
    %p361 = scmp.eq.s32.totalorder %s73, 0
    %p362 = por %p360, %p361
    %s364 = sadd.s32 %s363, 1
    %p367 = scmp.eq.s32.totalorder %s67, 1
    %p368 = scmp.ne.s32.totalorder %s363, %s365
    %p369 = scmp.eq.s32.totalorder %s67, 0
    %p370 = por %p368, %p369
    %p371 = scmp.ne.s32.totalorder %s363, %s365
    %p372 = scmp.eq.s32.totalorder %s72, 1
    %p373 = por %p371, %p372
    %p374 = scmp.ne.s32.totalorder %s365, %s366
    %p375 = scmp.eq.s32.totalorder %s72, 0
    %p376 = por %p374, %p375
    %p377 = scmp.ne.s32.totalorder %s365, %s366
    %p378 = scmp.eq.s32.totalorder %s73, 1
    %p379 = por %p377, %p378
    %p381 = scmp.ne.s32.totalorder %s366, %s380
    %p382 = scmp.eq.s32.totalorder %s73, 0
    %p383 = por %p381, %p382
    %s385 = sadd.s32 %s384, 1
    %p388 = scmp.eq.s32.totalorder %s67, 1
    %p389 = scmp.ne.s32.totalorder %s384, %s386
    %p390 = scmp.eq.s32.totalorder %s67, 0
    %p391 = por %p389, %p390
    %p392 = scmp.ne.s32.totalorder %s384, %s386
    %p393 = scmp.eq.s32.totalorder %s72, 1
    %p394 = por %p392, %p393
    %p395 = scmp.ne.s32.totalorder %s386, %s387
    %p396 = scmp.eq.s32.totalorder %s72, 0
    %p397 = por %p395, %p396
    %p398 = scmp.ne.s32.totalorder %s386, %s387
    %p399 = scmp.eq.s32.totalorder %s73, 1
    %p400 = por %p398, %p399
    %p402 = scmp.ne.s32.totalorder %s387, %s401
    %p403 = scmp.eq.s32.totalorder %s73, 0
    %p404 = por %p402, %p403
    %s406 = sadd.s32 %s405, 1
    %p409 = scmp.eq.s32.totalorder %s67, 1
    %p410 = scmp.ne.s32.totalorder %s405, %s407
    %p411 = scmp.eq.s32.totalorder %s67, 0
    %p412 = por %p410, %p411
    %p413 = scmp.ne.s32.totalorder %s405, %s407
    %p414 = scmp.eq.s32.totalorder %s72, 1
    %p415 = por %p413, %p414
    %p416 = scmp.ne.s32.totalorder %s407, %s408
    %p417 = scmp.eq.s32.totalorder %s72, 0
    %p418 = por %p416, %p417
    %p419 = scmp.ne.s32.totalorder %s407, %s408
    %p420 = scmp.eq.s32.totalorder %s73, 1
    %p421 = por %p419, %p420
    %p423 = scmp.ne.s32.totalorder %s408, %s422
    %p424 = scmp.eq.s32.totalorder %s73, 0
    %p425 = por %p423, %p424
    %s427 = sadd.s32 %s426, 1
    %p430 = scmp.eq.s32.totalorder %s67, 1
    %p431 = scmp.ne.s32.totalorder %s426, %s428
    %p432 = scmp.eq.s32.totalorder %s67, 0
    %p433 = por %p431, %p432
    %p434 = scmp.ne.s32.totalorder %s426, %s428
    %p435 = scmp.eq.s32.totalorder %s72, 1
    %p436 = por %p434, %p435
    %p437 = scmp.ne.s32.totalorder %s428, %s429
    %p438 = scmp.eq.s32.totalorder %s72, 0
    %p439 = por %p437, %p438
    %p440 = scmp.ne.s32.totalorder %s428, %s429
    %p441 = scmp.eq.s32.totalorder %s73, 1
    %p442 = por %p440, %p441
    %p444 = scmp.ne.s32.totalorder %s429, %s443
    %p445 = scmp.eq.s32.totalorder %s73, 0
    %p446 = por %p444, %p445
    %s448 = sadd.s32 %s447, 1
    %p451 = scmp.eq.s32.totalorder %s67, 1
    %p452 = scmp.ne.s32.totalorder %s447, %s449
    %p453 = scmp.eq.s32.totalorder %s67, 0
    %p454 = por %p452, %p453
    %p455 = scmp.ne.s32.totalorder %s447, %s449
    %p456 = scmp.eq.s32.totalorder %s72, 1
    %p457 = por %p455, %p456
    %p458 = scmp.ne.s32.totalorder %s449, %s450
    %p459 = scmp.eq.s32.totalorder %s72, 0
    %p460 = por %p458, %p459
    %p461 = scmp.ne.s32.totalorder %s449, %s450
    %p462 = scmp.eq.s32.totalorder %s73, 1
    %p463 = por %p461, %p462
    %p465 = scmp.ne.s32.totalorder %s450, %s464
    %p466 = scmp.eq.s32.totalorder %s73, 0
    %p467 = por %p465, %p466
    %s469 = sadd.s32 %s468, 1
    %p472 = scmp.eq.s32.totalorder %s67, 1
    %p473 = scmp.ne.s32.totalorder %s468, %s470
    %p474 = scmp.eq.s32.totalorder %s67, 0
    %p475 = por %p473, %p474
    %p476 = scmp.ne.s32.totalorder %s468, %s470
    %p477 = scmp.eq.s32.totalorder %s72, 1
    %p478 = por %p476, %p477
    %p479 = scmp.ne.s32.totalorder %s470, %s471
    %p480 = scmp.eq.s32.totalorder %s72, 0
    %p481 = por %p479, %p480
    %p482 = scmp.ne.s32.totalorder %s470, %s471
    %p483 = scmp.eq.s32.totalorder %s73, 1
    %p484 = por %p482, %p483
    %p486 = scmp.ne.s32.totalorder %s471, %s485
    %p487 = scmp.eq.s32.totalorder %s73, 0
    %p488 = por %p486, %p487
    %s490 = sadd.s32 %s489, 1
    %p493 = scmp.eq.s32.totalorder %s67, 1
    %p494 = scmp.ne.s32.totalorder %s489, %s491
    %p495 = scmp.eq.s32.totalorder %s67, 0
    %p496 = por %p494, %p495
    %p497 = scmp.ne.s32.totalorder %s489, %s491
    %p498 = scmp.eq.s32.totalorder %s72, 1
    %p499 = por %p497, %p498
    %p500 = scmp.ne.s32.totalorder %s491, %s492
    %p501 = scmp.eq.s32.totalorder %s72, 0
    %p502 = por %p500, %p501
    %p503 = scmp.ne.s32.totalorder %s491, %s492
    %p504 = scmp.eq.s32.totalorder %s73, 1
    %p505 = por %p503, %p504
    %p507 = scmp.ne.s32.totalorder %s492, %s506
    %p508 = scmp.eq.s32.totalorder %s73, 0
    %p509 = por %p507, %p508
    %s511 = sadd.s32 %s510, 1
    %p514 = scmp.eq.s32.totalorder %s67, 1
    %p515 = scmp.ne.s32.totalorder %s510, %s512
    %p516 = scmp.eq.s32.totalorder %s67, 0
    %p517 = por %p515, %p516
    %p518 = scmp.ne.s32.totalorder %s510, %s512
    %p519 = scmp.eq.s32.totalorder %s72, 1
    %p520 = por %p518, %p519
    %p521 = scmp.ne.s32.totalorder %s512, %s513
    %p522 = scmp.eq.s32.totalorder %s72, 0
    %p523 = por %p521, %p522
    %p524 = scmp.ne.s32.totalorder %s512, %s513
    %p525 = scmp.eq.s32.totalorder %s73, 1
    %p526 = por %p524, %p525
    %p528 = scmp.ne.s32.totalorder %s513, %s527
    %p529 = scmp.eq.s32.totalorder %s73, 0
    %p530 = por %p528, %p529
    %s532 = sadd.s32 %s531, 1
    %p535 = scmp.eq.s32.totalorder %s67, 1
    %p536 = scmp.ne.s32.totalorder %s531, %s533
    %p537 = scmp.eq.s32.totalorder %s67, 0
    %p538 = por %p536, %p537
    %p539 = scmp.ne.s32.totalorder %s531, %s533
    %p540 = scmp.eq.s32.totalorder %s72, 1
    %p541 = por %p539, %p540
    %p542 = scmp.ne.s32.totalorder %s533, %s534
    %p543 = scmp.eq.s32.totalorder %s72, 0
    %p544 = por %p542, %p543
    %p545 = scmp.ne.s32.totalorder %s533, %s534
    %p546 = scmp.eq.s32.totalorder %s73, 1
    %p547 = por %p545, %p546
    %p549 = scmp.ne.s32.totalorder %s534, %s548
    %p550 = scmp.eq.s32.totalorder %s73, 0
    %p551 = por %p549, %p550
    %s553 = sadd.s32 %s552, 1
    %p556 = scmp.eq.s32.totalorder %s67, 1
    %p557 = scmp.ne.s32.totalorder %s552, %s554
    %p558 = scmp.eq.s32.totalorder %s67, 0
    %p559 = por %p557, %p558
    %p560 = scmp.ne.s32.totalorder %s552, %s554
    %p561 = scmp.eq.s32.totalorder %s72, 1
    %p562 = por %p560, %p561
    %p563 = scmp.ne.s32.totalorder %s554, %s555
    %p564 = scmp.eq.s32.totalorder %s72, 0
    %p565 = por %p563, %p564
    %p566 = scmp.ne.s32.totalorder %s554, %s555
    %p567 = scmp.eq.s32.totalorder %s73, 1
    %p568 = por %p566, %p567
    %p570 = scmp.ne.s32.totalorder %s555, %s569
    %p571 = scmp.eq.s32.totalorder %s73, 0
    %p572 = por %p570, %p571
    %s574 = sadd.s32 %s573, 1
    %p577 = scmp.eq.s32.totalorder %s67, 1
    %p578 = scmp.ne.s32.totalorder %s573, %s575
    %p579 = scmp.eq.s32.totalorder %s67, 0
    %p580 = por %p578, %p579
    %p581 = scmp.ne.s32.totalorder %s573, %s575
    %p582 = scmp.eq.s32.totalorder %s72, 1
    %p583 = por %p581, %p582
    %p584 = scmp.ne.s32.totalorder %s575, %s576
    %p585 = scmp.eq.s32.totalorder %s72, 0
    %p586 = por %p584, %p585
    %p587 = scmp.ne.s32.totalorder %s575, %s576
    %p588 = scmp.eq.s32.totalorder %s73, 1
    %p589 = por %p587, %p588
    %p591 = scmp.ne.s32.totalorder %s576, %s590
    %p592 = scmp.eq.s32.totalorder %s73, 0
    %p593 = por %p591, %p592
    %s595 = sadd.s32 %s594, 1
    %p598 = scmp.eq.s32.totalorder %s67, 1
    %p599 = scmp.ne.s32.totalorder %s594, %s596
    %p600 = scmp.eq.s32.totalorder %s67, 0
    %p601 = por %p599, %p600
    %p602 = scmp.ne.s32.totalorder %s594, %s596
    %p603 = scmp.eq.s32.totalorder %s72, 1
    %p604 = por %p602, %p603
    %p605 = scmp.ne.s32.totalorder %s596, %s597
    %p606 = scmp.eq.s32.totalorder %s72, 0
    %p607 = por %p605, %p606
    %p608 = scmp.ne.s32.totalorder %s596, %s597
    %p609 = scmp.eq.s32.totalorder %s73, 1
    %p610 = por %p608, %p609
    %p612 = scmp.ne.s32.totalorder %s597, %s611
    %p613 = scmp.eq.s32.totalorder %s73, 0
    %p614 = por %p612, %p613
    %s616 = sadd.s32 %s615, 1
    %p619 = scmp.eq.s32.totalorder %s67, 1
    %p620 = scmp.ne.s32.totalorder %s615, %s617
    %p621 = scmp.eq.s32.totalorder %s67, 0
    %p622 = por %p620, %p621
    %p623 = scmp.ne.s32.totalorder %s615, %s617
    %p624 = scmp.eq.s32.totalorder %s72, 1
    %p625 = por %p623, %p624
    %p626 = scmp.ne.s32.totalorder %s617, %s618
    %p627 = scmp.eq.s32.totalorder %s72, 0
    %p628 = por %p626, %p627
    %p629 = scmp.ne.s32.totalorder %s617, %s618
    %p630 = scmp.eq.s32.totalorder %s73, 1
    %p631 = por %p629, %p630
    %p633 = scmp.ne.s32.totalorder %s618, %s632
    %p634 = scmp.eq.s32.totalorder %s73, 0
    %p635 = por %p633, %p634
    %s637 = sadd.s32 %s636, 1
    %p640 = scmp.eq.s32.totalorder %s67, 1
    %p641 = scmp.ne.s32.totalorder %s636, %s638
    %p642 = scmp.eq.s32.totalorder %s67, 0
    %p643 = por %p641, %p642
    %p644 = scmp.ne.s32.totalorder %s636, %s638
    %p645 = scmp.eq.s32.totalorder %s72, 1
    %p646 = por %p644, %p645
    %p647 = scmp.ne.s32.totalorder %s638, %s639
    %p648 = scmp.eq.s32.totalorder %s72, 0
    %p649 = por %p647, %p648
    %p650 = scmp.ne.s32.totalorder %s638, %s639
    %p651 = scmp.eq.s32.totalorder %s73, 1
    %p652 = por %p650, %p651
    %p654 = scmp.ne.s32.totalorder %s639, %s653
    %p655 = scmp.eq.s32.totalorder %s73, 0
    %p656 = por %p654, %p655
    %s658 = sadd.s32 %s657, 1
    %p661 = scmp.eq.s32.totalorder %s67, 1
    %p662 = scmp.ne.s32.totalorder %s657, %s659
    %p663 = scmp.eq.s32.totalorder %s67, 0
    %p664 = por %p662, %p663
    %p665 = scmp.ne.s32.totalorder %s657, %s659
    %p666 = scmp.eq.s32.totalorder %s72, 1
    %p667 = por %p665, %p666
    %p668 = scmp.ne.s32.totalorder %s659, %s660
    %p669 = scmp.eq.s32.totalorder %s72, 0
    %p670 = por %p668, %p669
    %p671 = scmp.ne.s32.totalorder %s659, %s660
    %p672 = scmp.eq.s32.totalorder %s73, 1
    %p673 = por %p671, %p672
    %p675 = scmp.ne.s32.totalorder %s660, %s674
    %p676 = scmp.eq.s32.totalorder %s73, 0
    %p677 = por %p675, %p676
    %s679 = sadd.s32 %s678, 1
    %p682 = scmp.eq.s32.totalorder %s67, 1
    %p683 = scmp.ne.s32.totalorder %s678, %s680
    %p684 = scmp.eq.s32.totalorder %s67, 0
    %p685 = por %p683, %p684
    %p686 = scmp.ne.s32.totalorder %s678, %s680
    %p687 = scmp.eq.s32.totalorder %s72, 1
    %p688 = por %p686, %p687
    %p689 = scmp.ne.s32.totalorder %s680, %s681
    %p690 = scmp.eq.s32.totalorder %s72, 0
    %p691 = por %p689, %p690
    %p692 = scmp.ne.s32.totalorder %s680, %s681
    %p693 = scmp.eq.s32.totalorder %s73, 1
    %p694 = por %p692, %p693
    %p696 = scmp.ne.s32.totalorder %s681, %s695
    %p697 = scmp.eq.s32.totalorder %s73, 0
    %p698 = por %p696, %p697
    %s700 = sadd.s32 %s699, 1
    %p703 = scmp.eq.s32.totalorder %s67, 1
    %p704 = scmp.ne.s32.totalorder %s699, %s701
    %p705 = scmp.eq.s32.totalorder %s67, 0
    %p706 = por %p704, %p705
    %p707 = scmp.ne.s32.totalorder %s699, %s701
    %p708 = scmp.eq.s32.totalorder %s72, 1
    %p709 = por %p707, %p708
    %p710 = scmp.ne.s32.totalorder %s701, %s702
    %p711 = scmp.eq.s32.totalorder %s72, 0
    %p712 = por %p710, %p711
    %p713 = scmp.ne.s32.totalorder %s701, %s702
    %p714 = scmp.eq.s32.totalorder %s73, 1
    %p715 = por %p713, %p714
    %p717 = scmp.ne.s32.totalorder %s702, %s716
    %p718 = scmp.eq.s32.totalorder %s73, 0
    %p719 = por %p717, %p718
    %s720 = ssub.s32 %s67, %s74
    %p721 = scmp.eq.s32.totalorder %s720, 0
    %s723 = sadd.s32 %s722, 1
    %s724 = scalar_select %p721, %s722, %s723
    %p727 = pneg %p721
    %p728 = scmp.eq.s32.totalorder %s67, 1
    %p729 = por %p727, %p728
    %p730 = scmp.ne.s32.totalorder %s722, %s725
    %p731 = scmp.eq.s32.totalorder %s67, 0
    %p732 = por %p730, %p731
    %p733 = scmp.ne.s32.totalorder %s722, %s725
    %p734 = scmp.eq.s32.totalorder %s72, 1
    %p735 = por %p733, %p734
    %p736 = scmp.ne.s32.totalorder %s725, %s726
    %p737 = scmp.eq.s32.totalorder %s72, 0
    %p738 = por %p736, %p737
    %p739 = scmp.ne.s32.totalorder %s725, %s726
    %p740 = scmp.eq.s32.totalorder %s73, 1
    %p741 = por %p739, %p740
    %p743 = scmp.ne.s32.totalorder %s726, %s742
    %p744 = scmp.eq.s32.totalorder %s73, 0
    %p745 = por %p743, %p744
    %p746 = scmp.le.s32.totalorder 1, %s67
    %p747 = scmp.lt.s32.totalorder %s67, 3
    %p748 = pnand %p746, %p747
    %p749 = pneg %p748
    // Predicated region
    $region9: #{forward.1} parent=5 // pred_check
      _
    $region10: #{forward.1} parent=5 // pred_check_branch
      %751 = sbr.rel (%p748) target = $region12
    $region11: #{forward.1} parent=5 // pred_region
      %s752 = ssub.s32 %s67, 1
      // Predicated region
      $region13: #{forward.1} parent=11 // pred_check
        %p753 = pneg %p166
      $region14: #{forward.1} parent=11 // pred_check_branch
        %755 = sbr.rel (%p753) target = $region16
      $region15: #{forward.1} parent=11 // pred_region
        _
      $region16: #{forward.1} parent=11 // pred_fallthru
        _
      // Predicated region
      $region17: #{forward.1} parent=11 // pred_check
        %p756 = pneg %p187
      $region18: #{forward.1} parent=11 // pred_check_branch
        %758 = sbr.rel (%p756) target = $region20
      $region19: #{forward.1} parent=11 // pred_region
        _
      $region20: #{forward.1} parent=11 // pred_fallthru
        _
      // Predicated region
      $region21: #{forward.1} parent=11 // pred_check
        %p759 = pneg %p208
      $region22: #{forward.1} parent=11 // pred_check_branch
        %761 = sbr.rel (%p759) target = $region24
      $region23: #{forward.1} parent=11 // pred_region
        _
      $region24: #{forward.1} parent=11 // pred_fallthru
        _
      // Predicated region
      $region25: #{forward.1} parent=11 // pred_check
        %p762 = pneg %p229
      $region26: #{forward.1} parent=11 // pred_check_branch
        %764 = sbr.rel (%p762) target = $region28
      $region27: #{forward.1} parent=11 // pred_region
        _
      $region28: #{forward.1} parent=11 // pred_fallthru
        _
      // Predicated region
      $region29: #{forward.1} parent=11 // pred_check
        %p765 = pneg %p250
      $region30: #{forward.1} parent=11 // pred_check_branch
        %767 = sbr.rel (%p765) target = $region32
      $region31: #{forward.1} parent=11 // pred_region
        _
      $region32: #{forward.1} parent=11 // pred_fallthru
        _
      // Predicated region
      $region33: #{forward.1} parent=11 // pred_check
        %p768 = pneg %p271
      $region34: #{forward.1} parent=11 // pred_check_branch
        %770 = sbr.rel (%p768) target = $region36
      $region35: #{forward.1} parent=11 // pred_region
        _
      $region36: #{forward.1} parent=11 // pred_fallthru
        _
      // Predicated region
      $region37: #{forward.1} parent=11 // pred_check
        %p771 = pneg %p292
      $region38: #{forward.1} parent=11 // pred_check_branch
        %773 = sbr.rel (%p771) target = $region40
      $region39: #{forward.1} parent=11 // pred_region
        _
      $region40: #{forward.1} parent=11 // pred_fallthru
        _
      // Predicated region
      $region41: #{forward.1} parent=11 // pred_check
        %p774 = pneg %p313
      $region42: #{forward.1} parent=11 // pred_check_branch
        %776 = sbr.rel (%p774) target = $region44
      $region43: #{forward.1} parent=11 // pred_region
        _
      $region44: #{forward.1} parent=11 // pred_fallthru
        _
      // Predicated region
      $region45: #{forward.1} parent=11 // pred_check
        %p777 = pneg %p334
      $region46: #{forward.1} parent=11 // pred_check_branch
        %779 = sbr.rel (%p777) target = $region48
      $region47: #{forward.1} parent=11 // pred_region
        _
      $region48: #{forward.1} parent=11 // pred_fallthru
        _
      // Predicated region
      $region49: #{forward.1} parent=11 // pred_check
        %p780 = pneg %p355
      $region50: #{forward.1} parent=11 // pred_check_branch
        %782 = sbr.rel (%p780) target = $region52
      $region51: #{forward.1} parent=11 // pred_region
        _
      $region52: #{forward.1} parent=11 // pred_fallthru
        _
      // Predicated region
      $region53: #{forward.1} parent=11 // pred_check
        %p783 = pneg %p376
      $region54: #{forward.1} parent=11 // pred_check_branch
        %785 = sbr.rel (%p783) target = $region56
      $region55: #{forward.1} parent=11 // pred_region
        _
      $region56: #{forward.1} parent=11 // pred_fallthru
        _
      // Predicated region
      $region57: #{forward.1} parent=11 // pred_check
        %p786 = pneg %p397
      $region58: #{forward.1} parent=11 // pred_check_branch
        %788 = sbr.rel (%p786) target = $region60
      $region59: #{forward.1} parent=11 // pred_region
        _
      $region60: #{forward.1} parent=11 // pred_fallthru
        _
      // Predicated region
      $region61: #{forward.1} parent=11 // pred_check
        %p789 = pneg %p418
      $region62: #{forward.1} parent=11 // pred_check_branch
        %791 = sbr.rel (%p789) target = $region64
      $region63: #{forward.1} parent=11 // pred_region
        _
      $region64: #{forward.1} parent=11 // pred_fallthru
        _
      // Predicated region
      $region65: #{forward.1} parent=11 // pred_check
        %p792 = pneg %p439
      $region66: #{forward.1} parent=11 // pred_check_branch
        %794 = sbr.rel (%p792) target = $region68
      $region67: #{forward.1} parent=11 // pred_region
        _
      $region68: #{forward.1} parent=11 // pred_fallthru
        _
      // Predicated region
      $region69: #{forward.1} parent=11 // pred_check
        %p795 = pneg %p460
      $region70: #{forward.1} parent=11 // pred_check_branch
        %797 = sbr.rel (%p795) target = $region72
      $region71: #{forward.1} parent=11 // pred_region
        _
      $region72: #{forward.1} parent=11 // pred_fallthru
        _
      // Predicated region
      $region73: #{forward.1} parent=11 // pred_check
        %p798 = pneg %p481
      $region74: #{forward.1} parent=11 // pred_check_branch
        %800 = sbr.rel (%p798) target = $region76
      $region75: #{forward.1} parent=11 // pred_region
        _
      $region76: #{forward.1} parent=11 // pred_fallthru
        _
      // Predicated region
      $region77: #{forward.1} parent=11 // pred_check
        %p801 = pneg %p502
      $region78: #{forward.1} parent=11 // pred_check_branch
        %803 = sbr.rel (%p801) target = $region80
      $region79: #{forward.1} parent=11 // pred_region
        _
      $region80: #{forward.1} parent=11 // pred_fallthru
        _
      // Predicated region
      $region81: #{forward.1} parent=11 // pred_check
        %p804 = pneg %p523
      $region82: #{forward.1} parent=11 // pred_check_branch
        %806 = sbr.rel (%p804) target = $region84
      $region83: #{forward.1} parent=11 // pred_region
        _
      $region84: #{forward.1} parent=11 // pred_fallthru
        _
      // Predicated region
      $region85: #{forward.1} parent=11 // pred_check
        %p807 = pneg %p544
      $region86: #{forward.1} parent=11 // pred_check_branch
        %809 = sbr.rel (%p807) target = $region88
      $region87: #{forward.1} parent=11 // pred_region
        _
      $region88: #{forward.1} parent=11 // pred_fallthru
        _
      // Predicated region
      $region89: #{forward.1} parent=11 // pred_check
        %p810 = pneg %p565
      $region90: #{forward.1} parent=11 // pred_check_branch
        %812 = sbr.rel (%p810) target = $region92
      $region91: #{forward.1} parent=11 // pred_region
        _
      $region92: #{forward.1} parent=11 // pred_fallthru
        _
      // Predicated region
      $region93: #{forward.1} parent=11 // pred_check
        %p813 = pneg %p586
      $region94: #{forward.1} parent=11 // pred_check_branch
        %815 = sbr.rel (%p813) target = $region96
      $region95: #{forward.1} parent=11 // pred_region
        _
      $region96: #{forward.1} parent=11 // pred_fallthru
        _
      // Predicated region
      $region97: #{forward.1} parent=11 // pred_check
        %p816 = pneg %p607
      $region98: #{forward.1} parent=11 // pred_check_branch
        %818 = sbr.rel (%p816) target = $region100
      $region99: #{forward.1} parent=11 // pred_region
        _
      $region100: #{forward.1} parent=11 // pred_fallthru
        _
      // Predicated region
      $region101: #{forward.1} parent=11 // pred_check
        %p819 = pneg %p628
      $region102: #{forward.1} parent=11 // pred_check_branch
        %821 = sbr.rel (%p819) target = $region104
      $region103: #{forward.1} parent=11 // pred_region
        _
      $region104: #{forward.1} parent=11 // pred_fallthru
        _
      // Predicated region
      $region105: #{forward.1} parent=11 // pred_check
        %p822 = pneg %p649
      $region106: #{forward.1} parent=11 // pred_check_branch
        %824 = sbr.rel (%p822) target = $region108
      $region107: #{forward.1} parent=11 // pred_region
        _
      $region108: #{forward.1} parent=11 // pred_fallthru
        _
      // Predicated region
      $region109: #{forward.1} parent=11 // pred_check
        %p825 = pneg %p670
      $region110: #{forward.1} parent=11 // pred_check_branch
        %827 = sbr.rel (%p825) target = $region112
      $region111: #{forward.1} parent=11 // pred_region
        _
      $region112: #{forward.1} parent=11 // pred_fallthru
        _
      // Predicated region
      $region113: #{forward.1} parent=11 // pred_check
        %p828 = pneg %p691
      $region114: #{forward.1} parent=11 // pred_check_branch
        %830 = sbr.rel (%p828) target = $region116
      $region115: #{forward.1} parent=11 // pred_region
        _
      $region116: #{forward.1} parent=11 // pred_fallthru
        _
      // Predicated region
      $region117: #{forward.1} parent=11 // pred_check
        %p831 = pneg %p712
      $region118: #{forward.1} parent=11 // pred_check_branch
        %833 = sbr.rel (%p831) target = $region120
      $region119: #{forward.1} parent=11 // pred_region
        _
      $region120: #{forward.1} parent=11 // pred_fallthru
        _
    $region12: #{forward.1} parent=5 // pred_fallthru
      _
    %p834 = scmp.lt.s32.totalorder %s67, 2
    // Predicated region
    $region121: #{forward.1} parent=5 // pred_check
      %p835 = pneg %p834
    $region122: #{forward.1} parent=5 // pred_check_branch
      %837 = sbr.rel (%p835) target = $region124
    $region123: #{forward.1} parent=5 // pred_region
      // Predicated region
      $region125: #{forward.1} parent=123 // pred_check
        %p838 = pneg %p87
      $region126: #{forward.1} parent=123 // pred_check_branch
        %840 = sbr.rel (%p838) target = $region128
      $region127: #{forward.1} parent=123 // pred_region
        %s841 = smul.u32 16, %s67
        %p842 = scmp.lt.s32.totalorder %s841, 31
        %s843 = scalar_select %p842, %s841, 31
        %s844 = smul.addr %s843, 8
        %s845 = scalar_lea.vmem %s1, %s844
        %s846 = smul.u32 16, %s67
      $region128: #{forward.1} parent=123 // pred_fallthru
        _
      // Predicated region
      $region129: #{forward.1} parent=123 // pred_check
        %p847 = pneg %p113
      $region130: #{forward.1} parent=123 // pred_check_branch
        %849 = sbr.rel (%p847) target = $region132
      $region131: #{forward.1} parent=123 // pred_region
        %s850 = smul.u32 2, %s67
        %p851 = scmp.lt.s32.totalorder %s850, 3
        %s852 = scalar_select %p851, %s850, 3
        %s853 = smul.addr %s852, 8
        %s854 = scalar_lea.vmem %s3, %s853
        %s855 = smul.u32 2, %s67
      $region132: #{forward.1} parent=123 // pred_fallthru
        _
      // Predicated region
      $region133: #{forward.1} parent=123 // pred_check
        %p856 = pneg %p139
      $region134: #{forward.1} parent=123 // pred_check_branch
        %858 = sbr.rel (%p856) target = $region136
      $region135: #{forward.1} parent=123 // pred_region
        %s859 = smul.u32 2, %s67
        %p860 = scmp.lt.s32.totalorder %s859, 3
        %s861 = scalar_select %p860, %s859, 3
        %s862 = smul.addr %s861, 8
        %s863 = scalar_lea.vmem %s5, %s862
        %s864 = smul.u32 2, %s67
      $region136: #{forward.1} parent=123 // pred_fallthru
        _
    $region124: #{forward.1} parent=5 // pred_fallthru
      _
    %p865 = scmp.le.s32.totalorder 1, %s67
    %p866 = scmp.lt.s32.totalorder %s67, 3
    %p867 = pnand %p865, %p866
    %p868 = pneg %p867
    // Predicated region
    $region137: #{forward.1} parent=5 // pred_check
      _
    $region138: #{forward.1} parent=5 // pred_check_branch
      %870 = sbr.rel (%p867) target = $region140
    $region139: #{forward.1} parent=5 // pred_region
      %s871 = ssub.s32 %s67, 1
      %s872 = smul.u32 16, %s72
      %p873 = scmp.lt.s32.totalorder %s872, 31
      %s874 = scalar_select %p873, %s872, 31
      %s875 = smul.addr %s874, 8
      %s876 = scalar_lea.vmem %s1, %s875
      %p877 = pneg %p93
      %p878 = pneg %p90
      %s879 = smul.u32 2, %s72
      %p880 = scmp.lt.s32.totalorder %s879, 3
      %s881 = scalar_select %p880, %s879, 3
      %s882 = smul.addr %s881, 8
      %s883 = scalar_lea.vmem %s3, %s882
      %p884 = pneg %p119
      %p885 = pneg %p116
      %s886 = smul.u32 2, %s72
      %p887 = scmp.lt.s32.totalorder %s886, 3
      %s888 = scalar_select %p887, %s886, 3
      %s889 = smul.addr %s888, 8
      %s890 = scalar_lea.vmem %s5, %s889
      %p891 = pneg %p145
      %p892 = pneg %p142
      %p893 = pneg %p166
      %p894 = pneg %p163
      %p895 = pneg %p187
      %p896 = pneg %p184
      %p897 = pneg %p208
      %p898 = pneg %p205
      %p899 = pneg %p229
      %p900 = pneg %p226
      %p901 = pneg %p250
      %p902 = pneg %p247
      %p903 = pneg %p271
      %p904 = pneg %p268
      %p905 = pneg %p292
      %p906 = pneg %p289
      %p907 = pneg %p313
      %p908 = pneg %p310
      %p909 = pneg %p334
      %p910 = pneg %p331
      %p911 = pneg %p355
      %p912 = pneg %p352
      %p913 = pneg %p376
      %p914 = pneg %p373
      %p915 = pneg %p397
      %p916 = pneg %p394
      %p917 = pneg %p418
      %p918 = pneg %p415
      %p919 = pneg %p439
      %p920 = pneg %p436
      %p921 = pneg %p460
      %p922 = pneg %p457
      %p923 = pneg %p481
      %p924 = pneg %p478
      %p925 = pneg %p502
      %p926 = pneg %p499
      %p927 = pneg %p523
      %p928 = pneg %p520
      %p929 = pneg %p544
      %p930 = pneg %p541
      %p931 = pneg %p565
      %p932 = pneg %p562
      %p933 = pneg %p586
      %p934 = pneg %p583
      %p935 = pneg %p607
      %p936 = pneg %p604
      %p937 = pneg %p628
      %p938 = pneg %p625
      %p939 = pneg %p649
      %p940 = pneg %p646
      %p941 = pneg %p670
      %p942 = pneg %p667
      %p943 = pneg %p691
      %p944 = pneg %p688
      %p945 = pneg %p712
      %p946 = pneg %p709
      %p947 = pneg %p738
      %p948 = pneg %p735
      %s949 = smul.u32 2, %s72
      %p950 = scmp.lt.s32.totalorder %s949, 3
      %s951 = scalar_select %p950, %s949, 3
      %s952 = smul.addr %s951, 8
      %s953 = scalar_lea.vmem %s61, %s952
      %s954 = smul.u32 16, %s72
      %p955 = scmp.lt.s32.totalorder %s954, 31
      %s956 = scalar_select %p955, %s954, 31
      %s957 = smul.addr %s956, 8
      %s958 = scalar_lea.vmem %s1, %s957
      %s959 = smul.u32 16, %s72
      %s960 = smul.u32 2, %s72
      %p961 = scmp.lt.s32.totalorder %s960, 3
      %s962 = scalar_select %p961, %s960, 3
      %s963 = smul.addr %s962, 8
      %s964 = scalar_lea.vmem %s3, %s963
      %s965 = smul.u32 2, %s72
      %s966 = smul.u32 2, %s72
      %p967 = scmp.lt.s32.totalorder %s966, 3
      %s968 = scalar_select %p967, %s966, 3
      %s969 = smul.addr %s968, 8
      %s970 = scalar_lea.vmem %s5, %s969
      %s971 = smul.u32 2, %s72
      %s972 = smul.u32 2, %s72
      %p973 = scmp.lt.s32.totalorder %s972, 3
      %s974 = scalar_select %p973, %s972, 3
      %s975 = smul.addr %s974, 8
      %s976 = scalar_lea.vmem %s61, %s975
      %s977 = smul.u32 2, %s72
      %v979 = vld [vmem:[%s958] sm:$0xff]
      %v980 = vld [vmem:[%s958 + $0x8] sm:$0xff]
      %v981 = vld [vmem:[%s958 + $0x10] sm:$0xff]
      %v982 = vld [vmem:[%s958 + $0x18] sm:$0xff]
      %v983 = vld [vmem:[%s958 + $0x20] sm:$0xff]
      %v984 = vld [vmem:[%s958 + $0x28] sm:$0xff]
      %v985 = vld [vmem:[%s958 + $0x30] sm:$0xff]
      %v986 = vld [vmem:[%s958 + $0x38] sm:$0xff]
      %v987 = vld [vmem:[%s958 + $0x40] sm:$0xff]
      %v988 = vld [vmem:[%s958 + $0x48] sm:$0xff]
      %v989 = vld [vmem:[%s958 + $0x50] sm:$0xff]
      %v990 = vld [vmem:[%s958 + $0x58] sm:$0xff]
      %v991 = vld [vmem:[%s958 + $0x60] sm:$0xff]
      %v992 = vld [vmem:[%s958 + $0x68] sm:$0xff]
      %v993 = vld [vmem:[%s958 + $0x70] sm:$0xff]
      %v994 = vld [vmem:[%s958 + $0x78] sm:$0xff]
      %v995 = vld [vmem:[%s7] sm:$0x1]
      %v996 = vld [vmem:[%s9] sm:$0x1]
      %vm997 = vcmask 523264
      %v998 = vsel %vm997, %v979, 0.0
      %999 = vadd.xlane.f32.xlu0 %v998
      %v1000 = vpop.xlane.xlu0 %999
      %v1001 = vsel %vm997, %v980, 0.0
      %1002 = vadd.xlane.f32.xlu0 %v1001
      %v1003 = vpop.xlane.xlu0 %1002
      %v1004 = vsel %vm997, %v981, 0.0
      %1005 = vadd.xlane.f32.xlu0 %v1004
      %v1006 = vpop.xlane.xlu0 %1005
      %v1007 = vsel %vm997, %v982, 0.0
      %1008 = vadd.xlane.f32.xlu0 %v1007
      %v1009 = vpop.xlane.xlu0 %1008
      %v1010 = vsel %vm997, %v983, 0.0
      %1011 = vadd.xlane.f32.xlu0 %v1010
      %v1012 = vpop.xlane.xlu0 %1011
      %v1013 = vsel %vm997, %v984, 0.0
      %1014 = vadd.xlane.f32.xlu0 %v1013
      %v1015 = vpop.xlane.xlu0 %1014
      %v1016 = vsel %vm997, %v985, 0.0
      %1017 = vadd.xlane.f32.xlu0 %v1016
      %v1018 = vpop.xlane.xlu0 %1017
      %v1019 = vsel %vm997, %v986, 0.0
      %1020 = vadd.xlane.f32.xlu0 %v1019
      %v1021 = vpop.xlane.xlu0 %1020
      %v1022 = vsel %vm997, %v987, 0.0
      %1023 = vadd.xlane.f32.xlu0 %v1022
      %v1024 = vpop.xlane.xlu0 %1023
      %v1025 = vsel %vm997, %v988, 0.0
      %1026 = vadd.xlane.f32.xlu0 %v1025
      %v1027 = vpop.xlane.xlu0 %1026
      %v1028 = vsel %vm997, %v989, 0.0
      %1029 = vadd.xlane.f32.xlu0 %v1028
      %v1030 = vpop.xlane.xlu0 %1029
      %v1031 = vsel %vm997, %v990, 0.0
      %1032 = vadd.xlane.f32.xlu0 %v1031
      %v1033 = vpop.xlane.xlu0 %1032
      %v1034 = vsel %vm997, %v991, 0.0
      %1035 = vadd.xlane.f32.xlu0 %v1034
      %v1036 = vpop.xlane.xlu0 %1035
      %v1037 = vsel %vm997, %v992, 0.0
      %1038 = vadd.xlane.f32.xlu0 %v1037
      %v1039 = vpop.xlane.xlu0 %1038
      %v1040 = vsel %vm997, %v993, 0.0
      %1041 = vadd.xlane.f32.xlu0 %v1040
      %v1042 = vpop.xlane.xlu0 %1041
      %v1043 = vsel %vm997, %v994, 0.0
      %1044 = vadd.xlane.f32.xlu0 %v1043
      %v1045 = vpop.xlane.xlu0 %1044
      %v1046 = vrcp.pop 64.0
      %v1047 = vmul.f32 %v1000, %v1046
      %v1048 = vmul.f32 %v1003, %v1046
      %v1049 = vmul.f32 %v1006, %v1046
      %v1050 = vmul.f32 %v1009, %v1046
      %v1051 = vmul.f32 %v1012, %v1046
      %v1052 = vmul.f32 %v1015, %v1046
      %v1053 = vmul.f32 %v1018, %v1046
      %v1054 = vmul.f32 %v1021, %v1046
      %v1055 = vmul.f32 %v1024, %v1046
      %v1056 = vmul.f32 %v1027, %v1046
      %v1057 = vmul.f32 %v1030, %v1046
      %v1058 = vmul.f32 %v1033, %v1046
      %v1059 = vmul.f32 %v1036, %v1046
      %v1060 = vmul.f32 %v1039, %v1046
      %v1061 = vmul.f32 %v1042, %v1046
      %v1062 = vmul.f32 %v1045, %v1046
      %v1063 = vsub.f32 %v979, %v1047
      %v1064 = vsub.f32 %v980, %v1048
      %v1065 = vsub.f32 %v981, %v1049
      %v1066 = vsub.f32 %v982, %v1050
      %v1067 = vsub.f32 %v983, %v1051
      %v1068 = vsub.f32 %v984, %v1052
      %v1069 = vsub.f32 %v985, %v1053
      %v1070 = vsub.f32 %v986, %v1054
      %v1071 = vsub.f32 %v987, %v1055
      %v1072 = vsub.f32 %v988, %v1056
      %v1073 = vsub.f32 %v989, %v1057
      %v1074 = vsub.f32 %v990, %v1058
      %v1075 = vsub.f32 %v991, %v1059
      %v1076 = vsub.f32 %v992, %v1060
      %v1077 = vsub.f32 %v993, %v1061
      %v1078 = vsub.f32 %v994, %v1062
      %v1079 = vmul.f32 %v1063, %v1063
      %v1080 = vmul.f32 %v1064, %v1064
      %v1081 = vmul.f32 %v1065, %v1065
      %v1082 = vmul.f32 %v1066, %v1066
      %v1083 = vmul.f32 %v1067, %v1067
      %v1084 = vmul.f32 %v1068, %v1068
      %v1085 = vmul.f32 %v1069, %v1069
      %v1086 = vmul.f32 %v1070, %v1070
      %v1087 = vmul.f32 %v1071, %v1071
      %v1088 = vmul.f32 %v1072, %v1072
      %v1089 = vmul.f32 %v1073, %v1073
      %v1090 = vmul.f32 %v1074, %v1074
      %v1091 = vmul.f32 %v1075, %v1075
      %v1092 = vmul.f32 %v1076, %v1076
      %v1093 = vmul.f32 %v1077, %v1077
      %v1094 = vmul.f32 %v1078, %v1078
      %v1095 = vsel %vm997, %v1079, 0.0
      %1096 = vadd.xlane.f32.xlu0 %v1095
      %v1097 = vpop.xlane.xlu0 %1096
      %v1098 = vsel %vm997, %v1080, 0.0
      %1099 = vadd.xlane.f32.xlu0 %v1098
      %v1100 = vpop.xlane.xlu0 %1099
      %v1101 = vsel %vm997, %v1081, 0.0
      %1102 = vadd.xlane.f32.xlu0 %v1101
      %v1103 = vpop.xlane.xlu0 %1102
      %v1104 = vsel %vm997, %v1082, 0.0
      %1105 = vadd.xlane.f32.xlu0 %v1104
      %v1106 = vpop.xlane.xlu0 %1105
      %v1107 = vsel %vm997, %v1083, 0.0
      %1108 = vadd.xlane.f32.xlu0 %v1107
      %v1109 = vpop.xlane.xlu0 %1108
      %v1110 = vsel %vm997, %v1084, 0.0
      %1111 = vadd.xlane.f32.xlu0 %v1110
      %v1112 = vpop.xlane.xlu0 %1111
      %v1113 = vsel %vm997, %v1085, 0.0
      %1114 = vadd.xlane.f32.xlu0 %v1113
      %v1115 = vpop.xlane.xlu0 %1114
      %v1116 = vsel %vm997, %v1086, 0.0
      %1117 = vadd.xlane.f32.xlu0 %v1116
      %v1118 = vpop.xlane.xlu0 %1117
      %v1119 = vsel %vm997, %v1087, 0.0
      %1120 = vadd.xlane.f32.xlu0 %v1119
      %v1121 = vpop.xlane.xlu0 %1120
      %v1122 = vsel %vm997, %v1088, 0.0
      %1123 = vadd.xlane.f32.xlu0 %v1122
      %v1124 = vpop.xlane.xlu0 %1123
      %v1125 = vsel %vm997, %v1089, 0.0
      %1126 = vadd.xlane.f32.xlu0 %v1125
      %v1127 = vpop.xlane.xlu0 %1126
      %v1128 = vsel %vm997, %v1090, 0.0
      %1129 = vadd.xlane.f32.xlu0 %v1128
      %v1130 = vpop.xlane.xlu0 %1129
      %v1131 = vsel %vm997, %v1091, 0.0
      %1132 = vadd.xlane.f32.xlu0 %v1131
      %v1133 = vpop.xlane.xlu0 %1132
      %v1134 = vsel %vm997, %v1092, 0.0
      %1135 = vadd.xlane.f32.xlu0 %v1134
      %v1136 = vpop.xlane.xlu0 %1135
      %v1137 = vsel %vm997, %v1093, 0.0
      %1138 = vadd.xlane.f32.xlu0 %v1137
      %v1139 = vpop.xlane.xlu0 %1138
      %v1140 = vsel %vm997, %v1094, 0.0
      %1141 = vadd.xlane.f32.xlu0 %v1140
      %v1142 = vpop.xlane.xlu0 %1141
      %v1143 = vmul.f32 %v1097, %v1046
      %v1144 = vmul.f32 %v1100, %v1046
      %v1145 = vmul.f32 %v1103, %v1046
      %v1146 = vmul.f32 %v1106, %v1046
      %v1147 = vmul.f32 %v1109, %v1046
      %v1148 = vmul.f32 %v1112, %v1046
      %v1149 = vmul.f32 %v1115, %v1046
      %v1150 = vmul.f32 %v1118, %v1046
      %v1151 = vmul.f32 %v1121, %v1046
      %v1152 = vmul.f32 %v1124, %v1046
      %v1153 = vmul.f32 %v1127, %v1046
      %v1154 = vmul.f32 %v1130, %v1046
      %v1155 = vmul.f32 %v1133, %v1046
      %v1156 = vmul.f32 %v1136, %v1046
      %v1157 = vmul.f32 %v1139, %v1046
      %v1158 = vmul.f32 %v1142, %v1046
      %v1159 = vadd.f32 %v1143, 1e-05
      %v1160 = vadd.f32 %v1144, 1e-05
      %v1161 = vadd.f32 %v1145, 1e-05
      %v1162 = vadd.f32 %v1146, 1e-05
      %v1163 = vadd.f32 %v1147, 1e-05
      %v1164 = vadd.f32 %v1148, 1e-05
      %v1165 = vadd.f32 %v1149, 1e-05
      %v1166 = vadd.f32 %v1150, 1e-05
      %v1167 = vadd.f32 %v1151, 1e-05
      %v1168 = vadd.f32 %v1152, 1e-05
      %v1169 = vadd.f32 %v1153, 1e-05
      %v1170 = vadd.f32 %v1154, 1e-05
      %v1171 = vadd.f32 %v1155, 1e-05
      %v1172 = vadd.f32 %v1156, 1e-05
      %v1173 = vadd.f32 %v1157, 1e-05
      %v1174 = vadd.f32 %v1158, 1e-05
      %v1175 = vrsqrt.pop %v1159
      %v1176 = vrsqrt.pop %v1160
      %v1177 = vrsqrt.pop %v1161
      %v1178 = vrsqrt.pop %v1162
      %v1179 = vrsqrt.pop %v1163
      %v1180 = vrsqrt.pop %v1164
      %v1181 = vrsqrt.pop %v1165
      %v1182 = vrsqrt.pop %v1166
      %v1183 = vrsqrt.pop %v1167
      %v1184 = vrsqrt.pop %v1168
      %v1185 = vrsqrt.pop %v1169
      %v1186 = vrsqrt.pop %v1170
      %v1187 = vrsqrt.pop %v1171
      %v1188 = vrsqrt.pop %v1172
      %v1189 = vrsqrt.pop %v1173
      %v1190 = vrsqrt.pop %v1174
      %v1191 = vmul.f32 %v1063, %v1175
      %v1192 = vmul.f32 %v1064, %v1176
      %v1193 = vmul.f32 %v1065, %v1177
      %v1194 = vmul.f32 %v1066, %v1178
      %v1195 = vmul.f32 %v1067, %v1179
      %v1196 = vmul.f32 %v1068, %v1180
      %v1197 = vmul.f32 %v1069, %v1181
      %v1198 = vmul.f32 %v1070, %v1182
      %v1199 = vmul.f32 %v1071, %v1183
      %v1200 = vmul.f32 %v1072, %v1184
      %v1201 = vmul.f32 %v1073, %v1185
      %v1202 = vmul.f32 %v1074, %v1186
      %v1203 = vmul.f32 %v1075, %v1187
      %v1204 = vmul.f32 %v1076, %v1188
      %v1205 = vmul.f32 %v1077, %v1189
      %v1206 = vmul.f32 %v1078, %v1190
      %v1208 = vlaneseq
      %v1209 = vshrl.u32 %v1208, 7
      %v1210 = vsub.s32 0, %v1209
      %v1211 = vrot.slane %v995, %v1210
      %v1213 = vmul.f32 %v1191, %v1211
      %v1214 = vmul.f32 %v1192, %v1211
      %v1215 = vmul.f32 %v1193, %v1211
      %v1216 = vmul.f32 %v1194, %v1211
      %v1217 = vmul.f32 %v1195, %v1211
      %v1218 = vmul.f32 %v1196, %v1211
      %v1219 = vmul.f32 %v1197, %v1211
      %v1220 = vmul.f32 %v1198, %v1211
      %v1221 = vmul.f32 %v1199, %v1211
      %v1222 = vmul.f32 %v1200, %v1211
      %v1223 = vmul.f32 %v1201, %v1211
      %v1224 = vmul.f32 %v1202, %v1211
      %v1225 = vmul.f32 %v1203, %v1211
      %v1226 = vmul.f32 %v1204, %v1211
      %v1227 = vmul.f32 %v1205, %v1211
      %v1228 = vmul.f32 %v1206, %v1211
      %v1230 = vlaneseq
      %v1231 = vshrl.u32 %v1230, 7
      %v1232 = vsub.s32 0, %v1231
      %v1233 = vrot.slane %v996, %v1232
      %v1235 = vadd.f32 %v1213, %v1233
      %v1236 = vadd.f32 %v1214, %v1233
      %v1237 = vadd.f32 %v1215, %v1233
      %v1238 = vadd.f32 %v1216, %v1233
      %v1239 = vadd.f32 %v1217, %v1233
      %v1240 = vadd.f32 %v1218, %v1233
      %v1241 = vadd.f32 %v1219, %v1233
      %v1242 = vadd.f32 %v1220, %v1233
      %v1243 = vadd.f32 %v1221, %v1233
      %v1244 = vadd.f32 %v1222, %v1233
      %v1245 = vadd.f32 %v1223, %v1233
      %v1246 = vadd.f32 %v1224, %v1233
      %v1247 = vadd.f32 %v1225, %v1233
      %v1248 = vadd.f32 %v1226, %v1233
      %v1249 = vadd.f32 %v1227, %v1233
      %v1250 = vadd.f32 %v1228, %v1233
      %v1251 = vpack.c.bf16 %v1236, %v1235
      %v1252 = vpack.c.bf16 %v1238, %v1237
      %v1253 = vpack.c.bf16 %v1240, %v1239
      %v1254 = vpack.c.bf16 %v1242, %v1241
      %v1255 = vpack.c.bf16 %v1244, %v1243
      %v1256 = vpack.c.bf16 %v1246, %v1245
      %v1257 = vpack.c.bf16 %v1248, %v1247
      %v1258 = vpack.c.bf16 %v1250, %v1249
      %v1259 = vld [vmem:[%s11] sm:$0xf]
      %v1260 = vld [vmem:[%s11 + $0x4] sm:$0xf]
      %v1261 = vld [vmem:[%s11 + $0x8] sm:$0xf]
      %v1262 = vld [vmem:[%s11 + $0xc] sm:$0xf]
      %v1263 = vld [vmem:[%s11 + $0x10] sm:$0xf]
      %v1264 = vld [vmem:[%s11 + $0x14] sm:$0xf]
      %v1265 = vld [vmem:[%s11 + $0x18] sm:$0xf]
      %v1266 = vld [vmem:[%s11 + $0x1c] sm:$0xf]
      %v1267 = vld [vmem:[%s17] sm:$0x1]
      %v1269 = vlaneseq
      %v1270 = vshrl.u32 %v1269, 7
      %v1271 = vsub.s32 0, %v1270
      %v1272 = vrot.slane %v1267, %v1271
      %v1282 = vunpack.c.l.b16 %v1259
      %v1283 = vunpack.c.l.b16 %v1260
      %v1284 = vunpack.c.l.b16 %v1261
      %v1285 = vunpack.c.l.b16 %v1262
      %v1286 = vunpack.c.l.b16 %v1263
      %v1287 = vunpack.c.l.b16 %v1264
      %v1288 = vunpack.c.l.b16 %v1265
      %v1289 = vunpack.c.l.b16 %v1266
      %v1290 = vpack.c.b16 %v1283, %v1282
      %v1291 = vpack.c.b16 %v1285, %v1284
      %v1292 = vpack.c.b16 %v1287, %v1286
      %v1293 = vpack.c.b16 %v1289, %v1288
      %v1299 = vsel %vm997, %v1251, 0
      %v1302 = vsel %vm997, %v1252, 0
      %v1305 = vsel %vm997, %v1253, 0
      %v1308 = vsel %vm997, %v1254, 0
      %v1311 = vsel %vm997, %v1255, 0
      %v1314 = vsel %vm997, %v1256, 0
      %v1317 = vsel %vm997, %v1257, 0
      %v1320 = vsel %vm997, %v1258, 0
      %1322 = vmatprep.subr.bf16.mxu0 0
      %1323 = vmatpush1.bf16.msra.mxu0 0
      %1324 = vmatprep.subr.bf16.mxu0 0
      %1325 = vmatpush1.bf16.msra.mxu0 0
      %1326 = vmatprep.subr.bf16.mxu0 0
      %1327 = vmatpush1.bf16.msra.mxu0 0
      %1328 = vmatprep.subr.bf16.mxu0 0
      %1329 = vmatpush1.bf16.msra.mxu0 0
      %1330 = vmatprep.subr.bf16.mxu0 0
      %1331 = vmatpush1.bf16.msra.mxu0 %v1293
      %1332 = vmatprep.subr.bf16.mxu0 0
      %1333 = vmatpush1.bf16.msra.mxu0 %v1292
      %1334 = vmatprep.subr.bf16.mxu0 0
      %1335 = vmatpush1.bf16.msra.mxu0 %v1291
      %1336 = vmatprep.subr.bf16.mxu0 0
      %1337 = vmatpush1.bf16.msra.mxu0 %v1290
      %1338 = vmatprep.subr.bf16.mxu0 0
      %1339 = vmatpush2.bf16.msra.mxu0 0
      %1340 = vmatprep.subr.bf16.mxu0 0
      %1341 = vmatpush2.bf16.msra.mxu0 0
      %1342 = vmatprep.subr.bf16.mxu0 0
      %1343 = vmatpush2.bf16.msra.mxu0 0
      %1344 = vmatprep.subr.bf16.mxu0 0
      %1345 = vmatpush2.bf16.msra.mxu0 0
      %1346 = vmatprep.subr.bf16.mxu0 0
      %1347 = vmatpush2.bf16.msra.mxu0 0
      %1348 = vmatprep.subr.bf16.mxu0 0
      %1349 = vmatpush2.bf16.msra.mxu0 0
      %1350 = vmatprep.subr.bf16.mxu0 0
      %1351 = vmatpush2.bf16.msra.mxu0 0
      %1352 = vmatprep.subr.bf16.mxu0 0
      %1353 = vmatpush2.bf16.msra.mxu0 0
      %1354 = vmatprep.mubr.bf16.mxu0 0
      %1355 = vmatmul.mubr.bf16.gmra.mxu0 %v1299
      %v1356 = vpop.f32.mrf.mxu0
      %v1357 = vadd.f32 %v1272, %v1356
      %v1358 = vpop.f32.mrf.mxu0
      %v1359 = vpop.f32.mrf.mxu0
      %v1360 = vadd.f32 %v1272, %v1359
      %v1361 = vpop.f32.mrf.mxu0
      %1362 = vmatprep.mubr.bf16.mxu0 0
      %1363 = vmatmul.mubr.bf16.gmra.mxu0 %v1302
      %v1364 = vpop.f32.mrf.mxu0
      %v1365 = vadd.f32 %v1272, %v1364
      %v1366 = vpop.f32.mrf.mxu0
      %v1367 = vpop.f32.mrf.mxu0
      %v1368 = vadd.f32 %v1272, %v1367
      %v1369 = vpop.f32.mrf.mxu0
      %1370 = vmatprep.mubr.bf16.mxu0 0
      %1371 = vmatmul.mubr.bf16.gmra.mxu0 %v1305
      %v1372 = vpop.f32.mrf.mxu0
      %v1373 = vadd.f32 %v1272, %v1372
      %v1374 = vpop.f32.mrf.mxu0
      %v1375 = vpop.f32.mrf.mxu0
      %v1376 = vadd.f32 %v1272, %v1375
      %v1377 = vpop.f32.mrf.mxu0
      %1378 = vmatprep.mubr.bf16.mxu0 0
      %1379 = vmatmul.mubr.bf16.gmra.mxu0 %v1308
      %v1380 = vpop.f32.mrf.mxu0
      %v1381 = vadd.f32 %v1272, %v1380
      %v1382 = vpop.f32.mrf.mxu0
      %v1383 = vpop.f32.mrf.mxu0
      %v1384 = vadd.f32 %v1272, %v1383
      %v1385 = vpop.f32.mrf.mxu0
      %1386 = vmatprep.mubr.bf16.mxu0 0
      %1387 = vmatmul.mubr.bf16.gmra.mxu0 %v1311
      %v1388 = vpop.f32.mrf.mxu0
      %v1389 = vadd.f32 %v1272, %v1388
      %v1390 = vpop.f32.mrf.mxu0
      %v1391 = vpop.f32.mrf.mxu0
      %v1392 = vadd.f32 %v1272, %v1391
      %v1393 = vpop.f32.mrf.mxu0
      %1394 = vmatprep.mubr.bf16.mxu0 0
      %1395 = vmatmul.mubr.bf16.gmra.mxu0 %v1314
      %v1396 = vpop.f32.mrf.mxu0
      %v1397 = vadd.f32 %v1272, %v1396
      %v1398 = vpop.f32.mrf.mxu0
      %v1399 = vpop.f32.mrf.mxu0
      %v1400 = vadd.f32 %v1272, %v1399
      %v1401 = vpop.f32.mrf.mxu0
      %1402 = vmatprep.mubr.bf16.mxu0 0
      %1403 = vmatmul.mubr.bf16.gmra.mxu0 %v1317
      %v1404 = vpop.f32.mrf.mxu0
      %v1405 = vadd.f32 %v1272, %v1404
      %v1406 = vpop.f32.mrf.mxu0
      %v1407 = vpop.f32.mrf.mxu0
      %v1408 = vadd.f32 %v1272, %v1407
      %v1409 = vpop.f32.mrf.mxu0
      %1410 = vmatprep.mubr.bf16.mxu0 0
      %1411 = vmatmul.mubr.bf16.gmra.mxu0 %v1320
      %v1412 = vpop.f32.mrf.mxu0
      %v1413 = vadd.f32 %v1272, %v1412
      %v1414 = vpop.f32.mrf.mxu0
      %v1415 = vpop.f32.mrf.mxu0
      %v1416 = vadd.f32 %v1272, %v1415
      %v1417 = vpop.f32.mrf.mxu0
      %1418 = vdwg.mxu0
      %v1419 = vld [vmem:[%s13] sm:$0xf]
      %v1420 = vld [vmem:[%s13 + $0x4] sm:$0xf]
      %v1421 = vld [vmem:[%s13 + $0x8] sm:$0xf]
      %v1422 = vld [vmem:[%s13 + $0xc] sm:$0xf]
      %v1423 = vld [vmem:[%s13 + $0x10] sm:$0xf]
      %v1424 = vld [vmem:[%s13 + $0x14] sm:$0xf]
      %v1425 = vld [vmem:[%s13 + $0x18] sm:$0xf]
      %v1426 = vld [vmem:[%s13 + $0x1c] sm:$0xf]
      %v1427 = vld [vmem:[%s19] sm:$0x1]
      %v1429 = vlaneseq
      %v1430 = vshrl.u32 %v1429, 7
      %v1431 = vsub.s32 0, %v1430
      %v1432 = vrot.slane %v1427, %v1431
      %v1442 = vunpack.c.l.b16 %v1419
      %v1443 = vunpack.c.l.b16 %v1420
      %v1444 = vunpack.c.l.b16 %v1421
      %v1445 = vunpack.c.l.b16 %v1422
      %v1446 = vunpack.c.l.b16 %v1423
      %v1447 = vunpack.c.l.b16 %v1424
      %v1448 = vunpack.c.l.b16 %v1425
      %v1449 = vunpack.c.l.b16 %v1426
      %v1450 = vpack.c.b16 %v1443, %v1442
      %v1451 = vpack.c.b16 %v1445, %v1444
      %v1452 = vpack.c.b16 %v1447, %v1446
      %v1453 = vpack.c.b16 %v1449, %v1448
      %1458 = vmatprep.subr.bf16.mxu0 0
      %1459 = vmatpush1.bf16.msra.mxu0 0
      %1460 = vmatprep.subr.bf16.mxu0 0
      %1461 = vmatpush1.bf16.msra.mxu0 0
      %1462 = vmatprep.subr.bf16.mxu0 0
      %1463 = vmatpush1.bf16.msra.mxu0 0
      %1464 = vmatprep.subr.bf16.mxu0 0
      %1465 = vmatpush1.bf16.msra.mxu0 0
      %1466 = vmatprep.subr.bf16.mxu0 0
      %1467 = vmatpush1.bf16.msra.mxu0 %v1453
      %1468 = vmatprep.subr.bf16.mxu0 0
      %1469 = vmatpush1.bf16.msra.mxu0 %v1452
      %1470 = vmatprep.subr.bf16.mxu0 0
      %1471 = vmatpush1.bf16.msra.mxu0 %v1451
      %1472 = vmatprep.subr.bf16.mxu0 0
      %1473 = vmatpush1.bf16.msra.mxu0 %v1450
      %1474 = vmatprep.subr.bf16.mxu0 0
      %1475 = vmatpush2.bf16.msra.mxu0 0
      %1476 = vmatprep.subr.bf16.mxu0 0
      %1477 = vmatpush2.bf16.msra.mxu0 0
      %1478 = vmatprep.subr.bf16.mxu0 0
      %1479 = vmatpush2.bf16.msra.mxu0 0
      %1480 = vmatprep.subr.bf16.mxu0 0
      %1481 = vmatpush2.bf16.msra.mxu0 0
      %1482 = vmatprep.subr.bf16.mxu0 0
      %1483 = vmatpush2.bf16.msra.mxu0 0
      %1484 = vmatprep.subr.bf16.mxu0 0
      %1485 = vmatpush2.bf16.msra.mxu0 0
      %1486 = vmatprep.subr.bf16.mxu0 0
      %1487 = vmatpush2.bf16.msra.mxu0 0
      %1488 = vmatprep.subr.bf16.mxu0 0
      %1489 = vmatpush2.bf16.msra.mxu0 0
      %1490 = vmatprep.mubr.bf16.mxu0 0
      %1491 = vmatmul.mubr.bf16.gmra.mxu0 %v1299
      %v1492 = vpop.f32.mrf.mxu0
      %v1493 = vadd.f32 %v1432, %v1492
      %v1494 = vpop.f32.mrf.mxu0
      %v1495 = vpop.f32.mrf.mxu0
      %v1496 = vadd.f32 %v1432, %v1495
      %v1497 = vpop.f32.mrf.mxu0
      %1498 = vmatprep.mubr.bf16.mxu0 0
      %1499 = vmatmul.mubr.bf16.gmra.mxu0 %v1302
      %v1500 = vpop.f32.mrf.mxu0
      %v1501 = vadd.f32 %v1432, %v1500
      %v1502 = vpop.f32.mrf.mxu0
      %v1503 = vpop.f32.mrf.mxu0
      %v1504 = vadd.f32 %v1432, %v1503
      %v1505 = vpop.f32.mrf.mxu0
      %1506 = vmatprep.mubr.bf16.mxu0 0
      %1507 = vmatmul.mubr.bf16.gmra.mxu0 %v1305
      %v1508 = vpop.f32.mrf.mxu0
      %v1509 = vadd.f32 %v1432, %v1508
      %v1510 = vpop.f32.mrf.mxu0
      %v1511 = vpop.f32.mrf.mxu0
      %v1512 = vadd.f32 %v1432, %v1511
      %v1513 = vpop.f32.mrf.mxu0
      %1514 = vmatprep.mubr.bf16.mxu0 0
      %1515 = vmatmul.mubr.bf16.gmra.mxu0 %v1308
      %v1516 = vpop.f32.mrf.mxu0
      %v1517 = vadd.f32 %v1432, %v1516
      %v1518 = vpop.f32.mrf.mxu0
      %v1519 = vpop.f32.mrf.mxu0
      %v1520 = vadd.f32 %v1432, %v1519
      %v1521 = vpop.f32.mrf.mxu0
      %1522 = vmatprep.mubr.bf16.mxu0 0
      %1523 = vmatmul.mubr.bf16.gmra.mxu0 %v1311
      %v1524 = vpop.f32.mrf.mxu0
      %v1525 = vadd.f32 %v1432, %v1524
      %v1526 = vpop.f32.mrf.mxu0
      %v1527 = vpop.f32.mrf.mxu0
      %v1528 = vadd.f32 %v1432, %v1527
      %v1529 = vpop.f32.mrf.mxu0
      %1530 = vmatprep.mubr.bf16.mxu0 0
      %1531 = vmatmul.mubr.bf16.gmra.mxu0 %v1314
      %v1532 = vpop.f32.mrf.mxu0
      %v1533 = vadd.f32 %v1432, %v1532
      %v1534 = vpop.f32.mrf.mxu0
      %v1535 = vpop.f32.mrf.mxu0
      %v1536 = vadd.f32 %v1432, %v1535
      %v1537 = vpop.f32.mrf.mxu0
      %1538 = vmatprep.mubr.bf16.mxu0 0
      %1539 = vmatmul.mubr.bf16.gmra.mxu0 %v1317
      %v1540 = vpop.f32.mrf.mxu0
      %v1541 = vadd.f32 %v1432, %v1540
      %v1542 = vpop.f32.mrf.mxu0
      %v1543 = vpop.f32.mrf.mxu0
      %v1544 = vadd.f32 %v1432, %v1543
      %v1545 = vpop.f32.mrf.mxu0
      %1546 = vmatprep.mubr.bf16.mxu0 0
      %1547 = vmatmul.mubr.bf16.gmra.mxu0 %v1320
      %v1548 = vpop.f32.mrf.mxu0
      %v1549 = vadd.f32 %v1432, %v1548
      %v1550 = vpop.f32.mrf.mxu0
      %v1551 = vpop.f32.mrf.mxu0
      %v1552 = vadd.f32 %v1432, %v1551
      %v1553 = vpop.f32.mrf.mxu0
      %1554 = vdwg.mxu0
      %v1555 = vld [vmem:[%s15] sm:$0xf]
      %v1556 = vld [vmem:[%s15 + $0x4] sm:$0xf]
      %v1557 = vld [vmem:[%s15 + $0x8] sm:$0xf]
      %v1558 = vld [vmem:[%s15 + $0xc] sm:$0xf]
      %v1559 = vld [vmem:[%s15 + $0x10] sm:$0xf]
      %v1560 = vld [vmem:[%s15 + $0x14] sm:$0xf]
      %v1561 = vld [vmem:[%s15 + $0x18] sm:$0xf]
      %v1562 = vld [vmem:[%s15 + $0x1c] sm:$0xf]
      %v1563 = vld [vmem:[%s21] sm:$0x1]
      %v1565 = vlaneseq
      %v1566 = vshrl.u32 %v1565, 7
      %v1567 = vsub.s32 0, %v1566
      %v1568 = vrot.slane %v1563, %v1567
      %v1578 = vunpack.c.l.b16 %v1555
      %v1579 = vunpack.c.l.b16 %v1556
      %v1580 = vunpack.c.l.b16 %v1557
      %v1581 = vunpack.c.l.b16 %v1558
      %v1582 = vunpack.c.l.b16 %v1559
      %v1583 = vunpack.c.l.b16 %v1560
      %v1584 = vunpack.c.l.b16 %v1561
      %v1585 = vunpack.c.l.b16 %v1562
      %v1586 = vpack.c.b16 %v1579, %v1578
      %v1587 = vpack.c.b16 %v1581, %v1580
      %v1588 = vpack.c.b16 %v1583, %v1582
      %v1589 = vpack.c.b16 %v1585, %v1584
      %1594 = vmatprep.subr.bf16.mxu0 0
      %1595 = vmatpush1.bf16.msra.mxu0 0
      %1596 = vmatprep.subr.bf16.mxu0 0
      %1597 = vmatpush1.bf16.msra.mxu0 0
      %1598 = vmatprep.subr.bf16.mxu0 0
      %1599 = vmatpush1.bf16.msra.mxu0 0
      %1600 = vmatprep.subr.bf16.mxu0 0
      %1601 = vmatpush1.bf16.msra.mxu0 0
      %1602 = vmatprep.subr.bf16.mxu0 0
      %1603 = vmatpush1.bf16.msra.mxu0 %v1589
      %1604 = vmatprep.subr.bf16.mxu0 0
      %1605 = vmatpush1.bf16.msra.mxu0 %v1588
      %1606 = vmatprep.subr.bf16.mxu0 0
      %1607 = vmatpush1.bf16.msra.mxu0 %v1587
      %1608 = vmatprep.subr.bf16.mxu0 0
      %1609 = vmatpush1.bf16.msra.mxu0 %v1586
      %1610 = vmatprep.subr.bf16.mxu0 0
      %1611 = vmatpush2.bf16.msra.mxu0 0
      %1612 = vmatprep.subr.bf16.mxu0 0
      %1613 = vmatpush2.bf16.msra.mxu0 0
      %1614 = vmatprep.subr.bf16.mxu0 0
      %1615 = vmatpush2.bf16.msra.mxu0 0
      %1616 = vmatprep.subr.bf16.mxu0 0
      %1617 = vmatpush2.bf16.msra.mxu0 0
      %1618 = vmatprep.subr.bf16.mxu0 0
      %1619 = vmatpush2.bf16.msra.mxu0 0
      %1620 = vmatprep.subr.bf16.mxu0 0
      %1621 = vmatpush2.bf16.msra.mxu0 0
      %1622 = vmatprep.subr.bf16.mxu0 0
      %1623 = vmatpush2.bf16.msra.mxu0 0
      %1624 = vmatprep.subr.bf16.mxu0 0
      %1625 = vmatpush2.bf16.msra.mxu0 0
      %1626 = vmatprep.mubr.bf16.mxu0 0
      %1627 = vmatmul.mubr.bf16.gmra.mxu0 %v1299
      %v1628 = vpop.f32.mrf.mxu0
      %v1629 = vadd.f32 %v1568, %v1628
      %v1630 = vpop.f32.mrf.mxu0
      %v1631 = vpop.f32.mrf.mxu0
      %v1632 = vadd.f32 %v1568, %v1631
      %v1633 = vpop.f32.mrf.mxu0
      %1634 = vmatprep.mubr.bf16.mxu0 0
      %1635 = vmatmul.mubr.bf16.gmra.mxu0 %v1302
      %v1636 = vpop.f32.mrf.mxu0
      %v1637 = vadd.f32 %v1568, %v1636
      %v1638 = vpop.f32.mrf.mxu0
      %v1639 = vpop.f32.mrf.mxu0
      %v1640 = vadd.f32 %v1568, %v1639
      %v1641 = vpop.f32.mrf.mxu0
      %1642 = vmatprep.mubr.bf16.mxu0 0
      %1643 = vmatmul.mubr.bf16.gmra.mxu0 %v1305
      %v1644 = vpop.f32.mrf.mxu0
      %v1645 = vadd.f32 %v1568, %v1644
      %v1646 = vpop.f32.mrf.mxu0
      %v1647 = vpop.f32.mrf.mxu0
      %v1648 = vadd.f32 %v1568, %v1647
      %v1649 = vpop.f32.mrf.mxu0
      %1650 = vmatprep.mubr.bf16.mxu0 0
      %1651 = vmatmul.mubr.bf16.gmra.mxu0 %v1308
      %v1652 = vpop.f32.mrf.mxu0
      %v1653 = vadd.f32 %v1568, %v1652
      %v1654 = vpop.f32.mrf.mxu0
      %v1655 = vpop.f32.mrf.mxu0
      %v1656 = vadd.f32 %v1568, %v1655
      %v1657 = vpop.f32.mrf.mxu0
      %1658 = vmatprep.mubr.bf16.mxu0 0
      %1659 = vmatmul.mubr.bf16.gmra.mxu0 %v1311
      %v1660 = vpop.f32.mrf.mxu0
      %v1661 = vadd.f32 %v1568, %v1660
      %v1662 = vpop.f32.mrf.mxu0
      %v1663 = vpop.f32.mrf.mxu0
      %v1664 = vadd.f32 %v1568, %v1663
      %v1665 = vpop.f32.mrf.mxu0
      %1666 = vmatprep.mubr.bf16.mxu0 0
      %1667 = vmatmul.mubr.bf16.gmra.mxu0 %v1314
      %v1668 = vpop.f32.mrf.mxu0
      %v1669 = vadd.f32 %v1568, %v1668
      %v1670 = vpop.f32.mrf.mxu0
      %v1671 = vpop.f32.mrf.mxu0
      %v1672 = vadd.f32 %v1568, %v1671
      %v1673 = vpop.f32.mrf.mxu0
      %1674 = vmatprep.mubr.bf16.mxu0 0
      %1675 = vmatmul.mubr.bf16.gmra.mxu0 %v1317
      %v1676 = vpop.f32.mrf.mxu0
      %v1677 = vadd.f32 %v1568, %v1676
      %v1678 = vpop.f32.mrf.mxu0
      %v1679 = vpop.f32.mrf.mxu0
      %v1680 = vadd.f32 %v1568, %v1679
      %v1681 = vpop.f32.mrf.mxu0
      %1682 = vmatprep.mubr.bf16.mxu0 0
      %1683 = vmatmul.mubr.bf16.gmra.mxu0 %v1320
      %v1684 = vpop.f32.mrf.mxu0
      %v1685 = vadd.f32 %v1568, %v1684
      %v1686 = vpop.f32.mrf.mxu0
      %v1687 = vpop.f32.mrf.mxu0
      %v1688 = vadd.f32 %v1568, %v1687
      %v1689 = vpop.f32.mrf.mxu0
      %1690 = vdwg.mxu0
      %v1691 = vld [vmem:[%s964] sm:$0xff]
      %v1692 = vld [vmem:[%s964 + $0x8] sm:$0xff]
      %v1693 = vsub.f32 1.0, %v1691
      %v1694 = vsub.f32 1.0, %v1692
      %v1695 = vmul.f32 %v1693, -1e+09
      %v1696 = vmul.f32 %v1694, -1e+09
      %v1699 = vcombine.high %v1695, %v1695
      %v1701 = vunpack.c.l.s4 1966171168
      %v1702 = vunpack.c.0.s8 %v1701
      %v1703 = vlaneseq
      %v1704 = vshrl.u32 %v1703, 7
      %v1705 = vsub.s32 %v1702, %v1704
      %v1706 = vrot.slane %v1695, %v1705
      %v1708 = vunpack.c.l.s4 1966171168
      %v1709 = vunpack.c.0.s8 %v1708
      %v1710 = vlaneseq
      %v1711 = vshrl.u32 %v1710, 7
      %v1712 = vsub.s32 %v1709, %v1711
      %v1713 = vrot.slane %v1699, %v1712
      %v1714 = vcombine.high %v1706, %v1706
      %v1715 = vcombine.high %v1713, %v1713
      %v1717 = vunpack.c.l.s4 1966171168
      %v1718 = vunpack.c.0.s8 %v1717
      %v1719 = vlaneseq
      %v1720 = vshrl.u32 %v1719, 7
      %v1721 = vsub.s32 %v1718, %v1720
      %v1722 = vrot.slane %v1706, %v1721
      %v1724 = vunpack.c.l.s4 1966171168
      %v1725 = vunpack.c.0.s8 %v1724
      %v1726 = vlaneseq
      %v1727 = vshrl.u32 %v1726, 7
      %v1728 = vsub.s32 %v1725, %v1727
      %v1729 = vrot.slane %v1713, %v1728
      %v1731 = vunpack.c.l.s4 1966171168
      %v1732 = vunpack.c.0.s8 %v1731
      %v1733 = vlaneseq
      %v1734 = vshrl.u32 %v1733, 7
      %v1735 = vsub.s32 %v1732, %v1734
      %v1736 = vrot.slane %v1714, %v1735
      %v1738 = vunpack.c.l.s4 1966171168
      %v1739 = vunpack.c.0.s8 %v1738
      %v1740 = vlaneseq
      %v1741 = vshrl.u32 %v1740, 7
      %v1742 = vsub.s32 %v1739, %v1741
      %v1743 = vrot.slane %v1715, %v1742
      %v1744 = vcombine.high %v1722, %v1722
      %v1745 = vcombine.high %v1729, %v1729
      %v1746 = vcombine.high %v1736, %v1736
      %v1747 = vcombine.high %v1743, %v1743
      %v1748 = vcombine.high %v1696, %v1696
      %v1750 = vunpack.c.l.s4 1966171168
      %v1751 = vunpack.c.0.s8 %v1750
      %v1752 = vlaneseq
      %v1753 = vshrl.u32 %v1752, 7
      %v1754 = vsub.s32 %v1751, %v1753
      %v1755 = vrot.slane %v1696, %v1754
      %v1757 = vunpack.c.l.s4 1966171168
      %v1758 = vunpack.c.0.s8 %v1757
      %v1759 = vlaneseq
      %v1760 = vshrl.u32 %v1759, 7
      %v1761 = vsub.s32 %v1758, %v1760
      %v1762 = vrot.slane %v1748, %v1761
      %v1763 = vcombine.high %v1755, %v1755
      %v1764 = vcombine.high %v1762, %v1762
      %v1766 = vunpack.c.l.s4 1966171168
      %v1767 = vunpack.c.0.s8 %v1766
      %v1768 = vlaneseq
      %v1769 = vshrl.u32 %v1768, 7
      %v1770 = vsub.s32 %v1767, %v1769
      %v1771 = vrot.slane %v1755, %v1770
      %v1773 = vunpack.c.l.s4 1966171168
      %v1774 = vunpack.c.0.s8 %v1773
      %v1775 = vlaneseq
      %v1776 = vshrl.u32 %v1775, 7
      %v1777 = vsub.s32 %v1774, %v1776
      %v1778 = vrot.slane %v1762, %v1777
      %v1780 = vunpack.c.l.s4 1966171168
      %v1781 = vunpack.c.0.s8 %v1780
      %v1782 = vlaneseq
      %v1783 = vshrl.u32 %v1782, 7
      %v1784 = vsub.s32 %v1781, %v1783
      %v1785 = vrot.slane %v1763, %v1784
      %v1787 = vunpack.c.l.s4 1966171168
      %v1788 = vunpack.c.0.s8 %v1787
      %v1789 = vlaneseq
      %v1790 = vshrl.u32 %v1789, 7
      %v1791 = vsub.s32 %v1788, %v1790
      %v1792 = vrot.slane %v1764, %v1791
      %v1793 = vcombine.high %v1771, %v1771
      %v1794 = vcombine.high %v1778, %v1778
      %v1795 = vcombine.high %v1785, %v1785
      %v1796 = vcombine.high %v1792, %v1792
      %v1797 = vpack.c.bf16 %v1357, %v1357
      %v1798 = vpack.c.bf16 %v1360, %v1360
      %v1799 = vpack.c.bf16 %v1365, %v1365
      %v1800 = vpack.c.bf16 %v1368, %v1368
      %v1801 = vpack.c.bf16 %v1373, %v1373
      %v1802 = vpack.c.bf16 %v1376, %v1376
      %v1803 = vpack.c.bf16 %v1381, %v1381
      %v1804 = vpack.c.bf16 %v1384, %v1384
      %v1805 = vpack.c.bf16 %v1389, %v1389
      %v1806 = vpack.c.bf16 %v1392, %v1392
      %v1807 = vpack.c.bf16 %v1397, %v1397
      %v1808 = vpack.c.bf16 %v1400, %v1400
      %v1809 = vpack.c.bf16 %v1405, %v1405
      %v1810 = vpack.c.bf16 %v1408, %v1408
      %v1811 = vpack.c.bf16 %v1413, %v1413
      %v1812 = vpack.c.bf16 %v1416, %v1416
      %v1813 = vpack.c.bf16 %v1493, %v1493
      %v1814 = vpack.c.bf16 %v1496, %v1496
      %v1815 = vpack.c.bf16 %v1501, %v1501
      %v1816 = vpack.c.bf16 %v1504, %v1504
      %v1817 = vpack.c.bf16 %v1509, %v1509
      %v1818 = vpack.c.bf16 %v1512, %v1512
      %v1819 = vpack.c.bf16 %v1517, %v1517
      %v1820 = vpack.c.bf16 %v1520, %v1520
      %v1821 = vpack.c.bf16 %v1525, %v1525
      %v1822 = vpack.c.bf16 %v1528, %v1528
      %v1823 = vpack.c.bf16 %v1533, %v1533
      %v1824 = vpack.c.bf16 %v1536, %v1536
      %v1825 = vpack.c.bf16 %v1541, %v1541
      %v1826 = vpack.c.bf16 %v1544, %v1544
      %v1827 = vpack.c.bf16 %v1549, %v1549
      %v1828 = vpack.c.bf16 %v1552, %v1552
      %v1829 = vpack.c.bf16 %v1629, %v1629
      %v1830 = vpack.c.bf16 %v1632, %v1632
      %v1831 = vpack.c.bf16 %v1637, %v1637
      %v1832 = vpack.c.bf16 %v1640, %v1640
      %v1833 = vpack.c.bf16 %v1645, %v1645
      %v1834 = vpack.c.bf16 %v1648, %v1648
      %v1835 = vpack.c.bf16 %v1653, %v1653
      %v1836 = vpack.c.bf16 %v1656, %v1656
      %v1837 = vpack.c.bf16 %v1661, %v1661
      %v1838 = vpack.c.bf16 %v1664, %v1664
      %v1839 = vpack.c.bf16 %v1669, %v1669
      %v1840 = vpack.c.bf16 %v1672, %v1672
      %v1841 = vpack.c.bf16 %v1677, %v1677
      %v1842 = vpack.c.bf16 %v1680, %v1680
      %v1843 = vpack.c.bf16 %v1685, %v1685
      %v1844 = vpack.c.bf16 %v1688, %v1688
      %vm1845 = vcmask 130048
      %v1847 = vsel %vm1845, %v1797, 0
      %v1850 = vsel %vm1845, %v1813, 0
      %1852 = vmatprep.subr.bf16.mxu0 0
      %1853 = vmatpush1.bf16.xpose.msra.mxu0 0
      %1854 = vmatprep.subr.bf16.mxu0 0
      %1855 = vmatpush1.bf16.xpose.msra.mxu0 0
      %1856 = vmatprep.subr.bf16.mxu0 0
      %1857 = vmatpush1.bf16.xpose.msra.mxu0 0
      %1858 = vmatprep.subr.bf16.mxu0 0
      %1859 = vmatpush1.bf16.xpose.msra.mxu0 0
      %1860 = vmatprep.subr.bf16.mxu0 0
      %1861 = vmatpush1.bf16.xpose.msra.mxu0 0
      %1862 = vmatprep.subr.bf16.mxu0 0
      %1863 = vmatpush1.bf16.xpose.msra.mxu0 0
      %1864 = vmatprep.subr.bf16.mxu0 0
      %1865 = vmatpush1.bf16.xpose.msra.mxu0 0
      %1866 = vmatprep.subr.bf16.mxu0 0
      %1867 = vmatpush1.bf16.xpose.msra.mxu0 %v1850
      %1868 = vmatprep.subr.bf16.mxu0 0
      %1869 = vmatpush2.bf16.xpose.msra.mxu0 0
      %1870 = vmatprep.subr.bf16.mxu0 0
      %1871 = vmatpush2.bf16.xpose.msra.mxu0 0
      %1872 = vmatprep.subr.bf16.mxu0 0
      %1873 = vmatpush2.bf16.xpose.msra.mxu0 0
      %1874 = vmatprep.subr.bf16.mxu0 0
      %1875 = vmatpush2.bf16.xpose.msra.mxu0 0
      %1876 = vmatprep.subr.bf16.mxu0 0
      %1877 = vmatpush2.bf16.xpose.msra.mxu0 0
      %1878 = vmatprep.subr.bf16.mxu0 0
      %1879 = vmatpush2.bf16.xpose.msra.mxu0 0
      %1880 = vmatprep.subr.bf16.mxu0 0
      %1881 = vmatpush2.bf16.xpose.msra.mxu0 0
      %1882 = vmatprep.subr.bf16.mxu0 0
      %1883 = vmatpush2.bf16.xpose.msra.mxu0 0
      %1884 = vmatprep.mubr.bf16.mxu0 0
      %1885 = vmatmul.mubr.bf16.gmra.mxu0 %v1847
      %v1886 = vpop.f32.mrf.mxu0
      %v1887 = vadd.f32 0.0, %v1886
      %v1888 = vpop.f32.mrf.mxu0
      %v1889 = vpop.f32.mrf.mxu0
      %v1890 = vpop.f32.mrf.mxu0
      %1891 = vdwg.mxu0
      %v1893 = vsel %vm1845, %v1798, 0
      %v1896 = vsel %vm1845, %v1814, 0
      %1898 = vmatprep.subr.bf16.mxu0 0
      %1899 = vmatpush1.bf16.xpose.msra.mxu0 0
      %1900 = vmatprep.subr.bf16.mxu0 0
      %1901 = vmatpush1.bf16.xpose.msra.mxu0 0
      %1902 = vmatprep.subr.bf16.mxu0 0
      %1903 = vmatpush1.bf16.xpose.msra.mxu0 0
      %1904 = vmatprep.subr.bf16.mxu0 0
      %1905 = vmatpush1.bf16.xpose.msra.mxu0 0
      %1906 = vmatprep.subr.bf16.mxu0 0
      %1907 = vmatpush1.bf16.xpose.msra.mxu0 0
      %1908 = vmatprep.subr.bf16.mxu0 0
      %1909 = vmatpush1.bf16.xpose.msra.mxu0 0
      %1910 = vmatprep.subr.bf16.mxu0 0
      %1911 = vmatpush1.bf16.xpose.msra.mxu0 0
      %1912 = vmatprep.subr.bf16.mxu0 0
      %1913 = vmatpush1.bf16.xpose.msra.mxu0 %v1896
      %1914 = vmatprep.subr.bf16.mxu0 0
      %1915 = vmatpush2.bf16.xpose.msra.mxu0 0
      %1916 = vmatprep.subr.bf16.mxu0 0
      %1917 = vmatpush2.bf16.xpose.msra.mxu0 0
      %1918 = vmatprep.subr.bf16.mxu0 0
      %1919 = vmatpush2.bf16.xpose.msra.mxu0 0
      %1920 = vmatprep.subr.bf16.mxu0 0
      %1921 = vmatpush2.bf16.xpose.msra.mxu0 0
      %1922 = vmatprep.subr.bf16.mxu0 0
      %1923 = vmatpush2.bf16.xpose.msra.mxu0 0
      %1924 = vmatprep.subr.bf16.mxu0 0
      %1925 = vmatpush2.bf16.xpose.msra.mxu0 0
      %1926 = vmatprep.subr.bf16.mxu0 0
      %1927 = vmatpush2.bf16.xpose.msra.mxu0 0
      %1928 = vmatprep.subr.bf16.mxu0 0
      %1929 = vmatpush2.bf16.xpose.msra.mxu0 0
      %1930 = vmatprep.mubr.bf16.mxu0 0
      %1931 = vmatmul.mubr.bf16.gmra.mxu0 %v1893
      %v1932 = vpop.f32.mrf.mxu0
      %v1933 = vadd.f32 0.0, %v1932
      %v1934 = vpop.f32.mrf.mxu0
      %v1935 = vpop.f32.mrf.mxu0
      %v1936 = vpop.f32.mrf.mxu0
      %1937 = vdwg.mxu0
      %v1939 = vsel %vm1845, %v1799, 0
      %v1942 = vsel %vm1845, %v1815, 0
      %1944 = vmatprep.subr.bf16.mxu0 0
      %1945 = vmatpush1.bf16.xpose.msra.mxu0 0
      %1946 = vmatprep.subr.bf16.mxu0 0
      %1947 = vmatpush1.bf16.xpose.msra.mxu0 0
      %1948 = vmatprep.subr.bf16.mxu0 0
      %1949 = vmatpush1.bf16.xpose.msra.mxu0 0
      %1950 = vmatprep.subr.bf16.mxu0 0
      %1951 = vmatpush1.bf16.xpose.msra.mxu0 0
      %1952 = vmatprep.subr.bf16.mxu0 0
      %1953 = vmatpush1.bf16.xpose.msra.mxu0 0
      %1954 = vmatprep.subr.bf16.mxu0 0
      %1955 = vmatpush1.bf16.xpose.msra.mxu0 0
      %1956 = vmatprep.subr.bf16.mxu0 0
      %1957 = vmatpush1.bf16.xpose.msra.mxu0 0
      %1958 = vmatprep.subr.bf16.mxu0 0
      %1959 = vmatpush1.bf16.xpose.msra.mxu0 %v1942
      %1960 = vmatprep.subr.bf16.mxu0 0
      %1961 = vmatpush2.bf16.xpose.msra.mxu0 0
      %1962 = vmatprep.subr.bf16.mxu0 0
      %1963 = vmatpush2.bf16.xpose.msra.mxu0 0
      %1964 = vmatprep.subr.bf16.mxu0 0
      %1965 = vmatpush2.bf16.xpose.msra.mxu0 0
      %1966 = vmatprep.subr.bf16.mxu0 0
      %1967 = vmatpush2.bf16.xpose.msra.mxu0 0
      %1968 = vmatprep.subr.bf16.mxu0 0
      %1969 = vmatpush2.bf16.xpose.msra.mxu0 0
      %1970 = vmatprep.subr.bf16.mxu0 0
      %1971 = vmatpush2.bf16.xpose.msra.mxu0 0
      %1972 = vmatprep.subr.bf16.mxu0 0
      %1973 = vmatpush2.bf16.xpose.msra.mxu0 0
      %1974 = vmatprep.subr.bf16.mxu0 0
      %1975 = vmatpush2.bf16.xpose.msra.mxu0 0
      %1976 = vmatprep.mubr.bf16.mxu0 0
      %1977 = vmatmul.mubr.bf16.gmra.mxu0 %v1939
      %v1978 = vpop.f32.mrf.mxu0
      %v1979 = vadd.f32 0.0, %v1978
      %v1980 = vpop.f32.mrf.mxu0
      %v1981 = vpop.f32.mrf.mxu0
      %v1982 = vpop.f32.mrf.mxu0
      %1983 = vdwg.mxu0
      %v1985 = vsel %vm1845, %v1800, 0
      %v1988 = vsel %vm1845, %v1816, 0
      %1990 = vmatprep.subr.bf16.mxu0 0
      %1991 = vmatpush1.bf16.xpose.msra.mxu0 0
      %1992 = vmatprep.subr.bf16.mxu0 0
      %1993 = vmatpush1.bf16.xpose.msra.mxu0 0
      %1994 = vmatprep.subr.bf16.mxu0 0
      %1995 = vmatpush1.bf16.xpose.msra.mxu0 0
      %1996 = vmatprep.subr.bf16.mxu0 0
      %1997 = vmatpush1.bf16.xpose.msra.mxu0 0
      %1998 = vmatprep.subr.bf16.mxu0 0
      %1999 = vmatpush1.bf16.xpose.msra.mxu0 0
      %2000 = vmatprep.subr.bf16.mxu0 0
      %2001 = vmatpush1.bf16.xpose.msra.mxu0 0
      %2002 = vmatprep.subr.bf16.mxu0 0
      %2003 = vmatpush1.bf16.xpose.msra.mxu0 0
      %2004 = vmatprep.subr.bf16.mxu0 0
      %2005 = vmatpush1.bf16.xpose.msra.mxu0 %v1988
      %2006 = vmatprep.subr.bf16.mxu0 0
      %2007 = vmatpush2.bf16.xpose.msra.mxu0 0
      %2008 = vmatprep.subr.bf16.mxu0 0
      %2009 = vmatpush2.bf16.xpose.msra.mxu0 0
      %2010 = vmatprep.subr.bf16.mxu0 0
      %2011 = vmatpush2.bf16.xpose.msra.mxu0 0
      %2012 = vmatprep.subr.bf16.mxu0 0
      %2013 = vmatpush2.bf16.xpose.msra.mxu0 0
      %2014 = vmatprep.subr.bf16.mxu0 0
      %2015 = vmatpush2.bf16.xpose.msra.mxu0 0
      %2016 = vmatprep.subr.bf16.mxu0 0
      %2017 = vmatpush2.bf16.xpose.msra.mxu0 0
      %2018 = vmatprep.subr.bf16.mxu0 0
      %2019 = vmatpush2.bf16.xpose.msra.mxu0 0
      %2020 = vmatprep.subr.bf16.mxu0 0
      %2021 = vmatpush2.bf16.xpose.msra.mxu0 0
      %2022 = vmatprep.mubr.bf16.mxu0 0
      %2023 = vmatmul.mubr.bf16.gmra.mxu0 %v1985
      %v2024 = vpop.f32.mrf.mxu0
      %v2025 = vadd.f32 0.0, %v2024
      %v2026 = vpop.f32.mrf.mxu0
      %v2027 = vpop.f32.mrf.mxu0
      %v2028 = vpop.f32.mrf.mxu0
      %2029 = vdwg.mxu0
      %v2031 = vsel %vm1845, %v1801, 0
      %v2034 = vsel %vm1845, %v1817, 0
      %2036 = vmatprep.subr.bf16.mxu0 0
      %2037 = vmatpush1.bf16.xpose.msra.mxu0 0
      %2038 = vmatprep.subr.bf16.mxu0 0
      %2039 = vmatpush1.bf16.xpose.msra.mxu0 0
      %2040 = vmatprep.subr.bf16.mxu0 0
      %2041 = vmatpush1.bf16.xpose.msra.mxu0 0
      %2042 = vmatprep.subr.bf16.mxu0 0
      %2043 = vmatpush1.bf16.xpose.msra.mxu0 0
      %2044 = vmatprep.subr.bf16.mxu0 0
      %2045 = vmatpush1.bf16.xpose.msra.mxu0 0
      %2046 = vmatprep.subr.bf16.mxu0 0
      %2047 = vmatpush1.bf16.xpose.msra.mxu0 0
      %2048 = vmatprep.subr.bf16.mxu0 0
      %2049 = vmatpush1.bf16.xpose.msra.mxu0 0
      %2050 = vmatprep.subr.bf16.mxu0 0
      %2051 = vmatpush1.bf16.xpose.msra.mxu0 %v2034
      %2052 = vmatprep.subr.bf16.mxu0 0
      %2053 = vmatpush2.bf16.xpose.msra.mxu0 0
      %2054 = vmatprep.subr.bf16.mxu0 0
      %2055 = vmatpush2.bf16.xpose.msra.mxu0 0
      %2056 = vmatprep.subr.bf16.mxu0 0
      %2057 = vmatpush2.bf16.xpose.msra.mxu0 0
      %2058 = vmatprep.subr.bf16.mxu0 0
      %2059 = vmatpush2.bf16.xpose.msra.mxu0 0
      %2060 = vmatprep.subr.bf16.mxu0 0
      %2061 = vmatpush2.bf16.xpose.msra.mxu0 0
      %2062 = vmatprep.subr.bf16.mxu0 0
      %2063 = vmatpush2.bf16.xpose.msra.mxu0 0
      %2064 = vmatprep.subr.bf16.mxu0 0
      %2065 = vmatpush2.bf16.xpose.msra.mxu0 0
      %2066 = vmatprep.subr.bf16.mxu0 0
      %2067 = vmatpush2.bf16.xpose.msra.mxu0 0
      %2068 = vmatprep.mubr.bf16.mxu0 0
      %2069 = vmatmul.mubr.bf16.gmra.mxu0 %v2031
      %v2070 = vpop.f32.mrf.mxu0
      %v2071 = vadd.f32 0.0, %v2070
      %v2072 = vpop.f32.mrf.mxu0
      %v2073 = vpop.f32.mrf.mxu0
      %v2074 = vpop.f32.mrf.mxu0
      %2075 = vdwg.mxu0
      %v2077 = vsel %vm1845, %v1802, 0
      %v2080 = vsel %vm1845, %v1818, 0
      %2082 = vmatprep.subr.bf16.mxu0 0
      %2083 = vmatpush1.bf16.xpose.msra.mxu0 0
      %2084 = vmatprep.subr.bf16.mxu0 0
      %2085 = vmatpush1.bf16.xpose.msra.mxu0 0
      %2086 = vmatprep.subr.bf16.mxu0 0
      %2087 = vmatpush1.bf16.xpose.msra.mxu0 0
      %2088 = vmatprep.subr.bf16.mxu0 0
      %2089 = vmatpush1.bf16.xpose.msra.mxu0 0
      %2090 = vmatprep.subr.bf16.mxu0 0
      %2091 = vmatpush1.bf16.xpose.msra.mxu0 0
      %2092 = vmatprep.subr.bf16.mxu0 0
      %2093 = vmatpush1.bf16.xpose.msra.mxu0 0
      %2094 = vmatprep.subr.bf16.mxu0 0
      %2095 = vmatpush1.bf16.xpose.msra.mxu0 0
      %2096 = vmatprep.subr.bf16.mxu0 0
      %2097 = vmatpush1.bf16.xpose.msra.mxu0 %v2080
      %2098 = vmatprep.subr.bf16.mxu0 0
      %2099 = vmatpush2.bf16.xpose.msra.mxu0 0
      %2100 = vmatprep.subr.bf16.mxu0 0
      %2101 = vmatpush2.bf16.xpose.msra.mxu0 0
      %2102 = vmatprep.subr.bf16.mxu0 0
      %2103 = vmatpush2.bf16.xpose.msra.mxu0 0
      %2104 = vmatprep.subr.bf16.mxu0 0
      %2105 = vmatpush2.bf16.xpose.msra.mxu0 0
      %2106 = vmatprep.subr.bf16.mxu0 0
      %2107 = vmatpush2.bf16.xpose.msra.mxu0 0
      %2108 = vmatprep.subr.bf16.mxu0 0
      %2109 = vmatpush2.bf16.xpose.msra.mxu0 0
      %2110 = vmatprep.subr.bf16.mxu0 0
      %2111 = vmatpush2.bf16.xpose.msra.mxu0 0
      %2112 = vmatprep.subr.bf16.mxu0 0
      %2113 = vmatpush2.bf16.xpose.msra.mxu0 0
      %2114 = vmatprep.mubr.bf16.mxu0 0
      %2115 = vmatmul.mubr.bf16.gmra.mxu0 %v2077
      %v2116 = vpop.f32.mrf.mxu0
      %v2117 = vadd.f32 0.0, %v2116
      %v2118 = vpop.f32.mrf.mxu0
      %v2119 = vpop.f32.mrf.mxu0
      %v2120 = vpop.f32.mrf.mxu0
      %2121 = vdwg.mxu0
      %v2123 = vsel %vm1845, %v1803, 0
      %v2126 = vsel %vm1845, %v1819, 0
      %2128 = vmatprep.subr.bf16.mxu0 0
      %2129 = vmatpush1.bf16.xpose.msra.mxu0 0
      %2130 = vmatprep.subr.bf16.mxu0 0
      %2131 = vmatpush1.bf16.xpose.msra.mxu0 0
      %2132 = vmatprep.subr.bf16.mxu0 0
      %2133 = vmatpush1.bf16.xpose.msra.mxu0 0
      %2134 = vmatprep.subr.bf16.mxu0 0
      %2135 = vmatpush1.bf16.xpose.msra.mxu0 0
      %2136 = vmatprep.subr.bf16.mxu0 0
      %2137 = vmatpush1.bf16.xpose.msra.mxu0 0
      %2138 = vmatprep.subr.bf16.mxu0 0
      %2139 = vmatpush1.bf16.xpose.msra.mxu0 0
      %2140 = vmatprep.subr.bf16.mxu0 0
      %2141 = vmatpush1.bf16.xpose.msra.mxu0 0
      %2142 = vmatprep.subr.bf16.mxu0 0
      %2143 = vmatpush1.bf16.xpose.msra.mxu0 %v2126
      %2144 = vmatprep.subr.bf16.mxu0 0
      %2145 = vmatpush2.bf16.xpose.msra.mxu0 0
      %2146 = vmatprep.subr.bf16.mxu0 0
      %2147 = vmatpush2.bf16.xpose.msra.mxu0 0
      %2148 = vmatprep.subr.bf16.mxu0 0
      %2149 = vmatpush2.bf16.xpose.msra.mxu0 0
      %2150 = vmatprep.subr.bf16.mxu0 0
      %2151 = vmatpush2.bf16.xpose.msra.mxu0 0
      %2152 = vmatprep.subr.bf16.mxu0 0
      %2153 = vmatpush2.bf16.xpose.msra.mxu0 0
      %2154 = vmatprep.subr.bf16.mxu0 0
      %2155 = vmatpush2.bf16.xpose.msra.mxu0 0
      %2156 = vmatprep.subr.bf16.mxu0 0
      %2157 = vmatpush2.bf16.xpose.msra.mxu0 0
      %2158 = vmatprep.subr.bf16.mxu0 0
      %2159 = vmatpush2.bf16.xpose.msra.mxu0 0
      %2160 = vmatprep.mubr.bf16.mxu0 0
      %2161 = vmatmul.mubr.bf16.gmra.mxu0 %v2123
      %v2162 = vpop.f32.mrf.mxu0
      %v2163 = vadd.f32 0.0, %v2162
      %v2164 = vpop.f32.mrf.mxu0
      %v2165 = vpop.f32.mrf.mxu0
      %v2166 = vpop.f32.mrf.mxu0
      %2167 = vdwg.mxu0
      %v2169 = vsel %vm1845, %v1804, 0
      %v2172 = vsel %vm1845, %v1820, 0
      %2174 = vmatprep.subr.bf16.mxu0 0
      %2175 = vmatpush1.bf16.xpose.msra.mxu0 0
      %2176 = vmatprep.subr.bf16.mxu0 0
      %2177 = vmatpush1.bf16.xpose.msra.mxu0 0
      %2178 = vmatprep.subr.bf16.mxu0 0
      %2179 = vmatpush1.bf16.xpose.msra.mxu0 0
      %2180 = vmatprep.subr.bf16.mxu0 0
      %2181 = vmatpush1.bf16.xpose.msra.mxu0 0
      %2182 = vmatprep.subr.bf16.mxu0 0
      %2183 = vmatpush1.bf16.xpose.msra.mxu0 0
      %2184 = vmatprep.subr.bf16.mxu0 0
      %2185 = vmatpush1.bf16.xpose.msra.mxu0 0
      %2186 = vmatprep.subr.bf16.mxu0 0
      %2187 = vmatpush1.bf16.xpose.msra.mxu0 0
      %2188 = vmatprep.subr.bf16.mxu0 0
      %2189 = vmatpush1.bf16.xpose.msra.mxu0 %v2172
      %2190 = vmatprep.subr.bf16.mxu0 0
      %2191 = vmatpush2.bf16.xpose.msra.mxu0 0
      %2192 = vmatprep.subr.bf16.mxu0 0
      %2193 = vmatpush2.bf16.xpose.msra.mxu0 0
      %2194 = vmatprep.subr.bf16.mxu0 0
      %2195 = vmatpush2.bf16.xpose.msra.mxu0 0
      %2196 = vmatprep.subr.bf16.mxu0 0
      %2197 = vmatpush2.bf16.xpose.msra.mxu0 0
      %2198 = vmatprep.subr.bf16.mxu0 0
      %2199 = vmatpush2.bf16.xpose.msra.mxu0 0
      %2200 = vmatprep.subr.bf16.mxu0 0
      %2201 = vmatpush2.bf16.xpose.msra.mxu0 0
      %2202 = vmatprep.subr.bf16.mxu0 0
      %2203 = vmatpush2.bf16.xpose.msra.mxu0 0
      %2204 = vmatprep.subr.bf16.mxu0 0
      %2205 = vmatpush2.bf16.xpose.msra.mxu0 0
      %2206 = vmatprep.mubr.bf16.mxu0 0
      %2207 = vmatmul.mubr.bf16.gmra.mxu0 %v2169
      %v2208 = vpop.f32.mrf.mxu0
      %v2209 = vadd.f32 0.0, %v2208
      %v2210 = vpop.f32.mrf.mxu0
      %v2211 = vpop.f32.mrf.mxu0
      %v2212 = vpop.f32.mrf.mxu0
      %2213 = vdwg.mxu0
      %v2215 = vsel %vm1845, %v1805, 0
      %v2218 = vsel %vm1845, %v1821, 0
      %2220 = vmatprep.subr.bf16.mxu0 0
      %2221 = vmatpush1.bf16.xpose.msra.mxu0 0
      %2222 = vmatprep.subr.bf16.mxu0 0
      %2223 = vmatpush1.bf16.xpose.msra.mxu0 0
      %2224 = vmatprep.subr.bf16.mxu0 0
      %2225 = vmatpush1.bf16.xpose.msra.mxu0 0
      %2226 = vmatprep.subr.bf16.mxu0 0
      %2227 = vmatpush1.bf16.xpose.msra.mxu0 0
      %2228 = vmatprep.subr.bf16.mxu0 0
      %2229 = vmatpush1.bf16.xpose.msra.mxu0 0
      %2230 = vmatprep.subr.bf16.mxu0 0
      %2231 = vmatpush1.bf16.xpose.msra.mxu0 0
      %2232 = vmatprep.subr.bf16.mxu0 0
      %2233 = vmatpush1.bf16.xpose.msra.mxu0 0
      %2234 = vmatprep.subr.bf16.mxu0 0
      %2235 = vmatpush1.bf16.xpose.msra.mxu0 %v2218
      %2236 = vmatprep.subr.bf16.mxu0 0
      %2237 = vmatpush2.bf16.xpose.msra.mxu0 0
      %2238 = vmatprep.subr.bf16.mxu0 0
      %2239 = vmatpush2.bf16.xpose.msra.mxu0 0
      %2240 = vmatprep.subr.bf16.mxu0 0
      %2241 = vmatpush2.bf16.xpose.msra.mxu0 0
      %2242 = vmatprep.subr.bf16.mxu0 0
      %2243 = vmatpush2.bf16.xpose.msra.mxu0 0
      %2244 = vmatprep.subr.bf16.mxu0 0
      %2245 = vmatpush2.bf16.xpose.msra.mxu0 0
      %2246 = vmatprep.subr.bf16.mxu0 0
      %2247 = vmatpush2.bf16.xpose.msra.mxu0 0
      %2248 = vmatprep.subr.bf16.mxu0 0
      %2249 = vmatpush2.bf16.xpose.msra.mxu0 0
      %2250 = vmatprep.subr.bf16.mxu0 0
      %2251 = vmatpush2.bf16.xpose.msra.mxu0 0
      %2252 = vmatprep.mubr.bf16.mxu0 0
      %2253 = vmatmul.mubr.bf16.gmra.mxu0 %v2215
      %v2254 = vpop.f32.mrf.mxu0
      %v2255 = vadd.f32 0.0, %v2254
      %v2256 = vpop.f32.mrf.mxu0
      %v2257 = vpop.f32.mrf.mxu0
      %v2258 = vpop.f32.mrf.mxu0
      %2259 = vdwg.mxu0
      %v2261 = vsel %vm1845, %v1806, 0
      %v2264 = vsel %vm1845, %v1822, 0
      %2266 = vmatprep.subr.bf16.mxu0 0
      %2267 = vmatpush1.bf16.xpose.msra.mxu0 0
      %2268 = vmatprep.subr.bf16.mxu0 0
      %2269 = vmatpush1.bf16.xpose.msra.mxu0 0
      %2270 = vmatprep.subr.bf16.mxu0 0
      %2271 = vmatpush1.bf16.xpose.msra.mxu0 0
      %2272 = vmatprep.subr.bf16.mxu0 0
      %2273 = vmatpush1.bf16.xpose.msra.mxu0 0
      %2274 = vmatprep.subr.bf16.mxu0 0
      %2275 = vmatpush1.bf16.xpose.msra.mxu0 0
      %2276 = vmatprep.subr.bf16.mxu0 0
      %2277 = vmatpush1.bf16.xpose.msra.mxu0 0
      %2278 = vmatprep.subr.bf16.mxu0 0
      %2279 = vmatpush1.bf16.xpose.msra.mxu0 0
      %2280 = vmatprep.subr.bf16.mxu0 0
      %2281 = vmatpush1.bf16.xpose.msra.mxu0 %v2264
      %2282 = vmatprep.subr.bf16.mxu0 0
      %2283 = vmatpush2.bf16.xpose.msra.mxu0 0
      %2284 = vmatprep.subr.bf16.mxu0 0
      %2285 = vmatpush2.bf16.xpose.msra.mxu0 0
      %2286 = vmatprep.subr.bf16.mxu0 0
      %2287 = vmatpush2.bf16.xpose.msra.mxu0 0
      %2288 = vmatprep.subr.bf16.mxu0 0
      %2289 = vmatpush2.bf16.xpose.msra.mxu0 0
      %2290 = vmatprep.subr.bf16.mxu0 0
      %2291 = vmatpush2.bf16.xpose.msra.mxu0 0
      %2292 = vmatprep.subr.bf16.mxu0 0
      %2293 = vmatpush2.bf16.xpose.msra.mxu0 0
      %2294 = vmatprep.subr.bf16.mxu0 0
      %2295 = vmatpush2.bf16.xpose.msra.mxu0 0
      %2296 = vmatprep.subr.bf16.mxu0 0
      %2297 = vmatpush2.bf16.xpose.msra.mxu0 0
      %2298 = vmatprep.mubr.bf16.mxu0 0
      %2299 = vmatmul.mubr.bf16.gmra.mxu0 %v2261
      %v2300 = vpop.f32.mrf.mxu0
      %v2301 = vadd.f32 0.0, %v2300
      %v2302 = vpop.f32.mrf.mxu0
      %v2303 = vpop.f32.mrf.mxu0
      %v2304 = vpop.f32.mrf.mxu0
      %2305 = vdwg.mxu0
      %v2307 = vsel %vm1845, %v1807, 0
      %v2310 = vsel %vm1845, %v1823, 0
      %2312 = vmatprep.subr.bf16.mxu0 0
      %2313 = vmatpush1.bf16.xpose.msra.mxu0 0
      %2314 = vmatprep.subr.bf16.mxu0 0
      %2315 = vmatpush1.bf16.xpose.msra.mxu0 0
      %2316 = vmatprep.subr.bf16.mxu0 0
      %2317 = vmatpush1.bf16.xpose.msra.mxu0 0
      %2318 = vmatprep.subr.bf16.mxu0 0
      %2319 = vmatpush1.bf16.xpose.msra.mxu0 0
      %2320 = vmatprep.subr.bf16.mxu0 0
      %2321 = vmatpush1.bf16.xpose.msra.mxu0 0
      %2322 = vmatprep.subr.bf16.mxu0 0
      %2323 = vmatpush1.bf16.xpose.msra.mxu0 0
      %2324 = vmatprep.subr.bf16.mxu0 0
      %2325 = vmatpush1.bf16.xpose.msra.mxu0 0
      %2326 = vmatprep.subr.bf16.mxu0 0
      %2327 = vmatpush1.bf16.xpose.msra.mxu0 %v2310
      %2328 = vmatprep.subr.bf16.mxu0 0
      %2329 = vmatpush2.bf16.xpose.msra.mxu0 0
      %2330 = vmatprep.subr.bf16.mxu0 0
      %2331 = vmatpush2.bf16.xpose.msra.mxu0 0
      %2332 = vmatprep.subr.bf16.mxu0 0
      %2333 = vmatpush2.bf16.xpose.msra.mxu0 0
      %2334 = vmatprep.subr.bf16.mxu0 0
      %2335 = vmatpush2.bf16.xpose.msra.mxu0 0
      %2336 = vmatprep.subr.bf16.mxu0 0
      %2337 = vmatpush2.bf16.xpose.msra.mxu0 0
      %2338 = vmatprep.subr.bf16.mxu0 0
      %2339 = vmatpush2.bf16.xpose.msra.mxu0 0
      %2340 = vmatprep.subr.bf16.mxu0 0
      %2341 = vmatpush2.bf16.xpose.msra.mxu0 0
      %2342 = vmatprep.subr.bf16.mxu0 0
      %2343 = vmatpush2.bf16.xpose.msra.mxu0 0
      %2344 = vmatprep.mubr.bf16.mxu0 0
      %2345 = vmatmul.mubr.bf16.gmra.mxu0 %v2307
      %v2346 = vpop.f32.mrf.mxu0
      %v2347 = vadd.f32 0.0, %v2346
      %v2348 = vpop.f32.mrf.mxu0
      %v2349 = vpop.f32.mrf.mxu0
      %v2350 = vpop.f32.mrf.mxu0
      %2351 = vdwg.mxu0
      %v2353 = vsel %vm1845, %v1808, 0
      %v2356 = vsel %vm1845, %v1824, 0
      %2358 = vmatprep.subr.bf16.mxu0 0
      %2359 = vmatpush1.bf16.xpose.msra.mxu0 0
      %2360 = vmatprep.subr.bf16.mxu0 0
      %2361 = vmatpush1.bf16.xpose.msra.mxu0 0
      %2362 = vmatprep.subr.bf16.mxu0 0
      %2363 = vmatpush1.bf16.xpose.msra.mxu0 0
      %2364 = vmatprep.subr.bf16.mxu0 0
      %2365 = vmatpush1.bf16.xpose.msra.mxu0 0
      %2366 = vmatprep.subr.bf16.mxu0 0
      %2367 = vmatpush1.bf16.xpose.msra.mxu0 0
      %2368 = vmatprep.subr.bf16.mxu0 0
      %2369 = vmatpush1.bf16.xpose.msra.mxu0 0
      %2370 = vmatprep.subr.bf16.mxu0 0
      %2371 = vmatpush1.bf16.xpose.msra.mxu0 0
      %2372 = vmatprep.subr.bf16.mxu0 0
      %2373 = vmatpush1.bf16.xpose.msra.mxu0 %v2356
      %2374 = vmatprep.subr.bf16.mxu0 0
      %2375 = vmatpush2.bf16.xpose.msra.mxu0 0
      %2376 = vmatprep.subr.bf16.mxu0 0
      %2377 = vmatpush2.bf16.xpose.msra.mxu0 0
      %2378 = vmatprep.subr.bf16.mxu0 0
      %2379 = vmatpush2.bf16.xpose.msra.mxu0 0
      %2380 = vmatprep.subr.bf16.mxu0 0
      %2381 = vmatpush2.bf16.xpose.msra.mxu0 0
      %2382 = vmatprep.subr.bf16.mxu0 0
      %2383 = vmatpush2.bf16.xpose.msra.mxu0 0
      %2384 = vmatprep.subr.bf16.mxu0 0
      %2385 = vmatpush2.bf16.xpose.msra.mxu0 0
      %2386 = vmatprep.subr.bf16.mxu0 0
      %2387 = vmatpush2.bf16.xpose.msra.mxu0 0
      %2388 = vmatprep.subr.bf16.mxu0 0
      %2389 = vmatpush2.bf16.xpose.msra.mxu0 0
      %2390 = vmatprep.mubr.bf16.mxu0 0
      %2391 = vmatmul.mubr.bf16.gmra.mxu0 %v2353
      %v2392 = vpop.f32.mrf.mxu0
      %v2393 = vadd.f32 0.0, %v2392
      %v2394 = vpop.f32.mrf.mxu0
      %v2395 = vpop.f32.mrf.mxu0
      %v2396 = vpop.f32.mrf.mxu0
      %2397 = vdwg.mxu0
      %v2399 = vsel %vm1845, %v1809, 0
      %v2402 = vsel %vm1845, %v1825, 0
      %2404 = vmatprep.subr.bf16.mxu0 0
      %2405 = vmatpush1.bf16.xpose.msra.mxu0 0
      %2406 = vmatprep.subr.bf16.mxu0 0
      %2407 = vmatpush1.bf16.xpose.msra.mxu0 0
      %2408 = vmatprep.subr.bf16.mxu0 0
      %2409 = vmatpush1.bf16.xpose.msra.mxu0 0
      %2410 = vmatprep.subr.bf16.mxu0 0
      %2411 = vmatpush1.bf16.xpose.msra.mxu0 0
      %2412 = vmatprep.subr.bf16.mxu0 0
      %2413 = vmatpush1.bf16.xpose.msra.mxu0 0
      %2414 = vmatprep.subr.bf16.mxu0 0
      %2415 = vmatpush1.bf16.xpose.msra.mxu0 0
      %2416 = vmatprep.subr.bf16.mxu0 0
      %2417 = vmatpush1.bf16.xpose.msra.mxu0 0
      %2418 = vmatprep.subr.bf16.mxu0 0
      %2419 = vmatpush1.bf16.xpose.msra.mxu0 %v2402
      %2420 = vmatprep.subr.bf16.mxu0 0
      %2421 = vmatpush2.bf16.xpose.msra.mxu0 0
      %2422 = vmatprep.subr.bf16.mxu0 0
      %2423 = vmatpush2.bf16.xpose.msra.mxu0 0
      %2424 = vmatprep.subr.bf16.mxu0 0
      %2425 = vmatpush2.bf16.xpose.msra.mxu0 0
      %2426 = vmatprep.subr.bf16.mxu0 0
      %2427 = vmatpush2.bf16.xpose.msra.mxu0 0
      %2428 = vmatprep.subr.bf16.mxu0 0
      %2429 = vmatpush2.bf16.xpose.msra.mxu0 0
      %2430 = vmatprep.subr.bf16.mxu0 0
      %2431 = vmatpush2.bf16.xpose.msra.mxu0 0
      %2432 = vmatprep.subr.bf16.mxu0 0
      %2433 = vmatpush2.bf16.xpose.msra.mxu0 0
      %2434 = vmatprep.subr.bf16.mxu0 0
      %2435 = vmatpush2.bf16.xpose.msra.mxu0 0
      %2436 = vmatprep.mubr.bf16.mxu0 0
      %2437 = vmatmul.mubr.bf16.gmra.mxu0 %v2399
      %v2438 = vpop.f32.mrf.mxu0
      %v2439 = vadd.f32 0.0, %v2438
      %v2440 = vpop.f32.mrf.mxu0
      %v2441 = vpop.f32.mrf.mxu0
      %v2442 = vpop.f32.mrf.mxu0
      %2443 = vdwg.mxu0
      %v2445 = vsel %vm1845, %v1810, 0
      %v2448 = vsel %vm1845, %v1826, 0
      %2450 = vmatprep.subr.bf16.mxu0 0
      %2451 = vmatpush1.bf16.xpose.msra.mxu0 0
      %2452 = vmatprep.subr.bf16.mxu0 0
      %2453 = vmatpush1.bf16.xpose.msra.mxu0 0
      %2454 = vmatprep.subr.bf16.mxu0 0
      %2455 = vmatpush1.bf16.xpose.msra.mxu0 0
      %2456 = vmatprep.subr.bf16.mxu0 0
      %2457 = vmatpush1.bf16.xpose.msra.mxu0 0
      %2458 = vmatprep.subr.bf16.mxu0 0
      %2459 = vmatpush1.bf16.xpose.msra.mxu0 0
      %2460 = vmatprep.subr.bf16.mxu0 0
      %2461 = vmatpush1.bf16.xpose.msra.mxu0 0
      %2462 = vmatprep.subr.bf16.mxu0 0
      %2463 = vmatpush1.bf16.xpose.msra.mxu0 0
      %2464 = vmatprep.subr.bf16.mxu0 0
      %2465 = vmatpush1.bf16.xpose.msra.mxu0 %v2448
      %2466 = vmatprep.subr.bf16.mxu0 0
      %2467 = vmatpush2.bf16.xpose.msra.mxu0 0
      %2468 = vmatprep.subr.bf16.mxu0 0
      %2469 = vmatpush2.bf16.xpose.msra.mxu0 0
      %2470 = vmatprep.subr.bf16.mxu0 0
      %2471 = vmatpush2.bf16.xpose.msra.mxu0 0
      %2472 = vmatprep.subr.bf16.mxu0 0
      %2473 = vmatpush2.bf16.xpose.msra.mxu0 0
      %2474 = vmatprep.subr.bf16.mxu0 0
      %2475 = vmatpush2.bf16.xpose.msra.mxu0 0
      %2476 = vmatprep.subr.bf16.mxu0 0
      %2477 = vmatpush2.bf16.xpose.msra.mxu0 0
      %2478 = vmatprep.subr.bf16.mxu0 0
      %2479 = vmatpush2.bf16.xpose.msra.mxu0 0
      %2480 = vmatprep.subr.bf16.mxu0 0
      %2481 = vmatpush2.bf16.xpose.msra.mxu0 0
      %2482 = vmatprep.mubr.bf16.mxu0 0
      %2483 = vmatmul.mubr.bf16.gmra.mxu0 %v2445
      %v2484 = vpop.f32.mrf.mxu0
      %v2485 = vadd.f32 0.0, %v2484
      %v2486 = vpop.f32.mrf.mxu0
      %v2487 = vpop.f32.mrf.mxu0
      %v2488 = vpop.f32.mrf.mxu0
      %2489 = vdwg.mxu0
      %v2491 = vsel %vm1845, %v1811, 0
      %v2494 = vsel %vm1845, %v1827, 0
      %2496 = vmatprep.subr.bf16.mxu0 0
      %2497 = vmatpush1.bf16.xpose.msra.mxu0 0
      %2498 = vmatprep.subr.bf16.mxu0 0
      %2499 = vmatpush1.bf16.xpose.msra.mxu0 0
      %2500 = vmatprep.subr.bf16.mxu0 0
      %2501 = vmatpush1.bf16.xpose.msra.mxu0 0
      %2502 = vmatprep.subr.bf16.mxu0 0
      %2503 = vmatpush1.bf16.xpose.msra.mxu0 0
      %2504 = vmatprep.subr.bf16.mxu0 0
      %2505 = vmatpush1.bf16.xpose.msra.mxu0 0
      %2506 = vmatprep.subr.bf16.mxu0 0
      %2507 = vmatpush1.bf16.xpose.msra.mxu0 0
      %2508 = vmatprep.subr.bf16.mxu0 0
      %2509 = vmatpush1.bf16.xpose.msra.mxu0 0
      %2510 = vmatprep.subr.bf16.mxu0 0
      %2511 = vmatpush1.bf16.xpose.msra.mxu0 %v2494
      %2512 = vmatprep.subr.bf16.mxu0 0
      %2513 = vmatpush2.bf16.xpose.msra.mxu0 0
      %2514 = vmatprep.subr.bf16.mxu0 0
      %2515 = vmatpush2.bf16.xpose.msra.mxu0 0
      %2516 = vmatprep.subr.bf16.mxu0 0
      %2517 = vmatpush2.bf16.xpose.msra.mxu0 0
      %2518 = vmatprep.subr.bf16.mxu0 0
      %2519 = vmatpush2.bf16.xpose.msra.mxu0 0
      %2520 = vmatprep.subr.bf16.mxu0 0
      %2521 = vmatpush2.bf16.xpose.msra.mxu0 0
      %2522 = vmatprep.subr.bf16.mxu0 0
      %2523 = vmatpush2.bf16.xpose.msra.mxu0 0
      %2524 = vmatprep.subr.bf16.mxu0 0
      %2525 = vmatpush2.bf16.xpose.msra.mxu0 0
      %2526 = vmatprep.subr.bf16.mxu0 0
      %2527 = vmatpush2.bf16.xpose.msra.mxu0 0
      %2528 = vmatprep.mubr.bf16.mxu0 0
      %2529 = vmatmul.mubr.bf16.gmra.mxu0 %v2491
      %v2530 = vpop.f32.mrf.mxu0
      %v2531 = vadd.f32 0.0, %v2530
      %v2532 = vpop.f32.mrf.mxu0
      %v2533 = vpop.f32.mrf.mxu0
      %v2534 = vpop.f32.mrf.mxu0
      %2535 = vdwg.mxu0
      %v2537 = vsel %vm1845, %v1812, 0
      %v2540 = vsel %vm1845, %v1828, 0
      %2542 = vmatprep.subr.bf16.mxu0 0
      %2543 = vmatpush1.bf16.xpose.msra.mxu0 0
      %2544 = vmatprep.subr.bf16.mxu0 0
      %2545 = vmatpush1.bf16.xpose.msra.mxu0 0
      %2546 = vmatprep.subr.bf16.mxu0 0
      %2547 = vmatpush1.bf16.xpose.msra.mxu0 0
      %2548 = vmatprep.subr.bf16.mxu0 0
      %2549 = vmatpush1.bf16.xpose.msra.mxu0 0
      %2550 = vmatprep.subr.bf16.mxu0 0
      %2551 = vmatpush1.bf16.xpose.msra.mxu0 0
      %2552 = vmatprep.subr.bf16.mxu0 0
      %2553 = vmatpush1.bf16.xpose.msra.mxu0 0
      %2554 = vmatprep.subr.bf16.mxu0 0
      %2555 = vmatpush1.bf16.xpose.msra.mxu0 0
      %2556 = vmatprep.subr.bf16.mxu0 0
      %2557 = vmatpush1.bf16.xpose.msra.mxu0 %v2540
      %2558 = vmatprep.subr.bf16.mxu0 0
      %2559 = vmatpush2.bf16.xpose.msra.mxu0 0
      %2560 = vmatprep.subr.bf16.mxu0 0
      %2561 = vmatpush2.bf16.xpose.msra.mxu0 0
      %2562 = vmatprep.subr.bf16.mxu0 0
      %2563 = vmatpush2.bf16.xpose.msra.mxu0 0
      %2564 = vmatprep.subr.bf16.mxu0 0
      %2565 = vmatpush2.bf16.xpose.msra.mxu0 0
      %2566 = vmatprep.subr.bf16.mxu0 0
      %2567 = vmatpush2.bf16.xpose.msra.mxu0 0
      %2568 = vmatprep.subr.bf16.mxu0 0
      %2569 = vmatpush2.bf16.xpose.msra.mxu0 0
      %2570 = vmatprep.subr.bf16.mxu0 0
      %2571 = vmatpush2.bf16.xpose.msra.mxu0 0
      %2572 = vmatprep.subr.bf16.mxu0 0
      %2573 = vmatpush2.bf16.xpose.msra.mxu0 0
      %2574 = vmatprep.mubr.bf16.mxu0 0
      %2575 = vmatmul.mubr.bf16.gmra.mxu0 %v2537
      %v2576 = vpop.f32.mrf.mxu0
      %v2577 = vadd.f32 0.0, %v2576
      %v2578 = vpop.f32.mrf.mxu0
      %v2579 = vpop.f32.mrf.mxu0
      %v2580 = vpop.f32.mrf.mxu0
      %2581 = vdwg.mxu0
      %v2582 = vmul.f32 %v1887, 0.25
      %v2583 = vmul.f32 %v1933, 0.25
      %v2584 = vmul.f32 %v1979, 0.25
      %v2585 = vmul.f32 %v2025, 0.25
      %v2586 = vmul.f32 %v2071, 0.25
      %v2587 = vmul.f32 %v2117, 0.25
      %v2588 = vmul.f32 %v2163, 0.25
      %v2589 = vmul.f32 %v2209, 0.25
      %v2590 = vmul.f32 %v2255, 0.25
      %v2591 = vmul.f32 %v2301, 0.25
      %v2592 = vmul.f32 %v2347, 0.25
      %v2593 = vmul.f32 %v2393, 0.25
      %v2594 = vmul.f32 %v2439, 0.25
      %v2595 = vmul.f32 %v2485, 0.25
      %v2596 = vmul.f32 %v2531, 0.25
      %v2597 = vmul.f32 %v2577, 0.25
      %v2598 = vlaneseq
      %v2599 = vshrl.u32 %v2598, 7
      %v2600 = vsub.s32 0, %v2599
      %v2601 = vrot.slane %v1722, %v2600
      %v2602 = vlaneseq
      %v2603 = vshrl.u32 %v2602, 7
      %v2604 = vsub.s32 0, %v2603
      %v2605 = vrot.slane %v1736, %v2604
      %v2606 = vlaneseq
      %v2607 = vshrl.u32 %v2606, 7
      %v2608 = vsub.s32 0, %v2607
      %v2609 = vrot.slane %v1744, %v2608
      %v2610 = vlaneseq
      %v2611 = vshrl.u32 %v2610, 7
      %v2612 = vsub.s32 0, %v2611
      %v2613 = vrot.slane %v1746, %v2612
      %v2614 = vlaneseq
      %v2615 = vshrl.u32 %v2614, 7
      %v2616 = vsub.s32 0, %v2615
      %v2617 = vrot.slane %v1729, %v2616
      %v2618 = vlaneseq
      %v2619 = vshrl.u32 %v2618, 7
      %v2620 = vsub.s32 0, %v2619
      %v2621 = vrot.slane %v1743, %v2620
      %v2622 = vlaneseq
      %v2623 = vshrl.u32 %v2622, 7
      %v2624 = vsub.s32 0, %v2623
      %v2625 = vrot.slane %v1745, %v2624
      %v2626 = vlaneseq
      %v2627 = vshrl.u32 %v2626, 7
      %v2628 = vsub.s32 0, %v2627
      %v2629 = vrot.slane %v1747, %v2628
      %v2630 = vlaneseq
      %v2631 = vshrl.u32 %v2630, 7
      %v2632 = vsub.s32 0, %v2631
      %v2633 = vrot.slane %v1771, %v2632
      %v2634 = vlaneseq
      %v2635 = vshrl.u32 %v2634, 7
      %v2636 = vsub.s32 0, %v2635
      %v2637 = vrot.slane %v1785, %v2636
      %v2638 = vlaneseq
      %v2639 = vshrl.u32 %v2638, 7
      %v2640 = vsub.s32 0, %v2639
      %v2641 = vrot.slane %v1793, %v2640
      %v2642 = vlaneseq
      %v2643 = vshrl.u32 %v2642, 7
      %v2644 = vsub.s32 0, %v2643
      %v2645 = vrot.slane %v1795, %v2644
      %v2646 = vlaneseq
      %v2647 = vshrl.u32 %v2646, 7
      %v2648 = vsub.s32 0, %v2647
      %v2649 = vrot.slane %v1778, %v2648
      %v2650 = vlaneseq
      %v2651 = vshrl.u32 %v2650, 7
      %v2652 = vsub.s32 0, %v2651
      %v2653 = vrot.slane %v1792, %v2652
      %v2654 = vlaneseq
      %v2655 = vshrl.u32 %v2654, 7
      %v2656 = vsub.s32 0, %v2655
      %v2657 = vrot.slane %v1794, %v2656
      %v2658 = vlaneseq
      %v2659 = vshrl.u32 %v2658, 7
      %v2660 = vsub.s32 0, %v2659
      %v2661 = vrot.slane %v1796, %v2660
      %v2678 = vadd.f32 %v2582, %v2601
      %v2679 = vadd.f32 %v2583, %v2605
      %v2680 = vadd.f32 %v2584, %v2609
      %v2681 = vadd.f32 %v2585, %v2613
      %v2682 = vadd.f32 %v2586, %v2617
      %v2683 = vadd.f32 %v2587, %v2621
      %v2684 = vadd.f32 %v2588, %v2625
      %v2685 = vadd.f32 %v2589, %v2629
      %v2686 = vadd.f32 %v2590, %v2633
      %v2687 = vadd.f32 %v2591, %v2637
      %v2688 = vadd.f32 %v2592, %v2641
      %v2689 = vadd.f32 %v2593, %v2645
      %v2690 = vadd.f32 %v2594, %v2649
      %v2691 = vadd.f32 %v2595, %v2653
      %v2692 = vadd.f32 %v2596, %v2657
      %v2693 = vadd.f32 %v2597, %v2661
      %vm2694 = vcmask 64512
      %v2695 = vsel %vm2694, %v2678, -inf
      %2696 = vmax.xlane.f32.xlu0 %v2695
      %v2697 = vpop.xlane.xlu0 %2696
      %v2698 = vsel %vm2694, %v2679, -inf
      %2699 = vmax.xlane.f32.xlu0 %v2698
      %v2700 = vpop.xlane.xlu0 %2699
      %v2701 = vsel %vm2694, %v2680, -inf
      %2702 = vmax.xlane.f32.xlu0 %v2701
      %v2703 = vpop.xlane.xlu0 %2702
      %v2704 = vsel %vm2694, %v2681, -inf
      %2705 = vmax.xlane.f32.xlu0 %v2704
      %v2706 = vpop.xlane.xlu0 %2705
      %v2707 = vsel %vm2694, %v2682, -inf
      %2708 = vmax.xlane.f32.xlu0 %v2707
      %v2709 = vpop.xlane.xlu0 %2708
      %v2710 = vsel %vm2694, %v2683, -inf
      %2711 = vmax.xlane.f32.xlu0 %v2710
      %v2712 = vpop.xlane.xlu0 %2711
      %v2713 = vsel %vm2694, %v2684, -inf
      %2714 = vmax.xlane.f32.xlu0 %v2713
      %v2715 = vpop.xlane.xlu0 %2714
      %v2716 = vsel %vm2694, %v2685, -inf
      %2717 = vmax.xlane.f32.xlu0 %v2716
      %v2718 = vpop.xlane.xlu0 %2717
      %v2719 = vsel %vm2694, %v2686, -inf
      %2720 = vmax.xlane.f32.xlu0 %v2719
      %v2721 = vpop.xlane.xlu0 %2720
      %v2722 = vsel %vm2694, %v2687, -inf
      %2723 = vmax.xlane.f32.xlu0 %v2722
      %v2724 = vpop.xlane.xlu0 %2723
      %v2725 = vsel %vm2694, %v2688, -inf
      %2726 = vmax.xlane.f32.xlu0 %v2725
      %v2727 = vpop.xlane.xlu0 %2726
      %v2728 = vsel %vm2694, %v2689, -inf
      %2729 = vmax.xlane.f32.xlu0 %v2728
      %v2730 = vpop.xlane.xlu0 %2729
      %v2731 = vsel %vm2694, %v2690, -inf
      %2732 = vmax.xlane.f32.xlu0 %v2731
      %v2733 = vpop.xlane.xlu0 %2732
      %v2734 = vsel %vm2694, %v2691, -inf
      %2735 = vmax.xlane.f32.xlu0 %v2734
      %v2736 = vpop.xlane.xlu0 %2735
      %v2737 = vsel %vm2694, %v2692, -inf
      %2738 = vmax.xlane.f32.xlu0 %v2737
      %v2739 = vpop.xlane.xlu0 %2738
      %v2740 = vsel %vm2694, %v2693, -inf
      %2741 = vmax.xlane.f32.xlu0 %v2740
      %v2742 = vpop.xlane.xlu0 %2741
      %v2743 = vsub.f32 %v2678, %v2697
      %v2744 = vsub.f32 %v2679, %v2700
      %v2745 = vsub.f32 %v2680, %v2703
      %v2746 = vsub.f32 %v2681, %v2706
      %v2747 = vsub.f32 %v2682, %v2709
      %v2748 = vsub.f32 %v2683, %v2712
      %v2749 = vsub.f32 %v2684, %v2715
      %v2750 = vsub.f32 %v2685, %v2718
      %v2751 = vsub.f32 %v2686, %v2721
      %v2752 = vsub.f32 %v2687, %v2724
      %v2753 = vsub.f32 %v2688, %v2727
      %v2754 = vsub.f32 %v2689, %v2730
      %v2755 = vsub.f32 %v2690, %v2733
      %v2756 = vsub.f32 %v2691, %v2736
      %v2757 = vsub.f32 %v2692, %v2739
      %v2758 = vsub.f32 %v2693, %v2742
      %v2759 = vmul.f32 %v2743, 1.442695
      %v2760 = vpow.pop %v2759
      %v2761 = vmul.f32 %v2744, 1.442695
      %v2762 = vpow.pop %v2761
      %v2763 = vmul.f32 %v2745, 1.442695
      %v2764 = vpow.pop %v2763
      %v2765 = vmul.f32 %v2746, 1.442695
      %v2766 = vpow.pop %v2765
      %v2767 = vmul.f32 %v2747, 1.442695
      %v2768 = vpow.pop %v2767
      %v2769 = vmul.f32 %v2748, 1.442695
      %v2770 = vpow.pop %v2769
      %v2771 = vmul.f32 %v2749, 1.442695
      %v2772 = vpow.pop %v2771
      %v2773 = vmul.f32 %v2750, 1.442695
      %v2774 = vpow.pop %v2773
      %v2775 = vmul.f32 %v2751, 1.442695
      %v2776 = vpow.pop %v2775
      %v2777 = vmul.f32 %v2752, 1.442695
      %v2778 = vpow.pop %v2777
      %v2779 = vmul.f32 %v2753, 1.442695
      %v2780 = vpow.pop %v2779
      %v2781 = vmul.f32 %v2754, 1.442695
      %v2782 = vpow.pop %v2781
      %v2783 = vmul.f32 %v2755, 1.442695
      %v2784 = vpow.pop %v2783
      %v2785 = vmul.f32 %v2756, 1.442695
      %v2786 = vpow.pop %v2785
      %v2787 = vmul.f32 %v2757, 1.442695
      %v2788 = vpow.pop %v2787
      %v2789 = vmul.f32 %v2758, 1.442695
      %v2790 = vpow.pop %v2789
      %v2791 = vsel %vm2694, %v2760, 0.0
      %2792 = vadd.xlane.f32.xlu0 %v2791
      %v2793 = vpop.xlane.xlu0 %2792
      %v2794 = vsel %vm2694, %v2762, 0.0
      %2795 = vadd.xlane.f32.xlu0 %v2794
      %v2796 = vpop.xlane.xlu0 %2795
      %v2797 = vsel %vm2694, %v2764, 0.0
      %2798 = vadd.xlane.f32.xlu0 %v2797
      %v2799 = vpop.xlane.xlu0 %2798
      %v2800 = vsel %vm2694, %v2766, 0.0
      %2801 = vadd.xlane.f32.xlu0 %v2800
      %v2802 = vpop.xlane.xlu0 %2801
      %v2803 = vsel %vm2694, %v2768, 0.0
      %2804 = vadd.xlane.f32.xlu0 %v2803
      %v2805 = vpop.xlane.xlu0 %2804
      %v2806 = vsel %vm2694, %v2770, 0.0
      %2807 = vadd.xlane.f32.xlu0 %v2806
      %v2808 = vpop.xlane.xlu0 %2807
      %v2809 = vsel %vm2694, %v2772, 0.0
      %2810 = vadd.xlane.f32.xlu0 %v2809
      %v2811 = vpop.xlane.xlu0 %2810
      %v2812 = vsel %vm2694, %v2774, 0.0
      %2813 = vadd.xlane.f32.xlu0 %v2812
      %v2814 = vpop.xlane.xlu0 %2813
      %v2815 = vsel %vm2694, %v2776, 0.0
      %2816 = vadd.xlane.f32.xlu0 %v2815
      %v2817 = vpop.xlane.xlu0 %2816
      %v2818 = vsel %vm2694, %v2778, 0.0
      %2819 = vadd.xlane.f32.xlu0 %v2818
      %v2820 = vpop.xlane.xlu0 %2819
      %v2821 = vsel %vm2694, %v2780, 0.0
      %2822 = vadd.xlane.f32.xlu0 %v2821
      %v2823 = vpop.xlane.xlu0 %2822
      %v2824 = vsel %vm2694, %v2782, 0.0
      %2825 = vadd.xlane.f32.xlu0 %v2824
      %v2826 = vpop.xlane.xlu0 %2825
      %v2827 = vsel %vm2694, %v2784, 0.0
      %2828 = vadd.xlane.f32.xlu0 %v2827
      %v2829 = vpop.xlane.xlu0 %2828
      %v2830 = vsel %vm2694, %v2786, 0.0
      %2831 = vadd.xlane.f32.xlu0 %v2830
      %v2832 = vpop.xlane.xlu0 %2831
      %v2833 = vsel %vm2694, %v2788, 0.0
      %2834 = vadd.xlane.f32.xlu0 %v2833
      %v2835 = vpop.xlane.xlu0 %2834
      %v2836 = vsel %vm2694, %v2790, 0.0
      %2837 = vadd.xlane.f32.xlu0 %v2836
      %v2838 = vpop.xlane.xlu0 %2837
      %v2839 = vrcp.pop %v2793
      %v2840 = vrcp.pop %v2796
      %v2841 = vrcp.pop %v2799
      %v2842 = vrcp.pop %v2802
      %v2843 = vrcp.pop %v2805
      %v2844 = vrcp.pop %v2808
      %v2845 = vrcp.pop %v2811
      %v2846 = vrcp.pop %v2814
      %v2847 = vrcp.pop %v2817
      %v2848 = vrcp.pop %v2820
      %v2849 = vrcp.pop %v2823
      %v2850 = vrcp.pop %v2826
      %v2851 = vrcp.pop %v2829
      %v2852 = vrcp.pop %v2832
      %v2853 = vrcp.pop %v2835
      %v2854 = vrcp.pop %v2838
      %v2855 = vmul.f32 %v2760, %v2839
      %v2856 = vmul.f32 %v2762, %v2840
      %v2857 = vmul.f32 %v2764, %v2841
      %v2858 = vmul.f32 %v2766, %v2842
      %v2859 = vmul.f32 %v2768, %v2843
      %v2860 = vmul.f32 %v2770, %v2844
      %v2861 = vmul.f32 %v2772, %v2845
      %v2862 = vmul.f32 %v2774, %v2846
      %v2863 = vmul.f32 %v2776, %v2847
      %v2864 = vmul.f32 %v2778, %v2848
      %v2865 = vmul.f32 %v2780, %v2849
      %v2866 = vmul.f32 %v2782, %v2850
      %v2867 = vmul.f32 %v2784, %v2851
      %v2868 = vmul.f32 %v2786, %v2852
      %v2869 = vmul.f32 %v2788, %v2853
      %v2870 = vmul.f32 %v2790, %v2854
      %v2871 = vpack.c.bf16 %v2855, %v2855
      %v2872 = vpack.c.bf16 %v2856, %v2856
      %v2873 = vpack.c.bf16 %v2857, %v2857
      %v2874 = vpack.c.bf16 %v2858, %v2858
      %v2875 = vpack.c.bf16 %v2859, %v2859
      %v2876 = vpack.c.bf16 %v2860, %v2860
      %v2877 = vpack.c.bf16 %v2861, %v2861
      %v2878 = vpack.c.bf16 %v2862, %v2862
      %v2879 = vpack.c.bf16 %v2863, %v2863
      %v2880 = vpack.c.bf16 %v2864, %v2864
      %v2881 = vpack.c.bf16 %v2865, %v2865
      %v2882 = vpack.c.bf16 %v2866, %v2866
      %v2883 = vpack.c.bf16 %v2867, %v2867
      %v2884 = vpack.c.bf16 %v2868, %v2868
      %v2885 = vpack.c.bf16 %v2869, %v2869
      %v2886 = vpack.c.bf16 %v2870, %v2870
      %v2888 = vsel %vm2694, %v2871, 0
      %vm2890 = vcmask 1043456
      %v2892 = vsel %vm2890, %v1829, 0
      %2894 = vmatprep.subr.bf16.mxu0 0
      %2895 = vmatpush1.bf16.msra.mxu0 0
      %2896 = vmatprep.subr.bf16.mxu0 0
      %2897 = vmatpush1.bf16.msra.mxu0 0
      %2898 = vmatprep.subr.bf16.mxu0 0
      %2899 = vmatpush1.bf16.msra.mxu0 0
      %2900 = vmatprep.subr.bf16.mxu0 0
      %2901 = vmatpush1.bf16.msra.mxu0 0
      %2902 = vmatprep.subr.bf16.mxu0 0
      %2903 = vmatpush1.bf16.msra.mxu0 0
      %2904 = vmatprep.subr.bf16.mxu0 0
      %2905 = vmatpush1.bf16.msra.mxu0 0
      %2906 = vmatprep.subr.bf16.mxu0 0
      %2907 = vmatpush1.bf16.msra.mxu0 0
      %2908 = vmatprep.subr.bf16.mxu0 0
      %2909 = vmatpush1.bf16.msra.mxu0 %v2892
      %2910 = vmatprep.subr.bf16.mxu0 0
      %2911 = vmatpush2.bf16.msra.mxu0 0
      %2912 = vmatprep.subr.bf16.mxu0 0
      %2913 = vmatpush2.bf16.msra.mxu0 0
      %2914 = vmatprep.subr.bf16.mxu0 0
      %2915 = vmatpush2.bf16.msra.mxu0 0
      %2916 = vmatprep.subr.bf16.mxu0 0
      %2917 = vmatpush2.bf16.msra.mxu0 0
      %2918 = vmatprep.subr.bf16.mxu0 0
      %2919 = vmatpush2.bf16.msra.mxu0 0
      %2920 = vmatprep.subr.bf16.mxu0 0
      %2921 = vmatpush2.bf16.msra.mxu0 0
      %2922 = vmatprep.subr.bf16.mxu0 0
      %2923 = vmatpush2.bf16.msra.mxu0 0
      %2924 = vmatprep.subr.bf16.mxu0 0
      %2925 = vmatpush2.bf16.msra.mxu0 0
      %2926 = vmatprep.mubr.bf16.mxu0 0
      %2927 = vmatmul.mubr.bf16.gmra.mxu0 %v2888
      %v2928 = vpop.f32.mrf.mxu0
      %v2929 = vadd.f32 0.0, %v2928
      %v2930 = vpop.f32.mrf.mxu0
      %v2931 = vpop.f32.mrf.mxu0
      %v2932 = vpop.f32.mrf.mxu0
      %2933 = vdwg.mxu0
      %v2935 = vsel %vm2694, %v2872, 0
      %v2938 = vsel %vm2890, %v1830, 0
      %2940 = vmatprep.subr.bf16.mxu0 0
      %2941 = vmatpush1.bf16.msra.mxu0 0
      %2942 = vmatprep.subr.bf16.mxu0 0
      %2943 = vmatpush1.bf16.msra.mxu0 0
      %2944 = vmatprep.subr.bf16.mxu0 0
      %2945 = vmatpush1.bf16.msra.mxu0 0
      %2946 = vmatprep.subr.bf16.mxu0 0
      %2947 = vmatpush1.bf16.msra.mxu0 0
      %2948 = vmatprep.subr.bf16.mxu0 0
      %2949 = vmatpush1.bf16.msra.mxu0 0
      %2950 = vmatprep.subr.bf16.mxu0 0
      %2951 = vmatpush1.bf16.msra.mxu0 0
      %2952 = vmatprep.subr.bf16.mxu0 0
      %2953 = vmatpush1.bf16.msra.mxu0 0
      %2954 = vmatprep.subr.bf16.mxu0 0
      %2955 = vmatpush1.bf16.msra.mxu0 %v2938
      %2956 = vmatprep.subr.bf16.mxu0 0
      %2957 = vmatpush2.bf16.msra.mxu0 0
      %2958 = vmatprep.subr.bf16.mxu0 0
      %2959 = vmatpush2.bf16.msra.mxu0 0
      %2960 = vmatprep.subr.bf16.mxu0 0
      %2961 = vmatpush2.bf16.msra.mxu0 0
      %2962 = vmatprep.subr.bf16.mxu0 0
      %2963 = vmatpush2.bf16.msra.mxu0 0
      %2964 = vmatprep.subr.bf16.mxu0 0
      %2965 = vmatpush2.bf16.msra.mxu0 0
      %2966 = vmatprep.subr.bf16.mxu0 0
      %2967 = vmatpush2.bf16.msra.mxu0 0
      %2968 = vmatprep.subr.bf16.mxu0 0
      %2969 = vmatpush2.bf16.msra.mxu0 0
      %2970 = vmatprep.subr.bf16.mxu0 0
      %2971 = vmatpush2.bf16.msra.mxu0 0
      %2972 = vmatprep.mubr.bf16.mxu0 0
      %2973 = vmatmul.mubr.bf16.gmra.mxu0 %v2935
      %v2974 = vpop.f32.mrf.mxu0
      %v2975 = vadd.f32 0.0, %v2974
      %v2976 = vpop.f32.mrf.mxu0
      %v2977 = vpop.f32.mrf.mxu0
      %v2978 = vpop.f32.mrf.mxu0
      %2979 = vdwg.mxu0
      %v2981 = vsel %vm2694, %v2873, 0
      %v2984 = vsel %vm2890, %v1831, 0
      %2986 = vmatprep.subr.bf16.mxu0 0
      %2987 = vmatpush1.bf16.msra.mxu0 0
      %2988 = vmatprep.subr.bf16.mxu0 0
      %2989 = vmatpush1.bf16.msra.mxu0 0
      %2990 = vmatprep.subr.bf16.mxu0 0
      %2991 = vmatpush1.bf16.msra.mxu0 0
      %2992 = vmatprep.subr.bf16.mxu0 0
      %2993 = vmatpush1.bf16.msra.mxu0 0
      %2994 = vmatprep.subr.bf16.mxu0 0
      %2995 = vmatpush1.bf16.msra.mxu0 0
      %2996 = vmatprep.subr.bf16.mxu0 0
      %2997 = vmatpush1.bf16.msra.mxu0 0
      %2998 = vmatprep.subr.bf16.mxu0 0
      %2999 = vmatpush1.bf16.msra.mxu0 0
      %3000 = vmatprep.subr.bf16.mxu0 0
      %3001 = vmatpush1.bf16.msra.mxu0 %v2984
      %3002 = vmatprep.subr.bf16.mxu0 0
      %3003 = vmatpush2.bf16.msra.mxu0 0
      %3004 = vmatprep.subr.bf16.mxu0 0
      %3005 = vmatpush2.bf16.msra.mxu0 0
      %3006 = vmatprep.subr.bf16.mxu0 0
      %3007 = vmatpush2.bf16.msra.mxu0 0
      %3008 = vmatprep.subr.bf16.mxu0 0
      %3009 = vmatpush2.bf16.msra.mxu0 0
      %3010 = vmatprep.subr.bf16.mxu0 0
      %3011 = vmatpush2.bf16.msra.mxu0 0
      %3012 = vmatprep.subr.bf16.mxu0 0
      %3013 = vmatpush2.bf16.msra.mxu0 0
      %3014 = vmatprep.subr.bf16.mxu0 0
      %3015 = vmatpush2.bf16.msra.mxu0 0
      %3016 = vmatprep.subr.bf16.mxu0 0
      %3017 = vmatpush2.bf16.msra.mxu0 0
      %3018 = vmatprep.mubr.bf16.mxu0 0
      %3019 = vmatmul.mubr.bf16.gmra.mxu0 %v2981
      %v3020 = vpop.f32.mrf.mxu0
      %v3021 = vadd.f32 0.0, %v3020
      %v3022 = vpop.f32.mrf.mxu0
      %v3023 = vpop.f32.mrf.mxu0
      %v3024 = vpop.f32.mrf.mxu0
      %3025 = vdwg.mxu0
      %v3027 = vsel %vm2694, %v2874, 0
      %v3030 = vsel %vm2890, %v1832, 0
      %3032 = vmatprep.subr.bf16.mxu0 0
      %3033 = vmatpush1.bf16.msra.mxu0 0
      %3034 = vmatprep.subr.bf16.mxu0 0
      %3035 = vmatpush1.bf16.msra.mxu0 0
      %3036 = vmatprep.subr.bf16.mxu0 0
      %3037 = vmatpush1.bf16.msra.mxu0 0
      %3038 = vmatprep.subr.bf16.mxu0 0
      %3039 = vmatpush1.bf16.msra.mxu0 0
      %3040 = vmatprep.subr.bf16.mxu0 0
      %3041 = vmatpush1.bf16.msra.mxu0 0
      %3042 = vmatprep.subr.bf16.mxu0 0
      %3043 = vmatpush1.bf16.msra.mxu0 0
      %3044 = vmatprep.subr.bf16.mxu0 0
      %3045 = vmatpush1.bf16.msra.mxu0 0
      %3046 = vmatprep.subr.bf16.mxu0 0
      %3047 = vmatpush1.bf16.msra.mxu0 %v3030
      %3048 = vmatprep.subr.bf16.mxu0 0
      %3049 = vmatpush2.bf16.msra.mxu0 0
      %3050 = vmatprep.subr.bf16.mxu0 0
      %3051 = vmatpush2.bf16.msra.mxu0 0
      %3052 = vmatprep.subr.bf16.mxu0 0
      %3053 = vmatpush2.bf16.msra.mxu0 0
      %3054 = vmatprep.subr.bf16.mxu0 0
      %3055 = vmatpush2.bf16.msra.mxu0 0
      %3056 = vmatprep.subr.bf16.mxu0 0
      %3057 = vmatpush2.bf16.msra.mxu0 0
      %3058 = vmatprep.subr.bf16.mxu0 0
      %3059 = vmatpush2.bf16.msra.mxu0 0
      %3060 = vmatprep.subr.bf16.mxu0 0
      %3061 = vmatpush2.bf16.msra.mxu0 0
      %3062 = vmatprep.subr.bf16.mxu0 0
      %3063 = vmatpush2.bf16.msra.mxu0 0
      %3064 = vmatprep.mubr.bf16.mxu0 0
      %3065 = vmatmul.mubr.bf16.gmra.mxu0 %v3027
      %v3066 = vpop.f32.mrf.mxu0
      %v3067 = vadd.f32 0.0, %v3066
      %v3068 = vpop.f32.mrf.mxu0
      %v3069 = vpop.f32.mrf.mxu0
      %v3070 = vpop.f32.mrf.mxu0
      %3071 = vdwg.mxu0
      %v3073 = vsel %vm2694, %v2875, 0
      %v3076 = vsel %vm2890, %v1833, 0
      %3078 = vmatprep.subr.bf16.mxu0 0
      %3079 = vmatpush1.bf16.msra.mxu0 0
      %3080 = vmatprep.subr.bf16.mxu0 0
      %3081 = vmatpush1.bf16.msra.mxu0 0
      %3082 = vmatprep.subr.bf16.mxu0 0
      %3083 = vmatpush1.bf16.msra.mxu0 0
      %3084 = vmatprep.subr.bf16.mxu0 0
      %3085 = vmatpush1.bf16.msra.mxu0 0
      %3086 = vmatprep.subr.bf16.mxu0 0
      %3087 = vmatpush1.bf16.msra.mxu0 0
      %3088 = vmatprep.subr.bf16.mxu0 0
      %3089 = vmatpush1.bf16.msra.mxu0 0
      %3090 = vmatprep.subr.bf16.mxu0 0
      %3091 = vmatpush1.bf16.msra.mxu0 0
      %3092 = vmatprep.subr.bf16.mxu0 0
      %3093 = vmatpush1.bf16.msra.mxu0 %v3076
      %3094 = vmatprep.subr.bf16.mxu0 0
      %3095 = vmatpush2.bf16.msra.mxu0 0
      %3096 = vmatprep.subr.bf16.mxu0 0
      %3097 = vmatpush2.bf16.msra.mxu0 0
      %3098 = vmatprep.subr.bf16.mxu0 0
      %3099 = vmatpush2.bf16.msra.mxu0 0
      %3100 = vmatprep.subr.bf16.mxu0 0
      %3101 = vmatpush2.bf16.msra.mxu0 0
      %3102 = vmatprep.subr.bf16.mxu0 0
      %3103 = vmatpush2.bf16.msra.mxu0 0
      %3104 = vmatprep.subr.bf16.mxu0 0
      %3105 = vmatpush2.bf16.msra.mxu0 0
      %3106 = vmatprep.subr.bf16.mxu0 0
      %3107 = vmatpush2.bf16.msra.mxu0 0
      %3108 = vmatprep.subr.bf16.mxu0 0
      %3109 = vmatpush2.bf16.msra.mxu0 0
      %3110 = vmatprep.mubr.bf16.mxu0 0
      %3111 = vmatmul.mubr.bf16.gmra.mxu0 %v3073
      %v3112 = vpop.f32.mrf.mxu0
      %v3113 = vadd.f32 0.0, %v3112
      %v3114 = vpop.f32.mrf.mxu0
      %v3115 = vpop.f32.mrf.mxu0
      %v3116 = vpop.f32.mrf.mxu0
      %3117 = vdwg.mxu0
      %v3119 = vsel %vm2694, %v2876, 0
      %v3122 = vsel %vm2890, %v1834, 0
      %3124 = vmatprep.subr.bf16.mxu0 0
      %3125 = vmatpush1.bf16.msra.mxu0 0
      %3126 = vmatprep.subr.bf16.mxu0 0
      %3127 = vmatpush1.bf16.msra.mxu0 0
      %3128 = vmatprep.subr.bf16.mxu0 0
      %3129 = vmatpush1.bf16.msra.mxu0 0
      %3130 = vmatprep.subr.bf16.mxu0 0
      %3131 = vmatpush1.bf16.msra.mxu0 0
      %3132 = vmatprep.subr.bf16.mxu0 0
      %3133 = vmatpush1.bf16.msra.mxu0 0
      %3134 = vmatprep.subr.bf16.mxu0 0
      %3135 = vmatpush1.bf16.msra.mxu0 0
      %3136 = vmatprep.subr.bf16.mxu0 0
      %3137 = vmatpush1.bf16.msra.mxu0 0
      %3138 = vmatprep.subr.bf16.mxu0 0
      %3139 = vmatpush1.bf16.msra.mxu0 %v3122
      %3140 = vmatprep.subr.bf16.mxu0 0
      %3141 = vmatpush2.bf16.msra.mxu0 0
      %3142 = vmatprep.subr.bf16.mxu0 0
      %3143 = vmatpush2.bf16.msra.mxu0 0
      %3144 = vmatprep.subr.bf16.mxu0 0
      %3145 = vmatpush2.bf16.msra.mxu0 0
      %3146 = vmatprep.subr.bf16.mxu0 0
      %3147 = vmatpush2.bf16.msra.mxu0 0
      %3148 = vmatprep.subr.bf16.mxu0 0
      %3149 = vmatpush2.bf16.msra.mxu0 0
      %3150 = vmatprep.subr.bf16.mxu0 0
      %3151 = vmatpush2.bf16.msra.mxu0 0
      %3152 = vmatprep.subr.bf16.mxu0 0
      %3153 = vmatpush2.bf16.msra.mxu0 0
      %3154 = vmatprep.subr.bf16.mxu0 0
      %3155 = vmatpush2.bf16.msra.mxu0 0
      %3156 = vmatprep.mubr.bf16.mxu0 0
      %3157 = vmatmul.mubr.bf16.gmra.mxu0 %v3119
      %v3158 = vpop.f32.mrf.mxu0
      %v3159 = vadd.f32 0.0, %v3158
      %v3160 = vpop.f32.mrf.mxu0
      %v3161 = vpop.f32.mrf.mxu0
      %v3162 = vpop.f32.mrf.mxu0
      %3163 = vdwg.mxu0
      %v3165 = vsel %vm2694, %v2877, 0
      %v3168 = vsel %vm2890, %v1835, 0
      %3170 = vmatprep.subr.bf16.mxu0 0
      %3171 = vmatpush1.bf16.msra.mxu0 0
      %3172 = vmatprep.subr.bf16.mxu0 0
      %3173 = vmatpush1.bf16.msra.mxu0 0
      %3174 = vmatprep.subr.bf16.mxu0 0
      %3175 = vmatpush1.bf16.msra.mxu0 0
      %3176 = vmatprep.subr.bf16.mxu0 0
      %3177 = vmatpush1.bf16.msra.mxu0 0
      %3178 = vmatprep.subr.bf16.mxu0 0
      %3179 = vmatpush1.bf16.msra.mxu0 0
      %3180 = vmatprep.subr.bf16.mxu0 0
      %3181 = vmatpush1.bf16.msra.mxu0 0
      %3182 = vmatprep.subr.bf16.mxu0 0
      %3183 = vmatpush1.bf16.msra.mxu0 0
      %3184 = vmatprep.subr.bf16.mxu0 0
      %3185 = vmatpush1.bf16.msra.mxu0 %v3168
      %3186 = vmatprep.subr.bf16.mxu0 0
      %3187 = vmatpush2.bf16.msra.mxu0 0
      %3188 = vmatprep.subr.bf16.mxu0 0
      %3189 = vmatpush2.bf16.msra.mxu0 0
      %3190 = vmatprep.subr.bf16.mxu0 0
      %3191 = vmatpush2.bf16.msra.mxu0 0
      %3192 = vmatprep.subr.bf16.mxu0 0
      %3193 = vmatpush2.bf16.msra.mxu0 0
      %3194 = vmatprep.subr.bf16.mxu0 0
      %3195 = vmatpush2.bf16.msra.mxu0 0
      %3196 = vmatprep.subr.bf16.mxu0 0
      %3197 = vmatpush2.bf16.msra.mxu0 0
      %3198 = vmatprep.subr.bf16.mxu0 0
      %3199 = vmatpush2.bf16.msra.mxu0 0
      %3200 = vmatprep.subr.bf16.mxu0 0
      %3201 = vmatpush2.bf16.msra.mxu0 0
      %3202 = vmatprep.mubr.bf16.mxu0 0
      %3203 = vmatmul.mubr.bf16.gmra.mxu0 %v3165
      %v3204 = vpop.f32.mrf.mxu0
      %v3205 = vadd.f32 0.0, %v3204
      %v3206 = vpop.f32.mrf.mxu0
      %v3207 = vpop.f32.mrf.mxu0
      %v3208 = vpop.f32.mrf.mxu0
      %3209 = vdwg.mxu0
      %v3211 = vsel %vm2694, %v2878, 0
      %v3214 = vsel %vm2890, %v1836, 0
      %3216 = vmatprep.subr.bf16.mxu0 0
      %3217 = vmatpush1.bf16.msra.mxu0 0
      %3218 = vmatprep.subr.bf16.mxu0 0
      %3219 = vmatpush1.bf16.msra.mxu0 0
      %3220 = vmatprep.subr.bf16.mxu0 0
      %3221 = vmatpush1.bf16.msra.mxu0 0
      %3222 = vmatprep.subr.bf16.mxu0 0
      %3223 = vmatpush1.bf16.msra.mxu0 0
      %3224 = vmatprep.subr.bf16.mxu0 0
      %3225 = vmatpush1.bf16.msra.mxu0 0
      %3226 = vmatprep.subr.bf16.mxu0 0
      %3227 = vmatpush1.bf16.msra.mxu0 0
      %3228 = vmatprep.subr.bf16.mxu0 0
      %3229 = vmatpush1.bf16.msra.mxu0 0
      %3230 = vmatprep.subr.bf16.mxu0 0
      %3231 = vmatpush1.bf16.msra.mxu0 %v3214
      %3232 = vmatprep.subr.bf16.mxu0 0
      %3233 = vmatpush2.bf16.msra.mxu0 0
      %3234 = vmatprep.subr.bf16.mxu0 0
      %3235 = vmatpush2.bf16.msra.mxu0 0
      %3236 = vmatprep.subr.bf16.mxu0 0
      %3237 = vmatpush2.bf16.msra.mxu0 0
      %3238 = vmatprep.subr.bf16.mxu0 0
      %3239 = vmatpush2.bf16.msra.mxu0 0
      %3240 = vmatprep.subr.bf16.mxu0 0
      %3241 = vmatpush2.bf16.msra.mxu0 0
      %3242 = vmatprep.subr.bf16.mxu0 0
      %3243 = vmatpush2.bf16.msra.mxu0 0
      %3244 = vmatprep.subr.bf16.mxu0 0
      %3245 = vmatpush2.bf16.msra.mxu0 0
      %3246 = vmatprep.subr.bf16.mxu0 0
      %3247 = vmatpush2.bf16.msra.mxu0 0
      %3248 = vmatprep.mubr.bf16.mxu0 0
      %3249 = vmatmul.mubr.bf16.gmra.mxu0 %v3211
      %v3250 = vpop.f32.mrf.mxu0
      %v3251 = vadd.f32 0.0, %v3250
      %v3252 = vpop.f32.mrf.mxu0
      %v3253 = vpop.f32.mrf.mxu0
      %v3254 = vpop.f32.mrf.mxu0
      %3255 = vdwg.mxu0
      %v3257 = vsel %vm2694, %v2879, 0
      %v3260 = vsel %vm2890, %v1837, 0
      %3262 = vmatprep.subr.bf16.mxu0 0
      %3263 = vmatpush1.bf16.msra.mxu0 0
      %3264 = vmatprep.subr.bf16.mxu0 0
      %3265 = vmatpush1.bf16.msra.mxu0 0
      %3266 = vmatprep.subr.bf16.mxu0 0
      %3267 = vmatpush1.bf16.msra.mxu0 0
      %3268 = vmatprep.subr.bf16.mxu0 0
      %3269 = vmatpush1.bf16.msra.mxu0 0
      %3270 = vmatprep.subr.bf16.mxu0 0
      %3271 = vmatpush1.bf16.msra.mxu0 0
      %3272 = vmatprep.subr.bf16.mxu0 0
      %3273 = vmatpush1.bf16.msra.mxu0 0
      %3274 = vmatprep.subr.bf16.mxu0 0
      %3275 = vmatpush1.bf16.msra.mxu0 0
      %3276 = vmatprep.subr.bf16.mxu0 0
      %3277 = vmatpush1.bf16.msra.mxu0 %v3260
      %3278 = vmatprep.subr.bf16.mxu0 0
      %3279 = vmatpush2.bf16.msra.mxu0 0
      %3280 = vmatprep.subr.bf16.mxu0 0
      %3281 = vmatpush2.bf16.msra.mxu0 0
      %3282 = vmatprep.subr.bf16.mxu0 0
      %3283 = vmatpush2.bf16.msra.mxu0 0
      %3284 = vmatprep.subr.bf16.mxu0 0
      %3285 = vmatpush2.bf16.msra.mxu0 0
      %3286 = vmatprep.subr.bf16.mxu0 0
      %3287 = vmatpush2.bf16.msra.mxu0 0
      %3288 = vmatprep.subr.bf16.mxu0 0
      %3289 = vmatpush2.bf16.msra.mxu0 0
      %3290 = vmatprep.subr.bf16.mxu0 0
      %3291 = vmatpush2.bf16.msra.mxu0 0
      %3292 = vmatprep.subr.bf16.mxu0 0
      %3293 = vmatpush2.bf16.msra.mxu0 0
      %3294 = vmatprep.mubr.bf16.mxu0 0
      %3295 = vmatmul.mubr.bf16.gmra.mxu0 %v3257
      %v3296 = vpop.f32.mrf.mxu0
      %v3297 = vadd.f32 0.0, %v3296
      %v3298 = vpop.f32.mrf.mxu0
      %v3299 = vpop.f32.mrf.mxu0
      %v3300 = vpop.f32.mrf.mxu0
      %3301 = vdwg.mxu0
      %v3303 = vsel %vm2694, %v2880, 0
      %v3306 = vsel %vm2890, %v1838, 0
      %3308 = vmatprep.subr.bf16.mxu0 0
      %3309 = vmatpush1.bf16.msra.mxu0 0
      %3310 = vmatprep.subr.bf16.mxu0 0
      %3311 = vmatpush1.bf16.msra.mxu0 0
      %3312 = vmatprep.subr.bf16.mxu0 0
      %3313 = vmatpush1.bf16.msra.mxu0 0
      %3314 = vmatprep.subr.bf16.mxu0 0
      %3315 = vmatpush1.bf16.msra.mxu0 0
      %3316 = vmatprep.subr.bf16.mxu0 0
      %3317 = vmatpush1.bf16.msra.mxu0 0
      %3318 = vmatprep.subr.bf16.mxu0 0
      %3319 = vmatpush1.bf16.msra.mxu0 0
      %3320 = vmatprep.subr.bf16.mxu0 0
      %3321 = vmatpush1.bf16.msra.mxu0 0
      %3322 = vmatprep.subr.bf16.mxu0 0
      %3323 = vmatpush1.bf16.msra.mxu0 %v3306
      %3324 = vmatprep.subr.bf16.mxu0 0
      %3325 = vmatpush2.bf16.msra.mxu0 0
      %3326 = vmatprep.subr.bf16.mxu0 0
      %3327 = vmatpush2.bf16.msra.mxu0 0
      %3328 = vmatprep.subr.bf16.mxu0 0
      %3329 = vmatpush2.bf16.msra.mxu0 0
      %3330 = vmatprep.subr.bf16.mxu0 0
      %3331 = vmatpush2.bf16.msra.mxu0 0
      %3332 = vmatprep.subr.bf16.mxu0 0
      %3333 = vmatpush2.bf16.msra.mxu0 0
      %3334 = vmatprep.subr.bf16.mxu0 0
      %3335 = vmatpush2.bf16.msra.mxu0 0
      %3336 = vmatprep.subr.bf16.mxu0 0
      %3337 = vmatpush2.bf16.msra.mxu0 0
      %3338 = vmatprep.subr.bf16.mxu0 0
      %3339 = vmatpush2.bf16.msra.mxu0 0
      %3340 = vmatprep.mubr.bf16.mxu0 0
      %3341 = vmatmul.mubr.bf16.gmra.mxu0 %v3303
      %v3342 = vpop.f32.mrf.mxu0
      %v3343 = vadd.f32 0.0, %v3342
      %v3344 = vpop.f32.mrf.mxu0
      %v3345 = vpop.f32.mrf.mxu0
      %v3346 = vpop.f32.mrf.mxu0
      %3347 = vdwg.mxu0
      %v3349 = vsel %vm2694, %v2881, 0
      %v3352 = vsel %vm2890, %v1839, 0
      %3354 = vmatprep.subr.bf16.mxu0 0
      %3355 = vmatpush1.bf16.msra.mxu0 0
      %3356 = vmatprep.subr.bf16.mxu0 0
      %3357 = vmatpush1.bf16.msra.mxu0 0
      %3358 = vmatprep.subr.bf16.mxu0 0
      %3359 = vmatpush1.bf16.msra.mxu0 0
      %3360 = vmatprep.subr.bf16.mxu0 0
      %3361 = vmatpush1.bf16.msra.mxu0 0
      %3362 = vmatprep.subr.bf16.mxu0 0
      %3363 = vmatpush1.bf16.msra.mxu0 0
      %3364 = vmatprep.subr.bf16.mxu0 0
      %3365 = vmatpush1.bf16.msra.mxu0 0
      %3366 = vmatprep.subr.bf16.mxu0 0
      %3367 = vmatpush1.bf16.msra.mxu0 0
      %3368 = vmatprep.subr.bf16.mxu0 0
      %3369 = vmatpush1.bf16.msra.mxu0 %v3352
      %3370 = vmatprep.subr.bf16.mxu0 0
      %3371 = vmatpush2.bf16.msra.mxu0 0
      %3372 = vmatprep.subr.bf16.mxu0 0
      %3373 = vmatpush2.bf16.msra.mxu0 0
      %3374 = vmatprep.subr.bf16.mxu0 0
      %3375 = vmatpush2.bf16.msra.mxu0 0
      %3376 = vmatprep.subr.bf16.mxu0 0
      %3377 = vmatpush2.bf16.msra.mxu0 0
      %3378 = vmatprep.subr.bf16.mxu0 0
      %3379 = vmatpush2.bf16.msra.mxu0 0
      %3380 = vmatprep.subr.bf16.mxu0 0
      %3381 = vmatpush2.bf16.msra.mxu0 0
      %3382 = vmatprep.subr.bf16.mxu0 0
      %3383 = vmatpush2.bf16.msra.mxu0 0
      %3384 = vmatprep.subr.bf16.mxu0 0
      %3385 = vmatpush2.bf16.msra.mxu0 0
      %3386 = vmatprep.mubr.bf16.mxu0 0
      %3387 = vmatmul.mubr.bf16.gmra.mxu0 %v3349
      %v3388 = vpop.f32.mrf.mxu0
      %v3389 = vadd.f32 0.0, %v3388
      %v3390 = vpop.f32.mrf.mxu0
      %v3391 = vpop.f32.mrf.mxu0
      %v3392 = vpop.f32.mrf.mxu0
      %3393 = vdwg.mxu0
      %v3395 = vsel %vm2694, %v2882, 0
      %v3398 = vsel %vm2890, %v1840, 0
      %3400 = vmatprep.subr.bf16.mxu0 0
      %3401 = vmatpush1.bf16.msra.mxu0 0
      %3402 = vmatprep.subr.bf16.mxu0 0
      %3403 = vmatpush1.bf16.msra.mxu0 0
      %3404 = vmatprep.subr.bf16.mxu0 0
      %3405 = vmatpush1.bf16.msra.mxu0 0
      %3406 = vmatprep.subr.bf16.mxu0 0
      %3407 = vmatpush1.bf16.msra.mxu0 0
      %3408 = vmatprep.subr.bf16.mxu0 0
      %3409 = vmatpush1.bf16.msra.mxu0 0
      %3410 = vmatprep.subr.bf16.mxu0 0
      %3411 = vmatpush1.bf16.msra.mxu0 0
      %3412 = vmatprep.subr.bf16.mxu0 0
      %3413 = vmatpush1.bf16.msra.mxu0 0
      %3414 = vmatprep.subr.bf16.mxu0 0
      %3415 = vmatpush1.bf16.msra.mxu0 %v3398
      %3416 = vmatprep.subr.bf16.mxu0 0
      %3417 = vmatpush2.bf16.msra.mxu0 0
      %3418 = vmatprep.subr.bf16.mxu0 0
      %3419 = vmatpush2.bf16.msra.mxu0 0
      %3420 = vmatprep.subr.bf16.mxu0 0
      %3421 = vmatpush2.bf16.msra.mxu0 0
      %3422 = vmatprep.subr.bf16.mxu0 0
      %3423 = vmatpush2.bf16.msra.mxu0 0
      %3424 = vmatprep.subr.bf16.mxu0 0
      %3425 = vmatpush2.bf16.msra.mxu0 0
      %3426 = vmatprep.subr.bf16.mxu0 0
      %3427 = vmatpush2.bf16.msra.mxu0 0
      %3428 = vmatprep.subr.bf16.mxu0 0
      %3429 = vmatpush2.bf16.msra.mxu0 0
      %3430 = vmatprep.subr.bf16.mxu0 0
      %3431 = vmatpush2.bf16.msra.mxu0 0
      %3432 = vmatprep.mubr.bf16.mxu0 0
      %3433 = vmatmul.mubr.bf16.gmra.mxu0 %v3395
      %v3434 = vpop.f32.mrf.mxu0
      %v3435 = vadd.f32 0.0, %v3434
      %v3436 = vpop.f32.mrf.mxu0
      %v3437 = vpop.f32.mrf.mxu0
      %v3438 = vpop.f32.mrf.mxu0
      %3439 = vdwg.mxu0
      %v3441 = vsel %vm2694, %v2883, 0
      %v3444 = vsel %vm2890, %v1841, 0
      %3446 = vmatprep.subr.bf16.mxu0 0
      %3447 = vmatpush1.bf16.msra.mxu0 0
      %3448 = vmatprep.subr.bf16.mxu0 0
      %3449 = vmatpush1.bf16.msra.mxu0 0
      %3450 = vmatprep.subr.bf16.mxu0 0
      %3451 = vmatpush1.bf16.msra.mxu0 0
      %3452 = vmatprep.subr.bf16.mxu0 0
      %3453 = vmatpush1.bf16.msra.mxu0 0
      %3454 = vmatprep.subr.bf16.mxu0 0
      %3455 = vmatpush1.bf16.msra.mxu0 0
      %3456 = vmatprep.subr.bf16.mxu0 0
      %3457 = vmatpush1.bf16.msra.mxu0 0
      %3458 = vmatprep.subr.bf16.mxu0 0
      %3459 = vmatpush1.bf16.msra.mxu0 0
      %3460 = vmatprep.subr.bf16.mxu0 0
      %3461 = vmatpush1.bf16.msra.mxu0 %v3444
      %3462 = vmatprep.subr.bf16.mxu0 0
      %3463 = vmatpush2.bf16.msra.mxu0 0
      %3464 = vmatprep.subr.bf16.mxu0 0
      %3465 = vmatpush2.bf16.msra.mxu0 0
      %3466 = vmatprep.subr.bf16.mxu0 0
      %3467 = vmatpush2.bf16.msra.mxu0 0
      %3468 = vmatprep.subr.bf16.mxu0 0
      %3469 = vmatpush2.bf16.msra.mxu0 0
      %3470 = vmatprep.subr.bf16.mxu0 0
      %3471 = vmatpush2.bf16.msra.mxu0 0
      %3472 = vmatprep.subr.bf16.mxu0 0
      %3473 = vmatpush2.bf16.msra.mxu0 0
      %3474 = vmatprep.subr.bf16.mxu0 0
      %3475 = vmatpush2.bf16.msra.mxu0 0
      %3476 = vmatprep.subr.bf16.mxu0 0
      %3477 = vmatpush2.bf16.msra.mxu0 0
      %3478 = vmatprep.mubr.bf16.mxu0 0
      %3479 = vmatmul.mubr.bf16.gmra.mxu0 %v3441
      %v3480 = vpop.f32.mrf.mxu0
      %v3481 = vadd.f32 0.0, %v3480
      %v3482 = vpop.f32.mrf.mxu0
      %v3483 = vpop.f32.mrf.mxu0
      %v3484 = vpop.f32.mrf.mxu0
      %3485 = vdwg.mxu0
      %v3487 = vsel %vm2694, %v2884, 0
      %v3490 = vsel %vm2890, %v1842, 0
      %3492 = vmatprep.subr.bf16.mxu0 0
      %3493 = vmatpush1.bf16.msra.mxu0 0
      %3494 = vmatprep.subr.bf16.mxu0 0
      %3495 = vmatpush1.bf16.msra.mxu0 0
      %3496 = vmatprep.subr.bf16.mxu0 0
      %3497 = vmatpush1.bf16.msra.mxu0 0
      %3498 = vmatprep.subr.bf16.mxu0 0
      %3499 = vmatpush1.bf16.msra.mxu0 0
      %3500 = vmatprep.subr.bf16.mxu0 0
      %3501 = vmatpush1.bf16.msra.mxu0 0
      %3502 = vmatprep.subr.bf16.mxu0 0
      %3503 = vmatpush1.bf16.msra.mxu0 0
      %3504 = vmatprep.subr.bf16.mxu0 0
      %3505 = vmatpush1.bf16.msra.mxu0 0
      %3506 = vmatprep.subr.bf16.mxu0 0
      %3507 = vmatpush1.bf16.msra.mxu0 %v3490
      %3508 = vmatprep.subr.bf16.mxu0 0
      %3509 = vmatpush2.bf16.msra.mxu0 0
      %3510 = vmatprep.subr.bf16.mxu0 0
      %3511 = vmatpush2.bf16.msra.mxu0 0
      %3512 = vmatprep.subr.bf16.mxu0 0
      %3513 = vmatpush2.bf16.msra.mxu0 0
      %3514 = vmatprep.subr.bf16.mxu0 0
      %3515 = vmatpush2.bf16.msra.mxu0 0
      %3516 = vmatprep.subr.bf16.mxu0 0
      %3517 = vmatpush2.bf16.msra.mxu0 0
      %3518 = vmatprep.subr.bf16.mxu0 0
      %3519 = vmatpush2.bf16.msra.mxu0 0
      %3520 = vmatprep.subr.bf16.mxu0 0
      %3521 = vmatpush2.bf16.msra.mxu0 0
      %3522 = vmatprep.subr.bf16.mxu0 0
      %3523 = vmatpush2.bf16.msra.mxu0 0
      %3524 = vmatprep.mubr.bf16.mxu0 0
      %3525 = vmatmul.mubr.bf16.gmra.mxu0 %v3487
      %v3526 = vpop.f32.mrf.mxu0
      %v3527 = vadd.f32 0.0, %v3526
      %v3528 = vpop.f32.mrf.mxu0
      %v3529 = vpop.f32.mrf.mxu0
      %v3530 = vpop.f32.mrf.mxu0
      %3531 = vdwg.mxu0
      %v3533 = vsel %vm2694, %v2885, 0
      %v3536 = vsel %vm2890, %v1843, 0
      %3538 = vmatprep.subr.bf16.mxu0 0
      %3539 = vmatpush1.bf16.msra.mxu0 0
      %3540 = vmatprep.subr.bf16.mxu0 0
      %3541 = vmatpush1.bf16.msra.mxu0 0
      %3542 = vmatprep.subr.bf16.mxu0 0
      %3543 = vmatpush1.bf16.msra.mxu0 0
      %3544 = vmatprep.subr.bf16.mxu0 0
      %3545 = vmatpush1.bf16.msra.mxu0 0
      %3546 = vmatprep.subr.bf16.mxu0 0
      %3547 = vmatpush1.bf16.msra.mxu0 0
      %3548 = vmatprep.subr.bf16.mxu0 0
      %3549 = vmatpush1.bf16.msra.mxu0 0
      %3550 = vmatprep.subr.bf16.mxu0 0
      %3551 = vmatpush1.bf16.msra.mxu0 0
      %3552 = vmatprep.subr.bf16.mxu0 0
      %3553 = vmatpush1.bf16.msra.mxu0 %v3536
      %3554 = vmatprep.subr.bf16.mxu0 0
      %3555 = vmatpush2.bf16.msra.mxu0 0
      %3556 = vmatprep.subr.bf16.mxu0 0
      %3557 = vmatpush2.bf16.msra.mxu0 0
      %3558 = vmatprep.subr.bf16.mxu0 0
      %3559 = vmatpush2.bf16.msra.mxu0 0
      %3560 = vmatprep.subr.bf16.mxu0 0
      %3561 = vmatpush2.bf16.msra.mxu0 0
      %3562 = vmatprep.subr.bf16.mxu0 0
      %3563 = vmatpush2.bf16.msra.mxu0 0
      %3564 = vmatprep.subr.bf16.mxu0 0
      %3565 = vmatpush2.bf16.msra.mxu0 0
      %3566 = vmatprep.subr.bf16.mxu0 0
      %3567 = vmatpush2.bf16.msra.mxu0 0
      %3568 = vmatprep.subr.bf16.mxu0 0
      %3569 = vmatpush2.bf16.msra.mxu0 0
      %3570 = vmatprep.mubr.bf16.mxu0 0
      %3571 = vmatmul.mubr.bf16.gmra.mxu0 %v3533
      %v3572 = vpop.f32.mrf.mxu0
      %v3573 = vadd.f32 0.0, %v3572
      %v3574 = vpop.f32.mrf.mxu0
      %v3575 = vpop.f32.mrf.mxu0
      %v3576 = vpop.f32.mrf.mxu0
      %3577 = vdwg.mxu0
      %v3579 = vsel %vm2694, %v2886, 0
      %v3582 = vsel %vm2890, %v1844, 0
      %3584 = vmatprep.subr.bf16.mxu0 0
      %3585 = vmatpush1.bf16.msra.mxu0 0
      %3586 = vmatprep.subr.bf16.mxu0 0
      %3587 = vmatpush1.bf16.msra.mxu0 0
      %3588 = vmatprep.subr.bf16.mxu0 0
      %3589 = vmatpush1.bf16.msra.mxu0 0
      %3590 = vmatprep.subr.bf16.mxu0 0
      %3591 = vmatpush1.bf16.msra.mxu0 0
      %3592 = vmatprep.subr.bf16.mxu0 0
      %3593 = vmatpush1.bf16.msra.mxu0 0
      %3594 = vmatprep.subr.bf16.mxu0 0
      %3595 = vmatpush1.bf16.msra.mxu0 0
      %3596 = vmatprep.subr.bf16.mxu0 0
      %3597 = vmatpush1.bf16.msra.mxu0 0
      %3598 = vmatprep.subr.bf16.mxu0 0
      %3599 = vmatpush1.bf16.msra.mxu0 %v3582
      %3600 = vmatprep.subr.bf16.mxu0 0
      %3601 = vmatpush2.bf16.msra.mxu0 0
      %3602 = vmatprep.subr.bf16.mxu0 0
      %3603 = vmatpush2.bf16.msra.mxu0 0
      %3604 = vmatprep.subr.bf16.mxu0 0
      %3605 = vmatpush2.bf16.msra.mxu0 0
      %3606 = vmatprep.subr.bf16.mxu0 0
      %3607 = vmatpush2.bf16.msra.mxu0 0
      %3608 = vmatprep.subr.bf16.mxu0 0
      %3609 = vmatpush2.bf16.msra.mxu0 0
      %3610 = vmatprep.subr.bf16.mxu0 0
      %3611 = vmatpush2.bf16.msra.mxu0 0
      %3612 = vmatprep.subr.bf16.mxu0 0
      %3613 = vmatpush2.bf16.msra.mxu0 0
      %3614 = vmatprep.subr.bf16.mxu0 0
      %3615 = vmatpush2.bf16.msra.mxu0 0
      %3616 = vmatprep.mubr.bf16.mxu0 0
      %3617 = vmatmul.mubr.bf16.gmra.mxu0 %v3579
      %v3618 = vpop.f32.mrf.mxu0
      %v3619 = vadd.f32 0.0, %v3618
      %v3620 = vpop.f32.mrf.mxu0
      %v3621 = vpop.f32.mrf.mxu0
      %v3622 = vpop.f32.mrf.mxu0
      %3623 = vdwg.mxu0
      %3625 = vrot.lane.b32.xlu0 %v1797, 112
      %v3626 = vpop.permute.xlu0 %3625
      %3628 = vrot.lane.b32.xlu0 %v1813, 112
      %v3629 = vpop.permute.xlu0 %3628
      %v3631 = vsel %vm1845, %v3626, 0
      %v3634 = vsel %vm1845, %v3629, 0
      %3636 = vmatprep.subr.bf16.mxu0 0
      %3637 = vmatpush1.bf16.xpose.msra.mxu0 0
      %3638 = vmatprep.subr.bf16.mxu0 0
      %3639 = vmatpush1.bf16.xpose.msra.mxu0 0
      %3640 = vmatprep.subr.bf16.mxu0 0
      %3641 = vmatpush1.bf16.xpose.msra.mxu0 0
      %3642 = vmatprep.subr.bf16.mxu0 0
      %3643 = vmatpush1.bf16.xpose.msra.mxu0 0
      %3644 = vmatprep.subr.bf16.mxu0 0
      %3645 = vmatpush1.bf16.xpose.msra.mxu0 0
      %3646 = vmatprep.subr.bf16.mxu0 0
      %3647 = vmatpush1.bf16.xpose.msra.mxu0 0
      %3648 = vmatprep.subr.bf16.mxu0 0
      %3649 = vmatpush1.bf16.xpose.msra.mxu0 0
      %3650 = vmatprep.subr.bf16.mxu0 0
      %3651 = vmatpush1.bf16.xpose.msra.mxu0 %v3634
      %3652 = vmatprep.subr.bf16.mxu0 0
      %3653 = vmatpush2.bf16.xpose.msra.mxu0 0
      %3654 = vmatprep.subr.bf16.mxu0 0
      %3655 = vmatpush2.bf16.xpose.msra.mxu0 0
      %3656 = vmatprep.subr.bf16.mxu0 0
      %3657 = vmatpush2.bf16.xpose.msra.mxu0 0
      %3658 = vmatprep.subr.bf16.mxu0 0
      %3659 = vmatpush2.bf16.xpose.msra.mxu0 0
      %3660 = vmatprep.subr.bf16.mxu0 0
      %3661 = vmatpush2.bf16.xpose.msra.mxu0 0
      %3662 = vmatprep.subr.bf16.mxu0 0
      %3663 = vmatpush2.bf16.xpose.msra.mxu0 0
      %3664 = vmatprep.subr.bf16.mxu0 0
      %3665 = vmatpush2.bf16.xpose.msra.mxu0 0
      %3666 = vmatprep.subr.bf16.mxu0 0
      %3667 = vmatpush2.bf16.xpose.msra.mxu0 0
      %3668 = vmatprep.mubr.bf16.mxu0 0
      %3669 = vmatmul.mubr.bf16.gmra.mxu0 %v3631
      %v3670 = vpop.f32.mrf.mxu0
      %v3671 = vadd.f32 0.0, %v3670
      %v3672 = vpop.f32.mrf.mxu0
      %v3673 = vpop.f32.mrf.mxu0
      %v3674 = vpop.f32.mrf.mxu0
      %3675 = vdwg.mxu0
      %3677 = vrot.lane.b32.xlu0 %v1798, 112
      %v3678 = vpop.permute.xlu0 %3677
      %3680 = vrot.lane.b32.xlu0 %v1814, 112
      %v3681 = vpop.permute.xlu0 %3680
      %v3683 = vsel %vm1845, %v3678, 0
      %v3686 = vsel %vm1845, %v3681, 0
      %3688 = vmatprep.subr.bf16.mxu0 0
      %3689 = vmatpush1.bf16.xpose.msra.mxu0 0
      %3690 = vmatprep.subr.bf16.mxu0 0
      %3691 = vmatpush1.bf16.xpose.msra.mxu0 0
      %3692 = vmatprep.subr.bf16.mxu0 0
      %3693 = vmatpush1.bf16.xpose.msra.mxu0 0
      %3694 = vmatprep.subr.bf16.mxu0 0
      %3695 = vmatpush1.bf16.xpose.msra.mxu0 0
      %3696 = vmatprep.subr.bf16.mxu0 0
      %3697 = vmatpush1.bf16.xpose.msra.mxu0 0
      %3698 = vmatprep.subr.bf16.mxu0 0
      %3699 = vmatpush1.bf16.xpose.msra.mxu0 0
      %3700 = vmatprep.subr.bf16.mxu0 0
      %3701 = vmatpush1.bf16.xpose.msra.mxu0 0
      %3702 = vmatprep.subr.bf16.mxu0 0
      %3703 = vmatpush1.bf16.xpose.msra.mxu0 %v3686
      %3704 = vmatprep.subr.bf16.mxu0 0
      %3705 = vmatpush2.bf16.xpose.msra.mxu0 0
      %3706 = vmatprep.subr.bf16.mxu0 0
      %3707 = vmatpush2.bf16.xpose.msra.mxu0 0
      %3708 = vmatprep.subr.bf16.mxu0 0
      %3709 = vmatpush2.bf16.xpose.msra.mxu0 0
      %3710 = vmatprep.subr.bf16.mxu0 0
      %3711 = vmatpush2.bf16.xpose.msra.mxu0 0
      %3712 = vmatprep.subr.bf16.mxu0 0
      %3713 = vmatpush2.bf16.xpose.msra.mxu0 0
      %3714 = vmatprep.subr.bf16.mxu0 0
      %3715 = vmatpush2.bf16.xpose.msra.mxu0 0
      %3716 = vmatprep.subr.bf16.mxu0 0
      %3717 = vmatpush2.bf16.xpose.msra.mxu0 0
      %3718 = vmatprep.subr.bf16.mxu0 0
      %3719 = vmatpush2.bf16.xpose.msra.mxu0 0
      %3720 = vmatprep.mubr.bf16.mxu0 0
      %3721 = vmatmul.mubr.bf16.gmra.mxu0 %v3683
      %v3722 = vpop.f32.mrf.mxu0
      %v3723 = vadd.f32 0.0, %v3722
      %v3724 = vpop.f32.mrf.mxu0
      %v3725 = vpop.f32.mrf.mxu0
      %v3726 = vpop.f32.mrf.mxu0
      %3727 = vdwg.mxu0
      %3729 = vrot.lane.b32.xlu0 %v1799, 112
      %v3730 = vpop.permute.xlu0 %3729
      %3732 = vrot.lane.b32.xlu0 %v1815, 112
      %v3733 = vpop.permute.xlu0 %3732
      %v3735 = vsel %vm1845, %v3730, 0
      %v3738 = vsel %vm1845, %v3733, 0
      %3740 = vmatprep.subr.bf16.mxu0 0
      %3741 = vmatpush1.bf16.xpose.msra.mxu0 0
      %3742 = vmatprep.subr.bf16.mxu0 0
      %3743 = vmatpush1.bf16.xpose.msra.mxu0 0
      %3744 = vmatprep.subr.bf16.mxu0 0
      %3745 = vmatpush1.bf16.xpose.msra.mxu0 0
      %3746 = vmatprep.subr.bf16.mxu0 0
      %3747 = vmatpush1.bf16.xpose.msra.mxu0 0
      %3748 = vmatprep.subr.bf16.mxu0 0
      %3749 = vmatpush1.bf16.xpose.msra.mxu0 0
      %3750 = vmatprep.subr.bf16.mxu0 0
      %3751 = vmatpush1.bf16.xpose.msra.mxu0 0
      %3752 = vmatprep.subr.bf16.mxu0 0
      %3753 = vmatpush1.bf16.xpose.msra.mxu0 0
      %3754 = vmatprep.subr.bf16.mxu0 0
      %3755 = vmatpush1.bf16.xpose.msra.mxu0 %v3738
      %3756 = vmatprep.subr.bf16.mxu0 0
      %3757 = vmatpush2.bf16.xpose.msra.mxu0 0
      %3758 = vmatprep.subr.bf16.mxu0 0
      %3759 = vmatpush2.bf16.xpose.msra.mxu0 0
      %3760 = vmatprep.subr.bf16.mxu0 0
      %3761 = vmatpush2.bf16.xpose.msra.mxu0 0
      %3762 = vmatprep.subr.bf16.mxu0 0
      %3763 = vmatpush2.bf16.xpose.msra.mxu0 0
      %3764 = vmatprep.subr.bf16.mxu0 0
      %3765 = vmatpush2.bf16.xpose.msra.mxu0 0
      %3766 = vmatprep.subr.bf16.mxu0 0
      %3767 = vmatpush2.bf16.xpose.msra.mxu0 0
      %3768 = vmatprep.subr.bf16.mxu0 0
      %3769 = vmatpush2.bf16.xpose.msra.mxu0 0
      %3770 = vmatprep.subr.bf16.mxu0 0
      %3771 = vmatpush2.bf16.xpose.msra.mxu0 0
      %3772 = vmatprep.mubr.bf16.mxu0 0
      %3773 = vmatmul.mubr.bf16.gmra.mxu0 %v3735
      %v3774 = vpop.f32.mrf.mxu0
      %v3775 = vadd.f32 0.0, %v3774
      %v3776 = vpop.f32.mrf.mxu0
      %v3777 = vpop.f32.mrf.mxu0
      %v3778 = vpop.f32.mrf.mxu0
      %3779 = vdwg.mxu0
      %3781 = vrot.lane.b32.xlu0 %v1800, 112
      %v3782 = vpop.permute.xlu0 %3781
      %3784 = vrot.lane.b32.xlu0 %v1816, 112
      %v3785 = vpop.permute.xlu0 %3784
      %v3787 = vsel %vm1845, %v3782, 0
      %v3790 = vsel %vm1845, %v3785, 0
      %3792 = vmatprep.subr.bf16.mxu0 0
      %3793 = vmatpush1.bf16.xpose.msra.mxu0 0
      %3794 = vmatprep.subr.bf16.mxu0 0
      %3795 = vmatpush1.bf16.xpose.msra.mxu0 0
      %3796 = vmatprep.subr.bf16.mxu0 0
      %3797 = vmatpush1.bf16.xpose.msra.mxu0 0
      %3798 = vmatprep.subr.bf16.mxu0 0
      %3799 = vmatpush1.bf16.xpose.msra.mxu0 0
      %3800 = vmatprep.subr.bf16.mxu0 0
      %3801 = vmatpush1.bf16.xpose.msra.mxu0 0
      %3802 = vmatprep.subr.bf16.mxu0 0
      %3803 = vmatpush1.bf16.xpose.msra.mxu0 0
      %3804 = vmatprep.subr.bf16.mxu0 0
      %3805 = vmatpush1.bf16.xpose.msra.mxu0 0
      %3806 = vmatprep.subr.bf16.mxu0 0
      %3807 = vmatpush1.bf16.xpose.msra.mxu0 %v3790
      %3808 = vmatprep.subr.bf16.mxu0 0
      %3809 = vmatpush2.bf16.xpose.msra.mxu0 0
      %3810 = vmatprep.subr.bf16.mxu0 0
      %3811 = vmatpush2.bf16.xpose.msra.mxu0 0
      %3812 = vmatprep.subr.bf16.mxu0 0
      %3813 = vmatpush2.bf16.xpose.msra.mxu0 0
      %3814 = vmatprep.subr.bf16.mxu0 0
      %3815 = vmatpush2.bf16.xpose.msra.mxu0 0
      %3816 = vmatprep.subr.bf16.mxu0 0
      %3817 = vmatpush2.bf16.xpose.msra.mxu0 0
      %3818 = vmatprep.subr.bf16.mxu0 0
      %3819 = vmatpush2.bf16.xpose.msra.mxu0 0
      %3820 = vmatprep.subr.bf16.mxu0 0
      %3821 = vmatpush2.bf16.xpose.msra.mxu0 0
      %3822 = vmatprep.subr.bf16.mxu0 0
      %3823 = vmatpush2.bf16.xpose.msra.mxu0 0
      %3824 = vmatprep.mubr.bf16.mxu0 0
      %3825 = vmatmul.mubr.bf16.gmra.mxu0 %v3787
      %v3826 = vpop.f32.mrf.mxu0
      %v3827 = vadd.f32 0.0, %v3826
      %v3828 = vpop.f32.mrf.mxu0
      %v3829 = vpop.f32.mrf.mxu0
      %v3830 = vpop.f32.mrf.mxu0
      %3831 = vdwg.mxu0
      %3833 = vrot.lane.b32.xlu0 %v1801, 112
      %v3834 = vpop.permute.xlu0 %3833
      %3836 = vrot.lane.b32.xlu0 %v1817, 112
      %v3837 = vpop.permute.xlu0 %3836
      %v3839 = vsel %vm1845, %v3834, 0
      %v3842 = vsel %vm1845, %v3837, 0
      %3844 = vmatprep.subr.bf16.mxu0 0
      %3845 = vmatpush1.bf16.xpose.msra.mxu0 0
      %3846 = vmatprep.subr.bf16.mxu0 0
      %3847 = vmatpush1.bf16.xpose.msra.mxu0 0
      %3848 = vmatprep.subr.bf16.mxu0 0
      %3849 = vmatpush1.bf16.xpose.msra.mxu0 0
      %3850 = vmatprep.subr.bf16.mxu0 0
      %3851 = vmatpush1.bf16.xpose.msra.mxu0 0
      %3852 = vmatprep.subr.bf16.mxu0 0
      %3853 = vmatpush1.bf16.xpose.msra.mxu0 0
      %3854 = vmatprep.subr.bf16.mxu0 0
      %3855 = vmatpush1.bf16.xpose.msra.mxu0 0
      %3856 = vmatprep.subr.bf16.mxu0 0
      %3857 = vmatpush1.bf16.xpose.msra.mxu0 0
      %3858 = vmatprep.subr.bf16.mxu0 0
      %3859 = vmatpush1.bf16.xpose.msra.mxu0 %v3842
      %3860 = vmatprep.subr.bf16.mxu0 0
      %3861 = vmatpush2.bf16.xpose.msra.mxu0 0
      %3862 = vmatprep.subr.bf16.mxu0 0
      %3863 = vmatpush2.bf16.xpose.msra.mxu0 0
      %3864 = vmatprep.subr.bf16.mxu0 0
      %3865 = vmatpush2.bf16.xpose.msra.mxu0 0
      %3866 = vmatprep.subr.bf16.mxu0 0
      %3867 = vmatpush2.bf16.xpose.msra.mxu0 0
      %3868 = vmatprep.subr.bf16.mxu0 0
      %3869 = vmatpush2.bf16.xpose.msra.mxu0 0
      %3870 = vmatprep.subr.bf16.mxu0 0
      %3871 = vmatpush2.bf16.xpose.msra.mxu0 0
      %3872 = vmatprep.subr.bf16.mxu0 0
      %3873 = vmatpush2.bf16.xpose.msra.mxu0 0
      %3874 = vmatprep.subr.bf16.mxu0 0
      %3875 = vmatpush2.bf16.xpose.msra.mxu0 0
      %3876 = vmatprep.mubr.bf16.mxu0 0
      %3877 = vmatmul.mubr.bf16.gmra.mxu0 %v3839
      %v3878 = vpop.f32.mrf.mxu0
      %v3879 = vadd.f32 0.0, %v3878
      %v3880 = vpop.f32.mrf.mxu0
      %v3881 = vpop.f32.mrf.mxu0
      %v3882 = vpop.f32.mrf.mxu0
      %3883 = vdwg.mxu0
      %3885 = vrot.lane.b32.xlu0 %v1802, 112
      %v3886 = vpop.permute.xlu0 %3885
      %3888 = vrot.lane.b32.xlu0 %v1818, 112
      %v3889 = vpop.permute.xlu0 %3888
      %v3891 = vsel %vm1845, %v3886, 0
      %v3894 = vsel %vm1845, %v3889, 0
      %3896 = vmatprep.subr.bf16.mxu0 0
      %3897 = vmatpush1.bf16.xpose.msra.mxu0 0
      %3898 = vmatprep.subr.bf16.mxu0 0
      %3899 = vmatpush1.bf16.xpose.msra.mxu0 0
      %3900 = vmatprep.subr.bf16.mxu0 0
      %3901 = vmatpush1.bf16.xpose.msra.mxu0 0
      %3902 = vmatprep.subr.bf16.mxu0 0
      %3903 = vmatpush1.bf16.xpose.msra.mxu0 0
      %3904 = vmatprep.subr.bf16.mxu0 0
      %3905 = vmatpush1.bf16.xpose.msra.mxu0 0
      %3906 = vmatprep.subr.bf16.mxu0 0
      %3907 = vmatpush1.bf16.xpose.msra.mxu0 0
      %3908 = vmatprep.subr.bf16.mxu0 0
      %3909 = vmatpush1.bf16.xpose.msra.mxu0 0
      %3910 = vmatprep.subr.bf16.mxu0 0
      %3911 = vmatpush1.bf16.xpose.msra.mxu0 %v3894
      %3912 = vmatprep.subr.bf16.mxu0 0
      %3913 = vmatpush2.bf16.xpose.msra.mxu0 0
      %3914 = vmatprep.subr.bf16.mxu0 0
      %3915 = vmatpush2.bf16.xpose.msra.mxu0 0
      %3916 = vmatprep.subr.bf16.mxu0 0
      %3917 = vmatpush2.bf16.xpose.msra.mxu0 0
      %3918 = vmatprep.subr.bf16.mxu0 0
      %3919 = vmatpush2.bf16.xpose.msra.mxu0 0
      %3920 = vmatprep.subr.bf16.mxu0 0
      %3921 = vmatpush2.bf16.xpose.msra.mxu0 0
      %3922 = vmatprep.subr.bf16.mxu0 0
      %3923 = vmatpush2.bf16.xpose.msra.mxu0 0
      %3924 = vmatprep.subr.bf16.mxu0 0
      %3925 = vmatpush2.bf16.xpose.msra.mxu0 0
      %3926 = vmatprep.subr.bf16.mxu0 0
      %3927 = vmatpush2.bf16.xpose.msra.mxu0 0
      %3928 = vmatprep.mubr.bf16.mxu0 0
      %3929 = vmatmul.mubr.bf16.gmra.mxu0 %v3891
      %v3930 = vpop.f32.mrf.mxu0
      %v3931 = vadd.f32 0.0, %v3930
      %v3932 = vpop.f32.mrf.mxu0
      %v3933 = vpop.f32.mrf.mxu0
      %v3934 = vpop.f32.mrf.mxu0
      %3935 = vdwg.mxu0
      %3937 = vrot.lane.b32.xlu0 %v1803, 112
      %v3938 = vpop.permute.xlu0 %3937
      %3940 = vrot.lane.b32.xlu0 %v1819, 112
      %v3941 = vpop.permute.xlu0 %3940
      %v3943 = vsel %vm1845, %v3938, 0
      %v3946 = vsel %vm1845, %v3941, 0
      %3948 = vmatprep.subr.bf16.mxu0 0
      %3949 = vmatpush1.bf16.xpose.msra.mxu0 0
      %3950 = vmatprep.subr.bf16.mxu0 0
      %3951 = vmatpush1.bf16.xpose.msra.mxu0 0
      %3952 = vmatprep.subr.bf16.mxu0 0
      %3953 = vmatpush1.bf16.xpose.msra.mxu0 0
      %3954 = vmatprep.subr.bf16.mxu0 0
      %3955 = vmatpush1.bf16.xpose.msra.mxu0 0
      %3956 = vmatprep.subr.bf16.mxu0 0
      %3957 = vmatpush1.bf16.xpose.msra.mxu0 0
      %3958 = vmatprep.subr.bf16.mxu0 0
      %3959 = vmatpush1.bf16.xpose.msra.mxu0 0
      %3960 = vmatprep.subr.bf16.mxu0 0
      %3961 = vmatpush1.bf16.xpose.msra.mxu0 0
      %3962 = vmatprep.subr.bf16.mxu0 0
      %3963 = vmatpush1.bf16.xpose.msra.mxu0 %v3946
      %3964 = vmatprep.subr.bf16.mxu0 0
      %3965 = vmatpush2.bf16.xpose.msra.mxu0 0
      %3966 = vmatprep.subr.bf16.mxu0 0
      %3967 = vmatpush2.bf16.xpose.msra.mxu0 0
      %3968 = vmatprep.subr.bf16.mxu0 0
      %3969 = vmatpush2.bf16.xpose.msra.mxu0 0
      %3970 = vmatprep.subr.bf16.mxu0 0
      %3971 = vmatpush2.bf16.xpose.msra.mxu0 0
      %3972 = vmatprep.subr.bf16.mxu0 0
      %3973 = vmatpush2.bf16.xpose.msra.mxu0 0
      %3974 = vmatprep.subr.bf16.mxu0 0
      %3975 = vmatpush2.bf16.xpose.msra.mxu0 0
      %3976 = vmatprep.subr.bf16.mxu0 0
      %3977 = vmatpush2.bf16.xpose.msra.mxu0 0
      %3978 = vmatprep.subr.bf16.mxu0 0
      %3979 = vmatpush2.bf16.xpose.msra.mxu0 0
      %3980 = vmatprep.mubr.bf16.mxu0 0
      %3981 = vmatmul.mubr.bf16.gmra.mxu0 %v3943
      %v3982 = vpop.f32.mrf.mxu0
      %v3983 = vadd.f32 0.0, %v3982
      %v3984 = vpop.f32.mrf.mxu0
      %v3985 = vpop.f32.mrf.mxu0
      %v3986 = vpop.f32.mrf.mxu0
      %3987 = vdwg.mxu0
      %3989 = vrot.lane.b32.xlu0 %v1804, 112
      %v3990 = vpop.permute.xlu0 %3989
      %3992 = vrot.lane.b32.xlu0 %v1820, 112
      %v3993 = vpop.permute.xlu0 %3992
      %v3995 = vsel %vm1845, %v3990, 0
      %v3998 = vsel %vm1845, %v3993, 0
      %4000 = vmatprep.subr.bf16.mxu0 0
      %4001 = vmatpush1.bf16.xpose.msra.mxu0 0
      %4002 = vmatprep.subr.bf16.mxu0 0
      %4003 = vmatpush1.bf16.xpose.msra.mxu0 0
      %4004 = vmatprep.subr.bf16.mxu0 0
      %4005 = vmatpush1.bf16.xpose.msra.mxu0 0
      %4006 = vmatprep.subr.bf16.mxu0 0
      %4007 = vmatpush1.bf16.xpose.msra.mxu0 0
      %4008 = vmatprep.subr.bf16.mxu0 0
      %4009 = vmatpush1.bf16.xpose.msra.mxu0 0
      %4010 = vmatprep.subr.bf16.mxu0 0
      %4011 = vmatpush1.bf16.xpose.msra.mxu0 0
      %4012 = vmatprep.subr.bf16.mxu0 0
      %4013 = vmatpush1.bf16.xpose.msra.mxu0 0
      %4014 = vmatprep.subr.bf16.mxu0 0
      %4015 = vmatpush1.bf16.xpose.msra.mxu0 %v3998
      %4016 = vmatprep.subr.bf16.mxu0 0
      %4017 = vmatpush2.bf16.xpose.msra.mxu0 0
      %4018 = vmatprep.subr.bf16.mxu0 0
      %4019 = vmatpush2.bf16.xpose.msra.mxu0 0
      %4020 = vmatprep.subr.bf16.mxu0 0
      %4021 = vmatpush2.bf16.xpose.msra.mxu0 0
      %4022 = vmatprep.subr.bf16.mxu0 0
      %4023 = vmatpush2.bf16.xpose.msra.mxu0 0
      %4024 = vmatprep.subr.bf16.mxu0 0
      %4025 = vmatpush2.bf16.xpose.msra.mxu0 0
      %4026 = vmatprep.subr.bf16.mxu0 0
      %4027 = vmatpush2.bf16.xpose.msra.mxu0 0
      %4028 = vmatprep.subr.bf16.mxu0 0
      %4029 = vmatpush2.bf16.xpose.msra.mxu0 0
      %4030 = vmatprep.subr.bf16.mxu0 0
      %4031 = vmatpush2.bf16.xpose.msra.mxu0 0
      %4032 = vmatprep.mubr.bf16.mxu0 0
      %4033 = vmatmul.mubr.bf16.gmra.mxu0 %v3995
      %v4034 = vpop.f32.mrf.mxu0
      %v4035 = vadd.f32 0.0, %v4034
      %v4036 = vpop.f32.mrf.mxu0
      %v4037 = vpop.f32.mrf.mxu0
      %v4038 = vpop.f32.mrf.mxu0
      %4039 = vdwg.mxu0
      %4041 = vrot.lane.b32.xlu0 %v1805, 112
      %v4042 = vpop.permute.xlu0 %4041
      %4044 = vrot.lane.b32.xlu0 %v1821, 112
      %v4045 = vpop.permute.xlu0 %4044
      %v4047 = vsel %vm1845, %v4042, 0
      %v4050 = vsel %vm1845, %v4045, 0
      %4052 = vmatprep.subr.bf16.mxu0 0
      %4053 = vmatpush1.bf16.xpose.msra.mxu0 0
      %4054 = vmatprep.subr.bf16.mxu0 0
      %4055 = vmatpush1.bf16.xpose.msra.mxu0 0
      %4056 = vmatprep.subr.bf16.mxu0 0
      %4057 = vmatpush1.bf16.xpose.msra.mxu0 0
      %4058 = vmatprep.subr.bf16.mxu0 0
      %4059 = vmatpush1.bf16.xpose.msra.mxu0 0
      %4060 = vmatprep.subr.bf16.mxu0 0
      %4061 = vmatpush1.bf16.xpose.msra.mxu0 0
      %4062 = vmatprep.subr.bf16.mxu0 0
      %4063 = vmatpush1.bf16.xpose.msra.mxu0 0
      %4064 = vmatprep.subr.bf16.mxu0 0
      %4065 = vmatpush1.bf16.xpose.msra.mxu0 0
      %4066 = vmatprep.subr.bf16.mxu0 0
      %4067 = vmatpush1.bf16.xpose.msra.mxu0 %v4050
      %4068 = vmatprep.subr.bf16.mxu0 0
      %4069 = vmatpush2.bf16.xpose.msra.mxu0 0
      %4070 = vmatprep.subr.bf16.mxu0 0
      %4071 = vmatpush2.bf16.xpose.msra.mxu0 0
      %4072 = vmatprep.subr.bf16.mxu0 0
      %4073 = vmatpush2.bf16.xpose.msra.mxu0 0
      %4074 = vmatprep.subr.bf16.mxu0 0
      %4075 = vmatpush2.bf16.xpose.msra.mxu0 0
      %4076 = vmatprep.subr.bf16.mxu0 0
      %4077 = vmatpush2.bf16.xpose.msra.mxu0 0
      %4078 = vmatprep.subr.bf16.mxu0 0
      %4079 = vmatpush2.bf16.xpose.msra.mxu0 0
      %4080 = vmatprep.subr.bf16.mxu0 0
      %4081 = vmatpush2.bf16.xpose.msra.mxu0 0
      %4082 = vmatprep.subr.bf16.mxu0 0
      %4083 = vmatpush2.bf16.xpose.msra.mxu0 0
      %4084 = vmatprep.mubr.bf16.mxu0 0
      %4085 = vmatmul.mubr.bf16.gmra.mxu0 %v4047
      %v4086 = vpop.f32.mrf.mxu0
      %v4087 = vadd.f32 0.0, %v4086
      %v4088 = vpop.f32.mrf.mxu0
      %v4089 = vpop.f32.mrf.mxu0
      %v4090 = vpop.f32.mrf.mxu0
      %4091 = vdwg.mxu0
      %4093 = vrot.lane.b32.xlu0 %v1806, 112
      %v4094 = vpop.permute.xlu0 %4093
      %4096 = vrot.lane.b32.xlu0 %v1822, 112
      %v4097 = vpop.permute.xlu0 %4096
      %v4099 = vsel %vm1845, %v4094, 0
      %v4102 = vsel %vm1845, %v4097, 0
      %4104 = vmatprep.subr.bf16.mxu0 0
      %4105 = vmatpush1.bf16.xpose.msra.mxu0 0
      %4106 = vmatprep.subr.bf16.mxu0 0
      %4107 = vmatpush1.bf16.xpose.msra.mxu0 0
      %4108 = vmatprep.subr.bf16.mxu0 0
      %4109 = vmatpush1.bf16.xpose.msra.mxu0 0
      %4110 = vmatprep.subr.bf16.mxu0 0
      %4111 = vmatpush1.bf16.xpose.msra.mxu0 0
      %4112 = vmatprep.subr.bf16.mxu0 0
      %4113 = vmatpush1.bf16.xpose.msra.mxu0 0
      %4114 = vmatprep.subr.bf16.mxu0 0
      %4115 = vmatpush1.bf16.xpose.msra.mxu0 0
      %4116 = vmatprep.subr.bf16.mxu0 0
      %4117 = vmatpush1.bf16.xpose.msra.mxu0 0
      %4118 = vmatprep.subr.bf16.mxu0 0
      %4119 = vmatpush1.bf16.xpose.msra.mxu0 %v4102
      %4120 = vmatprep.subr.bf16.mxu0 0
      %4121 = vmatpush2.bf16.xpose.msra.mxu0 0
      %4122 = vmatprep.subr.bf16.mxu0 0
      %4123 = vmatpush2.bf16.xpose.msra.mxu0 0
      %4124 = vmatprep.subr.bf16.mxu0 0
      %4125 = vmatpush2.bf16.xpose.msra.mxu0 0
      %4126 = vmatprep.subr.bf16.mxu0 0
      %4127 = vmatpush2.bf16.xpose.msra.mxu0 0
      %4128 = vmatprep.subr.bf16.mxu0 0
      %4129 = vmatpush2.bf16.xpose.msra.mxu0 0
      %4130 = vmatprep.subr.bf16.mxu0 0
      %4131 = vmatpush2.bf16.xpose.msra.mxu0 0
      %4132 = vmatprep.subr.bf16.mxu0 0
      %4133 = vmatpush2.bf16.xpose.msra.mxu0 0
      %4134 = vmatprep.subr.bf16.mxu0 0
      %4135 = vmatpush2.bf16.xpose.msra.mxu0 0
      %4136 = vmatprep.mubr.bf16.mxu0 0
      %4137 = vmatmul.mubr.bf16.gmra.mxu0 %v4099
      %v4138 = vpop.f32.mrf.mxu0
      %v4139 = vadd.f32 0.0, %v4138
      %v4140 = vpop.f32.mrf.mxu0
      %v4141 = vpop.f32.mrf.mxu0
      %v4142 = vpop.f32.mrf.mxu0
      %4143 = vdwg.mxu0
      %4145 = vrot.lane.b32.xlu0 %v1807, 112
      %v4146 = vpop.permute.xlu0 %4145
      %4148 = vrot.lane.b32.xlu0 %v1823, 112
      %v4149 = vpop.permute.xlu0 %4148
      %v4151 = vsel %vm1845, %v4146, 0
      %v4154 = vsel %vm1845, %v4149, 0
      %4156 = vmatprep.subr.bf16.mxu0 0
      %4157 = vmatpush1.bf16.xpose.msra.mxu0 0
      %4158 = vmatprep.subr.bf16.mxu0 0
      %4159 = vmatpush1.bf16.xpose.msra.mxu0 0
      %4160 = vmatprep.subr.bf16.mxu0 0
      %4161 = vmatpush1.bf16.xpose.msra.mxu0 0
      %4162 = vmatprep.subr.bf16.mxu0 0
      %4163 = vmatpush1.bf16.xpose.msra.mxu0 0
      %4164 = vmatprep.subr.bf16.mxu0 0
      %4165 = vmatpush1.bf16.xpose.msra.mxu0 0
      %4166 = vmatprep.subr.bf16.mxu0 0
      %4167 = vmatpush1.bf16.xpose.msra.mxu0 0
      %4168 = vmatprep.subr.bf16.mxu0 0
      %4169 = vmatpush1.bf16.xpose.msra.mxu0 0
      %4170 = vmatprep.subr.bf16.mxu0 0
      %4171 = vmatpush1.bf16.xpose.msra.mxu0 %v4154
      %4172 = vmatprep.subr.bf16.mxu0 0
      %4173 = vmatpush2.bf16.xpose.msra.mxu0 0
      %4174 = vmatprep.subr.bf16.mxu0 0
      %4175 = vmatpush2.bf16.xpose.msra.mxu0 0
      %4176 = vmatprep.subr.bf16.mxu0 0
      %4177 = vmatpush2.bf16.xpose.msra.mxu0 0
      %4178 = vmatprep.subr.bf16.mxu0 0
      %4179 = vmatpush2.bf16.xpose.msra.mxu0 0
      %4180 = vmatprep.subr.bf16.mxu0 0
      %4181 = vmatpush2.bf16.xpose.msra.mxu0 0
      %4182 = vmatprep.subr.bf16.mxu0 0
      %4183 = vmatpush2.bf16.xpose.msra.mxu0 0
      %4184 = vmatprep.subr.bf16.mxu0 0
      %4185 = vmatpush2.bf16.xpose.msra.mxu0 0
      %4186 = vmatprep.subr.bf16.mxu0 0
      %4187 = vmatpush2.bf16.xpose.msra.mxu0 0
      %4188 = vmatprep.mubr.bf16.mxu0 0
      %4189 = vmatmul.mubr.bf16.gmra.mxu0 %v4151
      %v4190 = vpop.f32.mrf.mxu0
      %v4191 = vadd.f32 0.0, %v4190
      %v4192 = vpop.f32.mrf.mxu0
      %v4193 = vpop.f32.mrf.mxu0
      %v4194 = vpop.f32.mrf.mxu0
      %4195 = vdwg.mxu0
      %4197 = vrot.lane.b32.xlu0 %v1808, 112
      %v4198 = vpop.permute.xlu0 %4197
      %4200 = vrot.lane.b32.xlu0 %v1824, 112
      %v4201 = vpop.permute.xlu0 %4200
      %v4203 = vsel %vm1845, %v4198, 0
      %v4206 = vsel %vm1845, %v4201, 0
      %4208 = vmatprep.subr.bf16.mxu0 0
      %4209 = vmatpush1.bf16.xpose.msra.mxu0 0
      %4210 = vmatprep.subr.bf16.mxu0 0
      %4211 = vmatpush1.bf16.xpose.msra.mxu0 0
      %4212 = vmatprep.subr.bf16.mxu0 0
      %4213 = vmatpush1.bf16.xpose.msra.mxu0 0
      %4214 = vmatprep.subr.bf16.mxu0 0
      %4215 = vmatpush1.bf16.xpose.msra.mxu0 0
      %4216 = vmatprep.subr.bf16.mxu0 0
      %4217 = vmatpush1.bf16.xpose.msra.mxu0 0
      %4218 = vmatprep.subr.bf16.mxu0 0
      %4219 = vmatpush1.bf16.xpose.msra.mxu0 0
      %4220 = vmatprep.subr.bf16.mxu0 0
      %4221 = vmatpush1.bf16.xpose.msra.mxu0 0
      %4222 = vmatprep.subr.bf16.mxu0 0
      %4223 = vmatpush1.bf16.xpose.msra.mxu0 %v4206
      %4224 = vmatprep.subr.bf16.mxu0 0
      %4225 = vmatpush2.bf16.xpose.msra.mxu0 0
      %4226 = vmatprep.subr.bf16.mxu0 0
      %4227 = vmatpush2.bf16.xpose.msra.mxu0 0
      %4228 = vmatprep.subr.bf16.mxu0 0
      %4229 = vmatpush2.bf16.xpose.msra.mxu0 0
      %4230 = vmatprep.subr.bf16.mxu0 0
      %4231 = vmatpush2.bf16.xpose.msra.mxu0 0
      %4232 = vmatprep.subr.bf16.mxu0 0
      %4233 = vmatpush2.bf16.xpose.msra.mxu0 0
      %4234 = vmatprep.subr.bf16.mxu0 0
      %4235 = vmatpush2.bf16.xpose.msra.mxu0 0
      %4236 = vmatprep.subr.bf16.mxu0 0
      %4237 = vmatpush2.bf16.xpose.msra.mxu0 0
      %4238 = vmatprep.subr.bf16.mxu0 0
      %4239 = vmatpush2.bf16.xpose.msra.mxu0 0
      %4240 = vmatprep.mubr.bf16.mxu0 0
      %4241 = vmatmul.mubr.bf16.gmra.mxu0 %v4203
      %v4242 = vpop.f32.mrf.mxu0
      %v4243 = vadd.f32 0.0, %v4242
      %v4244 = vpop.f32.mrf.mxu0
      %v4245 = vpop.f32.mrf.mxu0
      %v4246 = vpop.f32.mrf.mxu0
      %4247 = vdwg.mxu0
      %4249 = vrot.lane.b32.xlu0 %v1809, 112
      %v4250 = vpop.permute.xlu0 %4249
      %4252 = vrot.lane.b32.xlu0 %v1825, 112
      %v4253 = vpop.permute.xlu0 %4252
      %v4255 = vsel %vm1845, %v4250, 0
      %v4258 = vsel %vm1845, %v4253, 0
      %4260 = vmatprep.subr.bf16.mxu0 0
      %4261 = vmatpush1.bf16.xpose.msra.mxu0 0
      %4262 = vmatprep.subr.bf16.mxu0 0
      %4263 = vmatpush1.bf16.xpose.msra.mxu0 0
      %4264 = vmatprep.subr.bf16.mxu0 0
      %4265 = vmatpush1.bf16.xpose.msra.mxu0 0
      %4266 = vmatprep.subr.bf16.mxu0 0
      %4267 = vmatpush1.bf16.xpose.msra.mxu0 0
      %4268 = vmatprep.subr.bf16.mxu0 0
      %4269 = vmatpush1.bf16.xpose.msra.mxu0 0
      %4270 = vmatprep.subr.bf16.mxu0 0
      %4271 = vmatpush1.bf16.xpose.msra.mxu0 0
      %4272 = vmatprep.subr.bf16.mxu0 0
      %4273 = vmatpush1.bf16.xpose.msra.mxu0 0
      %4274 = vmatprep.subr.bf16.mxu0 0
      %4275 = vmatpush1.bf16.xpose.msra.mxu0 %v4258
      %4276 = vmatprep.subr.bf16.mxu0 0
      %4277 = vmatpush2.bf16.xpose.msra.mxu0 0
      %4278 = vmatprep.subr.bf16.mxu0 0
      %4279 = vmatpush2.bf16.xpose.msra.mxu0 0
      %4280 = vmatprep.subr.bf16.mxu0 0
      %4281 = vmatpush2.bf16.xpose.msra.mxu0 0
      %4282 = vmatprep.subr.bf16.mxu0 0
      %4283 = vmatpush2.bf16.xpose.msra.mxu0 0
      %4284 = vmatprep.subr.bf16.mxu0 0
      %4285 = vmatpush2.bf16.xpose.msra.mxu0 0
      %4286 = vmatprep.subr.bf16.mxu0 0
      %4287 = vmatpush2.bf16.xpose.msra.mxu0 0
      %4288 = vmatprep.subr.bf16.mxu0 0
      %4289 = vmatpush2.bf16.xpose.msra.mxu0 0
      %4290 = vmatprep.subr.bf16.mxu0 0
      %4291 = vmatpush2.bf16.xpose.msra.mxu0 0
      %4292 = vmatprep.mubr.bf16.mxu0 0
      %4293 = vmatmul.mubr.bf16.gmra.mxu0 %v4255
      %v4294 = vpop.f32.mrf.mxu0
      %v4295 = vadd.f32 0.0, %v4294
      %v4296 = vpop.f32.mrf.mxu0
      %v4297 = vpop.f32.mrf.mxu0
      %v4298 = vpop.f32.mrf.mxu0
      %4299 = vdwg.mxu0
      %4301 = vrot.lane.b32.xlu0 %v1810, 112
      %v4302 = vpop.permute.xlu0 %4301
      %4304 = vrot.lane.b32.xlu0 %v1826, 112
      %v4305 = vpop.permute.xlu0 %4304
      %v4307 = vsel %vm1845, %v4302, 0
      %v4310 = vsel %vm1845, %v4305, 0
      %4312 = vmatprep.subr.bf16.mxu0 0
      %4313 = vmatpush1.bf16.xpose.msra.mxu0 0
      %4314 = vmatprep.subr.bf16.mxu0 0
      %4315 = vmatpush1.bf16.xpose.msra.mxu0 0
      %4316 = vmatprep.subr.bf16.mxu0 0
      %4317 = vmatpush1.bf16.xpose.msra.mxu0 0
      %4318 = vmatprep.subr.bf16.mxu0 0
      %4319 = vmatpush1.bf16.xpose.msra.mxu0 0
      %4320 = vmatprep.subr.bf16.mxu0 0
      %4321 = vmatpush1.bf16.xpose.msra.mxu0 0
      %4322 = vmatprep.subr.bf16.mxu0 0
      %4323 = vmatpush1.bf16.xpose.msra.mxu0 0
      %4324 = vmatprep.subr.bf16.mxu0 0
      %4325 = vmatpush1.bf16.xpose.msra.mxu0 0
      %4326 = vmatprep.subr.bf16.mxu0 0
      %4327 = vmatpush1.bf16.xpose.msra.mxu0 %v4310
      %4328 = vmatprep.subr.bf16.mxu0 0
      %4329 = vmatpush2.bf16.xpose.msra.mxu0 0
      %4330 = vmatprep.subr.bf16.mxu0 0
      %4331 = vmatpush2.bf16.xpose.msra.mxu0 0
      %4332 = vmatprep.subr.bf16.mxu0 0
      %4333 = vmatpush2.bf16.xpose.msra.mxu0 0
      %4334 = vmatprep.subr.bf16.mxu0 0
      %4335 = vmatpush2.bf16.xpose.msra.mxu0 0
      %4336 = vmatprep.subr.bf16.mxu0 0
      %4337 = vmatpush2.bf16.xpose.msra.mxu0 0
      %4338 = vmatprep.subr.bf16.mxu0 0
      %4339 = vmatpush2.bf16.xpose.msra.mxu0 0
      %4340 = vmatprep.subr.bf16.mxu0 0
      %4341 = vmatpush2.bf16.xpose.msra.mxu0 0
      %4342 = vmatprep.subr.bf16.mxu0 0
      %4343 = vmatpush2.bf16.xpose.msra.mxu0 0
      %4344 = vmatprep.mubr.bf16.mxu0 0
      %4345 = vmatmul.mubr.bf16.gmra.mxu0 %v4307
      %v4346 = vpop.f32.mrf.mxu0
      %v4347 = vadd.f32 0.0, %v4346
      %v4348 = vpop.f32.mrf.mxu0
      %v4349 = vpop.f32.mrf.mxu0
      %v4350 = vpop.f32.mrf.mxu0
      %4351 = vdwg.mxu0
      %4353 = vrot.lane.b32.xlu0 %v1811, 112
      %v4354 = vpop.permute.xlu0 %4353
      %4356 = vrot.lane.b32.xlu0 %v1827, 112
      %v4357 = vpop.permute.xlu0 %4356
      %v4359 = vsel %vm1845, %v4354, 0
      %v4362 = vsel %vm1845, %v4357, 0
      %4364 = vmatprep.subr.bf16.mxu0 0
      %4365 = vmatpush1.bf16.xpose.msra.mxu0 0
      %4366 = vmatprep.subr.bf16.mxu0 0
      %4367 = vmatpush1.bf16.xpose.msra.mxu0 0
      %4368 = vmatprep.subr.bf16.mxu0 0
      %4369 = vmatpush1.bf16.xpose.msra.mxu0 0
      %4370 = vmatprep.subr.bf16.mxu0 0
      %4371 = vmatpush1.bf16.xpose.msra.mxu0 0
      %4372 = vmatprep.subr.bf16.mxu0 0
      %4373 = vmatpush1.bf16.xpose.msra.mxu0 0
      %4374 = vmatprep.subr.bf16.mxu0 0
      %4375 = vmatpush1.bf16.xpose.msra.mxu0 0
      %4376 = vmatprep.subr.bf16.mxu0 0
      %4377 = vmatpush1.bf16.xpose.msra.mxu0 0
      %4378 = vmatprep.subr.bf16.mxu0 0
      %4379 = vmatpush1.bf16.xpose.msra.mxu0 %v4362
      %4380 = vmatprep.subr.bf16.mxu0 0
      %4381 = vmatpush2.bf16.xpose.msra.mxu0 0
      %4382 = vmatprep.subr.bf16.mxu0 0
      %4383 = vmatpush2.bf16.xpose.msra.mxu0 0
      %4384 = vmatprep.subr.bf16.mxu0 0
      %4385 = vmatpush2.bf16.xpose.msra.mxu0 0
      %4386 = vmatprep.subr.bf16.mxu0 0
      %4387 = vmatpush2.bf16.xpose.msra.mxu0 0
      %4388 = vmatprep.subr.bf16.mxu0 0
      %4389 = vmatpush2.bf16.xpose.msra.mxu0 0
      %4390 = vmatprep.subr.bf16.mxu0 0
      %4391 = vmatpush2.bf16.xpose.msra.mxu0 0
      %4392 = vmatprep.subr.bf16.mxu0 0
      %4393 = vmatpush2.bf16.xpose.msra.mxu0 0
      %4394 = vmatprep.subr.bf16.mxu0 0
      %4395 = vmatpush2.bf16.xpose.msra.mxu0 0
      %4396 = vmatprep.mubr.bf16.mxu0 0
      %4397 = vmatmul.mubr.bf16.gmra.mxu0 %v4359
      %v4398 = vpop.f32.mrf.mxu0
      %v4399 = vadd.f32 0.0, %v4398
      %v4400 = vpop.f32.mrf.mxu0
      %v4401 = vpop.f32.mrf.mxu0
      %v4402 = vpop.f32.mrf.mxu0
      %4403 = vdwg.mxu0
      %4405 = vrot.lane.b32.xlu0 %v1812, 112
      %v4406 = vpop.permute.xlu0 %4405
      %4408 = vrot.lane.b32.xlu0 %v1828, 112
      %v4409 = vpop.permute.xlu0 %4408
      %v4411 = vsel %vm1845, %v4406, 0
      %v4414 = vsel %vm1845, %v4409, 0
      %4416 = vmatprep.subr.bf16.mxu0 0
      %4417 = vmatpush1.bf16.xpose.msra.mxu0 0
      %4418 = vmatprep.subr.bf16.mxu0 0
      %4419 = vmatpush1.bf16.xpose.msra.mxu0 0
      %4420 = vmatprep.subr.bf16.mxu0 0
      %4421 = vmatpush1.bf16.xpose.msra.mxu0 0
      %4422 = vmatprep.subr.bf16.mxu0 0
      %4423 = vmatpush1.bf16.xpose.msra.mxu0 0
      %4424 = vmatprep.subr.bf16.mxu0 0
      %4425 = vmatpush1.bf16.xpose.msra.mxu0 0
      %4426 = vmatprep.subr.bf16.mxu0 0
      %4427 = vmatpush1.bf16.xpose.msra.mxu0 0
      %4428 = vmatprep.subr.bf16.mxu0 0
      %4429 = vmatpush1.bf16.xpose.msra.mxu0 0
      %4430 = vmatprep.subr.bf16.mxu0 0
      %4431 = vmatpush1.bf16.xpose.msra.mxu0 %v4414
      %4432 = vmatprep.subr.bf16.mxu0 0
      %4433 = vmatpush2.bf16.xpose.msra.mxu0 0
      %4434 = vmatprep.subr.bf16.mxu0 0
      %4435 = vmatpush2.bf16.xpose.msra.mxu0 0
      %4436 = vmatprep.subr.bf16.mxu0 0
      %4437 = vmatpush2.bf16.xpose.msra.mxu0 0
      %4438 = vmatprep.subr.bf16.mxu0 0
      %4439 = vmatpush2.bf16.xpose.msra.mxu0 0
      %4440 = vmatprep.subr.bf16.mxu0 0
      %4441 = vmatpush2.bf16.xpose.msra.mxu0 0
      %4442 = vmatprep.subr.bf16.mxu0 0
      %4443 = vmatpush2.bf16.xpose.msra.mxu0 0
      %4444 = vmatprep.subr.bf16.mxu0 0
      %4445 = vmatpush2.bf16.xpose.msra.mxu0 0
      %4446 = vmatprep.subr.bf16.mxu0 0
      %4447 = vmatpush2.bf16.xpose.msra.mxu0 0
      %4448 = vmatprep.mubr.bf16.mxu0 0
      %4449 = vmatmul.mubr.bf16.gmra.mxu0 %v4411
      %v4450 = vpop.f32.mrf.mxu0
      %v4451 = vadd.f32 0.0, %v4450
      %v4452 = vpop.f32.mrf.mxu0
      %v4453 = vpop.f32.mrf.mxu0
      %v4454 = vpop.f32.mrf.mxu0
      %4455 = vdwg.mxu0
      %v4456 = vmul.f32 %v3671, 0.25
      %v4457 = vmul.f32 %v3723, 0.25
      %v4458 = vmul.f32 %v3775, 0.25
      %v4459 = vmul.f32 %v3827, 0.25
      %v4460 = vmul.f32 %v3879, 0.25
      %v4461 = vmul.f32 %v3931, 0.25
      %v4462 = vmul.f32 %v3983, 0.25
      %v4463 = vmul.f32 %v4035, 0.25
      %v4464 = vmul.f32 %v4087, 0.25
      %v4465 = vmul.f32 %v4139, 0.25
      %v4466 = vmul.f32 %v4191, 0.25
      %v4467 = vmul.f32 %v4243, 0.25
      %v4468 = vmul.f32 %v4295, 0.25
      %v4469 = vmul.f32 %v4347, 0.25
      %v4470 = vmul.f32 %v4399, 0.25
      %v4471 = vmul.f32 %v4451, 0.25
      %v4472 = vadd.f32 %v4456, %v2601
      %v4473 = vadd.f32 %v4457, %v2605
      %v4474 = vadd.f32 %v4458, %v2609
      %v4475 = vadd.f32 %v4459, %v2613
      %v4476 = vadd.f32 %v4460, %v2617
      %v4477 = vadd.f32 %v4461, %v2621
      %v4478 = vadd.f32 %v4462, %v2625
      %v4479 = vadd.f32 %v4463, %v2629
      %v4480 = vadd.f32 %v4464, %v2633
      %v4481 = vadd.f32 %v4465, %v2637
      %v4482 = vadd.f32 %v4466, %v2641
      %v4483 = vadd.f32 %v4467, %v2645
      %v4484 = vadd.f32 %v4468, %v2649
      %v4485 = vadd.f32 %v4469, %v2653
      %v4486 = vadd.f32 %v4470, %v2657
      %v4487 = vadd.f32 %v4471, %v2661
      %v4488 = vsel %vm2694, %v4472, -inf
      %4489 = vmax.xlane.f32.xlu0 %v4488
      %v4490 = vpop.xlane.xlu0 %4489
      %v4491 = vsel %vm2694, %v4473, -inf
      %4492 = vmax.xlane.f32.xlu0 %v4491
      %v4493 = vpop.xlane.xlu0 %4492
      %v4494 = vsel %vm2694, %v4474, -inf
      %4495 = vmax.xlane.f32.xlu0 %v4494
      %v4496 = vpop.xlane.xlu0 %4495
      %v4497 = vsel %vm2694, %v4475, -inf
      %4498 = vmax.xlane.f32.xlu0 %v4497
      %v4499 = vpop.xlane.xlu0 %4498
      %v4500 = vsel %vm2694, %v4476, -inf
      %4501 = vmax.xlane.f32.xlu0 %v4500
      %v4502 = vpop.xlane.xlu0 %4501
      %v4503 = vsel %vm2694, %v4477, -inf
      %4504 = vmax.xlane.f32.xlu0 %v4503
      %v4505 = vpop.xlane.xlu0 %4504
      %v4506 = vsel %vm2694, %v4478, -inf
      %4507 = vmax.xlane.f32.xlu0 %v4506
      %v4508 = vpop.xlane.xlu0 %4507
      %v4509 = vsel %vm2694, %v4479, -inf
      %4510 = vmax.xlane.f32.xlu0 %v4509
      %v4511 = vpop.xlane.xlu0 %4510
      %v4512 = vsel %vm2694, %v4480, -inf
      %4513 = vmax.xlane.f32.xlu0 %v4512
      %v4514 = vpop.xlane.xlu0 %4513
      %v4515 = vsel %vm2694, %v4481, -inf
      %4516 = vmax.xlane.f32.xlu0 %v4515
      %v4517 = vpop.xlane.xlu0 %4516
      %v4518 = vsel %vm2694, %v4482, -inf
      %4519 = vmax.xlane.f32.xlu0 %v4518
      %v4520 = vpop.xlane.xlu0 %4519
      %v4521 = vsel %vm2694, %v4483, -inf
      %4522 = vmax.xlane.f32.xlu0 %v4521
      %v4523 = vpop.xlane.xlu0 %4522
      %v4524 = vsel %vm2694, %v4484, -inf
      %4525 = vmax.xlane.f32.xlu0 %v4524
      %v4526 = vpop.xlane.xlu0 %4525
      %v4527 = vsel %vm2694, %v4485, -inf
      %4528 = vmax.xlane.f32.xlu0 %v4527
      %v4529 = vpop.xlane.xlu0 %4528
      %v4530 = vsel %vm2694, %v4486, -inf
      %4531 = vmax.xlane.f32.xlu0 %v4530
      %v4532 = vpop.xlane.xlu0 %4531
      %v4533 = vsel %vm2694, %v4487, -inf
      %4534 = vmax.xlane.f32.xlu0 %v4533
      %v4535 = vpop.xlane.xlu0 %4534
      %v4536 = vsub.f32 %v4472, %v4490
      %v4537 = vsub.f32 %v4473, %v4493
      %v4538 = vsub.f32 %v4474, %v4496
      %v4539 = vsub.f32 %v4475, %v4499
      %v4540 = vsub.f32 %v4476, %v4502
      %v4541 = vsub.f32 %v4477, %v4505
      %v4542 = vsub.f32 %v4478, %v4508
      %v4543 = vsub.f32 %v4479, %v4511
      %v4544 = vsub.f32 %v4480, %v4514
      %v4545 = vsub.f32 %v4481, %v4517
      %v4546 = vsub.f32 %v4482, %v4520
      %v4547 = vsub.f32 %v4483, %v4523
      %v4548 = vsub.f32 %v4484, %v4526
      %v4549 = vsub.f32 %v4485, %v4529
      %v4550 = vsub.f32 %v4486, %v4532
      %v4551 = vsub.f32 %v4487, %v4535
      %v4552 = vmul.f32 %v4536, 1.442695
      %v4553 = vpow.pop %v4552
      %v4554 = vmul.f32 %v4537, 1.442695
      %v4555 = vpow.pop %v4554
      %v4556 = vmul.f32 %v4538, 1.442695
      %v4557 = vpow.pop %v4556
      %v4558 = vmul.f32 %v4539, 1.442695
      %v4559 = vpow.pop %v4558
      %v4560 = vmul.f32 %v4540, 1.442695
      %v4561 = vpow.pop %v4560
      %v4562 = vmul.f32 %v4541, 1.442695
      %v4563 = vpow.pop %v4562
      %v4564 = vmul.f32 %v4542, 1.442695
      %v4565 = vpow.pop %v4564
      %v4566 = vmul.f32 %v4543, 1.442695
      %v4567 = vpow.pop %v4566
      %v4568 = vmul.f32 %v4544, 1.442695
      %v4569 = vpow.pop %v4568
      %v4570 = vmul.f32 %v4545, 1.442695
      %v4571 = vpow.pop %v4570
      %v4572 = vmul.f32 %v4546, 1.442695
      %v4573 = vpow.pop %v4572
      %v4574 = vmul.f32 %v4547, 1.442695
      %v4575 = vpow.pop %v4574
      %v4576 = vmul.f32 %v4548, 1.442695
      %v4577 = vpow.pop %v4576
      %v4578 = vmul.f32 %v4549, 1.442695
      %v4579 = vpow.pop %v4578
      %v4580 = vmul.f32 %v4550, 1.442695
      %v4581 = vpow.pop %v4580
      %v4582 = vmul.f32 %v4551, 1.442695
      %v4583 = vpow.pop %v4582
      %v4584 = vsel %vm2694, %v4553, 0.0
      %4585 = vadd.xlane.f32.xlu0 %v4584
      %v4586 = vpop.xlane.xlu0 %4585
      %v4587 = vsel %vm2694, %v4555, 0.0
      %4588 = vadd.xlane.f32.xlu0 %v4587
      %v4589 = vpop.xlane.xlu0 %4588
      %v4590 = vsel %vm2694, %v4557, 0.0
      %4591 = vadd.xlane.f32.xlu0 %v4590
      %v4592 = vpop.xlane.xlu0 %4591
      %v4593 = vsel %vm2694, %v4559, 0.0
      %4594 = vadd.xlane.f32.xlu0 %v4593
      %v4595 = vpop.xlane.xlu0 %4594
      %v4596 = vsel %vm2694, %v4561, 0.0
      %4597 = vadd.xlane.f32.xlu0 %v4596
      %v4598 = vpop.xlane.xlu0 %4597
      %v4599 = vsel %vm2694, %v4563, 0.0
      %4600 = vadd.xlane.f32.xlu0 %v4599
      %v4601 = vpop.xlane.xlu0 %4600
      %v4602 = vsel %vm2694, %v4565, 0.0
      %4603 = vadd.xlane.f32.xlu0 %v4602
      %v4604 = vpop.xlane.xlu0 %4603
      %v4605 = vsel %vm2694, %v4567, 0.0
      %4606 = vadd.xlane.f32.xlu0 %v4605
      %v4607 = vpop.xlane.xlu0 %4606
      %v4608 = vsel %vm2694, %v4569, 0.0
      %4609 = vadd.xlane.f32.xlu0 %v4608
      %v4610 = vpop.xlane.xlu0 %4609
      %v4611 = vsel %vm2694, %v4571, 0.0
      %4612 = vadd.xlane.f32.xlu0 %v4611
      %v4613 = vpop.xlane.xlu0 %4612
      %v4614 = vsel %vm2694, %v4573, 0.0
      %4615 = vadd.xlane.f32.xlu0 %v4614
      %v4616 = vpop.xlane.xlu0 %4615
      %v4617 = vsel %vm2694, %v4575, 0.0
      %4618 = vadd.xlane.f32.xlu0 %v4617
      %v4619 = vpop.xlane.xlu0 %4618
      %v4620 = vsel %vm2694, %v4577, 0.0
      %4621 = vadd.xlane.f32.xlu0 %v4620
      %v4622 = vpop.xlane.xlu0 %4621
      %v4623 = vsel %vm2694, %v4579, 0.0
      %4624 = vadd.xlane.f32.xlu0 %v4623
      %v4625 = vpop.xlane.xlu0 %4624
      %v4626 = vsel %vm2694, %v4581, 0.0
      %4627 = vadd.xlane.f32.xlu0 %v4626
      %v4628 = vpop.xlane.xlu0 %4627
      %v4629 = vsel %vm2694, %v4583, 0.0
      %4630 = vadd.xlane.f32.xlu0 %v4629
      %v4631 = vpop.xlane.xlu0 %4630
      %v4632 = vrcp.pop %v4586
      %v4633 = vrcp.pop %v4589
      %v4634 = vrcp.pop %v4592
      %v4635 = vrcp.pop %v4595
      %v4636 = vrcp.pop %v4598
      %v4637 = vrcp.pop %v4601
      %v4638 = vrcp.pop %v4604
      %v4639 = vrcp.pop %v4607
      %v4640 = vrcp.pop %v4610
      %v4641 = vrcp.pop %v4613
      %v4642 = vrcp.pop %v4616
      %v4643 = vrcp.pop %v4619
      %v4644 = vrcp.pop %v4622
      %v4645 = vrcp.pop %v4625
      %v4646 = vrcp.pop %v4628
      %v4647 = vrcp.pop %v4631
      %v4648 = vmul.f32 %v4553, %v4632
      %v4649 = vmul.f32 %v4555, %v4633
      %v4650 = vmul.f32 %v4557, %v4634
      %v4651 = vmul.f32 %v4559, %v4635
      %v4652 = vmul.f32 %v4561, %v4636
      %v4653 = vmul.f32 %v4563, %v4637
      %v4654 = vmul.f32 %v4565, %v4638
      %v4655 = vmul.f32 %v4567, %v4639
      %v4656 = vmul.f32 %v4569, %v4640
      %v4657 = vmul.f32 %v4571, %v4641
      %v4658 = vmul.f32 %v4573, %v4642
      %v4659 = vmul.f32 %v4575, %v4643
      %v4660 = vmul.f32 %v4577, %v4644
      %v4661 = vmul.f32 %v4579, %v4645
      %v4662 = vmul.f32 %v4581, %v4646
      %v4663 = vmul.f32 %v4583, %v4647
      %v4664 = vpack.c.bf16 %v4648, %v4648
      %v4665 = vpack.c.bf16 %v4649, %v4649
      %v4666 = vpack.c.bf16 %v4650, %v4650
      %v4667 = vpack.c.bf16 %v4651, %v4651
      %v4668 = vpack.c.bf16 %v4652, %v4652
      %v4669 = vpack.c.bf16 %v4653, %v4653
      %v4670 = vpack.c.bf16 %v4654, %v4654
      %v4671 = vpack.c.bf16 %v4655, %v4655
      %v4672 = vpack.c.bf16 %v4656, %v4656
      %v4673 = vpack.c.bf16 %v4657, %v4657
      %v4674 = vpack.c.bf16 %v4658, %v4658
      %v4675 = vpack.c.bf16 %v4659, %v4659
      %v4676 = vpack.c.bf16 %v4660, %v4660
      %v4677 = vpack.c.bf16 %v4661, %v4661
      %v4678 = vpack.c.bf16 %v4662, %v4662
      %v4679 = vpack.c.bf16 %v4663, %v4663
      %4681 = vrot.lane.b32.xlu0 %v1829, 112
      %v4682 = vpop.permute.xlu0 %4681
      %v4684 = vsel %vm2694, %v4664, 0
      %v4687 = vsel %vm2890, %v4682, 0
      %4689 = vmatprep.subr.bf16.mxu0 0
      %4690 = vmatpush1.bf16.msra.mxu0 0
      %4691 = vmatprep.subr.bf16.mxu0 0
      %4692 = vmatpush1.bf16.msra.mxu0 0
      %4693 = vmatprep.subr.bf16.mxu0 0
      %4694 = vmatpush1.bf16.msra.mxu0 0
      %4695 = vmatprep.subr.bf16.mxu0 0
      %4696 = vmatpush1.bf16.msra.mxu0 0
      %4697 = vmatprep.subr.bf16.mxu0 0
      %4698 = vmatpush1.bf16.msra.mxu0 0
      %4699 = vmatprep.subr.bf16.mxu0 0
      %4700 = vmatpush1.bf16.msra.mxu0 0
      %4701 = vmatprep.subr.bf16.mxu0 0
      %4702 = vmatpush1.bf16.msra.mxu0 0
      %4703 = vmatprep.subr.bf16.mxu0 0
      %4704 = vmatpush1.bf16.msra.mxu0 %v4687
      %4705 = vmatprep.subr.bf16.mxu0 0
      %4706 = vmatpush2.bf16.msra.mxu0 0
      %4707 = vmatprep.subr.bf16.mxu0 0
      %4708 = vmatpush2.bf16.msra.mxu0 0
      %4709 = vmatprep.subr.bf16.mxu0 0
      %4710 = vmatpush2.bf16.msra.mxu0 0
      %4711 = vmatprep.subr.bf16.mxu0 0
      %4712 = vmatpush2.bf16.msra.mxu0 0
      %4713 = vmatprep.subr.bf16.mxu0 0
      %4714 = vmatpush2.bf16.msra.mxu0 0
      %4715 = vmatprep.subr.bf16.mxu0 0
      %4716 = vmatpush2.bf16.msra.mxu0 0
      %4717 = vmatprep.subr.bf16.mxu0 0
      %4718 = vmatpush2.bf16.msra.mxu0 0
      %4719 = vmatprep.subr.bf16.mxu0 0
      %4720 = vmatpush2.bf16.msra.mxu0 0
      %4721 = vmatprep.mubr.bf16.mxu0 0
      %4722 = vmatmul.mubr.bf16.gmra.mxu0 %v4684
      %v4723 = vpop.f32.mrf.mxu0
      %v4724 = vadd.f32 0.0, %v4723
      %v4725 = vpop.f32.mrf.mxu0
      %v4726 = vpop.f32.mrf.mxu0
      %v4727 = vpop.f32.mrf.mxu0
      %4728 = vdwg.mxu0
      %4730 = vrot.lane.b32.xlu0 %v1830, 112
      %v4731 = vpop.permute.xlu0 %4730
      %v4733 = vsel %vm2694, %v4665, 0
      %v4736 = vsel %vm2890, %v4731, 0
      %4738 = vmatprep.subr.bf16.mxu0 0
      %4739 = vmatpush1.bf16.msra.mxu0 0
      %4740 = vmatprep.subr.bf16.mxu0 0
      %4741 = vmatpush1.bf16.msra.mxu0 0
      %4742 = vmatprep.subr.bf16.mxu0 0
      %4743 = vmatpush1.bf16.msra.mxu0 0
      %4744 = vmatprep.subr.bf16.mxu0 0
      %4745 = vmatpush1.bf16.msra.mxu0 0
      %4746 = vmatprep.subr.bf16.mxu0 0
      %4747 = vmatpush1.bf16.msra.mxu0 0
      %4748 = vmatprep.subr.bf16.mxu0 0
      %4749 = vmatpush1.bf16.msra.mxu0 0
      %4750 = vmatprep.subr.bf16.mxu0 0
      %4751 = vmatpush1.bf16.msra.mxu0 0
      %4752 = vmatprep.subr.bf16.mxu0 0
      %4753 = vmatpush1.bf16.msra.mxu0 %v4736
      %4754 = vmatprep.subr.bf16.mxu0 0
      %4755 = vmatpush2.bf16.msra.mxu0 0
      %4756 = vmatprep.subr.bf16.mxu0 0
      %4757 = vmatpush2.bf16.msra.mxu0 0
      %4758 = vmatprep.subr.bf16.mxu0 0
      %4759 = vmatpush2.bf16.msra.mxu0 0
      %4760 = vmatprep.subr.bf16.mxu0 0
      %4761 = vmatpush2.bf16.msra.mxu0 0
      %4762 = vmatprep.subr.bf16.mxu0 0
      %4763 = vmatpush2.bf16.msra.mxu0 0
      %4764 = vmatprep.subr.bf16.mxu0 0
      %4765 = vmatpush2.bf16.msra.mxu0 0
      %4766 = vmatprep.subr.bf16.mxu0 0
      %4767 = vmatpush2.bf16.msra.mxu0 0
      %4768 = vmatprep.subr.bf16.mxu0 0
      %4769 = vmatpush2.bf16.msra.mxu0 0
      %4770 = vmatprep.mubr.bf16.mxu0 0
      %4771 = vmatmul.mubr.bf16.gmra.mxu0 %v4733
      %v4772 = vpop.f32.mrf.mxu0
      %v4773 = vadd.f32 0.0, %v4772
      %v4774 = vpop.f32.mrf.mxu0
      %v4775 = vpop.f32.mrf.mxu0
      %v4776 = vpop.f32.mrf.mxu0
      %4777 = vdwg.mxu0
      %4779 = vrot.lane.b32.xlu0 %v1831, 112
      %v4780 = vpop.permute.xlu0 %4779
      %v4782 = vsel %vm2694, %v4666, 0
      %v4785 = vsel %vm2890, %v4780, 0
      %4787 = vmatprep.subr.bf16.mxu0 0
      %4788 = vmatpush1.bf16.msra.mxu0 0
      %4789 = vmatprep.subr.bf16.mxu0 0
      %4790 = vmatpush1.bf16.msra.mxu0 0
      %4791 = vmatprep.subr.bf16.mxu0 0
      %4792 = vmatpush1.bf16.msra.mxu0 0
      %4793 = vmatprep.subr.bf16.mxu0 0
      %4794 = vmatpush1.bf16.msra.mxu0 0
      %4795 = vmatprep.subr.bf16.mxu0 0
      %4796 = vmatpush1.bf16.msra.mxu0 0
      %4797 = vmatprep.subr.bf16.mxu0 0
      %4798 = vmatpush1.bf16.msra.mxu0 0
      %4799 = vmatprep.subr.bf16.mxu0 0
      %4800 = vmatpush1.bf16.msra.mxu0 0
      %4801 = vmatprep.subr.bf16.mxu0 0
      %4802 = vmatpush1.bf16.msra.mxu0 %v4785
      %4803 = vmatprep.subr.bf16.mxu0 0
      %4804 = vmatpush2.bf16.msra.mxu0 0
      %4805 = vmatprep.subr.bf16.mxu0 0
      %4806 = vmatpush2.bf16.msra.mxu0 0
      %4807 = vmatprep.subr.bf16.mxu0 0
      %4808 = vmatpush2.bf16.msra.mxu0 0
      %4809 = vmatprep.subr.bf16.mxu0 0
      %4810 = vmatpush2.bf16.msra.mxu0 0
      %4811 = vmatprep.subr.bf16.mxu0 0
      %4812 = vmatpush2.bf16.msra.mxu0 0
      %4813 = vmatprep.subr.bf16.mxu0 0
      %4814 = vmatpush2.bf16.msra.mxu0 0
      %4815 = vmatprep.subr.bf16.mxu0 0
      %4816 = vmatpush2.bf16.msra.mxu0 0
      %4817 = vmatprep.subr.bf16.mxu0 0
      %4818 = vmatpush2.bf16.msra.mxu0 0
      %4819 = vmatprep.mubr.bf16.mxu0 0
      %4820 = vmatmul.mubr.bf16.gmra.mxu0 %v4782
      %v4821 = vpop.f32.mrf.mxu0
      %v4822 = vadd.f32 0.0, %v4821
      %v4823 = vpop.f32.mrf.mxu0
      %v4824 = vpop.f32.mrf.mxu0
      %v4825 = vpop.f32.mrf.mxu0
      %4826 = vdwg.mxu0
      %4828 = vrot.lane.b32.xlu0 %v1832, 112
      %v4829 = vpop.permute.xlu0 %4828
      %v4831 = vsel %vm2694, %v4667, 0
      %v4834 = vsel %vm2890, %v4829, 0
      %4836 = vmatprep.subr.bf16.mxu0 0
      %4837 = vmatpush1.bf16.msra.mxu0 0
      %4838 = vmatprep.subr.bf16.mxu0 0
      %4839 = vmatpush1.bf16.msra.mxu0 0
      %4840 = vmatprep.subr.bf16.mxu0 0
      %4841 = vmatpush1.bf16.msra.mxu0 0
      %4842 = vmatprep.subr.bf16.mxu0 0
      %4843 = vmatpush1.bf16.msra.mxu0 0
      %4844 = vmatprep.subr.bf16.mxu0 0
      %4845 = vmatpush1.bf16.msra.mxu0 0
      %4846 = vmatprep.subr.bf16.mxu0 0
      %4847 = vmatpush1.bf16.msra.mxu0 0
      %4848 = vmatprep.subr.bf16.mxu0 0
      %4849 = vmatpush1.bf16.msra.mxu0 0
      %4850 = vmatprep.subr.bf16.mxu0 0
      %4851 = vmatpush1.bf16.msra.mxu0 %v4834
      %4852 = vmatprep.subr.bf16.mxu0 0
      %4853 = vmatpush2.bf16.msra.mxu0 0
      %4854 = vmatprep.subr.bf16.mxu0 0
      %4855 = vmatpush2.bf16.msra.mxu0 0
      %4856 = vmatprep.subr.bf16.mxu0 0
      %4857 = vmatpush2.bf16.msra.mxu0 0
      %4858 = vmatprep.subr.bf16.mxu0 0
      %4859 = vmatpush2.bf16.msra.mxu0 0
      %4860 = vmatprep.subr.bf16.mxu0 0
      %4861 = vmatpush2.bf16.msra.mxu0 0
      %4862 = vmatprep.subr.bf16.mxu0 0
      %4863 = vmatpush2.bf16.msra.mxu0 0
      %4864 = vmatprep.subr.bf16.mxu0 0
      %4865 = vmatpush2.bf16.msra.mxu0 0
      %4866 = vmatprep.subr.bf16.mxu0 0
      %4867 = vmatpush2.bf16.msra.mxu0 0
      %4868 = vmatprep.mubr.bf16.mxu0 0
      %4869 = vmatmul.mubr.bf16.gmra.mxu0 %v4831
      %v4870 = vpop.f32.mrf.mxu0
      %v4871 = vadd.f32 0.0, %v4870
      %v4872 = vpop.f32.mrf.mxu0
      %v4873 = vpop.f32.mrf.mxu0
      %v4874 = vpop.f32.mrf.mxu0
      %4875 = vdwg.mxu0
      %4877 = vrot.lane.b32.xlu0 %v1833, 112
      %v4878 = vpop.permute.xlu0 %4877
      %v4880 = vsel %vm2694, %v4668, 0
      %v4883 = vsel %vm2890, %v4878, 0
      %4885 = vmatprep.subr.bf16.mxu0 0
      %4886 = vmatpush1.bf16.msra.mxu0 0
      %4887 = vmatprep.subr.bf16.mxu0 0
      %4888 = vmatpush1.bf16.msra.mxu0 0
      %4889 = vmatprep.subr.bf16.mxu0 0
      %4890 = vmatpush1.bf16.msra.mxu0 0
      %4891 = vmatprep.subr.bf16.mxu0 0
      %4892 = vmatpush1.bf16.msra.mxu0 0
      %4893 = vmatprep.subr.bf16.mxu0 0
      %4894 = vmatpush1.bf16.msra.mxu0 0
      %4895 = vmatprep.subr.bf16.mxu0 0
      %4896 = vmatpush1.bf16.msra.mxu0 0
      %4897 = vmatprep.subr.bf16.mxu0 0
      %4898 = vmatpush1.bf16.msra.mxu0 0
      %4899 = vmatprep.subr.bf16.mxu0 0
      %4900 = vmatpush1.bf16.msra.mxu0 %v4883
      %4901 = vmatprep.subr.bf16.mxu0 0
      %4902 = vmatpush2.bf16.msra.mxu0 0
      %4903 = vmatprep.subr.bf16.mxu0 0
      %4904 = vmatpush2.bf16.msra.mxu0 0
      %4905 = vmatprep.subr.bf16.mxu0 0
      %4906 = vmatpush2.bf16.msra.mxu0 0
      %4907 = vmatprep.subr.bf16.mxu0 0
      %4908 = vmatpush2.bf16.msra.mxu0 0
      %4909 = vmatprep.subr.bf16.mxu0 0
      %4910 = vmatpush2.bf16.msra.mxu0 0
      %4911 = vmatprep.subr.bf16.mxu0 0
      %4912 = vmatpush2.bf16.msra.mxu0 0
      %4913 = vmatprep.subr.bf16.mxu0 0
      %4914 = vmatpush2.bf16.msra.mxu0 0
      %4915 = vmatprep.subr.bf16.mxu0 0
      %4916 = vmatpush2.bf16.msra.mxu0 0
      %4917 = vmatprep.mubr.bf16.mxu0 0
      %4918 = vmatmul.mubr.bf16.gmra.mxu0 %v4880
      %v4919 = vpop.f32.mrf.mxu0
      %v4920 = vadd.f32 0.0, %v4919
      %v4921 = vpop.f32.mrf.mxu0
      %v4922 = vpop.f32.mrf.mxu0
      %v4923 = vpop.f32.mrf.mxu0
      %4924 = vdwg.mxu0
      %4926 = vrot.lane.b32.xlu0 %v1834, 112
      %v4927 = vpop.permute.xlu0 %4926
      %v4929 = vsel %vm2694, %v4669, 0
      %v4932 = vsel %vm2890, %v4927, 0
      %4934 = vmatprep.subr.bf16.mxu0 0
      %4935 = vmatpush1.bf16.msra.mxu0 0
      %4936 = vmatprep.subr.bf16.mxu0 0
      %4937 = vmatpush1.bf16.msra.mxu0 0
      %4938 = vmatprep.subr.bf16.mxu0 0
      %4939 = vmatpush1.bf16.msra.mxu0 0
      %4940 = vmatprep.subr.bf16.mxu0 0
      %4941 = vmatpush1.bf16.msra.mxu0 0
      %4942 = vmatprep.subr.bf16.mxu0 0
      %4943 = vmatpush1.bf16.msra.mxu0 0
      %4944 = vmatprep.subr.bf16.mxu0 0
      %4945 = vmatpush1.bf16.msra.mxu0 0
      %4946 = vmatprep.subr.bf16.mxu0 0
      %4947 = vmatpush1.bf16.msra.mxu0 0
      %4948 = vmatprep.subr.bf16.mxu0 0
      %4949 = vmatpush1.bf16.msra.mxu0 %v4932
      %4950 = vmatprep.subr.bf16.mxu0 0
      %4951 = vmatpush2.bf16.msra.mxu0 0
      %4952 = vmatprep.subr.bf16.mxu0 0
      %4953 = vmatpush2.bf16.msra.mxu0 0
      %4954 = vmatprep.subr.bf16.mxu0 0
      %4955 = vmatpush2.bf16.msra.mxu0 0
      %4956 = vmatprep.subr.bf16.mxu0 0
      %4957 = vmatpush2.bf16.msra.mxu0 0
      %4958 = vmatprep.subr.bf16.mxu0 0
      %4959 = vmatpush2.bf16.msra.mxu0 0
      %4960 = vmatprep.subr.bf16.mxu0 0
      %4961 = vmatpush2.bf16.msra.mxu0 0
      %4962 = vmatprep.subr.bf16.mxu0 0
      %4963 = vmatpush2.bf16.msra.mxu0 0
      %4964 = vmatprep.subr.bf16.mxu0 0
      %4965 = vmatpush2.bf16.msra.mxu0 0
      %4966 = vmatprep.mubr.bf16.mxu0 0
      %4967 = vmatmul.mubr.bf16.gmra.mxu0 %v4929
      %v4968 = vpop.f32.mrf.mxu0
      %v4969 = vadd.f32 0.0, %v4968
      %v4970 = vpop.f32.mrf.mxu0
      %v4971 = vpop.f32.mrf.mxu0
      %v4972 = vpop.f32.mrf.mxu0
      %4973 = vdwg.mxu0
      %4975 = vrot.lane.b32.xlu0 %v1835, 112
      %v4976 = vpop.permute.xlu0 %4975
      %v4978 = vsel %vm2694, %v4670, 0
      %v4981 = vsel %vm2890, %v4976, 0
      %4983 = vmatprep.subr.bf16.mxu0 0
      %4984 = vmatpush1.bf16.msra.mxu0 0
      %4985 = vmatprep.subr.bf16.mxu0 0
      %4986 = vmatpush1.bf16.msra.mxu0 0
      %4987 = vmatprep.subr.bf16.mxu0 0
      %4988 = vmatpush1.bf16.msra.mxu0 0
      %4989 = vmatprep.subr.bf16.mxu0 0
      %4990 = vmatpush1.bf16.msra.mxu0 0
      %4991 = vmatprep.subr.bf16.mxu0 0
      %4992 = vmatpush1.bf16.msra.mxu0 0
      %4993 = vmatprep.subr.bf16.mxu0 0
      %4994 = vmatpush1.bf16.msra.mxu0 0
      %4995 = vmatprep.subr.bf16.mxu0 0
      %4996 = vmatpush1.bf16.msra.mxu0 0
      %4997 = vmatprep.subr.bf16.mxu0 0
      %4998 = vmatpush1.bf16.msra.mxu0 %v4981
      %4999 = vmatprep.subr.bf16.mxu0 0
      %5000 = vmatpush2.bf16.msra.mxu0 0
      %5001 = vmatprep.subr.bf16.mxu0 0
      %5002 = vmatpush2.bf16.msra.mxu0 0
      %5003 = vmatprep.subr.bf16.mxu0 0
      %5004 = vmatpush2.bf16.msra.mxu0 0
      %5005 = vmatprep.subr.bf16.mxu0 0
      %5006 = vmatpush2.bf16.msra.mxu0 0
      %5007 = vmatprep.subr.bf16.mxu0 0
      %5008 = vmatpush2.bf16.msra.mxu0 0
      %5009 = vmatprep.subr.bf16.mxu0 0
      %5010 = vmatpush2.bf16.msra.mxu0 0
      %5011 = vmatprep.subr.bf16.mxu0 0
      %5012 = vmatpush2.bf16.msra.mxu0 0
      %5013 = vmatprep.subr.bf16.mxu0 0
      %5014 = vmatpush2.bf16.msra.mxu0 0
      %5015 = vmatprep.mubr.bf16.mxu0 0
      %5016 = vmatmul.mubr.bf16.gmra.mxu0 %v4978
      %v5017 = vpop.f32.mrf.mxu0
      %v5018 = vadd.f32 0.0, %v5017
      %v5019 = vpop.f32.mrf.mxu0
      %v5020 = vpop.f32.mrf.mxu0
      %v5021 = vpop.f32.mrf.mxu0
      %5022 = vdwg.mxu0
      %5024 = vrot.lane.b32.xlu0 %v1836, 112
      %v5025 = vpop.permute.xlu0 %5024
      %v5027 = vsel %vm2694, %v4671, 0
      %v5030 = vsel %vm2890, %v5025, 0
      %5032 = vmatprep.subr.bf16.mxu0 0
      %5033 = vmatpush1.bf16.msra.mxu0 0
      %5034 = vmatprep.subr.bf16.mxu0 0
      %5035 = vmatpush1.bf16.msra.mxu0 0
      %5036 = vmatprep.subr.bf16.mxu0 0
      %5037 = vmatpush1.bf16.msra.mxu0 0
      %5038 = vmatprep.subr.bf16.mxu0 0
      %5039 = vmatpush1.bf16.msra.mxu0 0
      %5040 = vmatprep.subr.bf16.mxu0 0
      %5041 = vmatpush1.bf16.msra.mxu0 0
      %5042 = vmatprep.subr.bf16.mxu0 0
      %5043 = vmatpush1.bf16.msra.mxu0 0
      %5044 = vmatprep.subr.bf16.mxu0 0
      %5045 = vmatpush1.bf16.msra.mxu0 0
      %5046 = vmatprep.subr.bf16.mxu0 0
      %5047 = vmatpush1.bf16.msra.mxu0 %v5030
      %5048 = vmatprep.subr.bf16.mxu0 0
      %5049 = vmatpush2.bf16.msra.mxu0 0
      %5050 = vmatprep.subr.bf16.mxu0 0
      %5051 = vmatpush2.bf16.msra.mxu0 0
      %5052 = vmatprep.subr.bf16.mxu0 0
      %5053 = vmatpush2.bf16.msra.mxu0 0
      %5054 = vmatprep.subr.bf16.mxu0 0
      %5055 = vmatpush2.bf16.msra.mxu0 0
      %5056 = vmatprep.subr.bf16.mxu0 0
      %5057 = vmatpush2.bf16.msra.mxu0 0
      %5058 = vmatprep.subr.bf16.mxu0 0
      %5059 = vmatpush2.bf16.msra.mxu0 0
      %5060 = vmatprep.subr.bf16.mxu0 0
      %5061 = vmatpush2.bf16.msra.mxu0 0
      %5062 = vmatprep.subr.bf16.mxu0 0
      %5063 = vmatpush2.bf16.msra.mxu0 0
      %5064 = vmatprep.mubr.bf16.mxu0 0
      %5065 = vmatmul.mubr.bf16.gmra.mxu0 %v5027
      %v5066 = vpop.f32.mrf.mxu0
      %v5067 = vadd.f32 0.0, %v5066
      %v5068 = vpop.f32.mrf.mxu0
      %v5069 = vpop.f32.mrf.mxu0
      %v5070 = vpop.f32.mrf.mxu0
      %5071 = vdwg.mxu0
      %5073 = vrot.lane.b32.xlu0 %v1837, 112
      %v5074 = vpop.permute.xlu0 %5073
      %v5076 = vsel %vm2694, %v4672, 0
      %v5079 = vsel %vm2890, %v5074, 0
      %5081 = vmatprep.subr.bf16.mxu0 0
      %5082 = vmatpush1.bf16.msra.mxu0 0
      %5083 = vmatprep.subr.bf16.mxu0 0
      %5084 = vmatpush1.bf16.msra.mxu0 0
      %5085 = vmatprep.subr.bf16.mxu0 0
      %5086 = vmatpush1.bf16.msra.mxu0 0
      %5087 = vmatprep.subr.bf16.mxu0 0
      %5088 = vmatpush1.bf16.msra.mxu0 0
      %5089 = vmatprep.subr.bf16.mxu0 0
      %5090 = vmatpush1.bf16.msra.mxu0 0
      %5091 = vmatprep.subr.bf16.mxu0 0
      %5092 = vmatpush1.bf16.msra.mxu0 0
      %5093 = vmatprep.subr.bf16.mxu0 0
      %5094 = vmatpush1.bf16.msra.mxu0 0
      %5095 = vmatprep.subr.bf16.mxu0 0
      %5096 = vmatpush1.bf16.msra.mxu0 %v5079
      %5097 = vmatprep.subr.bf16.mxu0 0
      %5098 = vmatpush2.bf16.msra.mxu0 0
      %5099 = vmatprep.subr.bf16.mxu0 0
      %5100 = vmatpush2.bf16.msra.mxu0 0
      %5101 = vmatprep.subr.bf16.mxu0 0
      %5102 = vmatpush2.bf16.msra.mxu0 0
      %5103 = vmatprep.subr.bf16.mxu0 0
      %5104 = vmatpush2.bf16.msra.mxu0 0
      %5105 = vmatprep.subr.bf16.mxu0 0
      %5106 = vmatpush2.bf16.msra.mxu0 0
      %5107 = vmatprep.subr.bf16.mxu0 0
      %5108 = vmatpush2.bf16.msra.mxu0 0
      %5109 = vmatprep.subr.bf16.mxu0 0
      %5110 = vmatpush2.bf16.msra.mxu0 0
      %5111 = vmatprep.subr.bf16.mxu0 0
      %5112 = vmatpush2.bf16.msra.mxu0 0
      %5113 = vmatprep.mubr.bf16.mxu0 0
      %5114 = vmatmul.mubr.bf16.gmra.mxu0 %v5076
      %v5115 = vpop.f32.mrf.mxu0
      %v5116 = vadd.f32 0.0, %v5115
      %v5117 = vpop.f32.mrf.mxu0
      %v5118 = vpop.f32.mrf.mxu0
      %v5119 = vpop.f32.mrf.mxu0
      %5120 = vdwg.mxu0
      %5122 = vrot.lane.b32.xlu0 %v1838, 112
      %v5123 = vpop.permute.xlu0 %5122
      %v5125 = vsel %vm2694, %v4673, 0
      %v5128 = vsel %vm2890, %v5123, 0
      %5130 = vmatprep.subr.bf16.mxu0 0
      %5131 = vmatpush1.bf16.msra.mxu0 0
      %5132 = vmatprep.subr.bf16.mxu0 0
      %5133 = vmatpush1.bf16.msra.mxu0 0
      %5134 = vmatprep.subr.bf16.mxu0 0
      %5135 = vmatpush1.bf16.msra.mxu0 0
      %5136 = vmatprep.subr.bf16.mxu0 0
      %5137 = vmatpush1.bf16.msra.mxu0 0
      %5138 = vmatprep.subr.bf16.mxu0 0
      %5139 = vmatpush1.bf16.msra.mxu0 0
      %5140 = vmatprep.subr.bf16.mxu0 0
      %5141 = vmatpush1.bf16.msra.mxu0 0
      %5142 = vmatprep.subr.bf16.mxu0 0
      %5143 = vmatpush1.bf16.msra.mxu0 0
      %5144 = vmatprep.subr.bf16.mxu0 0
      %5145 = vmatpush1.bf16.msra.mxu0 %v5128
      %5146 = vmatprep.subr.bf16.mxu0 0
      %5147 = vmatpush2.bf16.msra.mxu0 0
      %5148 = vmatprep.subr.bf16.mxu0 0
      %5149 = vmatpush2.bf16.msra.mxu0 0
      %5150 = vmatprep.subr.bf16.mxu0 0
      %5151 = vmatpush2.bf16.msra.mxu0 0
      %5152 = vmatprep.subr.bf16.mxu0 0
      %5153 = vmatpush2.bf16.msra.mxu0 0
      %5154 = vmatprep.subr.bf16.mxu0 0
      %5155 = vmatpush2.bf16.msra.mxu0 0
      %5156 = vmatprep.subr.bf16.mxu0 0
      %5157 = vmatpush2.bf16.msra.mxu0 0
      %5158 = vmatprep.subr.bf16.mxu0 0
      %5159 = vmatpush2.bf16.msra.mxu0 0
      %5160 = vmatprep.subr.bf16.mxu0 0
      %5161 = vmatpush2.bf16.msra.mxu0 0
      %5162 = vmatprep.mubr.bf16.mxu0 0
      %5163 = vmatmul.mubr.bf16.gmra.mxu0 %v5125
      %v5164 = vpop.f32.mrf.mxu0
      %v5165 = vadd.f32 0.0, %v5164
      %v5166 = vpop.f32.mrf.mxu0
      %v5167 = vpop.f32.mrf.mxu0
      %v5168 = vpop.f32.mrf.mxu0
      %5169 = vdwg.mxu0
      %5171 = vrot.lane.b32.xlu0 %v1839, 112
      %v5172 = vpop.permute.xlu0 %5171
      %v5174 = vsel %vm2694, %v4674, 0
      %v5177 = vsel %vm2890, %v5172, 0
      %5179 = vmatprep.subr.bf16.mxu0 0
      %5180 = vmatpush1.bf16.msra.mxu0 0
      %5181 = vmatprep.subr.bf16.mxu0 0
      %5182 = vmatpush1.bf16.msra.mxu0 0
      %5183 = vmatprep.subr.bf16.mxu0 0
      %5184 = vmatpush1.bf16.msra.mxu0 0
      %5185 = vmatprep.subr.bf16.mxu0 0
      %5186 = vmatpush1.bf16.msra.mxu0 0
      %5187 = vmatprep.subr.bf16.mxu0 0
      %5188 = vmatpush1.bf16.msra.mxu0 0
      %5189 = vmatprep.subr.bf16.mxu0 0
      %5190 = vmatpush1.bf16.msra.mxu0 0
      %5191 = vmatprep.subr.bf16.mxu0 0
      %5192 = vmatpush1.bf16.msra.mxu0 0
      %5193 = vmatprep.subr.bf16.mxu0 0
      %5194 = vmatpush1.bf16.msra.mxu0 %v5177
      %5195 = vmatprep.subr.bf16.mxu0 0
      %5196 = vmatpush2.bf16.msra.mxu0 0
      %5197 = vmatprep.subr.bf16.mxu0 0
      %5198 = vmatpush2.bf16.msra.mxu0 0
      %5199 = vmatprep.subr.bf16.mxu0 0
      %5200 = vmatpush2.bf16.msra.mxu0 0
      %5201 = vmatprep.subr.bf16.mxu0 0
      %5202 = vmatpush2.bf16.msra.mxu0 0
      %5203 = vmatprep.subr.bf16.mxu0 0
      %5204 = vmatpush2.bf16.msra.mxu0 0
      %5205 = vmatprep.subr.bf16.mxu0 0
      %5206 = vmatpush2.bf16.msra.mxu0 0
      %5207 = vmatprep.subr.bf16.mxu0 0
      %5208 = vmatpush2.bf16.msra.mxu0 0
      %5209 = vmatprep.subr.bf16.mxu0 0
      %5210 = vmatpush2.bf16.msra.mxu0 0
      %5211 = vmatprep.mubr.bf16.mxu0 0
      %5212 = vmatmul.mubr.bf16.gmra.mxu0 %v5174
      %v5213 = vpop.f32.mrf.mxu0
      %v5214 = vadd.f32 0.0, %v5213
      %v5215 = vpop.f32.mrf.mxu0
      %v5216 = vpop.f32.mrf.mxu0
      %v5217 = vpop.f32.mrf.mxu0
      %5218 = vdwg.mxu0
      %5220 = vrot.lane.b32.xlu0 %v1840, 112
      %v5221 = vpop.permute.xlu0 %5220
      %v5223 = vsel %vm2694, %v4675, 0
      %v5226 = vsel %vm2890, %v5221, 0
      %5228 = vmatprep.subr.bf16.mxu0 0
      %5229 = vmatpush1.bf16.msra.mxu0 0
      %5230 = vmatprep.subr.bf16.mxu0 0
      %5231 = vmatpush1.bf16.msra.mxu0 0
      %5232 = vmatprep.subr.bf16.mxu0 0
      %5233 = vmatpush1.bf16.msra.mxu0 0
      %5234 = vmatprep.subr.bf16.mxu0 0
      %5235 = vmatpush1.bf16.msra.mxu0 0
      %5236 = vmatprep.subr.bf16.mxu0 0
      %5237 = vmatpush1.bf16.msra.mxu0 0
      %5238 = vmatprep.subr.bf16.mxu0 0
      %5239 = vmatpush1.bf16.msra.mxu0 0
      %5240 = vmatprep.subr.bf16.mxu0 0
      %5241 = vmatpush1.bf16.msra.mxu0 0
      %5242 = vmatprep.subr.bf16.mxu0 0
      %5243 = vmatpush1.bf16.msra.mxu0 %v5226
      %5244 = vmatprep.subr.bf16.mxu0 0
      %5245 = vmatpush2.bf16.msra.mxu0 0
      %5246 = vmatprep.subr.bf16.mxu0 0
      %5247 = vmatpush2.bf16.msra.mxu0 0
      %5248 = vmatprep.subr.bf16.mxu0 0
      %5249 = vmatpush2.bf16.msra.mxu0 0
      %5250 = vmatprep.subr.bf16.mxu0 0
      %5251 = vmatpush2.bf16.msra.mxu0 0
      %5252 = vmatprep.subr.bf16.mxu0 0
      %5253 = vmatpush2.bf16.msra.mxu0 0
      %5254 = vmatprep.subr.bf16.mxu0 0
      %5255 = vmatpush2.bf16.msra.mxu0 0
      %5256 = vmatprep.subr.bf16.mxu0 0
      %5257 = vmatpush2.bf16.msra.mxu0 0
      %5258 = vmatprep.subr.bf16.mxu0 0
      %5259 = vmatpush2.bf16.msra.mxu0 0
      %5260 = vmatprep.mubr.bf16.mxu0 0
      %5261 = vmatmul.mubr.bf16.gmra.mxu0 %v5223
      %v5262 = vpop.f32.mrf.mxu0
      %v5263 = vadd.f32 0.0, %v5262
      %v5264 = vpop.f32.mrf.mxu0
      %v5265 = vpop.f32.mrf.mxu0
      %v5266 = vpop.f32.mrf.mxu0
      %5267 = vdwg.mxu0
      %5269 = vrot.lane.b32.xlu0 %v1841, 112
      %v5270 = vpop.permute.xlu0 %5269
      %v5272 = vsel %vm2694, %v4676, 0
      %v5275 = vsel %vm2890, %v5270, 0
      %5277 = vmatprep.subr.bf16.mxu0 0
      %5278 = vmatpush1.bf16.msra.mxu0 0
      %5279 = vmatprep.subr.bf16.mxu0 0
      %5280 = vmatpush1.bf16.msra.mxu0 0
      %5281 = vmatprep.subr.bf16.mxu0 0
      %5282 = vmatpush1.bf16.msra.mxu0 0
      %5283 = vmatprep.subr.bf16.mxu0 0
      %5284 = vmatpush1.bf16.msra.mxu0 0
      %5285 = vmatprep.subr.bf16.mxu0 0
      %5286 = vmatpush1.bf16.msra.mxu0 0
      %5287 = vmatprep.subr.bf16.mxu0 0
      %5288 = vmatpush1.bf16.msra.mxu0 0
      %5289 = vmatprep.subr.bf16.mxu0 0
      %5290 = vmatpush1.bf16.msra.mxu0 0
      %5291 = vmatprep.subr.bf16.mxu0 0
      %5292 = vmatpush1.bf16.msra.mxu0 %v5275
      %5293 = vmatprep.subr.bf16.mxu0 0
      %5294 = vmatpush2.bf16.msra.mxu0 0
      %5295 = vmatprep.subr.bf16.mxu0 0
      %5296 = vmatpush2.bf16.msra.mxu0 0
      %5297 = vmatprep.subr.bf16.mxu0 0
      %5298 = vmatpush2.bf16.msra.mxu0 0
      %5299 = vmatprep.subr.bf16.mxu0 0
      %5300 = vmatpush2.bf16.msra.mxu0 0
      %5301 = vmatprep.subr.bf16.mxu0 0
      %5302 = vmatpush2.bf16.msra.mxu0 0
      %5303 = vmatprep.subr.bf16.mxu0 0
      %5304 = vmatpush2.bf16.msra.mxu0 0
      %5305 = vmatprep.subr.bf16.mxu0 0
      %5306 = vmatpush2.bf16.msra.mxu0 0
      %5307 = vmatprep.subr.bf16.mxu0 0
      %5308 = vmatpush2.bf16.msra.mxu0 0
      %5309 = vmatprep.mubr.bf16.mxu0 0
      %5310 = vmatmul.mubr.bf16.gmra.mxu0 %v5272
      %v5311 = vpop.f32.mrf.mxu0
      %v5312 = vadd.f32 0.0, %v5311
      %v5313 = vpop.f32.mrf.mxu0
      %v5314 = vpop.f32.mrf.mxu0
      %v5315 = vpop.f32.mrf.mxu0
      %5316 = vdwg.mxu0
      %5318 = vrot.lane.b32.xlu0 %v1842, 112
      %v5319 = vpop.permute.xlu0 %5318
      %v5321 = vsel %vm2694, %v4677, 0
      %v5324 = vsel %vm2890, %v5319, 0
      %5326 = vmatprep.subr.bf16.mxu0 0
      %5327 = vmatpush1.bf16.msra.mxu0 0
      %5328 = vmatprep.subr.bf16.mxu0 0
      %5329 = vmatpush1.bf16.msra.mxu0 0
      %5330 = vmatprep.subr.bf16.mxu0 0
      %5331 = vmatpush1.bf16.msra.mxu0 0
      %5332 = vmatprep.subr.bf16.mxu0 0
      %5333 = vmatpush1.bf16.msra.mxu0 0
      %5334 = vmatprep.subr.bf16.mxu0 0
      %5335 = vmatpush1.bf16.msra.mxu0 0
      %5336 = vmatprep.subr.bf16.mxu0 0
      %5337 = vmatpush1.bf16.msra.mxu0 0
      %5338 = vmatprep.subr.bf16.mxu0 0
      %5339 = vmatpush1.bf16.msra.mxu0 0
      %5340 = vmatprep.subr.bf16.mxu0 0
      %5341 = vmatpush1.bf16.msra.mxu0 %v5324
      %5342 = vmatprep.subr.bf16.mxu0 0
      %5343 = vmatpush2.bf16.msra.mxu0 0
      %5344 = vmatprep.subr.bf16.mxu0 0
      %5345 = vmatpush2.bf16.msra.mxu0 0
      %5346 = vmatprep.subr.bf16.mxu0 0
      %5347 = vmatpush2.bf16.msra.mxu0 0
      %5348 = vmatprep.subr.bf16.mxu0 0
      %5349 = vmatpush2.bf16.msra.mxu0 0
      %5350 = vmatprep.subr.bf16.mxu0 0
      %5351 = vmatpush2.bf16.msra.mxu0 0
      %5352 = vmatprep.subr.bf16.mxu0 0
      %5353 = vmatpush2.bf16.msra.mxu0 0
      %5354 = vmatprep.subr.bf16.mxu0 0
      %5355 = vmatpush2.bf16.msra.mxu0 0
      %5356 = vmatprep.subr.bf16.mxu0 0
      %5357 = vmatpush2.bf16.msra.mxu0 0
      %5358 = vmatprep.mubr.bf16.mxu0 0
      %5359 = vmatmul.mubr.bf16.gmra.mxu0 %v5321
      %v5360 = vpop.f32.mrf.mxu0
      %v5361 = vadd.f32 0.0, %v5360
      %v5362 = vpop.f32.mrf.mxu0
      %v5363 = vpop.f32.mrf.mxu0
      %v5364 = vpop.f32.mrf.mxu0
      %5365 = vdwg.mxu0
      %5367 = vrot.lane.b32.xlu0 %v1843, 112
      %v5368 = vpop.permute.xlu0 %5367
      %v5370 = vsel %vm2694, %v4678, 0
      %v5373 = vsel %vm2890, %v5368, 0
      %5375 = vmatprep.subr.bf16.mxu0 0
      %5376 = vmatpush1.bf16.msra.mxu0 0
      %5377 = vmatprep.subr.bf16.mxu0 0
      %5378 = vmatpush1.bf16.msra.mxu0 0
      %5379 = vmatprep.subr.bf16.mxu0 0
      %5380 = vmatpush1.bf16.msra.mxu0 0
      %5381 = vmatprep.subr.bf16.mxu0 0
      %5382 = vmatpush1.bf16.msra.mxu0 0
      %5383 = vmatprep.subr.bf16.mxu0 0
      %5384 = vmatpush1.bf16.msra.mxu0 0
      %5385 = vmatprep.subr.bf16.mxu0 0
      %5386 = vmatpush1.bf16.msra.mxu0 0
      %5387 = vmatprep.subr.bf16.mxu0 0
      %5388 = vmatpush1.bf16.msra.mxu0 0
      %5389 = vmatprep.subr.bf16.mxu0 0
      %5390 = vmatpush1.bf16.msra.mxu0 %v5373
      %5391 = vmatprep.subr.bf16.mxu0 0
      %5392 = vmatpush2.bf16.msra.mxu0 0
      %5393 = vmatprep.subr.bf16.mxu0 0
      %5394 = vmatpush2.bf16.msra.mxu0 0
      %5395 = vmatprep.subr.bf16.mxu0 0
      %5396 = vmatpush2.bf16.msra.mxu0 0
      %5397 = vmatprep.subr.bf16.mxu0 0
      %5398 = vmatpush2.bf16.msra.mxu0 0
      %5399 = vmatprep.subr.bf16.mxu0 0
      %5400 = vmatpush2.bf16.msra.mxu0 0
      %5401 = vmatprep.subr.bf16.mxu0 0
      %5402 = vmatpush2.bf16.msra.mxu0 0
      %5403 = vmatprep.subr.bf16.mxu0 0
      %5404 = vmatpush2.bf16.msra.mxu0 0
      %5405 = vmatprep.subr.bf16.mxu0 0
      %5406 = vmatpush2.bf16.msra.mxu0 0
      %5407 = vmatprep.mubr.bf16.mxu0 0
      %5408 = vmatmul.mubr.bf16.gmra.mxu0 %v5370
      %v5409 = vpop.f32.mrf.mxu0
      %v5410 = vadd.f32 0.0, %v5409
      %v5411 = vpop.f32.mrf.mxu0
      %v5412 = vpop.f32.mrf.mxu0
      %v5413 = vpop.f32.mrf.mxu0
      %5414 = vdwg.mxu0
      %5416 = vrot.lane.b32.xlu0 %v1844, 112
      %v5417 = vpop.permute.xlu0 %5416
      %v5419 = vsel %vm2694, %v4679, 0
      %v5422 = vsel %vm2890, %v5417, 0
      %5424 = vmatprep.subr.bf16.mxu0 0
      %5425 = vmatpush1.bf16.msra.mxu0 0
      %5426 = vmatprep.subr.bf16.mxu0 0
      %5427 = vmatpush1.bf16.msra.mxu0 0
      %5428 = vmatprep.subr.bf16.mxu0 0
      %5429 = vmatpush1.bf16.msra.mxu0 0
      %5430 = vmatprep.subr.bf16.mxu0 0
      %5431 = vmatpush1.bf16.msra.mxu0 0
      %5432 = vmatprep.subr.bf16.mxu0 0
      %5433 = vmatpush1.bf16.msra.mxu0 0
      %5434 = vmatprep.subr.bf16.mxu0 0
      %5435 = vmatpush1.bf16.msra.mxu0 0
      %5436 = vmatprep.subr.bf16.mxu0 0
      %5437 = vmatpush1.bf16.msra.mxu0 0
      %5438 = vmatprep.subr.bf16.mxu0 0
      %5439 = vmatpush1.bf16.msra.mxu0 %v5422
      %5440 = vmatprep.subr.bf16.mxu0 0
      %5441 = vmatpush2.bf16.msra.mxu0 0
      %5442 = vmatprep.subr.bf16.mxu0 0
      %5443 = vmatpush2.bf16.msra.mxu0 0
      %5444 = vmatprep.subr.bf16.mxu0 0
      %5445 = vmatpush2.bf16.msra.mxu0 0
      %5446 = vmatprep.subr.bf16.mxu0 0
      %5447 = vmatpush2.bf16.msra.mxu0 0
      %5448 = vmatprep.subr.bf16.mxu0 0
      %5449 = vmatpush2.bf16.msra.mxu0 0
      %5450 = vmatprep.subr.bf16.mxu0 0
      %5451 = vmatpush2.bf16.msra.mxu0 0
      %5452 = vmatprep.subr.bf16.mxu0 0
      %5453 = vmatpush2.bf16.msra.mxu0 0
      %5454 = vmatprep.subr.bf16.mxu0 0
      %5455 = vmatpush2.bf16.msra.mxu0 0
      %5456 = vmatprep.mubr.bf16.mxu0 0
      %5457 = vmatmul.mubr.bf16.gmra.mxu0 %v5419
      %v5458 = vpop.f32.mrf.mxu0
      %v5459 = vadd.f32 0.0, %v5458
      %v5460 = vpop.f32.mrf.mxu0
      %v5461 = vpop.f32.mrf.mxu0
      %v5462 = vpop.f32.mrf.mxu0
      %5463 = vdwg.mxu0
      %5464 = vrot.lane.b32.xlu0 %v1797, 96
      %v5465 = vpop.permute.xlu0 %5464
      %5466 = vrot.lane.b32.xlu0 %v1813, 96
      %v5467 = vpop.permute.xlu0 %5466
      %v5469 = vsel %vm1845, %v5465, 0
      %v5472 = vsel %vm1845, %v5467, 0
      %5474 = vmatprep.subr.bf16.mxu0 0
      %5475 = vmatpush1.bf16.xpose.msra.mxu0 0
      %5476 = vmatprep.subr.bf16.mxu0 0
      %5477 = vmatpush1.bf16.xpose.msra.mxu0 0
      %5478 = vmatprep.subr.bf16.mxu0 0
      %5479 = vmatpush1.bf16.xpose.msra.mxu0 0
      %5480 = vmatprep.subr.bf16.mxu0 0
      %5481 = vmatpush1.bf16.xpose.msra.mxu0 0
      %5482 = vmatprep.subr.bf16.mxu0 0
      %5483 = vmatpush1.bf16.xpose.msra.mxu0 0
      %5484 = vmatprep.subr.bf16.mxu0 0
      %5485 = vmatpush1.bf16.xpose.msra.mxu0 0
      %5486 = vmatprep.subr.bf16.mxu0 0
      %5487 = vmatpush1.bf16.xpose.msra.mxu0 0
      %5488 = vmatprep.subr.bf16.mxu0 0
      %5489 = vmatpush1.bf16.xpose.msra.mxu0 %v5472
      %5490 = vmatprep.subr.bf16.mxu0 0
      %5491 = vmatpush2.bf16.xpose.msra.mxu0 0
      %5492 = vmatprep.subr.bf16.mxu0 0
      %5493 = vmatpush2.bf16.xpose.msra.mxu0 0
      %5494 = vmatprep.subr.bf16.mxu0 0
      %5495 = vmatpush2.bf16.xpose.msra.mxu0 0
      %5496 = vmatprep.subr.bf16.mxu0 0
      %5497 = vmatpush2.bf16.xpose.msra.mxu0 0
      %5498 = vmatprep.subr.bf16.mxu0 0
      %5499 = vmatpush2.bf16.xpose.msra.mxu0 0
      %5500 = vmatprep.subr.bf16.mxu0 0
      %5501 = vmatpush2.bf16.xpose.msra.mxu0 0
      %5502 = vmatprep.subr.bf16.mxu0 0
      %5503 = vmatpush2.bf16.xpose.msra.mxu0 0
      %5504 = vmatprep.subr.bf16.mxu0 0
      %5505 = vmatpush2.bf16.xpose.msra.mxu0 0
      %5506 = vmatprep.mubr.bf16.mxu0 0
      %5507 = vmatmul.mubr.bf16.gmra.mxu0 %v5469
      %v5508 = vpop.f32.mrf.mxu0
      %v5509 = vadd.f32 0.0, %v5508
      %v5510 = vpop.f32.mrf.mxu0
      %v5511 = vpop.f32.mrf.mxu0
      %v5512 = vpop.f32.mrf.mxu0
      %5513 = vdwg.mxu0
      %5514 = vrot.lane.b32.xlu0 %v1798, 96
      %v5515 = vpop.permute.xlu0 %5514
      %5516 = vrot.lane.b32.xlu0 %v1814, 96
      %v5517 = vpop.permute.xlu0 %5516
      %v5519 = vsel %vm1845, %v5515, 0
      %v5522 = vsel %vm1845, %v5517, 0
      %5524 = vmatprep.subr.bf16.mxu0 0
      %5525 = vmatpush1.bf16.xpose.msra.mxu0 0
      %5526 = vmatprep.subr.bf16.mxu0 0
      %5527 = vmatpush1.bf16.xpose.msra.mxu0 0
      %5528 = vmatprep.subr.bf16.mxu0 0
      %5529 = vmatpush1.bf16.xpose.msra.mxu0 0
      %5530 = vmatprep.subr.bf16.mxu0 0
      %5531 = vmatpush1.bf16.xpose.msra.mxu0 0
      %5532 = vmatprep.subr.bf16.mxu0 0
      %5533 = vmatpush1.bf16.xpose.msra.mxu0 0
      %5534 = vmatprep.subr.bf16.mxu0 0
      %5535 = vmatpush1.bf16.xpose.msra.mxu0 0
      %5536 = vmatprep.subr.bf16.mxu0 0
      %5537 = vmatpush1.bf16.xpose.msra.mxu0 0
      %5538 = vmatprep.subr.bf16.mxu0 0
      %5539 = vmatpush1.bf16.xpose.msra.mxu0 %v5522
      %5540 = vmatprep.subr.bf16.mxu0 0
      %5541 = vmatpush2.bf16.xpose.msra.mxu0 0
      %5542 = vmatprep.subr.bf16.mxu0 0
      %5543 = vmatpush2.bf16.xpose.msra.mxu0 0
      %5544 = vmatprep.subr.bf16.mxu0 0
      %5545 = vmatpush2.bf16.xpose.msra.mxu0 0
      %5546 = vmatprep.subr.bf16.mxu0 0
      %5547 = vmatpush2.bf16.xpose.msra.mxu0 0
      %5548 = vmatprep.subr.bf16.mxu0 0
      %5549 = vmatpush2.bf16.xpose.msra.mxu0 0
      %5550 = vmatprep.subr.bf16.mxu0 0
      %5551 = vmatpush2.bf16.xpose.msra.mxu0 0
      %5552 = vmatprep.subr.bf16.mxu0 0
      %5553 = vmatpush2.bf16.xpose.msra.mxu0 0
      %5554 = vmatprep.subr.bf16.mxu0 0
      %5555 = vmatpush2.bf16.xpose.msra.mxu0 0
      %5556 = vmatprep.mubr.bf16.mxu0 0
      %5557 = vmatmul.mubr.bf16.gmra.mxu0 %v5519
      %v5558 = vpop.f32.mrf.mxu0
      %v5559 = vadd.f32 0.0, %v5558
      %v5560 = vpop.f32.mrf.mxu0
      %v5561 = vpop.f32.mrf.mxu0
      %v5562 = vpop.f32.mrf.mxu0
      %5563 = vdwg.mxu0
      %5564 = vrot.lane.b32.xlu0 %v1799, 96
      %v5565 = vpop.permute.xlu0 %5564
      %5566 = vrot.lane.b32.xlu0 %v1815, 96
      %v5567 = vpop.permute.xlu0 %5566
      %v5569 = vsel %vm1845, %v5565, 0
      %v5572 = vsel %vm1845, %v5567, 0
      %5574 = vmatprep.subr.bf16.mxu0 0
      %5575 = vmatpush1.bf16.xpose.msra.mxu0 0
      %5576 = vmatprep.subr.bf16.mxu0 0
      %5577 = vmatpush1.bf16.xpose.msra.mxu0 0
      %5578 = vmatprep.subr.bf16.mxu0 0
      %5579 = vmatpush1.bf16.xpose.msra.mxu0 0
      %5580 = vmatprep.subr.bf16.mxu0 0
      %5581 = vmatpush1.bf16.xpose.msra.mxu0 0
      %5582 = vmatprep.subr.bf16.mxu0 0
      %5583 = vmatpush1.bf16.xpose.msra.mxu0 0
      %5584 = vmatprep.subr.bf16.mxu0 0
      %5585 = vmatpush1.bf16.xpose.msra.mxu0 0
      %5586 = vmatprep.subr.bf16.mxu0 0
      %5587 = vmatpush1.bf16.xpose.msra.mxu0 0
      %5588 = vmatprep.subr.bf16.mxu0 0
      %5589 = vmatpush1.bf16.xpose.msra.mxu0 %v5572
      %5590 = vmatprep.subr.bf16.mxu0 0
      %5591 = vmatpush2.bf16.xpose.msra.mxu0 0
      %5592 = vmatprep.subr.bf16.mxu0 0
      %5593 = vmatpush2.bf16.xpose.msra.mxu0 0
      %5594 = vmatprep.subr.bf16.mxu0 0
      %5595 = vmatpush2.bf16.xpose.msra.mxu0 0
      %5596 = vmatprep.subr.bf16.mxu0 0
      %5597 = vmatpush2.bf16.xpose.msra.mxu0 0
      %5598 = vmatprep.subr.bf16.mxu0 0
      %5599 = vmatpush2.bf16.xpose.msra.mxu0 0
      %5600 = vmatprep.subr.bf16.mxu0 0
      %5601 = vmatpush2.bf16.xpose.msra.mxu0 0
      %5602 = vmatprep.subr.bf16.mxu0 0
      %5603 = vmatpush2.bf16.xpose.msra.mxu0 0
      %5604 = vmatprep.subr.bf16.mxu0 0
      %5605 = vmatpush2.bf16.xpose.msra.mxu0 0
      %5606 = vmatprep.mubr.bf16.mxu0 0
      %5607 = vmatmul.mubr.bf16.gmra.mxu0 %v5569
      %v5608 = vpop.f32.mrf.mxu0
      %v5609 = vadd.f32 0.0, %v5608
      %v5610 = vpop.f32.mrf.mxu0
      %v5611 = vpop.f32.mrf.mxu0
      %v5612 = vpop.f32.mrf.mxu0
      %5613 = vdwg.mxu0
      %5614 = vrot.lane.b32.xlu0 %v1800, 96
      %v5615 = vpop.permute.xlu0 %5614
      %5616 = vrot.lane.b32.xlu0 %v1816, 96
      %v5617 = vpop.permute.xlu0 %5616
      %v5619 = vsel %vm1845, %v5615, 0
      %v5622 = vsel %vm1845, %v5617, 0
      %5624 = vmatprep.subr.bf16.mxu0 0
      %5625 = vmatpush1.bf16.xpose.msra.mxu0 0
      %5626 = vmatprep.subr.bf16.mxu0 0
      %5627 = vmatpush1.bf16.xpose.msra.mxu0 0
      %5628 = vmatprep.subr.bf16.mxu0 0
      %5629 = vmatpush1.bf16.xpose.msra.mxu0 0
      %5630 = vmatprep.subr.bf16.mxu0 0
      %5631 = vmatpush1.bf16.xpose.msra.mxu0 0
      %5632 = vmatprep.subr.bf16.mxu0 0
      %5633 = vmatpush1.bf16.xpose.msra.mxu0 0
      %5634 = vmatprep.subr.bf16.mxu0 0
      %5635 = vmatpush1.bf16.xpose.msra.mxu0 0
      %5636 = vmatprep.subr.bf16.mxu0 0
      %5637 = vmatpush1.bf16.xpose.msra.mxu0 0
      %5638 = vmatprep.subr.bf16.mxu0 0
      %5639 = vmatpush1.bf16.xpose.msra.mxu0 %v5622
      %5640 = vmatprep.subr.bf16.mxu0 0
      %5641 = vmatpush2.bf16.xpose.msra.mxu0 0
      %5642 = vmatprep.subr.bf16.mxu0 0
      %5643 = vmatpush2.bf16.xpose.msra.mxu0 0
      %5644 = vmatprep.subr.bf16.mxu0 0
      %5645 = vmatpush2.bf16.xpose.msra.mxu0 0
      %5646 = vmatprep.subr.bf16.mxu0 0
      %5647 = vmatpush2.bf16.xpose.msra.mxu0 0
      %5648 = vmatprep.subr.bf16.mxu0 0
      %5649 = vmatpush2.bf16.xpose.msra.mxu0 0
      %5650 = vmatprep.subr.bf16.mxu0 0
      %5651 = vmatpush2.bf16.xpose.msra.mxu0 0
      %5652 = vmatprep.subr.bf16.mxu0 0
      %5653 = vmatpush2.bf16.xpose.msra.mxu0 0
      %5654 = vmatprep.subr.bf16.mxu0 0
      %5655 = vmatpush2.bf16.xpose.msra.mxu0 0
      %5656 = vmatprep.mubr.bf16.mxu0 0
      %5657 = vmatmul.mubr.bf16.gmra.mxu0 %v5619
      %v5658 = vpop.f32.mrf.mxu0
      %v5659 = vadd.f32 0.0, %v5658
      %v5660 = vpop.f32.mrf.mxu0
      %v5661 = vpop.f32.mrf.mxu0
      %v5662 = vpop.f32.mrf.mxu0
      %5663 = vdwg.mxu0
      %5664 = vrot.lane.b32.xlu0 %v1801, 96
      %v5665 = vpop.permute.xlu0 %5664
      %5666 = vrot.lane.b32.xlu0 %v1817, 96
      %v5667 = vpop.permute.xlu0 %5666
      %v5669 = vsel %vm1845, %v5665, 0
      %v5672 = vsel %vm1845, %v5667, 0
      %5674 = vmatprep.subr.bf16.mxu0 0
      %5675 = vmatpush1.bf16.xpose.msra.mxu0 0
      %5676 = vmatprep.subr.bf16.mxu0 0
      %5677 = vmatpush1.bf16.xpose.msra.mxu0 0
      %5678 = vmatprep.subr.bf16.mxu0 0
      %5679 = vmatpush1.bf16.xpose.msra.mxu0 0
      %5680 = vmatprep.subr.bf16.mxu0 0
      %5681 = vmatpush1.bf16.xpose.msra.mxu0 0
      %5682 = vmatprep.subr.bf16.mxu0 0
      %5683 = vmatpush1.bf16.xpose.msra.mxu0 0
      %5684 = vmatprep.subr.bf16.mxu0 0
      %5685 = vmatpush1.bf16.xpose.msra.mxu0 0
      %5686 = vmatprep.subr.bf16.mxu0 0
      %5687 = vmatpush1.bf16.xpose.msra.mxu0 0
      %5688 = vmatprep.subr.bf16.mxu0 0
      %5689 = vmatpush1.bf16.xpose.msra.mxu0 %v5672
      %5690 = vmatprep.subr.bf16.mxu0 0
      %5691 = vmatpush2.bf16.xpose.msra.mxu0 0
      %5692 = vmatprep.subr.bf16.mxu0 0
      %5693 = vmatpush2.bf16.xpose.msra.mxu0 0
      %5694 = vmatprep.subr.bf16.mxu0 0
      %5695 = vmatpush2.bf16.xpose.msra.mxu0 0
      %5696 = vmatprep.subr.bf16.mxu0 0
      %5697 = vmatpush2.bf16.xpose.msra.mxu0 0
      %5698 = vmatprep.subr.bf16.mxu0 0
      %5699 = vmatpush2.bf16.xpose.msra.mxu0 0
      %5700 = vmatprep.subr.bf16.mxu0 0
      %5701 = vmatpush2.bf16.xpose.msra.mxu0 0
      %5702 = vmatprep.subr.bf16.mxu0 0
      %5703 = vmatpush2.bf16.xpose.msra.mxu0 0
      %5704 = vmatprep.subr.bf16.mxu0 0
      %5705 = vmatpush2.bf16.xpose.msra.mxu0 0
      %5706 = vmatprep.mubr.bf16.mxu0 0
      %5707 = vmatmul.mubr.bf16.gmra.mxu0 %v5669
      %v5708 = vpop.f32.mrf.mxu0
      %v5709 = vadd.f32 0.0, %v5708
      %v5710 = vpop.f32.mrf.mxu0
      %v5711 = vpop.f32.mrf.mxu0
      %v5712 = vpop.f32.mrf.mxu0
      %5713 = vdwg.mxu0
      %5714 = vrot.lane.b32.xlu0 %v1802, 96
      %v5715 = vpop.permute.xlu0 %5714
      %5716 = vrot.lane.b32.xlu0 %v1818, 96
      %v5717 = vpop.permute.xlu0 %5716
      %v5719 = vsel %vm1845, %v5715, 0
      %v5722 = vsel %vm1845, %v5717, 0
      %5724 = vmatprep.subr.bf16.mxu0 0
      %5725 = vmatpush1.bf16.xpose.msra.mxu0 0
      %5726 = vmatprep.subr.bf16.mxu0 0
      %5727 = vmatpush1.bf16.xpose.msra.mxu0 0
      %5728 = vmatprep.subr.bf16.mxu0 0
      %5729 = vmatpush1.bf16.xpose.msra.mxu0 0
      %5730 = vmatprep.subr.bf16.mxu0 0
      %5731 = vmatpush1.bf16.xpose.msra.mxu0 0
      %5732 = vmatprep.subr.bf16.mxu0 0
      %5733 = vmatpush1.bf16.xpose.msra.mxu0 0
      %5734 = vmatprep.subr.bf16.mxu0 0
      %5735 = vmatpush1.bf16.xpose.msra.mxu0 0
      %5736 = vmatprep.subr.bf16.mxu0 0
      %5737 = vmatpush1.bf16.xpose.msra.mxu0 0
      %5738 = vmatprep.subr.bf16.mxu0 0
      %5739 = vmatpush1.bf16.xpose.msra.mxu0 %v5722
      %5740 = vmatprep.subr.bf16.mxu0 0
      %5741 = vmatpush2.bf16.xpose.msra.mxu0 0
      %5742 = vmatprep.subr.bf16.mxu0 0
      %5743 = vmatpush2.bf16.xpose.msra.mxu0 0
      %5744 = vmatprep.subr.bf16.mxu0 0
      %5745 = vmatpush2.bf16.xpose.msra.mxu0 0
      %5746 = vmatprep.subr.bf16.mxu0 0
      %5747 = vmatpush2.bf16.xpose.msra.mxu0 0
      %5748 = vmatprep.subr.bf16.mxu0 0
      %5749 = vmatpush2.bf16.xpose.msra.mxu0 0
      %5750 = vmatprep.subr.bf16.mxu0 0
      %5751 = vmatpush2.bf16.xpose.msra.mxu0 0
      %5752 = vmatprep.subr.bf16.mxu0 0
      %5753 = vmatpush2.bf16.xpose.msra.mxu0 0
      %5754 = vmatprep.subr.bf16.mxu0 0
      %5755 = vmatpush2.bf16.xpose.msra.mxu0 0
      %5756 = vmatprep.mubr.bf16.mxu0 0
      %5757 = vmatmul.mubr.bf16.gmra.mxu0 %v5719
      %v5758 = vpop.f32.mrf.mxu0
      %v5759 = vadd.f32 0.0, %v5758
      %v5760 = vpop.f32.mrf.mxu0
      %v5761 = vpop.f32.mrf.mxu0
      %v5762 = vpop.f32.mrf.mxu0
      %5763 = vdwg.mxu0
      %5764 = vrot.lane.b32.xlu0 %v1803, 96
      %v5765 = vpop.permute.xlu0 %5764
      %5766 = vrot.lane.b32.xlu0 %v1819, 96
      %v5767 = vpop.permute.xlu0 %5766
      %v5769 = vsel %vm1845, %v5765, 0
      %v5772 = vsel %vm1845, %v5767, 0
      %5774 = vmatprep.subr.bf16.mxu0 0
      %5775 = vmatpush1.bf16.xpose.msra.mxu0 0
      %5776 = vmatprep.subr.bf16.mxu0 0
      %5777 = vmatpush1.bf16.xpose.msra.mxu0 0
      %5778 = vmatprep.subr.bf16.mxu0 0
      %5779 = vmatpush1.bf16.xpose.msra.mxu0 0
      %5780 = vmatprep.subr.bf16.mxu0 0
      %5781 = vmatpush1.bf16.xpose.msra.mxu0 0
      %5782 = vmatprep.subr.bf16.mxu0 0
      %5783 = vmatpush1.bf16.xpose.msra.mxu0 0
      %5784 = vmatprep.subr.bf16.mxu0 0
      %5785 = vmatpush1.bf16.xpose.msra.mxu0 0
      %5786 = vmatprep.subr.bf16.mxu0 0
      %5787 = vmatpush1.bf16.xpose.msra.mxu0 0
      %5788 = vmatprep.subr.bf16.mxu0 0
      %5789 = vmatpush1.bf16.xpose.msra.mxu0 %v5772
      %5790 = vmatprep.subr.bf16.mxu0 0
      %5791 = vmatpush2.bf16.xpose.msra.mxu0 0
      %5792 = vmatprep.subr.bf16.mxu0 0
      %5793 = vmatpush2.bf16.xpose.msra.mxu0 0
      %5794 = vmatprep.subr.bf16.mxu0 0
      %5795 = vmatpush2.bf16.xpose.msra.mxu0 0
      %5796 = vmatprep.subr.bf16.mxu0 0
      %5797 = vmatpush2.bf16.xpose.msra.mxu0 0
      %5798 = vmatprep.subr.bf16.mxu0 0
      %5799 = vmatpush2.bf16.xpose.msra.mxu0 0
      %5800 = vmatprep.subr.bf16.mxu0 0
      %5801 = vmatpush2.bf16.xpose.msra.mxu0 0
      %5802 = vmatprep.subr.bf16.mxu0 0
      %5803 = vmatpush2.bf16.xpose.msra.mxu0 0
      %5804 = vmatprep.subr.bf16.mxu0 0
      %5805 = vmatpush2.bf16.xpose.msra.mxu0 0
      %5806 = vmatprep.mubr.bf16.mxu0 0
      %5807 = vmatmul.mubr.bf16.gmra.mxu0 %v5769
      %v5808 = vpop.f32.mrf.mxu0
      %v5809 = vadd.f32 0.0, %v5808
      %v5810 = vpop.f32.mrf.mxu0
      %v5811 = vpop.f32.mrf.mxu0
      %v5812 = vpop.f32.mrf.mxu0
      %5813 = vdwg.mxu0
      %5814 = vrot.lane.b32.xlu0 %v1804, 96
      %v5815 = vpop.permute.xlu0 %5814
      %5816 = vrot.lane.b32.xlu0 %v1820, 96
      %v5817 = vpop.permute.xlu0 %5816
      %v5819 = vsel %vm1845, %v5815, 0
      %v5822 = vsel %vm1845, %v5817, 0
      %5824 = vmatprep.subr.bf16.mxu0 0
      %5825 = vmatpush1.bf16.xpose.msra.mxu0 0
      %5826 = vmatprep.subr.bf16.mxu0 0
      %5827 = vmatpush1.bf16.xpose.msra.mxu0 0
      %5828 = vmatprep.subr.bf16.mxu0 0
      %5829 = vmatpush1.bf16.xpose.msra.mxu0 0
      %5830 = vmatprep.subr.bf16.mxu0 0
      %5831 = vmatpush1.bf16.xpose.msra.mxu0 0
      %5832 = vmatprep.subr.bf16.mxu0 0
      %5833 = vmatpush1.bf16.xpose.msra.mxu0 0
      %5834 = vmatprep.subr.bf16.mxu0 0
      %5835 = vmatpush1.bf16.xpose.msra.mxu0 0
      %5836 = vmatprep.subr.bf16.mxu0 0
      %5837 = vmatpush1.bf16.xpose.msra.mxu0 0
      %5838 = vmatprep.subr.bf16.mxu0 0
      %5839 = vmatpush1.bf16.xpose.msra.mxu0 %v5822
      %5840 = vmatprep.subr.bf16.mxu0 0
      %5841 = vmatpush2.bf16.xpose.msra.mxu0 0
      %5842 = vmatprep.subr.bf16.mxu0 0
      %5843 = vmatpush2.bf16.xpose.msra.mxu0 0
      %5844 = vmatprep.subr.bf16.mxu0 0
      %5845 = vmatpush2.bf16.xpose.msra.mxu0 0
      %5846 = vmatprep.subr.bf16.mxu0 0
      %5847 = vmatpush2.bf16.xpose.msra.mxu0 0
      %5848 = vmatprep.subr.bf16.mxu0 0
      %5849 = vmatpush2.bf16.xpose.msra.mxu0 0
      %5850 = vmatprep.subr.bf16.mxu0 0
      %5851 = vmatpush2.bf16.xpose.msra.mxu0 0
      %5852 = vmatprep.subr.bf16.mxu0 0
      %5853 = vmatpush2.bf16.xpose.msra.mxu0 0
      %5854 = vmatprep.subr.bf16.mxu0 0
      %5855 = vmatpush2.bf16.xpose.msra.mxu0 0
      %5856 = vmatprep.mubr.bf16.mxu0 0
      %5857 = vmatmul.mubr.bf16.gmra.mxu0 %v5819
      %v5858 = vpop.f32.mrf.mxu0
      %v5859 = vadd.f32 0.0, %v5858
      %v5860 = vpop.f32.mrf.mxu0
      %v5861 = vpop.f32.mrf.mxu0
      %v5862 = vpop.f32.mrf.mxu0
      %5863 = vdwg.mxu0
      %5864 = vrot.lane.b32.xlu0 %v1805, 96
      %v5865 = vpop.permute.xlu0 %5864
      %5866 = vrot.lane.b32.xlu0 %v1821, 96
      %v5867 = vpop.permute.xlu0 %5866
      %v5869 = vsel %vm1845, %v5865, 0
      %v5872 = vsel %vm1845, %v5867, 0
      %5874 = vmatprep.subr.bf16.mxu0 0
      %5875 = vmatpush1.bf16.xpose.msra.mxu0 0
      %5876 = vmatprep.subr.bf16.mxu0 0
      %5877 = vmatpush1.bf16.xpose.msra.mxu0 0
      %5878 = vmatprep.subr.bf16.mxu0 0
      %5879 = vmatpush1.bf16.xpose.msra.mxu0 0
      %5880 = vmatprep.subr.bf16.mxu0 0
      %5881 = vmatpush1.bf16.xpose.msra.mxu0 0
      %5882 = vmatprep.subr.bf16.mxu0 0
      %5883 = vmatpush1.bf16.xpose.msra.mxu0 0
      %5884 = vmatprep.subr.bf16.mxu0 0
      %5885 = vmatpush1.bf16.xpose.msra.mxu0 0
      %5886 = vmatprep.subr.bf16.mxu0 0
      %5887 = vmatpush1.bf16.xpose.msra.mxu0 0
      %5888 = vmatprep.subr.bf16.mxu0 0
      %5889 = vmatpush1.bf16.xpose.msra.mxu0 %v5872
      %5890 = vmatprep.subr.bf16.mxu0 0
      %5891 = vmatpush2.bf16.xpose.msra.mxu0 0
      %5892 = vmatprep.subr.bf16.mxu0 0
      %5893 = vmatpush2.bf16.xpose.msra.mxu0 0
      %5894 = vmatprep.subr.bf16.mxu0 0
      %5895 = vmatpush2.bf16.xpose.msra.mxu0 0
      %5896 = vmatprep.subr.bf16.mxu0 0
      %5897 = vmatpush2.bf16.xpose.msra.mxu0 0
      %5898 = vmatprep.subr.bf16.mxu0 0
      %5899 = vmatpush2.bf16.xpose.msra.mxu0 0
      %5900 = vmatprep.subr.bf16.mxu0 0
      %5901 = vmatpush2.bf16.xpose.msra.mxu0 0
      %5902 = vmatprep.subr.bf16.mxu0 0
      %5903 = vmatpush2.bf16.xpose.msra.mxu0 0
      %5904 = vmatprep.subr.bf16.mxu0 0
      %5905 = vmatpush2.bf16.xpose.msra.mxu0 0
      %5906 = vmatprep.mubr.bf16.mxu0 0
      %5907 = vmatmul.mubr.bf16.gmra.mxu0 %v5869
      %v5908 = vpop.f32.mrf.mxu0
      %v5909 = vadd.f32 0.0, %v5908
      %v5910 = vpop.f32.mrf.mxu0
      %v5911 = vpop.f32.mrf.mxu0
      %v5912 = vpop.f32.mrf.mxu0
      %5913 = vdwg.mxu0
      %5914 = vrot.lane.b32.xlu0 %v1806, 96
      %v5915 = vpop.permute.xlu0 %5914
      %5916 = vrot.lane.b32.xlu0 %v1822, 96
      %v5917 = vpop.permute.xlu0 %5916
      %v5919 = vsel %vm1845, %v5915, 0
      %v5922 = vsel %vm1845, %v5917, 0
      %5924 = vmatprep.subr.bf16.mxu0 0
      %5925 = vmatpush1.bf16.xpose.msra.mxu0 0
      %5926 = vmatprep.subr.bf16.mxu0 0
      %5927 = vmatpush1.bf16.xpose.msra.mxu0 0
      %5928 = vmatprep.subr.bf16.mxu0 0
      %5929 = vmatpush1.bf16.xpose.msra.mxu0 0
      %5930 = vmatprep.subr.bf16.mxu0 0
      %5931 = vmatpush1.bf16.xpose.msra.mxu0 0
      %5932 = vmatprep.subr.bf16.mxu0 0
      %5933 = vmatpush1.bf16.xpose.msra.mxu0 0
      %5934 = vmatprep.subr.bf16.mxu0 0
      %5935 = vmatpush1.bf16.xpose.msra.mxu0 0
      %5936 = vmatprep.subr.bf16.mxu0 0
      %5937 = vmatpush1.bf16.xpose.msra.mxu0 0
      %5938 = vmatprep.subr.bf16.mxu0 0
      %5939 = vmatpush1.bf16.xpose.msra.mxu0 %v5922
      %5940 = vmatprep.subr.bf16.mxu0 0
      %5941 = vmatpush2.bf16.xpose.msra.mxu0 0
      %5942 = vmatprep.subr.bf16.mxu0 0
      %5943 = vmatpush2.bf16.xpose.msra.mxu0 0
      %5944 = vmatprep.subr.bf16.mxu0 0
      %5945 = vmatpush2.bf16.xpose.msra.mxu0 0
      %5946 = vmatprep.subr.bf16.mxu0 0
      %5947 = vmatpush2.bf16.xpose.msra.mxu0 0
      %5948 = vmatprep.subr.bf16.mxu0 0
      %5949 = vmatpush2.bf16.xpose.msra.mxu0 0
      %5950 = vmatprep.subr.bf16.mxu0 0
      %5951 = vmatpush2.bf16.xpose.msra.mxu0 0
      %5952 = vmatprep.subr.bf16.mxu0 0
      %5953 = vmatpush2.bf16.xpose.msra.mxu0 0
      %5954 = vmatprep.subr.bf16.mxu0 0
      %5955 = vmatpush2.bf16.xpose.msra.mxu0 0
      %5956 = vmatprep.mubr.bf16.mxu0 0
      %5957 = vmatmul.mubr.bf16.gmra.mxu0 %v5919
      %v5958 = vpop.f32.mrf.mxu0
      %v5959 = vadd.f32 0.0, %v5958
      %v5960 = vpop.f32.mrf.mxu0
      %v5961 = vpop.f32.mrf.mxu0
      %v5962 = vpop.f32.mrf.mxu0
      %5963 = vdwg.mxu0
      %5964 = vrot.lane.b32.xlu0 %v1807, 96
      %v5965 = vpop.permute.xlu0 %5964
      %5966 = vrot.lane.b32.xlu0 %v1823, 96
      %v5967 = vpop.permute.xlu0 %5966
      %v5969 = vsel %vm1845, %v5965, 0
      %v5972 = vsel %vm1845, %v5967, 0
      %5974 = vmatprep.subr.bf16.mxu0 0
      %5975 = vmatpush1.bf16.xpose.msra.mxu0 0
      %5976 = vmatprep.subr.bf16.mxu0 0
      %5977 = vmatpush1.bf16.xpose.msra.mxu0 0
      %5978 = vmatprep.subr.bf16.mxu0 0
      %5979 = vmatpush1.bf16.xpose.msra.mxu0 0
      %5980 = vmatprep.subr.bf16.mxu0 0
      %5981 = vmatpush1.bf16.xpose.msra.mxu0 0
      %5982 = vmatprep.subr.bf16.mxu0 0
      %5983 = vmatpush1.bf16.xpose.msra.mxu0 0
      %5984 = vmatprep.subr.bf16.mxu0 0
      %5985 = vmatpush1.bf16.xpose.msra.mxu0 0
      %5986 = vmatprep.subr.bf16.mxu0 0
      %5987 = vmatpush1.bf16.xpose.msra.mxu0 0
      %5988 = vmatprep.subr.bf16.mxu0 0
      %5989 = vmatpush1.bf16.xpose.msra.mxu0 %v5972
      %5990 = vmatprep.subr.bf16.mxu0 0
      %5991 = vmatpush2.bf16.xpose.msra.mxu0 0
      %5992 = vmatprep.subr.bf16.mxu0 0
      %5993 = vmatpush2.bf16.xpose.msra.mxu0 0
      %5994 = vmatprep.subr.bf16.mxu0 0
      %5995 = vmatpush2.bf16.xpose.msra.mxu0 0
      %5996 = vmatprep.subr.bf16.mxu0 0
      %5997 = vmatpush2.bf16.xpose.msra.mxu0 0
      %5998 = vmatprep.subr.bf16.mxu0 0
      %5999 = vmatpush2.bf16.xpose.msra.mxu0 0
      %6000 = vmatprep.subr.bf16.mxu0 0
      %6001 = vmatpush2.bf16.xpose.msra.mxu0 0
      %6002 = vmatprep.subr.bf16.mxu0 0
      %6003 = vmatpush2.bf16.xpose.msra.mxu0 0
      %6004 = vmatprep.subr.bf16.mxu0 0
      %6005 = vmatpush2.bf16.xpose.msra.mxu0 0
      %6006 = vmatprep.mubr.bf16.mxu0 0
      %6007 = vmatmul.mubr.bf16.gmra.mxu0 %v5969
      %v6008 = vpop.f32.mrf.mxu0
      %v6009 = vadd.f32 0.0, %v6008
      %v6010 = vpop.f32.mrf.mxu0
      %v6011 = vpop.f32.mrf.mxu0
      %v6012 = vpop.f32.mrf.mxu0
      %6013 = vdwg.mxu0
      %6014 = vrot.lane.b32.xlu0 %v1808, 96
      %v6015 = vpop.permute.xlu0 %6014
      %6016 = vrot.lane.b32.xlu0 %v1824, 96
      %v6017 = vpop.permute.xlu0 %6016
      %v6019 = vsel %vm1845, %v6015, 0
      %v6022 = vsel %vm1845, %v6017, 0
      %6024 = vmatprep.subr.bf16.mxu0 0
      %6025 = vmatpush1.bf16.xpose.msra.mxu0 0
      %6026 = vmatprep.subr.bf16.mxu0 0
      %6027 = vmatpush1.bf16.xpose.msra.mxu0 0
      %6028 = vmatprep.subr.bf16.mxu0 0
      %6029 = vmatpush1.bf16.xpose.msra.mxu0 0
      %6030 = vmatprep.subr.bf16.mxu0 0
      %6031 = vmatpush1.bf16.xpose.msra.mxu0 0
      %6032 = vmatprep.subr.bf16.mxu0 0
      %6033 = vmatpush1.bf16.xpose.msra.mxu0 0
      %6034 = vmatprep.subr.bf16.mxu0 0
      %6035 = vmatpush1.bf16.xpose.msra.mxu0 0
      %6036 = vmatprep.subr.bf16.mxu0 0
      %6037 = vmatpush1.bf16.xpose.msra.mxu0 0
      %6038 = vmatprep.subr.bf16.mxu0 0
      %6039 = vmatpush1.bf16.xpose.msra.mxu0 %v6022
      %6040 = vmatprep.subr.bf16.mxu0 0
      %6041 = vmatpush2.bf16.xpose.msra.mxu0 0
      %6042 = vmatprep.subr.bf16.mxu0 0
      %6043 = vmatpush2.bf16.xpose.msra.mxu0 0
      %6044 = vmatprep.subr.bf16.mxu0 0
      %6045 = vmatpush2.bf16.xpose.msra.mxu0 0
      %6046 = vmatprep.subr.bf16.mxu0 0
      %6047 = vmatpush2.bf16.xpose.msra.mxu0 0
      %6048 = vmatprep.subr.bf16.mxu0 0
      %6049 = vmatpush2.bf16.xpose.msra.mxu0 0
      %6050 = vmatprep.subr.bf16.mxu0 0
      %6051 = vmatpush2.bf16.xpose.msra.mxu0 0
      %6052 = vmatprep.subr.bf16.mxu0 0
      %6053 = vmatpush2.bf16.xpose.msra.mxu0 0
      %6054 = vmatprep.subr.bf16.mxu0 0
      %6055 = vmatpush2.bf16.xpose.msra.mxu0 0
      %6056 = vmatprep.mubr.bf16.mxu0 0
      %6057 = vmatmul.mubr.bf16.gmra.mxu0 %v6019
      %v6058 = vpop.f32.mrf.mxu0
      %v6059 = vadd.f32 0.0, %v6058
      %v6060 = vpop.f32.mrf.mxu0
      %v6061 = vpop.f32.mrf.mxu0
      %v6062 = vpop.f32.mrf.mxu0
      %6063 = vdwg.mxu0
      %6064 = vrot.lane.b32.xlu0 %v1809, 96
      %v6065 = vpop.permute.xlu0 %6064
      %6066 = vrot.lane.b32.xlu0 %v1825, 96
      %v6067 = vpop.permute.xlu0 %6066
      %v6069 = vsel %vm1845, %v6065, 0
      %v6072 = vsel %vm1845, %v6067, 0
      %6074 = vmatprep.subr.bf16.mxu0 0
      %6075 = vmatpush1.bf16.xpose.msra.mxu0 0
      %6076 = vmatprep.subr.bf16.mxu0 0
      %6077 = vmatpush1.bf16.xpose.msra.mxu0 0
      %6078 = vmatprep.subr.bf16.mxu0 0
      %6079 = vmatpush1.bf16.xpose.msra.mxu0 0
      %6080 = vmatprep.subr.bf16.mxu0 0
      %6081 = vmatpush1.bf16.xpose.msra.mxu0 0
      %6082 = vmatprep.subr.bf16.mxu0 0
      %6083 = vmatpush1.bf16.xpose.msra.mxu0 0
      %6084 = vmatprep.subr.bf16.mxu0 0
      %6085 = vmatpush1.bf16.xpose.msra.mxu0 0
      %6086 = vmatprep.subr.bf16.mxu0 0
      %6087 = vmatpush1.bf16.xpose.msra.mxu0 0
      %6088 = vmatprep.subr.bf16.mxu0 0
      %6089 = vmatpush1.bf16.xpose.msra.mxu0 %v6072
      %6090 = vmatprep.subr.bf16.mxu0 0
      %6091 = vmatpush2.bf16.xpose.msra.mxu0 0
      %6092 = vmatprep.subr.bf16.mxu0 0
      %6093 = vmatpush2.bf16.xpose.msra.mxu0 0
      %6094 = vmatprep.subr.bf16.mxu0 0
      %6095 = vmatpush2.bf16.xpose.msra.mxu0 0
      %6096 = vmatprep.subr.bf16.mxu0 0
      %6097 = vmatpush2.bf16.xpose.msra.mxu0 0
      %6098 = vmatprep.subr.bf16.mxu0 0
      %6099 = vmatpush2.bf16.xpose.msra.mxu0 0
      %6100 = vmatprep.subr.bf16.mxu0 0
      %6101 = vmatpush2.bf16.xpose.msra.mxu0 0
      %6102 = vmatprep.subr.bf16.mxu0 0
      %6103 = vmatpush2.bf16.xpose.msra.mxu0 0
      %6104 = vmatprep.subr.bf16.mxu0 0
      %6105 = vmatpush2.bf16.xpose.msra.mxu0 0
      %6106 = vmatprep.mubr.bf16.mxu0 0
      %6107 = vmatmul.mubr.bf16.gmra.mxu0 %v6069
      %v6108 = vpop.f32.mrf.mxu0
      %v6109 = vadd.f32 0.0, %v6108
      %v6110 = vpop.f32.mrf.mxu0
      %v6111 = vpop.f32.mrf.mxu0
      %v6112 = vpop.f32.mrf.mxu0
      %6113 = vdwg.mxu0
      %6114 = vrot.lane.b32.xlu0 %v1810, 96
      %v6115 = vpop.permute.xlu0 %6114
      %6116 = vrot.lane.b32.xlu0 %v1826, 96
      %v6117 = vpop.permute.xlu0 %6116
      %v6119 = vsel %vm1845, %v6115, 0
      %v6122 = vsel %vm1845, %v6117, 0
      %6124 = vmatprep.subr.bf16.mxu0 0
      %6125 = vmatpush1.bf16.xpose.msra.mxu0 0
      %6126 = vmatprep.subr.bf16.mxu0 0
      %6127 = vmatpush1.bf16.xpose.msra.mxu0 0
      %6128 = vmatprep.subr.bf16.mxu0 0
      %6129 = vmatpush1.bf16.xpose.msra.mxu0 0
      %6130 = vmatprep.subr.bf16.mxu0 0
      %6131 = vmatpush1.bf16.xpose.msra.mxu0 0
      %6132 = vmatprep.subr.bf16.mxu0 0
      %6133 = vmatpush1.bf16.xpose.msra.mxu0 0
      %6134 = vmatprep.subr.bf16.mxu0 0
      %6135 = vmatpush1.bf16.xpose.msra.mxu0 0
      %6136 = vmatprep.subr.bf16.mxu0 0
      %6137 = vmatpush1.bf16.xpose.msra.mxu0 0
      %6138 = vmatprep.subr.bf16.mxu0 0
      %6139 = vmatpush1.bf16.xpose.msra.mxu0 %v6122
      %6140 = vmatprep.subr.bf16.mxu0 0
      %6141 = vmatpush2.bf16.xpose.msra.mxu0 0
      %6142 = vmatprep.subr.bf16.mxu0 0
      %6143 = vmatpush2.bf16.xpose.msra.mxu0 0
      %6144 = vmatprep.subr.bf16.mxu0 0
      %6145 = vmatpush2.bf16.xpose.msra.mxu0 0
      %6146 = vmatprep.subr.bf16.mxu0 0
      %6147 = vmatpush2.bf16.xpose.msra.mxu0 0
      %6148 = vmatprep.subr.bf16.mxu0 0
      %6149 = vmatpush2.bf16.xpose.msra.mxu0 0
      %6150 = vmatprep.subr.bf16.mxu0 0
      %6151 = vmatpush2.bf16.xpose.msra.mxu0 0
      %6152 = vmatprep.subr.bf16.mxu0 0
      %6153 = vmatpush2.bf16.xpose.msra.mxu0 0
      %6154 = vmatprep.subr.bf16.mxu0 0
      %6155 = vmatpush2.bf16.xpose.msra.mxu0 0
      %6156 = vmatprep.mubr.bf16.mxu0 0
      %6157 = vmatmul.mubr.bf16.gmra.mxu0 %v6119
      %v6158 = vpop.f32.mrf.mxu0
      %v6159 = vadd.f32 0.0, %v6158
      %v6160 = vpop.f32.mrf.mxu0
      %v6161 = vpop.f32.mrf.mxu0
      %v6162 = vpop.f32.mrf.mxu0
      %6163 = vdwg.mxu0
      %6164 = vrot.lane.b32.xlu0 %v1811, 96
      %v6165 = vpop.permute.xlu0 %6164
      %6166 = vrot.lane.b32.xlu0 %v1827, 96
      %v6167 = vpop.permute.xlu0 %6166
      %v6169 = vsel %vm1845, %v6165, 0
      %v6172 = vsel %vm1845, %v6167, 0
      %6174 = vmatprep.subr.bf16.mxu0 0
      %6175 = vmatpush1.bf16.xpose.msra.mxu0 0
      %6176 = vmatprep.subr.bf16.mxu0 0
      %6177 = vmatpush1.bf16.xpose.msra.mxu0 0
      %6178 = vmatprep.subr.bf16.mxu0 0
      %6179 = vmatpush1.bf16.xpose.msra.mxu0 0
      %6180 = vmatprep.subr.bf16.mxu0 0
      %6181 = vmatpush1.bf16.xpose.msra.mxu0 0
      %6182 = vmatprep.subr.bf16.mxu0 0
      %6183 = vmatpush1.bf16.xpose.msra.mxu0 0
      %6184 = vmatprep.subr.bf16.mxu0 0
      %6185 = vmatpush1.bf16.xpose.msra.mxu0 0
      %6186 = vmatprep.subr.bf16.mxu0 0
      %6187 = vmatpush1.bf16.xpose.msra.mxu0 0
      %6188 = vmatprep.subr.bf16.mxu0 0
      %6189 = vmatpush1.bf16.xpose.msra.mxu0 %v6172
      %6190 = vmatprep.subr.bf16.mxu0 0
      %6191 = vmatpush2.bf16.xpose.msra.mxu0 0
      %6192 = vmatprep.subr.bf16.mxu0 0
      %6193 = vmatpush2.bf16.xpose.msra.mxu0 0
      %6194 = vmatprep.subr.bf16.mxu0 0
      %6195 = vmatpush2.bf16.xpose.msra.mxu0 0
      %6196 = vmatprep.subr.bf16.mxu0 0
      %6197 = vmatpush2.bf16.xpose.msra.mxu0 0
      %6198 = vmatprep.subr.bf16.mxu0 0
      %6199 = vmatpush2.bf16.xpose.msra.mxu0 0
      %6200 = vmatprep.subr.bf16.mxu0 0
      %6201 = vmatpush2.bf16.xpose.msra.mxu0 0
      %6202 = vmatprep.subr.bf16.mxu0 0
      %6203 = vmatpush2.bf16.xpose.msra.mxu0 0
      %6204 = vmatprep.subr.bf16.mxu0 0
      %6205 = vmatpush2.bf16.xpose.msra.mxu0 0
      %6206 = vmatprep.mubr.bf16.mxu0 0
      %6207 = vmatmul.mubr.bf16.gmra.mxu0 %v6169
      %v6208 = vpop.f32.mrf.mxu0
      %v6209 = vadd.f32 0.0, %v6208
      %v6210 = vpop.f32.mrf.mxu0
      %v6211 = vpop.f32.mrf.mxu0
      %v6212 = vpop.f32.mrf.mxu0
      %6213 = vdwg.mxu0
      %6214 = vrot.lane.b32.xlu0 %v1812, 96
      %v6215 = vpop.permute.xlu0 %6214
      %6216 = vrot.lane.b32.xlu0 %v1828, 96
      %v6217 = vpop.permute.xlu0 %6216
      %v6219 = vsel %vm1845, %v6215, 0
      %v6222 = vsel %vm1845, %v6217, 0
      %6224 = vmatprep.subr.bf16.mxu0 0
      %6225 = vmatpush1.bf16.xpose.msra.mxu0 0
      %6226 = vmatprep.subr.bf16.mxu0 0
      %6227 = vmatpush1.bf16.xpose.msra.mxu0 0
      %6228 = vmatprep.subr.bf16.mxu0 0
      %6229 = vmatpush1.bf16.xpose.msra.mxu0 0
      %6230 = vmatprep.subr.bf16.mxu0 0
      %6231 = vmatpush1.bf16.xpose.msra.mxu0 0
      %6232 = vmatprep.subr.bf16.mxu0 0
      %6233 = vmatpush1.bf16.xpose.msra.mxu0 0
      %6234 = vmatprep.subr.bf16.mxu0 0
      %6235 = vmatpush1.bf16.xpose.msra.mxu0 0
      %6236 = vmatprep.subr.bf16.mxu0 0
      %6237 = vmatpush1.bf16.xpose.msra.mxu0 0
      %6238 = vmatprep.subr.bf16.mxu0 0
      %6239 = vmatpush1.bf16.xpose.msra.mxu0 %v6222
      %6240 = vmatprep.subr.bf16.mxu0 0
      %6241 = vmatpush2.bf16.xpose.msra.mxu0 0
      %6242 = vmatprep.subr.bf16.mxu0 0
      %6243 = vmatpush2.bf16.xpose.msra.mxu0 0
      %6244 = vmatprep.subr.bf16.mxu0 0
      %6245 = vmatpush2.bf16.xpose.msra.mxu0 0
      %6246 = vmatprep.subr.bf16.mxu0 0
      %6247 = vmatpush2.bf16.xpose.msra.mxu0 0
      %6248 = vmatprep.subr.bf16.mxu0 0
      %6249 = vmatpush2.bf16.xpose.msra.mxu0 0
      %6250 = vmatprep.subr.bf16.mxu0 0
      %6251 = vmatpush2.bf16.xpose.msra.mxu0 0
      %6252 = vmatprep.subr.bf16.mxu0 0
      %6253 = vmatpush2.bf16.xpose.msra.mxu0 0
      %6254 = vmatprep.subr.bf16.mxu0 0
      %6255 = vmatpush2.bf16.xpose.msra.mxu0 0
      %6256 = vmatprep.mubr.bf16.mxu0 0
      %6257 = vmatmul.mubr.bf16.gmra.mxu0 %v6219
      %v6258 = vpop.f32.mrf.mxu0
      %v6259 = vadd.f32 0.0, %v6258
      %v6260 = vpop.f32.mrf.mxu0
      %v6261 = vpop.f32.mrf.mxu0
      %v6262 = vpop.f32.mrf.mxu0
      %6263 = vdwg.mxu0
      %v6264 = vmul.f32 %v5509, 0.25
      %v6265 = vmul.f32 %v5559, 0.25
      %v6266 = vmul.f32 %v5609, 0.25
      %v6267 = vmul.f32 %v5659, 0.25
      %v6268 = vmul.f32 %v5709, 0.25
      %v6269 = vmul.f32 %v5759, 0.25
      %v6270 = vmul.f32 %v5809, 0.25
      %v6271 = vmul.f32 %v5859, 0.25
      %v6272 = vmul.f32 %v5909, 0.25
      %v6273 = vmul.f32 %v5959, 0.25
      %v6274 = vmul.f32 %v6009, 0.25
      %v6275 = vmul.f32 %v6059, 0.25
      %v6276 = vmul.f32 %v6109, 0.25
      %v6277 = vmul.f32 %v6159, 0.25
      %v6278 = vmul.f32 %v6209, 0.25
      %v6279 = vmul.f32 %v6259, 0.25
      %v6280 = vadd.f32 %v6264, %v2601
      %v6281 = vadd.f32 %v6265, %v2605
      %v6282 = vadd.f32 %v6266, %v2609
      %v6283 = vadd.f32 %v6267, %v2613
      %v6284 = vadd.f32 %v6268, %v2617
      %v6285 = vadd.f32 %v6269, %v2621
      %v6286 = vadd.f32 %v6270, %v2625
      %v6287 = vadd.f32 %v6271, %v2629
      %v6288 = vadd.f32 %v6272, %v2633
      %v6289 = vadd.f32 %v6273, %v2637
      %v6290 = vadd.f32 %v6274, %v2641
      %v6291 = vadd.f32 %v6275, %v2645
      %v6292 = vadd.f32 %v6276, %v2649
      %v6293 = vadd.f32 %v6277, %v2653
      %v6294 = vadd.f32 %v6278, %v2657
      %v6295 = vadd.f32 %v6279, %v2661
      %v6296 = vsel %vm2694, %v6280, -inf
      %6297 = vmax.xlane.f32.xlu0 %v6296
      %v6298 = vpop.xlane.xlu0 %6297
      %v6299 = vsel %vm2694, %v6281, -inf
      %6300 = vmax.xlane.f32.xlu0 %v6299
      %v6301 = vpop.xlane.xlu0 %6300
      %v6302 = vsel %vm2694, %v6282, -inf
      %6303 = vmax.xlane.f32.xlu0 %v6302
      %v6304 = vpop.xlane.xlu0 %6303
      %v6305 = vsel %vm2694, %v6283, -inf
      %6306 = vmax.xlane.f32.xlu0 %v6305
      %v6307 = vpop.xlane.xlu0 %6306
      %v6308 = vsel %vm2694, %v6284, -inf
      %6309 = vmax.xlane.f32.xlu0 %v6308
      %v6310 = vpop.xlane.xlu0 %6309
      %v6311 = vsel %vm2694, %v6285, -inf
      %6312 = vmax.xlane.f32.xlu0 %v6311
      %v6313 = vpop.xlane.xlu0 %6312
      %v6314 = vsel %vm2694, %v6286, -inf
      %6315 = vmax.xlane.f32.xlu0 %v6314
      %v6316 = vpop.xlane.xlu0 %6315
      %v6317 = vsel %vm2694, %v6287, -inf
      %6318 = vmax.xlane.f32.xlu0 %v6317
      %v6319 = vpop.xlane.xlu0 %6318
      %v6320 = vsel %vm2694, %v6288, -inf
      %6321 = vmax.xlane.f32.xlu0 %v6320
      %v6322 = vpop.xlane.xlu0 %6321
      %v6323 = vsel %vm2694, %v6289, -inf
      %6324 = vmax.xlane.f32.xlu0 %v6323
      %v6325 = vpop.xlane.xlu0 %6324
      %v6326 = vsel %vm2694, %v6290, -inf
      %6327 = vmax.xlane.f32.xlu0 %v6326
      %v6328 = vpop.xlane.xlu0 %6327
      %v6329 = vsel %vm2694, %v6291, -inf
      %6330 = vmax.xlane.f32.xlu0 %v6329
      %v6331 = vpop.xlane.xlu0 %6330
      %v6332 = vsel %vm2694, %v6292, -inf
      %6333 = vmax.xlane.f32.xlu0 %v6332
      %v6334 = vpop.xlane.xlu0 %6333
      %v6335 = vsel %vm2694, %v6293, -inf
      %6336 = vmax.xlane.f32.xlu0 %v6335
      %v6337 = vpop.xlane.xlu0 %6336
      %v6338 = vsel %vm2694, %v6294, -inf
      %6339 = vmax.xlane.f32.xlu0 %v6338
      %v6340 = vpop.xlane.xlu0 %6339
      %v6341 = vsel %vm2694, %v6295, -inf
      %6342 = vmax.xlane.f32.xlu0 %v6341
      %v6343 = vpop.xlane.xlu0 %6342
      %v6344 = vsub.f32 %v6280, %v6298
      %v6345 = vsub.f32 %v6281, %v6301
      %v6346 = vsub.f32 %v6282, %v6304
      %v6347 = vsub.f32 %v6283, %v6307
      %v6348 = vsub.f32 %v6284, %v6310
      %v6349 = vsub.f32 %v6285, %v6313
      %v6350 = vsub.f32 %v6286, %v6316
      %v6351 = vsub.f32 %v6287, %v6319
      %v6352 = vsub.f32 %v6288, %v6322
      %v6353 = vsub.f32 %v6289, %v6325
      %v6354 = vsub.f32 %v6290, %v6328
      %v6355 = vsub.f32 %v6291, %v6331
      %v6356 = vsub.f32 %v6292, %v6334
      %v6357 = vsub.f32 %v6293, %v6337
      %v6358 = vsub.f32 %v6294, %v6340
      %v6359 = vsub.f32 %v6295, %v6343
      %v6360 = vmul.f32 %v6344, 1.442695
      %v6361 = vpow.pop %v6360
      %v6362 = vmul.f32 %v6345, 1.442695
      %v6363 = vpow.pop %v6362
      %v6364 = vmul.f32 %v6346, 1.442695
      %v6365 = vpow.pop %v6364
      %v6366 = vmul.f32 %v6347, 1.442695
      %v6367 = vpow.pop %v6366
      %v6368 = vmul.f32 %v6348, 1.442695
      %v6369 = vpow.pop %v6368
      %v6370 = vmul.f32 %v6349, 1.442695
      %v6371 = vpow.pop %v6370
      %v6372 = vmul.f32 %v6350, 1.442695
      %v6373 = vpow.pop %v6372
      %v6374 = vmul.f32 %v6351, 1.442695
      %v6375 = vpow.pop %v6374
      %v6376 = vmul.f32 %v6352, 1.442695
      %v6377 = vpow.pop %v6376
      %v6378 = vmul.f32 %v6353, 1.442695
      %v6379 = vpow.pop %v6378
      %v6380 = vmul.f32 %v6354, 1.442695
      %v6381 = vpow.pop %v6380
      %v6382 = vmul.f32 %v6355, 1.442695
      %v6383 = vpow.pop %v6382
      %v6384 = vmul.f32 %v6356, 1.442695
      %v6385 = vpow.pop %v6384
      %v6386 = vmul.f32 %v6357, 1.442695
      %v6387 = vpow.pop %v6386
      %v6388 = vmul.f32 %v6358, 1.442695
      %v6389 = vpow.pop %v6388
      %v6390 = vmul.f32 %v6359, 1.442695
      %v6391 = vpow.pop %v6390
      %v6392 = vsel %vm2694, %v6361, 0.0
      %6393 = vadd.xlane.f32.xlu0 %v6392
      %v6394 = vpop.xlane.xlu0 %6393
      %v6395 = vsel %vm2694, %v6363, 0.0
      %6396 = vadd.xlane.f32.xlu0 %v6395
      %v6397 = vpop.xlane.xlu0 %6396
      %v6398 = vsel %vm2694, %v6365, 0.0
      %6399 = vadd.xlane.f32.xlu0 %v6398
      %v6400 = vpop.xlane.xlu0 %6399
      %v6401 = vsel %vm2694, %v6367, 0.0
      %6402 = vadd.xlane.f32.xlu0 %v6401
      %v6403 = vpop.xlane.xlu0 %6402
      %v6404 = vsel %vm2694, %v6369, 0.0
      %6405 = vadd.xlane.f32.xlu0 %v6404
      %v6406 = vpop.xlane.xlu0 %6405
      %v6407 = vsel %vm2694, %v6371, 0.0
      %6408 = vadd.xlane.f32.xlu0 %v6407
      %v6409 = vpop.xlane.xlu0 %6408
      %v6410 = vsel %vm2694, %v6373, 0.0
      %6411 = vadd.xlane.f32.xlu0 %v6410
      %v6412 = vpop.xlane.xlu0 %6411
      %v6413 = vsel %vm2694, %v6375, 0.0
      %6414 = vadd.xlane.f32.xlu0 %v6413
      %v6415 = vpop.xlane.xlu0 %6414
      %v6416 = vsel %vm2694, %v6377, 0.0
      %6417 = vadd.xlane.f32.xlu0 %v6416
      %v6418 = vpop.xlane.xlu0 %6417
      %v6419 = vsel %vm2694, %v6379, 0.0
      %6420 = vadd.xlane.f32.xlu0 %v6419
      %v6421 = vpop.xlane.xlu0 %6420
      %v6422 = vsel %vm2694, %v6381, 0.0
      %6423 = vadd.xlane.f32.xlu0 %v6422
      %v6424 = vpop.xlane.xlu0 %6423
      %v6425 = vsel %vm2694, %v6383, 0.0
      %6426 = vadd.xlane.f32.xlu0 %v6425
      %v6427 = vpop.xlane.xlu0 %6426
      %v6428 = vsel %vm2694, %v6385, 0.0
      %6429 = vadd.xlane.f32.xlu0 %v6428
      %v6430 = vpop.xlane.xlu0 %6429
      %v6431 = vsel %vm2694, %v6387, 0.0
      %6432 = vadd.xlane.f32.xlu0 %v6431
      %v6433 = vpop.xlane.xlu0 %6432
      %v6434 = vsel %vm2694, %v6389, 0.0
      %6435 = vadd.xlane.f32.xlu0 %v6434
      %v6436 = vpop.xlane.xlu0 %6435
      %v6437 = vsel %vm2694, %v6391, 0.0
      %6438 = vadd.xlane.f32.xlu0 %v6437
      %v6439 = vpop.xlane.xlu0 %6438
      %v6440 = vrcp.pop %v6394
      %v6441 = vrcp.pop %v6397
      %v6442 = vrcp.pop %v6400
      %v6443 = vrcp.pop %v6403
      %v6444 = vrcp.pop %v6406
      %v6445 = vrcp.pop %v6409
      %v6446 = vrcp.pop %v6412
      %v6447 = vrcp.pop %v6415
      %v6448 = vrcp.pop %v6418
      %v6449 = vrcp.pop %v6421
      %v6450 = vrcp.pop %v6424
      %v6451 = vrcp.pop %v6427
      %v6452 = vrcp.pop %v6430
      %v6453 = vrcp.pop %v6433
      %v6454 = vrcp.pop %v6436
      %v6455 = vrcp.pop %v6439
      %v6456 = vmul.f32 %v6361, %v6440
      %v6457 = vmul.f32 %v6363, %v6441
      %v6458 = vmul.f32 %v6365, %v6442
      %v6459 = vmul.f32 %v6367, %v6443
      %v6460 = vmul.f32 %v6369, %v6444
      %v6461 = vmul.f32 %v6371, %v6445
      %v6462 = vmul.f32 %v6373, %v6446
      %v6463 = vmul.f32 %v6375, %v6447
      %v6464 = vmul.f32 %v6377, %v6448
      %v6465 = vmul.f32 %v6379, %v6449
      %v6466 = vmul.f32 %v6381, %v6450
      %v6467 = vmul.f32 %v6383, %v6451
      %v6468 = vmul.f32 %v6385, %v6452
      %v6469 = vmul.f32 %v6387, %v6453
      %v6470 = vmul.f32 %v6389, %v6454
      %v6471 = vmul.f32 %v6391, %v6455
      %v6472 = vpack.c.bf16 %v6456, %v6456
      %v6473 = vpack.c.bf16 %v6457, %v6457
      %v6474 = vpack.c.bf16 %v6458, %v6458
      %v6475 = vpack.c.bf16 %v6459, %v6459
      %v6476 = vpack.c.bf16 %v6460, %v6460
      %v6477 = vpack.c.bf16 %v6461, %v6461
      %v6478 = vpack.c.bf16 %v6462, %v6462
      %v6479 = vpack.c.bf16 %v6463, %v6463
      %v6480 = vpack.c.bf16 %v6464, %v6464
      %v6481 = vpack.c.bf16 %v6465, %v6465
      %v6482 = vpack.c.bf16 %v6466, %v6466
      %v6483 = vpack.c.bf16 %v6467, %v6467
      %v6484 = vpack.c.bf16 %v6468, %v6468
      %v6485 = vpack.c.bf16 %v6469, %v6469
      %v6486 = vpack.c.bf16 %v6470, %v6470
      %v6487 = vpack.c.bf16 %v6471, %v6471
      %6488 = vrot.lane.b32.xlu0 %v1829, 96
      %v6489 = vpop.permute.xlu0 %6488
      %v6491 = vsel %vm2694, %v6472, 0
      %v6494 = vsel %vm2890, %v6489, 0
      %6496 = vmatprep.subr.bf16.mxu0 0
      %6497 = vmatpush1.bf16.msra.mxu0 0
      %6498 = vmatprep.subr.bf16.mxu0 0
      %6499 = vmatpush1.bf16.msra.mxu0 0
      %6500 = vmatprep.subr.bf16.mxu0 0
      %6501 = vmatpush1.bf16.msra.mxu0 0
      %6502 = vmatprep.subr.bf16.mxu0 0
      %6503 = vmatpush1.bf16.msra.mxu0 0
      %6504 = vmatprep.subr.bf16.mxu0 0
      %6505 = vmatpush1.bf16.msra.mxu0 0
      %6506 = vmatprep.subr.bf16.mxu0 0
      %6507 = vmatpush1.bf16.msra.mxu0 0
      %6508 = vmatprep.subr.bf16.mxu0 0
      %6509 = vmatpush1.bf16.msra.mxu0 0
      %6510 = vmatprep.subr.bf16.mxu0 0
      %6511 = vmatpush1.bf16.msra.mxu0 %v6494
      %6512 = vmatprep.subr.bf16.mxu0 0
      %6513 = vmatpush2.bf16.msra.mxu0 0
      %6514 = vmatprep.subr.bf16.mxu0 0
      %6515 = vmatpush2.bf16.msra.mxu0 0
      %6516 = vmatprep.subr.bf16.mxu0 0
      %6517 = vmatpush2.bf16.msra.mxu0 0
      %6518 = vmatprep.subr.bf16.mxu0 0
      %6519 = vmatpush2.bf16.msra.mxu0 0
      %6520 = vmatprep.subr.bf16.mxu0 0
      %6521 = vmatpush2.bf16.msra.mxu0 0
      %6522 = vmatprep.subr.bf16.mxu0 0
      %6523 = vmatpush2.bf16.msra.mxu0 0
      %6524 = vmatprep.subr.bf16.mxu0 0
      %6525 = vmatpush2.bf16.msra.mxu0 0
      %6526 = vmatprep.subr.bf16.mxu0 0
      %6527 = vmatpush2.bf16.msra.mxu0 0
      %6528 = vmatprep.mubr.bf16.mxu0 0
      %6529 = vmatmul.mubr.bf16.gmra.mxu0 %v6491
      %v6530 = vpop.f32.mrf.mxu0
      %v6531 = vadd.f32 0.0, %v6530
      %v6532 = vpop.f32.mrf.mxu0
      %v6533 = vpop.f32.mrf.mxu0
      %v6534 = vpop.f32.mrf.mxu0
      %6535 = vdwg.mxu0
      %6536 = vrot.lane.b32.xlu0 %v1830, 96
      %v6537 = vpop.permute.xlu0 %6536
      %v6539 = vsel %vm2694, %v6473, 0
      %v6542 = vsel %vm2890, %v6537, 0
      %6544 = vmatprep.subr.bf16.mxu0 0
      %6545 = vmatpush1.bf16.msra.mxu0 0
      %6546 = vmatprep.subr.bf16.mxu0 0
      %6547 = vmatpush1.bf16.msra.mxu0 0
      %6548 = vmatprep.subr.bf16.mxu0 0
      %6549 = vmatpush1.bf16.msra.mxu0 0
      %6550 = vmatprep.subr.bf16.mxu0 0
      %6551 = vmatpush1.bf16.msra.mxu0 0
      %6552 = vmatprep.subr.bf16.mxu0 0
      %6553 = vmatpush1.bf16.msra.mxu0 0
      %6554 = vmatprep.subr.bf16.mxu0 0
      %6555 = vmatpush1.bf16.msra.mxu0 0
      %6556 = vmatprep.subr.bf16.mxu0 0
      %6557 = vmatpush1.bf16.msra.mxu0 0
      %6558 = vmatprep.subr.bf16.mxu0 0
      %6559 = vmatpush1.bf16.msra.mxu0 %v6542
      %6560 = vmatprep.subr.bf16.mxu0 0
      %6561 = vmatpush2.bf16.msra.mxu0 0
      %6562 = vmatprep.subr.bf16.mxu0 0
      %6563 = vmatpush2.bf16.msra.mxu0 0
      %6564 = vmatprep.subr.bf16.mxu0 0
      %6565 = vmatpush2.bf16.msra.mxu0 0
      %6566 = vmatprep.subr.bf16.mxu0 0
      %6567 = vmatpush2.bf16.msra.mxu0 0
      %6568 = vmatprep.subr.bf16.mxu0 0
      %6569 = vmatpush2.bf16.msra.mxu0 0
      %6570 = vmatprep.subr.bf16.mxu0 0
      %6571 = vmatpush2.bf16.msra.mxu0 0
      %6572 = vmatprep.subr.bf16.mxu0 0
      %6573 = vmatpush2.bf16.msra.mxu0 0
      %6574 = vmatprep.subr.bf16.mxu0 0
      %6575 = vmatpush2.bf16.msra.mxu0 0
      %6576 = vmatprep.mubr.bf16.mxu0 0
      %6577 = vmatmul.mubr.bf16.gmra.mxu0 %v6539
      %v6578 = vpop.f32.mrf.mxu0
      %v6579 = vadd.f32 0.0, %v6578
      %v6580 = vpop.f32.mrf.mxu0
      %v6581 = vpop.f32.mrf.mxu0
      %v6582 = vpop.f32.mrf.mxu0
      %6583 = vdwg.mxu0
      %6584 = vrot.lane.b32.xlu0 %v1831, 96
      %v6585 = vpop.permute.xlu0 %6584
      %v6587 = vsel %vm2694, %v6474, 0
      %v6590 = vsel %vm2890, %v6585, 0
      %6592 = vmatprep.subr.bf16.mxu0 0
      %6593 = vmatpush1.bf16.msra.mxu0 0
      %6594 = vmatprep.subr.bf16.mxu0 0
      %6595 = vmatpush1.bf16.msra.mxu0 0
      %6596 = vmatprep.subr.bf16.mxu0 0
      %6597 = vmatpush1.bf16.msra.mxu0 0
      %6598 = vmatprep.subr.bf16.mxu0 0
      %6599 = vmatpush1.bf16.msra.mxu0 0
      %6600 = vmatprep.subr.bf16.mxu0 0
      %6601 = vmatpush1.bf16.msra.mxu0 0
      %6602 = vmatprep.subr.bf16.mxu0 0
      %6603 = vmatpush1.bf16.msra.mxu0 0
      %6604 = vmatprep.subr.bf16.mxu0 0
      %6605 = vmatpush1.bf16.msra.mxu0 0
      %6606 = vmatprep.subr.bf16.mxu0 0
      %6607 = vmatpush1.bf16.msra.mxu0 %v6590
      %6608 = vmatprep.subr.bf16.mxu0 0
      %6609 = vmatpush2.bf16.msra.mxu0 0
      %6610 = vmatprep.subr.bf16.mxu0 0
      %6611 = vmatpush2.bf16.msra.mxu0 0
      %6612 = vmatprep.subr.bf16.mxu0 0
      %6613 = vmatpush2.bf16.msra.mxu0 0
      %6614 = vmatprep.subr.bf16.mxu0 0
      %6615 = vmatpush2.bf16.msra.mxu0 0
      %6616 = vmatprep.subr.bf16.mxu0 0
      %6617 = vmatpush2.bf16.msra.mxu0 0
      %6618 = vmatprep.subr.bf16.mxu0 0
      %6619 = vmatpush2.bf16.msra.mxu0 0
      %6620 = vmatprep.subr.bf16.mxu0 0
      %6621 = vmatpush2.bf16.msra.mxu0 0
      %6622 = vmatprep.subr.bf16.mxu0 0
      %6623 = vmatpush2.bf16.msra.mxu0 0
      %6624 = vmatprep.mubr.bf16.mxu0 0
      %6625 = vmatmul.mubr.bf16.gmra.mxu0 %v6587
      %v6626 = vpop.f32.mrf.mxu0
      %v6627 = vadd.f32 0.0, %v6626
      %v6628 = vpop.f32.mrf.mxu0
      %v6629 = vpop.f32.mrf.mxu0
      %v6630 = vpop.f32.mrf.mxu0
      %6631 = vdwg.mxu0
      %6632 = vrot.lane.b32.xlu0 %v1832, 96
      %v6633 = vpop.permute.xlu0 %6632
      %v6635 = vsel %vm2694, %v6475, 0
      %v6638 = vsel %vm2890, %v6633, 0
      %6640 = vmatprep.subr.bf16.mxu0 0
      %6641 = vmatpush1.bf16.msra.mxu0 0
      %6642 = vmatprep.subr.bf16.mxu0 0
      %6643 = vmatpush1.bf16.msra.mxu0 0
      %6644 = vmatprep.subr.bf16.mxu0 0
      %6645 = vmatpush1.bf16.msra.mxu0 0
      %6646 = vmatprep.subr.bf16.mxu0 0
      %6647 = vmatpush1.bf16.msra.mxu0 0
      %6648 = vmatprep.subr.bf16.mxu0 0
      %6649 = vmatpush1.bf16.msra.mxu0 0
      %6650 = vmatprep.subr.bf16.mxu0 0
      %6651 = vmatpush1.bf16.msra.mxu0 0
      %6652 = vmatprep.subr.bf16.mxu0 0
      %6653 = vmatpush1.bf16.msra.mxu0 0
      %6654 = vmatprep.subr.bf16.mxu0 0
      %6655 = vmatpush1.bf16.msra.mxu0 %v6638
      %6656 = vmatprep.subr.bf16.mxu0 0
      %6657 = vmatpush2.bf16.msra.mxu0 0
      %6658 = vmatprep.subr.bf16.mxu0 0
      %6659 = vmatpush2.bf16.msra.mxu0 0
      %6660 = vmatprep.subr.bf16.mxu0 0
      %6661 = vmatpush2.bf16.msra.mxu0 0
      %6662 = vmatprep.subr.bf16.mxu0 0
      %6663 = vmatpush2.bf16.msra.mxu0 0
      %6664 = vmatprep.subr.bf16.mxu0 0
      %6665 = vmatpush2.bf16.msra.mxu0 0
      %6666 = vmatprep.subr.bf16.mxu0 0
      %6667 = vmatpush2.bf16.msra.mxu0 0
      %6668 = vmatprep.subr.bf16.mxu0 0
      %6669 = vmatpush2.bf16.msra.mxu0 0
      %6670 = vmatprep.subr.bf16.mxu0 0
      %6671 = vmatpush2.bf16.msra.mxu0 0
      %6672 = vmatprep.mubr.bf16.mxu0 0
      %6673 = vmatmul.mubr.bf16.gmra.mxu0 %v6635
      %v6674 = vpop.f32.mrf.mxu0
      %v6675 = vadd.f32 0.0, %v6674
      %v6676 = vpop.f32.mrf.mxu0
      %v6677 = vpop.f32.mrf.mxu0
      %v6678 = vpop.f32.mrf.mxu0
      %6679 = vdwg.mxu0
      %6680 = vrot.lane.b32.xlu0 %v1833, 96
      %v6681 = vpop.permute.xlu0 %6680
      %v6683 = vsel %vm2694, %v6476, 0
      %v6686 = vsel %vm2890, %v6681, 0
      %6688 = vmatprep.subr.bf16.mxu0 0
      %6689 = vmatpush1.bf16.msra.mxu0 0
      %6690 = vmatprep.subr.bf16.mxu0 0
      %6691 = vmatpush1.bf16.msra.mxu0 0
      %6692 = vmatprep.subr.bf16.mxu0 0
      %6693 = vmatpush1.bf16.msra.mxu0 0
      %6694 = vmatprep.subr.bf16.mxu0 0
      %6695 = vmatpush1.bf16.msra.mxu0 0
      %6696 = vmatprep.subr.bf16.mxu0 0
      %6697 = vmatpush1.bf16.msra.mxu0 0
      %6698 = vmatprep.subr.bf16.mxu0 0
      %6699 = vmatpush1.bf16.msra.mxu0 0
      %6700 = vmatprep.subr.bf16.mxu0 0
      %6701 = vmatpush1.bf16.msra.mxu0 0
      %6702 = vmatprep.subr.bf16.mxu0 0
      %6703 = vmatpush1.bf16.msra.mxu0 %v6686
      %6704 = vmatprep.subr.bf16.mxu0 0
      %6705 = vmatpush2.bf16.msra.mxu0 0
      %6706 = vmatprep.subr.bf16.mxu0 0
      %6707 = vmatpush2.bf16.msra.mxu0 0
      %6708 = vmatprep.subr.bf16.mxu0 0
      %6709 = vmatpush2.bf16.msra.mxu0 0
      %6710 = vmatprep.subr.bf16.mxu0 0
      %6711 = vmatpush2.bf16.msra.mxu0 0
      %6712 = vmatprep.subr.bf16.mxu0 0
      %6713 = vmatpush2.bf16.msra.mxu0 0
      %6714 = vmatprep.subr.bf16.mxu0 0
      %6715 = vmatpush2.bf16.msra.mxu0 0
      %6716 = vmatprep.subr.bf16.mxu0 0
      %6717 = vmatpush2.bf16.msra.mxu0 0
      %6718 = vmatprep.subr.bf16.mxu0 0
      %6719 = vmatpush2.bf16.msra.mxu0 0
      %6720 = vmatprep.mubr.bf16.mxu0 0
      %6721 = vmatmul.mubr.bf16.gmra.mxu0 %v6683
      %v6722 = vpop.f32.mrf.mxu0
      %v6723 = vadd.f32 0.0, %v6722
      %v6724 = vpop.f32.mrf.mxu0
      %v6725 = vpop.f32.mrf.mxu0
      %v6726 = vpop.f32.mrf.mxu0
      %6727 = vdwg.mxu0
      %6728 = vrot.lane.b32.xlu0 %v1834, 96
      %v6729 = vpop.permute.xlu0 %6728
      %v6731 = vsel %vm2694, %v6477, 0
      %v6734 = vsel %vm2890, %v6729, 0
      %6736 = vmatprep.subr.bf16.mxu0 0
      %6737 = vmatpush1.bf16.msra.mxu0 0
      %6738 = vmatprep.subr.bf16.mxu0 0
      %6739 = vmatpush1.bf16.msra.mxu0 0
      %6740 = vmatprep.subr.bf16.mxu0 0
      %6741 = vmatpush1.bf16.msra.mxu0 0
      %6742 = vmatprep.subr.bf16.mxu0 0
      %6743 = vmatpush1.bf16.msra.mxu0 0
      %6744 = vmatprep.subr.bf16.mxu0 0
      %6745 = vmatpush1.bf16.msra.mxu0 0
      %6746 = vmatprep.subr.bf16.mxu0 0
      %6747 = vmatpush1.bf16.msra.mxu0 0
      %6748 = vmatprep.subr.bf16.mxu0 0
      %6749 = vmatpush1.bf16.msra.mxu0 0
      %6750 = vmatprep.subr.bf16.mxu0 0
      %6751 = vmatpush1.bf16.msra.mxu0 %v6734
      %6752 = vmatprep.subr.bf16.mxu0 0
      %6753 = vmatpush2.bf16.msra.mxu0 0
      %6754 = vmatprep.subr.bf16.mxu0 0
      %6755 = vmatpush2.bf16.msra.mxu0 0
      %6756 = vmatprep.subr.bf16.mxu0 0
      %6757 = vmatpush2.bf16.msra.mxu0 0
      %6758 = vmatprep.subr.bf16.mxu0 0
      %6759 = vmatpush2.bf16.msra.mxu0 0
      %6760 = vmatprep.subr.bf16.mxu0 0
      %6761 = vmatpush2.bf16.msra.mxu0 0
      %6762 = vmatprep.subr.bf16.mxu0 0
      %6763 = vmatpush2.bf16.msra.mxu0 0
      %6764 = vmatprep.subr.bf16.mxu0 0
      %6765 = vmatpush2.bf16.msra.mxu0 0
      %6766 = vmatprep.subr.bf16.mxu0 0
      %6767 = vmatpush2.bf16.msra.mxu0 0
      %6768 = vmatprep.mubr.bf16.mxu0 0
      %6769 = vmatmul.mubr.bf16.gmra.mxu0 %v6731
      %v6770 = vpop.f32.mrf.mxu0
      %v6771 = vadd.f32 0.0, %v6770
      %v6772 = vpop.f32.mrf.mxu0
      %v6773 = vpop.f32.mrf.mxu0
      %v6774 = vpop.f32.mrf.mxu0
      %6775 = vdwg.mxu0
      %6776 = vrot.lane.b32.xlu0 %v1835, 96
      %v6777 = vpop.permute.xlu0 %6776
      %v6779 = vsel %vm2694, %v6478, 0
      %v6782 = vsel %vm2890, %v6777, 0
      %6784 = vmatprep.subr.bf16.mxu0 0
      %6785 = vmatpush1.bf16.msra.mxu0 0
      %6786 = vmatprep.subr.bf16.mxu0 0
      %6787 = vmatpush1.bf16.msra.mxu0 0
      %6788 = vmatprep.subr.bf16.mxu0 0
      %6789 = vmatpush1.bf16.msra.mxu0 0
      %6790 = vmatprep.subr.bf16.mxu0 0
      %6791 = vmatpush1.bf16.msra.mxu0 0
      %6792 = vmatprep.subr.bf16.mxu0 0
      %6793 = vmatpush1.bf16.msra.mxu0 0
      %6794 = vmatprep.subr.bf16.mxu0 0
      %6795 = vmatpush1.bf16.msra.mxu0 0
      %6796 = vmatprep.subr.bf16.mxu0 0
      %6797 = vmatpush1.bf16.msra.mxu0 0
      %6798 = vmatprep.subr.bf16.mxu0 0
      %6799 = vmatpush1.bf16.msra.mxu0 %v6782
      %6800 = vmatprep.subr.bf16.mxu0 0
      %6801 = vmatpush2.bf16.msra.mxu0 0
      %6802 = vmatprep.subr.bf16.mxu0 0
      %6803 = vmatpush2.bf16.msra.mxu0 0
      %6804 = vmatprep.subr.bf16.mxu0 0
      %6805 = vmatpush2.bf16.msra.mxu0 0
      %6806 = vmatprep.subr.bf16.mxu0 0
      %6807 = vmatpush2.bf16.msra.mxu0 0
      %6808 = vmatprep.subr.bf16.mxu0 0
      %6809 = vmatpush2.bf16.msra.mxu0 0
      %6810 = vmatprep.subr.bf16.mxu0 0
      %6811 = vmatpush2.bf16.msra.mxu0 0
      %6812 = vmatprep.subr.bf16.mxu0 0
      %6813 = vmatpush2.bf16.msra.mxu0 0
      %6814 = vmatprep.subr.bf16.mxu0 0
      %6815 = vmatpush2.bf16.msra.mxu0 0
      %6816 = vmatprep.mubr.bf16.mxu0 0
      %6817 = vmatmul.mubr.bf16.gmra.mxu0 %v6779
      %v6818 = vpop.f32.mrf.mxu0
      %v6819 = vadd.f32 0.0, %v6818
      %v6820 = vpop.f32.mrf.mxu0
      %v6821 = vpop.f32.mrf.mxu0
      %v6822 = vpop.f32.mrf.mxu0
      %6823 = vdwg.mxu0
      %6824 = vrot.lane.b32.xlu0 %v1836, 96
      %v6825 = vpop.permute.xlu0 %6824
      %v6827 = vsel %vm2694, %v6479, 0
      %v6830 = vsel %vm2890, %v6825, 0
      %6832 = vmatprep.subr.bf16.mxu0 0
      %6833 = vmatpush1.bf16.msra.mxu0 0
      %6834 = vmatprep.subr.bf16.mxu0 0
      %6835 = vmatpush1.bf16.msra.mxu0 0
      %6836 = vmatprep.subr.bf16.mxu0 0
      %6837 = vmatpush1.bf16.msra.mxu0 0
      %6838 = vmatprep.subr.bf16.mxu0 0
      %6839 = vmatpush1.bf16.msra.mxu0 0
      %6840 = vmatprep.subr.bf16.mxu0 0
      %6841 = vmatpush1.bf16.msra.mxu0 0
      %6842 = vmatprep.subr.bf16.mxu0 0
      %6843 = vmatpush1.bf16.msra.mxu0 0
      %6844 = vmatprep.subr.bf16.mxu0 0
      %6845 = vmatpush1.bf16.msra.mxu0 0
      %6846 = vmatprep.subr.bf16.mxu0 0
      %6847 = vmatpush1.bf16.msra.mxu0 %v6830
      %6848 = vmatprep.subr.bf16.mxu0 0
      %6849 = vmatpush2.bf16.msra.mxu0 0
      %6850 = vmatprep.subr.bf16.mxu0 0
      %6851 = vmatpush2.bf16.msra.mxu0 0
      %6852 = vmatprep.subr.bf16.mxu0 0
      %6853 = vmatpush2.bf16.msra.mxu0 0
      %6854 = vmatprep.subr.bf16.mxu0 0
      %6855 = vmatpush2.bf16.msra.mxu0 0
      %6856 = vmatprep.subr.bf16.mxu0 0
      %6857 = vmatpush2.bf16.msra.mxu0 0
      %6858 = vmatprep.subr.bf16.mxu0 0
      %6859 = vmatpush2.bf16.msra.mxu0 0
      %6860 = vmatprep.subr.bf16.mxu0 0
      %6861 = vmatpush2.bf16.msra.mxu0 0
      %6862 = vmatprep.subr.bf16.mxu0 0
      %6863 = vmatpush2.bf16.msra.mxu0 0
      %6864 = vmatprep.mubr.bf16.mxu0 0
      %6865 = vmatmul.mubr.bf16.gmra.mxu0 %v6827
      %v6866 = vpop.f32.mrf.mxu0
      %v6867 = vadd.f32 0.0, %v6866
      %v6868 = vpop.f32.mrf.mxu0
      %v6869 = vpop.f32.mrf.mxu0
      %v6870 = vpop.f32.mrf.mxu0
      %6871 = vdwg.mxu0
      %6872 = vrot.lane.b32.xlu0 %v1837, 96
      %v6873 = vpop.permute.xlu0 %6872
      %v6875 = vsel %vm2694, %v6480, 0
      %v6878 = vsel %vm2890, %v6873, 0
      %6880 = vmatprep.subr.bf16.mxu0 0
      %6881 = vmatpush1.bf16.msra.mxu0 0
      %6882 = vmatprep.subr.bf16.mxu0 0
      %6883 = vmatpush1.bf16.msra.mxu0 0
      %6884 = vmatprep.subr.bf16.mxu0 0
      %6885 = vmatpush1.bf16.msra.mxu0 0
      %6886 = vmatprep.subr.bf16.mxu0 0
      %6887 = vmatpush1.bf16.msra.mxu0 0
      %6888 = vmatprep.subr.bf16.mxu0 0
      %6889 = vmatpush1.bf16.msra.mxu0 0
      %6890 = vmatprep.subr.bf16.mxu0 0
      %6891 = vmatpush1.bf16.msra.mxu0 0
      %6892 = vmatprep.subr.bf16.mxu0 0
      %6893 = vmatpush1.bf16.msra.mxu0 0
      %6894 = vmatprep.subr.bf16.mxu0 0
      %6895 = vmatpush1.bf16.msra.mxu0 %v6878
      %6896 = vmatprep.subr.bf16.mxu0 0
      %6897 = vmatpush2.bf16.msra.mxu0 0
      %6898 = vmatprep.subr.bf16.mxu0 0
      %6899 = vmatpush2.bf16.msra.mxu0 0
      %6900 = vmatprep.subr.bf16.mxu0 0
      %6901 = vmatpush2.bf16.msra.mxu0 0
      %6902 = vmatprep.subr.bf16.mxu0 0
      %6903 = vmatpush2.bf16.msra.mxu0 0
      %6904 = vmatprep.subr.bf16.mxu0 0
      %6905 = vmatpush2.bf16.msra.mxu0 0
      %6906 = vmatprep.subr.bf16.mxu0 0
      %6907 = vmatpush2.bf16.msra.mxu0 0
      %6908 = vmatprep.subr.bf16.mxu0 0
      %6909 = vmatpush2.bf16.msra.mxu0 0
      %6910 = vmatprep.subr.bf16.mxu0 0
      %6911 = vmatpush2.bf16.msra.mxu0 0
      %6912 = vmatprep.mubr.bf16.mxu0 0
      %6913 = vmatmul.mubr.bf16.gmra.mxu0 %v6875
      %v6914 = vpop.f32.mrf.mxu0
      %v6915 = vadd.f32 0.0, %v6914
      %v6916 = vpop.f32.mrf.mxu0
      %v6917 = vpop.f32.mrf.mxu0
      %v6918 = vpop.f32.mrf.mxu0
      %6919 = vdwg.mxu0
      %6920 = vrot.lane.b32.xlu0 %v1838, 96
      %v6921 = vpop.permute.xlu0 %6920
      %v6923 = vsel %vm2694, %v6481, 0
      %v6926 = vsel %vm2890, %v6921, 0
      %6928 = vmatprep.subr.bf16.mxu0 0
      %6929 = vmatpush1.bf16.msra.mxu0 0
      %6930 = vmatprep.subr.bf16.mxu0 0
      %6931 = vmatpush1.bf16.msra.mxu0 0
      %6932 = vmatprep.subr.bf16.mxu0 0
      %6933 = vmatpush1.bf16.msra.mxu0 0
      %6934 = vmatprep.subr.bf16.mxu0 0
      %6935 = vmatpush1.bf16.msra.mxu0 0
      %6936 = vmatprep.subr.bf16.mxu0 0
      %6937 = vmatpush1.bf16.msra.mxu0 0
      %6938 = vmatprep.subr.bf16.mxu0 0
      %6939 = vmatpush1.bf16.msra.mxu0 0
      %6940 = vmatprep.subr.bf16.mxu0 0
      %6941 = vmatpush1.bf16.msra.mxu0 0
      %6942 = vmatprep.subr.bf16.mxu0 0
      %6943 = vmatpush1.bf16.msra.mxu0 %v6926
      %6944 = vmatprep.subr.bf16.mxu0 0
      %6945 = vmatpush2.bf16.msra.mxu0 0
      %6946 = vmatprep.subr.bf16.mxu0 0
      %6947 = vmatpush2.bf16.msra.mxu0 0
      %6948 = vmatprep.subr.bf16.mxu0 0
      %6949 = vmatpush2.bf16.msra.mxu0 0
      %6950 = vmatprep.subr.bf16.mxu0 0
      %6951 = vmatpush2.bf16.msra.mxu0 0
      %6952 = vmatprep.subr.bf16.mxu0 0
      %6953 = vmatpush2.bf16.msra.mxu0 0
      %6954 = vmatprep.subr.bf16.mxu0 0
      %6955 = vmatpush2.bf16.msra.mxu0 0
      %6956 = vmatprep.subr.bf16.mxu0 0
      %6957 = vmatpush2.bf16.msra.mxu0 0
      %6958 = vmatprep.subr.bf16.mxu0 0
      %6959 = vmatpush2.bf16.msra.mxu0 0
      %6960 = vmatprep.mubr.bf16.mxu0 0
      %6961 = vmatmul.mubr.bf16.gmra.mxu0 %v6923
      %v6962 = vpop.f32.mrf.mxu0
      %v6963 = vadd.f32 0.0, %v6962
      %v6964 = vpop.f32.mrf.mxu0
      %v6965 = vpop.f32.mrf.mxu0
      %v6966 = vpop.f32.mrf.mxu0
      %6967 = vdwg.mxu0
      %6968 = vrot.lane.b32.xlu0 %v1839, 96
      %v6969 = vpop.permute.xlu0 %6968
      %v6971 = vsel %vm2694, %v6482, 0
      %v6974 = vsel %vm2890, %v6969, 0
      %6976 = vmatprep.subr.bf16.mxu0 0
      %6977 = vmatpush1.bf16.msra.mxu0 0
      %6978 = vmatprep.subr.bf16.mxu0 0
      %6979 = vmatpush1.bf16.msra.mxu0 0
      %6980 = vmatprep.subr.bf16.mxu0 0
      %6981 = vmatpush1.bf16.msra.mxu0 0
      %6982 = vmatprep.subr.bf16.mxu0 0
      %6983 = vmatpush1.bf16.msra.mxu0 0
      %6984 = vmatprep.subr.bf16.mxu0 0
      %6985 = vmatpush1.bf16.msra.mxu0 0
      %6986 = vmatprep.subr.bf16.mxu0 0
      %6987 = vmatpush1.bf16.msra.mxu0 0
      %6988 = vmatprep.subr.bf16.mxu0 0
      %6989 = vmatpush1.bf16.msra.mxu0 0
      %6990 = vmatprep.subr.bf16.mxu0 0
      %6991 = vmatpush1.bf16.msra.mxu0 %v6974
      %6992 = vmatprep.subr.bf16.mxu0 0
      %6993 = vmatpush2.bf16.msra.mxu0 0
      %6994 = vmatprep.subr.bf16.mxu0 0
      %6995 = vmatpush2.bf16.msra.mxu0 0
      %6996 = vmatprep.subr.bf16.mxu0 0
      %6997 = vmatpush2.bf16.msra.mxu0 0
      %6998 = vmatprep.subr.bf16.mxu0 0
      %6999 = vmatpush2.bf16.msra.mxu0 0
      %7000 = vmatprep.subr.bf16.mxu0 0
      %7001 = vmatpush2.bf16.msra.mxu0 0
      %7002 = vmatprep.subr.bf16.mxu0 0
      %7003 = vmatpush2.bf16.msra.mxu0 0
      %7004 = vmatprep.subr.bf16.mxu0 0
      %7005 = vmatpush2.bf16.msra.mxu0 0
      %7006 = vmatprep.subr.bf16.mxu0 0
      %7007 = vmatpush2.bf16.msra.mxu0 0
      %7008 = vmatprep.mubr.bf16.mxu0 0
      %7009 = vmatmul.mubr.bf16.gmra.mxu0 %v6971
      %v7010 = vpop.f32.mrf.mxu0
      %v7011 = vadd.f32 0.0, %v7010
      %v7012 = vpop.f32.mrf.mxu0
      %v7013 = vpop.f32.mrf.mxu0
      %v7014 = vpop.f32.mrf.mxu0
      %7015 = vdwg.mxu0
      %7016 = vrot.lane.b32.xlu0 %v1840, 96
      %v7017 = vpop.permute.xlu0 %7016
      %v7019 = vsel %vm2694, %v6483, 0
      %v7022 = vsel %vm2890, %v7017, 0
      %7024 = vmatprep.subr.bf16.mxu0 0
      %7025 = vmatpush1.bf16.msra.mxu0 0
      %7026 = vmatprep.subr.bf16.mxu0 0
      %7027 = vmatpush1.bf16.msra.mxu0 0
      %7028 = vmatprep.subr.bf16.mxu0 0
      %7029 = vmatpush1.bf16.msra.mxu0 0
      %7030 = vmatprep.subr.bf16.mxu0 0
      %7031 = vmatpush1.bf16.msra.mxu0 0
      %7032 = vmatprep.subr.bf16.mxu0 0
      %7033 = vmatpush1.bf16.msra.mxu0 0
      %7034 = vmatprep.subr.bf16.mxu0 0
      %7035 = vmatpush1.bf16.msra.mxu0 0
      %7036 = vmatprep.subr.bf16.mxu0 0
      %7037 = vmatpush1.bf16.msra.mxu0 0
      %7038 = vmatprep.subr.bf16.mxu0 0
      %7039 = vmatpush1.bf16.msra.mxu0 %v7022
      %7040 = vmatprep.subr.bf16.mxu0 0
      %7041 = vmatpush2.bf16.msra.mxu0 0
      %7042 = vmatprep.subr.bf16.mxu0 0
      %7043 = vmatpush2.bf16.msra.mxu0 0
      %7044 = vmatprep.subr.bf16.mxu0 0
      %7045 = vmatpush2.bf16.msra.mxu0 0
      %7046 = vmatprep.subr.bf16.mxu0 0
      %7047 = vmatpush2.bf16.msra.mxu0 0
      %7048 = vmatprep.subr.bf16.mxu0 0
      %7049 = vmatpush2.bf16.msra.mxu0 0
      %7050 = vmatprep.subr.bf16.mxu0 0
      %7051 = vmatpush2.bf16.msra.mxu0 0
      %7052 = vmatprep.subr.bf16.mxu0 0
      %7053 = vmatpush2.bf16.msra.mxu0 0
      %7054 = vmatprep.subr.bf16.mxu0 0
      %7055 = vmatpush2.bf16.msra.mxu0 0
      %7056 = vmatprep.mubr.bf16.mxu0 0
      %7057 = vmatmul.mubr.bf16.gmra.mxu0 %v7019
      %v7058 = vpop.f32.mrf.mxu0
      %v7059 = vadd.f32 0.0, %v7058
      %v7060 = vpop.f32.mrf.mxu0
      %v7061 = vpop.f32.mrf.mxu0
      %v7062 = vpop.f32.mrf.mxu0
      %7063 = vdwg.mxu0
      %7064 = vrot.lane.b32.xlu0 %v1841, 96
      %v7065 = vpop.permute.xlu0 %7064
      %v7067 = vsel %vm2694, %v6484, 0
      %v7070 = vsel %vm2890, %v7065, 0
      %7072 = vmatprep.subr.bf16.mxu0 0
      %7073 = vmatpush1.bf16.msra.mxu0 0
      %7074 = vmatprep.subr.bf16.mxu0 0
      %7075 = vmatpush1.bf16.msra.mxu0 0
      %7076 = vmatprep.subr.bf16.mxu0 0
      %7077 = vmatpush1.bf16.msra.mxu0 0
      %7078 = vmatprep.subr.bf16.mxu0 0
      %7079 = vmatpush1.bf16.msra.mxu0 0
      %7080 = vmatprep.subr.bf16.mxu0 0
      %7081 = vmatpush1.bf16.msra.mxu0 0
      %7082 = vmatprep.subr.bf16.mxu0 0
      %7083 = vmatpush1.bf16.msra.mxu0 0
      %7084 = vmatprep.subr.bf16.mxu0 0
      %7085 = vmatpush1.bf16.msra.mxu0 0
      %7086 = vmatprep.subr.bf16.mxu0 0
      %7087 = vmatpush1.bf16.msra.mxu0 %v7070
      %7088 = vmatprep.subr.bf16.mxu0 0
      %7089 = vmatpush2.bf16.msra.mxu0 0
      %7090 = vmatprep.subr.bf16.mxu0 0
      %7091 = vmatpush2.bf16.msra.mxu0 0
      %7092 = vmatprep.subr.bf16.mxu0 0
      %7093 = vmatpush2.bf16.msra.mxu0 0
      %7094 = vmatprep.subr.bf16.mxu0 0
      %7095 = vmatpush2.bf16.msra.mxu0 0
      %7096 = vmatprep.subr.bf16.mxu0 0
      %7097 = vmatpush2.bf16.msra.mxu0 0
      %7098 = vmatprep.subr.bf16.mxu0 0
      %7099 = vmatpush2.bf16.msra.mxu0 0
      %7100 = vmatprep.subr.bf16.mxu0 0
      %7101 = vmatpush2.bf16.msra.mxu0 0
      %7102 = vmatprep.subr.bf16.mxu0 0
      %7103 = vmatpush2.bf16.msra.mxu0 0
      %7104 = vmatprep.mubr.bf16.mxu0 0
      %7105 = vmatmul.mubr.bf16.gmra.mxu0 %v7067
      %v7106 = vpop.f32.mrf.mxu0
      %v7107 = vadd.f32 0.0, %v7106
      %v7108 = vpop.f32.mrf.mxu0
      %v7109 = vpop.f32.mrf.mxu0
      %v7110 = vpop.f32.mrf.mxu0
      %7111 = vdwg.mxu0
      %7112 = vrot.lane.b32.xlu0 %v1842, 96
      %v7113 = vpop.permute.xlu0 %7112
      %v7115 = vsel %vm2694, %v6485, 0
      %v7118 = vsel %vm2890, %v7113, 0
      %7120 = vmatprep.subr.bf16.mxu0 0
      %7121 = vmatpush1.bf16.msra.mxu0 0
      %7122 = vmatprep.subr.bf16.mxu0 0
      %7123 = vmatpush1.bf16.msra.mxu0 0
      %7124 = vmatprep.subr.bf16.mxu0 0
      %7125 = vmatpush1.bf16.msra.mxu0 0
      %7126 = vmatprep.subr.bf16.mxu0 0
      %7127 = vmatpush1.bf16.msra.mxu0 0
      %7128 = vmatprep.subr.bf16.mxu0 0
      %7129 = vmatpush1.bf16.msra.mxu0 0
      %7130 = vmatprep.subr.bf16.mxu0 0
      %7131 = vmatpush1.bf16.msra.mxu0 0
      %7132 = vmatprep.subr.bf16.mxu0 0
      %7133 = vmatpush1.bf16.msra.mxu0 0
      %7134 = vmatprep.subr.bf16.mxu0 0
      %7135 = vmatpush1.bf16.msra.mxu0 %v7118
      %7136 = vmatprep.subr.bf16.mxu0 0
      %7137 = vmatpush2.bf16.msra.mxu0 0
      %7138 = vmatprep.subr.bf16.mxu0 0
      %7139 = vmatpush2.bf16.msra.mxu0 0
      %7140 = vmatprep.subr.bf16.mxu0 0
      %7141 = vmatpush2.bf16.msra.mxu0 0
      %7142 = vmatprep.subr.bf16.mxu0 0
      %7143 = vmatpush2.bf16.msra.mxu0 0
      %7144 = vmatprep.subr.bf16.mxu0 0
      %7145 = vmatpush2.bf16.msra.mxu0 0
      %7146 = vmatprep.subr.bf16.mxu0 0
      %7147 = vmatpush2.bf16.msra.mxu0 0
      %7148 = vmatprep.subr.bf16.mxu0 0
      %7149 = vmatpush2.bf16.msra.mxu0 0
      %7150 = vmatprep.subr.bf16.mxu0 0
      %7151 = vmatpush2.bf16.msra.mxu0 0
      %7152 = vmatprep.mubr.bf16.mxu0 0
      %7153 = vmatmul.mubr.bf16.gmra.mxu0 %v7115
      %v7154 = vpop.f32.mrf.mxu0
      %v7155 = vadd.f32 0.0, %v7154
      %v7156 = vpop.f32.mrf.mxu0
      %v7157 = vpop.f32.mrf.mxu0
      %v7158 = vpop.f32.mrf.mxu0
      %7159 = vdwg.mxu0
      %7160 = vrot.lane.b32.xlu0 %v1843, 96
      %v7161 = vpop.permute.xlu0 %7160
      %v7163 = vsel %vm2694, %v6486, 0
      %v7166 = vsel %vm2890, %v7161, 0
      %7168 = vmatprep.subr.bf16.mxu0 0
      %7169 = vmatpush1.bf16.msra.mxu0 0
      %7170 = vmatprep.subr.bf16.mxu0 0
      %7171 = vmatpush1.bf16.msra.mxu0 0
      %7172 = vmatprep.subr.bf16.mxu0 0
      %7173 = vmatpush1.bf16.msra.mxu0 0
      %7174 = vmatprep.subr.bf16.mxu0 0
      %7175 = vmatpush1.bf16.msra.mxu0 0
      %7176 = vmatprep.subr.bf16.mxu0 0
      %7177 = vmatpush1.bf16.msra.mxu0 0
      %7178 = vmatprep.subr.bf16.mxu0 0
      %7179 = vmatpush1.bf16.msra.mxu0 0
      %7180 = vmatprep.subr.bf16.mxu0 0
      %7181 = vmatpush1.bf16.msra.mxu0 0
      %7182 = vmatprep.subr.bf16.mxu0 0
      %7183 = vmatpush1.bf16.msra.mxu0 %v7166
      %7184 = vmatprep.subr.bf16.mxu0 0
      %7185 = vmatpush2.bf16.msra.mxu0 0
      %7186 = vmatprep.subr.bf16.mxu0 0
      %7187 = vmatpush2.bf16.msra.mxu0 0
      %7188 = vmatprep.subr.bf16.mxu0 0
      %7189 = vmatpush2.bf16.msra.mxu0 0
      %7190 = vmatprep.subr.bf16.mxu0 0
      %7191 = vmatpush2.bf16.msra.mxu0 0
      %7192 = vmatprep.subr.bf16.mxu0 0
      %7193 = vmatpush2.bf16.msra.mxu0 0
      %7194 = vmatprep.subr.bf16.mxu0 0
      %7195 = vmatpush2.bf16.msra.mxu0 0
      %7196 = vmatprep.subr.bf16.mxu0 0
      %7197 = vmatpush2.bf16.msra.mxu0 0
      %7198 = vmatprep.subr.bf16.mxu0 0
      %7199 = vmatpush2.bf16.msra.mxu0 0
      %7200 = vmatprep.mubr.bf16.mxu0 0
      %7201 = vmatmul.mubr.bf16.gmra.mxu0 %v7163
      %v7202 = vpop.f32.mrf.mxu0
      %v7203 = vadd.f32 0.0, %v7202
      %v7204 = vpop.f32.mrf.mxu0
      %v7205 = vpop.f32.mrf.mxu0
      %v7206 = vpop.f32.mrf.mxu0
      %7207 = vdwg.mxu0
      %7208 = vrot.lane.b32.xlu0 %v1844, 96
      %v7209 = vpop.permute.xlu0 %7208
      %v7211 = vsel %vm2694, %v6487, 0
      %v7214 = vsel %vm2890, %v7209, 0
      %7216 = vmatprep.subr.bf16.mxu0 0
      %7217 = vmatpush1.bf16.msra.mxu0 0
      %7218 = vmatprep.subr.bf16.mxu0 0
      %7219 = vmatpush1.bf16.msra.mxu0 0
      %7220 = vmatprep.subr.bf16.mxu0 0
      %7221 = vmatpush1.bf16.msra.mxu0 0
      %7222 = vmatprep.subr.bf16.mxu0 0
      %7223 = vmatpush1.bf16.msra.mxu0 0
      %7224 = vmatprep.subr.bf16.mxu0 0
      %7225 = vmatpush1.bf16.msra.mxu0 0
      %7226 = vmatprep.subr.bf16.mxu0 0
      %7227 = vmatpush1.bf16.msra.mxu0 0
      %7228 = vmatprep.subr.bf16.mxu0 0
      %7229 = vmatpush1.bf16.msra.mxu0 0
      %7230 = vmatprep.subr.bf16.mxu0 0
      %7231 = vmatpush1.bf16.msra.mxu0 %v7214
      %7232 = vmatprep.subr.bf16.mxu0 0
      %7233 = vmatpush2.bf16.msra.mxu0 0
      %7234 = vmatprep.subr.bf16.mxu0 0
      %7235 = vmatpush2.bf16.msra.mxu0 0
      %7236 = vmatprep.subr.bf16.mxu0 0
      %7237 = vmatpush2.bf16.msra.mxu0 0
      %7238 = vmatprep.subr.bf16.mxu0 0
      %7239 = vmatpush2.bf16.msra.mxu0 0
      %7240 = vmatprep.subr.bf16.mxu0 0
      %7241 = vmatpush2.bf16.msra.mxu0 0
      %7242 = vmatprep.subr.bf16.mxu0 0
      %7243 = vmatpush2.bf16.msra.mxu0 0
      %7244 = vmatprep.subr.bf16.mxu0 0
      %7245 = vmatpush2.bf16.msra.mxu0 0
      %7246 = vmatprep.subr.bf16.mxu0 0
      %7247 = vmatpush2.bf16.msra.mxu0 0
      %7248 = vmatprep.mubr.bf16.mxu0 0
      %7249 = vmatmul.mubr.bf16.gmra.mxu0 %v7211
      %v7250 = vpop.f32.mrf.mxu0
      %v7251 = vadd.f32 0.0, %v7250
      %v7252 = vpop.f32.mrf.mxu0
      %v7253 = vpop.f32.mrf.mxu0
      %v7254 = vpop.f32.mrf.mxu0
      %7255 = vdwg.mxu0
      %7256 = vrot.lane.b32.xlu0 %v1797, 80
      %v7257 = vpop.permute.xlu0 %7256
      %7258 = vrot.lane.b32.xlu0 %v1813, 80
      %v7259 = vpop.permute.xlu0 %7258
      %v7261 = vsel %vm1845, %v7257, 0
      %v7264 = vsel %vm1845, %v7259, 0
      %7266 = vmatprep.subr.bf16.mxu0 0
      %7267 = vmatpush1.bf16.xpose.msra.mxu0 0
      %7268 = vmatprep.subr.bf16.mxu0 0
      %7269 = vmatpush1.bf16.xpose.msra.mxu0 0
      %7270 = vmatprep.subr.bf16.mxu0 0
      %7271 = vmatpush1.bf16.xpose.msra.mxu0 0
      %7272 = vmatprep.subr.bf16.mxu0 0
      %7273 = vmatpush1.bf16.xpose.msra.mxu0 0
      %7274 = vmatprep.subr.bf16.mxu0 0
      %7275 = vmatpush1.bf16.xpose.msra.mxu0 0
      %7276 = vmatprep.subr.bf16.mxu0 0
      %7277 = vmatpush1.bf16.xpose.msra.mxu0 0
      %7278 = vmatprep.subr.bf16.mxu0 0
      %7279 = vmatpush1.bf16.xpose.msra.mxu0 0
      %7280 = vmatprep.subr.bf16.mxu0 0
      %7281 = vmatpush1.bf16.xpose.msra.mxu0 %v7264
      %7282 = vmatprep.subr.bf16.mxu0 0
      %7283 = vmatpush2.bf16.xpose.msra.mxu0 0
      %7284 = vmatprep.subr.bf16.mxu0 0
      %7285 = vmatpush2.bf16.xpose.msra.mxu0 0
      %7286 = vmatprep.subr.bf16.mxu0 0
      %7287 = vmatpush2.bf16.xpose.msra.mxu0 0
      %7288 = vmatprep.subr.bf16.mxu0 0
      %7289 = vmatpush2.bf16.xpose.msra.mxu0 0
      %7290 = vmatprep.subr.bf16.mxu0 0
      %7291 = vmatpush2.bf16.xpose.msra.mxu0 0
      %7292 = vmatprep.subr.bf16.mxu0 0
      %7293 = vmatpush2.bf16.xpose.msra.mxu0 0
      %7294 = vmatprep.subr.bf16.mxu0 0
      %7295 = vmatpush2.bf16.xpose.msra.mxu0 0
      %7296 = vmatprep.subr.bf16.mxu0 0
      %7297 = vmatpush2.bf16.xpose.msra.mxu0 0
      %7298 = vmatprep.mubr.bf16.mxu0 0
      %7299 = vmatmul.mubr.bf16.gmra.mxu0 %v7261
      %v7300 = vpop.f32.mrf.mxu0
      %v7301 = vadd.f32 0.0, %v7300
      %v7302 = vpop.f32.mrf.mxu0
      %v7303 = vpop.f32.mrf.mxu0
      %v7304 = vpop.f32.mrf.mxu0
      %7305 = vdwg.mxu0
      %7306 = vrot.lane.b32.xlu0 %v1798, 80
      %v7307 = vpop.permute.xlu0 %7306
      %7308 = vrot.lane.b32.xlu0 %v1814, 80
      %v7309 = vpop.permute.xlu0 %7308
      %v7311 = vsel %vm1845, %v7307, 0
      %v7314 = vsel %vm1845, %v7309, 0
      %7316 = vmatprep.subr.bf16.mxu0 0
      %7317 = vmatpush1.bf16.xpose.msra.mxu0 0
      %7318 = vmatprep.subr.bf16.mxu0 0
      %7319 = vmatpush1.bf16.xpose.msra.mxu0 0
      %7320 = vmatprep.subr.bf16.mxu0 0
      %7321 = vmatpush1.bf16.xpose.msra.mxu0 0
      %7322 = vmatprep.subr.bf16.mxu0 0
      %7323 = vmatpush1.bf16.xpose.msra.mxu0 0
      %7324 = vmatprep.subr.bf16.mxu0 0
      %7325 = vmatpush1.bf16.xpose.msra.mxu0 0
      %7326 = vmatprep.subr.bf16.mxu0 0
      %7327 = vmatpush1.bf16.xpose.msra.mxu0 0
      %7328 = vmatprep.subr.bf16.mxu0 0
      %7329 = vmatpush1.bf16.xpose.msra.mxu0 0
      %7330 = vmatprep.subr.bf16.mxu0 0
      %7331 = vmatpush1.bf16.xpose.msra.mxu0 %v7314
      %7332 = vmatprep.subr.bf16.mxu0 0
      %7333 = vmatpush2.bf16.xpose.msra.mxu0 0
      %7334 = vmatprep.subr.bf16.mxu0 0
      %7335 = vmatpush2.bf16.xpose.msra.mxu0 0
      %7336 = vmatprep.subr.bf16.mxu0 0
      %7337 = vmatpush2.bf16.xpose.msra.mxu0 0
      %7338 = vmatprep.subr.bf16.mxu0 0
      %7339 = vmatpush2.bf16.xpose.msra.mxu0 0
      %7340 = vmatprep.subr.bf16.mxu0 0
      %7341 = vmatpush2.bf16.xpose.msra.mxu0 0
      %7342 = vmatprep.subr.bf16.mxu0 0
      %7343 = vmatpush2.bf16.xpose.msra.mxu0 0
      %7344 = vmatprep.subr.bf16.mxu0 0
      %7345 = vmatpush2.bf16.xpose.msra.mxu0 0
      %7346 = vmatprep.subr.bf16.mxu0 0
      %7347 = vmatpush2.bf16.xpose.msra.mxu0 0
      %7348 = vmatprep.mubr.bf16.mxu0 0
      %7349 = vmatmul.mubr.bf16.gmra.mxu0 %v7311
      %v7350 = vpop.f32.mrf.mxu0
      %v7351 = vadd.f32 0.0, %v7350
      %v7352 = vpop.f32.mrf.mxu0
      %v7353 = vpop.f32.mrf.mxu0
      %v7354 = vpop.f32.mrf.mxu0
      %7355 = vdwg.mxu0
      %7356 = vrot.lane.b32.xlu0 %v1799, 80
      %v7357 = vpop.permute.xlu0 %7356
      %7358 = vrot.lane.b32.xlu0 %v1815, 80
      %v7359 = vpop.permute.xlu0 %7358
      %v7361 = vsel %vm1845, %v7357, 0
      %v7364 = vsel %vm1845, %v7359, 0
      %7366 = vmatprep.subr.bf16.mxu0 0
      %7367 = vmatpush1.bf16.xpose.msra.mxu0 0
      %7368 = vmatprep.subr.bf16.mxu0 0
      %7369 = vmatpush1.bf16.xpose.msra.mxu0 0
      %7370 = vmatprep.subr.bf16.mxu0 0
      %7371 = vmatpush1.bf16.xpose.msra.mxu0 0
      %7372 = vmatprep.subr.bf16.mxu0 0
      %7373 = vmatpush1.bf16.xpose.msra.mxu0 0
      %7374 = vmatprep.subr.bf16.mxu0 0
      %7375 = vmatpush1.bf16.xpose.msra.mxu0 0
      %7376 = vmatprep.subr.bf16.mxu0 0
      %7377 = vmatpush1.bf16.xpose.msra.mxu0 0
      %7378 = vmatprep.subr.bf16.mxu0 0
      %7379 = vmatpush1.bf16.xpose.msra.mxu0 0
      %7380 = vmatprep.subr.bf16.mxu0 0
      %7381 = vmatpush1.bf16.xpose.msra.mxu0 %v7364
      %7382 = vmatprep.subr.bf16.mxu0 0
      %7383 = vmatpush2.bf16.xpose.msra.mxu0 0
      %7384 = vmatprep.subr.bf16.mxu0 0
      %7385 = vmatpush2.bf16.xpose.msra.mxu0 0
      %7386 = vmatprep.subr.bf16.mxu0 0
      %7387 = vmatpush2.bf16.xpose.msra.mxu0 0
      %7388 = vmatprep.subr.bf16.mxu0 0
      %7389 = vmatpush2.bf16.xpose.msra.mxu0 0
      %7390 = vmatprep.subr.bf16.mxu0 0
      %7391 = vmatpush2.bf16.xpose.msra.mxu0 0
      %7392 = vmatprep.subr.bf16.mxu0 0
      %7393 = vmatpush2.bf16.xpose.msra.mxu0 0
      %7394 = vmatprep.subr.bf16.mxu0 0
      %7395 = vmatpush2.bf16.xpose.msra.mxu0 0
      %7396 = vmatprep.subr.bf16.mxu0 0
      %7397 = vmatpush2.bf16.xpose.msra.mxu0 0
      %7398 = vmatprep.mubr.bf16.mxu0 0
      %7399 = vmatmul.mubr.bf16.gmra.mxu0 %v7361
      %v7400 = vpop.f32.mrf.mxu0
      %v7401 = vadd.f32 0.0, %v7400
      %v7402 = vpop.f32.mrf.mxu0
      %v7403 = vpop.f32.mrf.mxu0
      %v7404 = vpop.f32.mrf.mxu0
      %7405 = vdwg.mxu0
      %7406 = vrot.lane.b32.xlu0 %v1800, 80
      %v7407 = vpop.permute.xlu0 %7406
      %7408 = vrot.lane.b32.xlu0 %v1816, 80
      %v7409 = vpop.permute.xlu0 %7408
      %v7411 = vsel %vm1845, %v7407, 0
      %v7414 = vsel %vm1845, %v7409, 0
      %7416 = vmatprep.subr.bf16.mxu0 0
      %7417 = vmatpush1.bf16.xpose.msra.mxu0 0
      %7418 = vmatprep.subr.bf16.mxu0 0
      %7419 = vmatpush1.bf16.xpose.msra.mxu0 0
      %7420 = vmatprep.subr.bf16.mxu0 0
      %7421 = vmatpush1.bf16.xpose.msra.mxu0 0
      %7422 = vmatprep.subr.bf16.mxu0 0
      %7423 = vmatpush1.bf16.xpose.msra.mxu0 0
      %7424 = vmatprep.subr.bf16.mxu0 0
      %7425 = vmatpush1.bf16.xpose.msra.mxu0 0
      %7426 = vmatprep.subr.bf16.mxu0 0
      %7427 = vmatpush1.bf16.xpose.msra.mxu0 0
      %7428 = vmatprep.subr.bf16.mxu0 0
      %7429 = vmatpush1.bf16.xpose.msra.mxu0 0
      %7430 = vmatprep.subr.bf16.mxu0 0
      %7431 = vmatpush1.bf16.xpose.msra.mxu0 %v7414
      %7432 = vmatprep.subr.bf16.mxu0 0
      %7433 = vmatpush2.bf16.xpose.msra.mxu0 0
      %7434 = vmatprep.subr.bf16.mxu0 0
      %7435 = vmatpush2.bf16.xpose.msra.mxu0 0
      %7436 = vmatprep.subr.bf16.mxu0 0
      %7437 = vmatpush2.bf16.xpose.msra.mxu0 0
      %7438 = vmatprep.subr.bf16.mxu0 0
      %7439 = vmatpush2.bf16.xpose.msra.mxu0 0
      %7440 = vmatprep.subr.bf16.mxu0 0
      %7441 = vmatpush2.bf16.xpose.msra.mxu0 0
      %7442 = vmatprep.subr.bf16.mxu0 0
      %7443 = vmatpush2.bf16.xpose.msra.mxu0 0
      %7444 = vmatprep.subr.bf16.mxu0 0
      %7445 = vmatpush2.bf16.xpose.msra.mxu0 0
      %7446 = vmatprep.subr.bf16.mxu0 0
      %7447 = vmatpush2.bf16.xpose.msra.mxu0 0
      %7448 = vmatprep.mubr.bf16.mxu0 0
      %7449 = vmatmul.mubr.bf16.gmra.mxu0 %v7411
      %v7450 = vpop.f32.mrf.mxu0
      %v7451 = vadd.f32 0.0, %v7450
      %v7452 = vpop.f32.mrf.mxu0
      %v7453 = vpop.f32.mrf.mxu0
      %v7454 = vpop.f32.mrf.mxu0
      %7455 = vdwg.mxu0
      %7456 = vrot.lane.b32.xlu0 %v1801, 80
      %v7457 = vpop.permute.xlu0 %7456
      %7458 = vrot.lane.b32.xlu0 %v1817, 80
      %v7459 = vpop.permute.xlu0 %7458
      %v7461 = vsel %vm1845, %v7457, 0
      %v7464 = vsel %vm1845, %v7459, 0
      %7466 = vmatprep.subr.bf16.mxu0 0
      %7467 = vmatpush1.bf16.xpose.msra.mxu0 0
      %7468 = vmatprep.subr.bf16.mxu0 0
      %7469 = vmatpush1.bf16.xpose.msra.mxu0 0
      %7470 = vmatprep.subr.bf16.mxu0 0
      %7471 = vmatpush1.bf16.xpose.msra.mxu0 0
      %7472 = vmatprep.subr.bf16.mxu0 0
      %7473 = vmatpush1.bf16.xpose.msra.mxu0 0
      %7474 = vmatprep.subr.bf16.mxu0 0
      %7475 = vmatpush1.bf16.xpose.msra.mxu0 0
      %7476 = vmatprep.subr.bf16.mxu0 0
      %7477 = vmatpush1.bf16.xpose.msra.mxu0 0
      %7478 = vmatprep.subr.bf16.mxu0 0
      %7479 = vmatpush1.bf16.xpose.msra.mxu0 0
      %7480 = vmatprep.subr.bf16.mxu0 0
      %7481 = vmatpush1.bf16.xpose.msra.mxu0 %v7464
      %7482 = vmatprep.subr.bf16.mxu0 0
      %7483 = vmatpush2.bf16.xpose.msra.mxu0 0
      %7484 = vmatprep.subr.bf16.mxu0 0
      %7485 = vmatpush2.bf16.xpose.msra.mxu0 0
      %7486 = vmatprep.subr.bf16.mxu0 0
      %7487 = vmatpush2.bf16.xpose.msra.mxu0 0
      %7488 = vmatprep.subr.bf16.mxu0 0
      %7489 = vmatpush2.bf16.xpose.msra.mxu0 0
      %7490 = vmatprep.subr.bf16.mxu0 0
      %7491 = vmatpush2.bf16.xpose.msra.mxu0 0
      %7492 = vmatprep.subr.bf16.mxu0 0
      %7493 = vmatpush2.bf16.xpose.msra.mxu0 0
      %7494 = vmatprep.subr.bf16.mxu0 0
      %7495 = vmatpush2.bf16.xpose.msra.mxu0 0
      %7496 = vmatprep.subr.bf16.mxu0 0
      %7497 = vmatpush2.bf16.xpose.msra.mxu0 0
      %7498 = vmatprep.mubr.bf16.mxu0 0
      %7499 = vmatmul.mubr.bf16.gmra.mxu0 %v7461
      %v7500 = vpop.f32.mrf.mxu0
      %v7501 = vadd.f32 0.0, %v7500
      %v7502 = vpop.f32.mrf.mxu0
      %v7503 = vpop.f32.mrf.mxu0
      %v7504 = vpop.f32.mrf.mxu0
      %7505 = vdwg.mxu0
      %7506 = vrot.lane.b32.xlu0 %v1802, 80
      %v7507 = vpop.permute.xlu0 %7506
      %7508 = vrot.lane.b32.xlu0 %v1818, 80
      %v7509 = vpop.permute.xlu0 %7508
      %v7511 = vsel %vm1845, %v7507, 0
      %v7514 = vsel %vm1845, %v7509, 0
      %7516 = vmatprep.subr.bf16.mxu0 0
      %7517 = vmatpush1.bf16.xpose.msra.mxu0 0
      %7518 = vmatprep.subr.bf16.mxu0 0
      %7519 = vmatpush1.bf16.xpose.msra.mxu0 0
      %7520 = vmatprep.subr.bf16.mxu0 0
      %7521 = vmatpush1.bf16.xpose.msra.mxu0 0
      %7522 = vmatprep.subr.bf16.mxu0 0
      %7523 = vmatpush1.bf16.xpose.msra.mxu0 0
      %7524 = vmatprep.subr.bf16.mxu0 0
      %7525 = vmatpush1.bf16.xpose.msra.mxu0 0
      %7526 = vmatprep.subr.bf16.mxu0 0
      %7527 = vmatpush1.bf16.xpose.msra.mxu0 0
      %7528 = vmatprep.subr.bf16.mxu0 0
      %7529 = vmatpush1.bf16.xpose.msra.mxu0 0
      %7530 = vmatprep.subr.bf16.mxu0 0
      %7531 = vmatpush1.bf16.xpose.msra.mxu0 %v7514
      %7532 = vmatprep.subr.bf16.mxu0 0
      %7533 = vmatpush2.bf16.xpose.msra.mxu0 0
      %7534 = vmatprep.subr.bf16.mxu0 0
      %7535 = vmatpush2.bf16.xpose.msra.mxu0 0
      %7536 = vmatprep.subr.bf16.mxu0 0
      %7537 = vmatpush2.bf16.xpose.msra.mxu0 0
      %7538 = vmatprep.subr.bf16.mxu0 0
      %7539 = vmatpush2.bf16.xpose.msra.mxu0 0
      %7540 = vmatprep.subr.bf16.mxu0 0
      %7541 = vmatpush2.bf16.xpose.msra.mxu0 0
      %7542 = vmatprep.subr.bf16.mxu0 0
      %7543 = vmatpush2.bf16.xpose.msra.mxu0 0
      %7544 = vmatprep.subr.bf16.mxu0 0
      %7545 = vmatpush2.bf16.xpose.msra.mxu0 0
      %7546 = vmatprep.subr.bf16.mxu0 0
      %7547 = vmatpush2.bf16.xpose.msra.mxu0 0
      %7548 = vmatprep.mubr.bf16.mxu0 0
      %7549 = vmatmul.mubr.bf16.gmra.mxu0 %v7511
      %v7550 = vpop.f32.mrf.mxu0
      %v7551 = vadd.f32 0.0, %v7550
      %v7552 = vpop.f32.mrf.mxu0
      %v7553 = vpop.f32.mrf.mxu0
      %v7554 = vpop.f32.mrf.mxu0
      %7555 = vdwg.mxu0
      %7556 = vrot.lane.b32.xlu0 %v1803, 80
      %v7557 = vpop.permute.xlu0 %7556
      %7558 = vrot.lane.b32.xlu0 %v1819, 80
      %v7559 = vpop.permute.xlu0 %7558
      %v7561 = vsel %vm1845, %v7557, 0
      %v7564 = vsel %vm1845, %v7559, 0
      %7566 = vmatprep.subr.bf16.mxu0 0
      %7567 = vmatpush1.bf16.xpose.msra.mxu0 0
      %7568 = vmatprep.subr.bf16.mxu0 0
      %7569 = vmatpush1.bf16.xpose.msra.mxu0 0
      %7570 = vmatprep.subr.bf16.mxu0 0
      %7571 = vmatpush1.bf16.xpose.msra.mxu0 0
      %7572 = vmatprep.subr.bf16.mxu0 0
      %7573 = vmatpush1.bf16.xpose.msra.mxu0 0
      %7574 = vmatprep.subr.bf16.mxu0 0
      %7575 = vmatpush1.bf16.xpose.msra.mxu0 0
      %7576 = vmatprep.subr.bf16.mxu0 0
      %7577 = vmatpush1.bf16.xpose.msra.mxu0 0
      %7578 = vmatprep.subr.bf16.mxu0 0
      %7579 = vmatpush1.bf16.xpose.msra.mxu0 0
      %7580 = vmatprep.subr.bf16.mxu0 0
      %7581 = vmatpush1.bf16.xpose.msra.mxu0 %v7564
      %7582 = vmatprep.subr.bf16.mxu0 0
      %7583 = vmatpush2.bf16.xpose.msra.mxu0 0
      %7584 = vmatprep.subr.bf16.mxu0 0
      %7585 = vmatpush2.bf16.xpose.msra.mxu0 0
      %7586 = vmatprep.subr.bf16.mxu0 0
      %7587 = vmatpush2.bf16.xpose.msra.mxu0 0
      %7588 = vmatprep.subr.bf16.mxu0 0
      %7589 = vmatpush2.bf16.xpose.msra.mxu0 0
      %7590 = vmatprep.subr.bf16.mxu0 0
      %7591 = vmatpush2.bf16.xpose.msra.mxu0 0
      %7592 = vmatprep.subr.bf16.mxu0 0
      %7593 = vmatpush2.bf16.xpose.msra.mxu0 0
      %7594 = vmatprep.subr.bf16.mxu0 0
      %7595 = vmatpush2.bf16.xpose.msra.mxu0 0
      %7596 = vmatprep.subr.bf16.mxu0 0
      %7597 = vmatpush2.bf16.xpose.msra.mxu0 0
      %7598 = vmatprep.mubr.bf16.mxu0 0
      %7599 = vmatmul.mubr.bf16.gmra.mxu0 %v7561
      %v7600 = vpop.f32.mrf.mxu0
      %v7601 = vadd.f32 0.0, %v7600
      %v7602 = vpop.f32.mrf.mxu0
      %v7603 = vpop.f32.mrf.mxu0
      %v7604 = vpop.f32.mrf.mxu0
      %7605 = vdwg.mxu0
      %7606 = vrot.lane.b32.xlu0 %v1804, 80
      %v7607 = vpop.permute.xlu0 %7606
      %7608 = vrot.lane.b32.xlu0 %v1820, 80
      %v7609 = vpop.permute.xlu0 %7608
      %v7611 = vsel %vm1845, %v7607, 0
      %v7614 = vsel %vm1845, %v7609, 0
      %7616 = vmatprep.subr.bf16.mxu0 0
      %7617 = vmatpush1.bf16.xpose.msra.mxu0 0
      %7618 = vmatprep.subr.bf16.mxu0 0
      %7619 = vmatpush1.bf16.xpose.msra.mxu0 0
      %7620 = vmatprep.subr.bf16.mxu0 0
      %7621 = vmatpush1.bf16.xpose.msra.mxu0 0
      %7622 = vmatprep.subr.bf16.mxu0 0
      %7623 = vmatpush1.bf16.xpose.msra.mxu0 0
      %7624 = vmatprep.subr.bf16.mxu0 0
      %7625 = vmatpush1.bf16.xpose.msra.mxu0 0
      %7626 = vmatprep.subr.bf16.mxu0 0
      %7627 = vmatpush1.bf16.xpose.msra.mxu0 0
      %7628 = vmatprep.subr.bf16.mxu0 0
      %7629 = vmatpush1.bf16.xpose.msra.mxu0 0
      %7630 = vmatprep.subr.bf16.mxu0 0
      %7631 = vmatpush1.bf16.xpose.msra.mxu0 %v7614
      %7632 = vmatprep.subr.bf16.mxu0 0
      %7633 = vmatpush2.bf16.xpose.msra.mxu0 0
      %7634 = vmatprep.subr.bf16.mxu0 0
      %7635 = vmatpush2.bf16.xpose.msra.mxu0 0
      %7636 = vmatprep.subr.bf16.mxu0 0
      %7637 = vmatpush2.bf16.xpose.msra.mxu0 0
      %7638 = vmatprep.subr.bf16.mxu0 0
      %7639 = vmatpush2.bf16.xpose.msra.mxu0 0
      %7640 = vmatprep.subr.bf16.mxu0 0
      %7641 = vmatpush2.bf16.xpose.msra.mxu0 0
      %7642 = vmatprep.subr.bf16.mxu0 0
      %7643 = vmatpush2.bf16.xpose.msra.mxu0 0
      %7644 = vmatprep.subr.bf16.mxu0 0
      %7645 = vmatpush2.bf16.xpose.msra.mxu0 0
      %7646 = vmatprep.subr.bf16.mxu0 0
      %7647 = vmatpush2.bf16.xpose.msra.mxu0 0
      %7648 = vmatprep.mubr.bf16.mxu0 0
      %7649 = vmatmul.mubr.bf16.gmra.mxu0 %v7611
      %v7650 = vpop.f32.mrf.mxu0
      %v7651 = vadd.f32 0.0, %v7650
      %v7652 = vpop.f32.mrf.mxu0
      %v7653 = vpop.f32.mrf.mxu0
      %v7654 = vpop.f32.mrf.mxu0
      %7655 = vdwg.mxu0
      %7656 = vrot.lane.b32.xlu0 %v1805, 80
      %v7657 = vpop.permute.xlu0 %7656
      %7658 = vrot.lane.b32.xlu0 %v1821, 80
      %v7659 = vpop.permute.xlu0 %7658
      %v7661 = vsel %vm1845, %v7657, 0
      %v7664 = vsel %vm1845, %v7659, 0
      %7666 = vmatprep.subr.bf16.mxu0 0
      %7667 = vmatpush1.bf16.xpose.msra.mxu0 0
      %7668 = vmatprep.subr.bf16.mxu0 0
      %7669 = vmatpush1.bf16.xpose.msra.mxu0 0
      %7670 = vmatprep.subr.bf16.mxu0 0
      %7671 = vmatpush1.bf16.xpose.msra.mxu0 0
      %7672 = vmatprep.subr.bf16.mxu0 0
      %7673 = vmatpush1.bf16.xpose.msra.mxu0 0
      %7674 = vmatprep.subr.bf16.mxu0 0
      %7675 = vmatpush1.bf16.xpose.msra.mxu0 0
      %7676 = vmatprep.subr.bf16.mxu0 0
      %7677 = vmatpush1.bf16.xpose.msra.mxu0 0
      %7678 = vmatprep.subr.bf16.mxu0 0
      %7679 = vmatpush1.bf16.xpose.msra.mxu0 0
      %7680 = vmatprep.subr.bf16.mxu0 0
      %7681 = vmatpush1.bf16.xpose.msra.mxu0 %v7664
      %7682 = vmatprep.subr.bf16.mxu0 0
      %7683 = vmatpush2.bf16.xpose.msra.mxu0 0
      %7684 = vmatprep.subr.bf16.mxu0 0
      %7685 = vmatpush2.bf16.xpose.msra.mxu0 0
      %7686 = vmatprep.subr.bf16.mxu0 0
      %7687 = vmatpush2.bf16.xpose.msra.mxu0 0
      %7688 = vmatprep.subr.bf16.mxu0 0
      %7689 = vmatpush2.bf16.xpose.msra.mxu0 0
      %7690 = vmatprep.subr.bf16.mxu0 0
      %7691 = vmatpush2.bf16.xpose.msra.mxu0 0
      %7692 = vmatprep.subr.bf16.mxu0 0
      %7693 = vmatpush2.bf16.xpose.msra.mxu0 0
      %7694 = vmatprep.subr.bf16.mxu0 0
      %7695 = vmatpush2.bf16.xpose.msra.mxu0 0
      %7696 = vmatprep.subr.bf16.mxu0 0
      %7697 = vmatpush2.bf16.xpose.msra.mxu0 0
      %7698 = vmatprep.mubr.bf16.mxu0 0
      %7699 = vmatmul.mubr.bf16.gmra.mxu0 %v7661
      %v7700 = vpop.f32.mrf.mxu0
      %v7701 = vadd.f32 0.0, %v7700
      %v7702 = vpop.f32.mrf.mxu0
      %v7703 = vpop.f32.mrf.mxu0
      %v7704 = vpop.f32.mrf.mxu0
      %7705 = vdwg.mxu0
      %7706 = vrot.lane.b32.xlu0 %v1806, 80
      %v7707 = vpop.permute.xlu0 %7706
      %7708 = vrot.lane.b32.xlu0 %v1822, 80
      %v7709 = vpop.permute.xlu0 %7708
      %v7711 = vsel %vm1845, %v7707, 0
      %v7714 = vsel %vm1845, %v7709, 0
      %7716 = vmatprep.subr.bf16.mxu0 0
      %7717 = vmatpush1.bf16.xpose.msra.mxu0 0
      %7718 = vmatprep.subr.bf16.mxu0 0
      %7719 = vmatpush1.bf16.xpose.msra.mxu0 0
      %7720 = vmatprep.subr.bf16.mxu0 0
      %7721 = vmatpush1.bf16.xpose.msra.mxu0 0
      %7722 = vmatprep.subr.bf16.mxu0 0
      %7723 = vmatpush1.bf16.xpose.msra.mxu0 0
      %7724 = vmatprep.subr.bf16.mxu0 0
      %7725 = vmatpush1.bf16.xpose.msra.mxu0 0
      %7726 = vmatprep.subr.bf16.mxu0 0
      %7727 = vmatpush1.bf16.xpose.msra.mxu0 0
      %7728 = vmatprep.subr.bf16.mxu0 0
      %7729 = vmatpush1.bf16.xpose.msra.mxu0 0
      %7730 = vmatprep.subr.bf16.mxu0 0
      %7731 = vmatpush1.bf16.xpose.msra.mxu0 %v7714
      %7732 = vmatprep.subr.bf16.mxu0 0
      %7733 = vmatpush2.bf16.xpose.msra.mxu0 0
      %7734 = vmatprep.subr.bf16.mxu0 0
      %7735 = vmatpush2.bf16.xpose.msra.mxu0 0
      %7736 = vmatprep.subr.bf16.mxu0 0
      %7737 = vmatpush2.bf16.xpose.msra.mxu0 0
      %7738 = vmatprep.subr.bf16.mxu0 0
      %7739 = vmatpush2.bf16.xpose.msra.mxu0 0
      %7740 = vmatprep.subr.bf16.mxu0 0
      %7741 = vmatpush2.bf16.xpose.msra.mxu0 0
      %7742 = vmatprep.subr.bf16.mxu0 0
      %7743 = vmatpush2.bf16.xpose.msra.mxu0 0
      %7744 = vmatprep.subr.bf16.mxu0 0
      %7745 = vmatpush2.bf16.xpose.msra.mxu0 0
      %7746 = vmatprep.subr.bf16.mxu0 0
      %7747 = vmatpush2.bf16.xpose.msra.mxu0 0
      %7748 = vmatprep.mubr.bf16.mxu0 0
      %7749 = vmatmul.mubr.bf16.gmra.mxu0 %v7711
      %v7750 = vpop.f32.mrf.mxu0
      %v7751 = vadd.f32 0.0, %v7750
      %v7752 = vpop.f32.mrf.mxu0
      %v7753 = vpop.f32.mrf.mxu0
      %v7754 = vpop.f32.mrf.mxu0
      %7755 = vdwg.mxu0
      %7756 = vrot.lane.b32.xlu0 %v1807, 80
      %v7757 = vpop.permute.xlu0 %7756
      %7758 = vrot.lane.b32.xlu0 %v1823, 80
      %v7759 = vpop.permute.xlu0 %7758
      %v7761 = vsel %vm1845, %v7757, 0
      %v7764 = vsel %vm1845, %v7759, 0
      %7766 = vmatprep.subr.bf16.mxu0 0
      %7767 = vmatpush1.bf16.xpose.msra.mxu0 0
      %7768 = vmatprep.subr.bf16.mxu0 0
      %7769 = vmatpush1.bf16.xpose.msra.mxu0 0
      %7770 = vmatprep.subr.bf16.mxu0 0
      %7771 = vmatpush1.bf16.xpose.msra.mxu0 0
      %7772 = vmatprep.subr.bf16.mxu0 0
      %7773 = vmatpush1.bf16.xpose.msra.mxu0 0
      %7774 = vmatprep.subr.bf16.mxu0 0
      %7775 = vmatpush1.bf16.xpose.msra.mxu0 0
      %7776 = vmatprep.subr.bf16.mxu0 0
      %7777 = vmatpush1.bf16.xpose.msra.mxu0 0
      %7778 = vmatprep.subr.bf16.mxu0 0
      %7779 = vmatpush1.bf16.xpose.msra.mxu0 0
      %7780 = vmatprep.subr.bf16.mxu0 0
      %7781 = vmatpush1.bf16.xpose.msra.mxu0 %v7764
      %7782 = vmatprep.subr.bf16.mxu0 0
      %7783 = vmatpush2.bf16.xpose.msra.mxu0 0
      %7784 = vmatprep.subr.bf16.mxu0 0
      %7785 = vmatpush2.bf16.xpose.msra.mxu0 0
      %7786 = vmatprep.subr.bf16.mxu0 0
      %7787 = vmatpush2.bf16.xpose.msra.mxu0 0
      %7788 = vmatprep.subr.bf16.mxu0 0
      %7789 = vmatpush2.bf16.xpose.msra.mxu0 0
      %7790 = vmatprep.subr.bf16.mxu0 0
      %7791 = vmatpush2.bf16.xpose.msra.mxu0 0
      %7792 = vmatprep.subr.bf16.mxu0 0
      %7793 = vmatpush2.bf16.xpose.msra.mxu0 0
      %7794 = vmatprep.subr.bf16.mxu0 0
      %7795 = vmatpush2.bf16.xpose.msra.mxu0 0
      %7796 = vmatprep.subr.bf16.mxu0 0
      %7797 = vmatpush2.bf16.xpose.msra.mxu0 0
      %7798 = vmatprep.mubr.bf16.mxu0 0
      %7799 = vmatmul.mubr.bf16.gmra.mxu0 %v7761
      %v7800 = vpop.f32.mrf.mxu0
      %v7801 = vadd.f32 0.0, %v7800
      %v7802 = vpop.f32.mrf.mxu0
      %v7803 = vpop.f32.mrf.mxu0
      %v7804 = vpop.f32.mrf.mxu0
      %7805 = vdwg.mxu0
      %7806 = vrot.lane.b32.xlu0 %v1808, 80
      %v7807 = vpop.permute.xlu0 %7806
      %7808 = vrot.lane.b32.xlu0 %v1824, 80
      %v7809 = vpop.permute.xlu0 %7808
      %v7811 = vsel %vm1845, %v7807, 0
      %v7814 = vsel %vm1845, %v7809, 0
      %7816 = vmatprep.subr.bf16.mxu0 0
      %7817 = vmatpush1.bf16.xpose.msra.mxu0 0
      %7818 = vmatprep.subr.bf16.mxu0 0
      %7819 = vmatpush1.bf16.xpose.msra.mxu0 0
      %7820 = vmatprep.subr.bf16.mxu0 0
      %7821 = vmatpush1.bf16.xpose.msra.mxu0 0
      %7822 = vmatprep.subr.bf16.mxu0 0
      %7823 = vmatpush1.bf16.xpose.msra.mxu0 0
      %7824 = vmatprep.subr.bf16.mxu0 0
      %7825 = vmatpush1.bf16.xpose.msra.mxu0 0
      %7826 = vmatprep.subr.bf16.mxu0 0
      %7827 = vmatpush1.bf16.xpose.msra.mxu0 0
      %7828 = vmatprep.subr.bf16.mxu0 0
      %7829 = vmatpush1.bf16.xpose.msra.mxu0 0
      %7830 = vmatprep.subr.bf16.mxu0 0
      %7831 = vmatpush1.bf16.xpose.msra.mxu0 %v7814
      %7832 = vmatprep.subr.bf16.mxu0 0
      %7833 = vmatpush2.bf16.xpose.msra.mxu0 0
      %7834 = vmatprep.subr.bf16.mxu0 0
      %7835 = vmatpush2.bf16.xpose.msra.mxu0 0
      %7836 = vmatprep.subr.bf16.mxu0 0
      %7837 = vmatpush2.bf16.xpose.msra.mxu0 0
      %7838 = vmatprep.subr.bf16.mxu0 0
      %7839 = vmatpush2.bf16.xpose.msra.mxu0 0
      %7840 = vmatprep.subr.bf16.mxu0 0
      %7841 = vmatpush2.bf16.xpose.msra.mxu0 0
      %7842 = vmatprep.subr.bf16.mxu0 0
      %7843 = vmatpush2.bf16.xpose.msra.mxu0 0
      %7844 = vmatprep.subr.bf16.mxu0 0
      %7845 = vmatpush2.bf16.xpose.msra.mxu0 0
      %7846 = vmatprep.subr.bf16.mxu0 0
      %7847 = vmatpush2.bf16.xpose.msra.mxu0 0
      %7848 = vmatprep.mubr.bf16.mxu0 0
      %7849 = vmatmul.mubr.bf16.gmra.mxu0 %v7811
      %v7850 = vpop.f32.mrf.mxu0
      %v7851 = vadd.f32 0.0, %v7850
      %v7852 = vpop.f32.mrf.mxu0
      %v7853 = vpop.f32.mrf.mxu0
      %v7854 = vpop.f32.mrf.mxu0
      %7855 = vdwg.mxu0
      %7856 = vrot.lane.b32.xlu0 %v1809, 80
      %v7857 = vpop.permute.xlu0 %7856
      %7858 = vrot.lane.b32.xlu0 %v1825, 80
      %v7859 = vpop.permute.xlu0 %7858
      %v7861 = vsel %vm1845, %v7857, 0
      %v7864 = vsel %vm1845, %v7859, 0
      %7866 = vmatprep.subr.bf16.mxu0 0
      %7867 = vmatpush1.bf16.xpose.msra.mxu0 0
      %7868 = vmatprep.subr.bf16.mxu0 0
      %7869 = vmatpush1.bf16.xpose.msra.mxu0 0
      %7870 = vmatprep.subr.bf16.mxu0 0
      %7871 = vmatpush1.bf16.xpose.msra.mxu0 0
      %7872 = vmatprep.subr.bf16.mxu0 0
      %7873 = vmatpush1.bf16.xpose.msra.mxu0 0
      %7874 = vmatprep.subr.bf16.mxu0 0
      %7875 = vmatpush1.bf16.xpose.msra.mxu0 0
      %7876 = vmatprep.subr.bf16.mxu0 0
      %7877 = vmatpush1.bf16.xpose.msra.mxu0 0
      %7878 = vmatprep.subr.bf16.mxu0 0
      %7879 = vmatpush1.bf16.xpose.msra.mxu0 0
      %7880 = vmatprep.subr.bf16.mxu0 0
      %7881 = vmatpush1.bf16.xpose.msra.mxu0 %v7864
      %7882 = vmatprep.subr.bf16.mxu0 0
      %7883 = vmatpush2.bf16.xpose.msra.mxu0 0
      %7884 = vmatprep.subr.bf16.mxu0 0
      %7885 = vmatpush2.bf16.xpose.msra.mxu0 0
      %7886 = vmatprep.subr.bf16.mxu0 0
      %7887 = vmatpush2.bf16.xpose.msra.mxu0 0
      %7888 = vmatprep.subr.bf16.mxu0 0
      %7889 = vmatpush2.bf16.xpose.msra.mxu0 0
      %7890 = vmatprep.subr.bf16.mxu0 0
      %7891 = vmatpush2.bf16.xpose.msra.mxu0 0
      %7892 = vmatprep.subr.bf16.mxu0 0
      %7893 = vmatpush2.bf16.xpose.msra.mxu0 0
      %7894 = vmatprep.subr.bf16.mxu0 0
      %7895 = vmatpush2.bf16.xpose.msra.mxu0 0
      %7896 = vmatprep.subr.bf16.mxu0 0
      %7897 = vmatpush2.bf16.xpose.msra.mxu0 0
      %7898 = vmatprep.mubr.bf16.mxu0 0
      %7899 = vmatmul.mubr.bf16.gmra.mxu0 %v7861
      %v7900 = vpop.f32.mrf.mxu0
      %v7901 = vadd.f32 0.0, %v7900
      %v7902 = vpop.f32.mrf.mxu0
      %v7903 = vpop.f32.mrf.mxu0
      %v7904 = vpop.f32.mrf.mxu0
      %7905 = vdwg.mxu0
      %7906 = vrot.lane.b32.xlu0 %v1810, 80
      %v7907 = vpop.permute.xlu0 %7906
      %7908 = vrot.lane.b32.xlu0 %v1826, 80
      %v7909 = vpop.permute.xlu0 %7908
      %v7911 = vsel %vm1845, %v7907, 0
      %v7914 = vsel %vm1845, %v7909, 0
      %7916 = vmatprep.subr.bf16.mxu0 0
      %7917 = vmatpush1.bf16.xpose.msra.mxu0 0
      %7918 = vmatprep.subr.bf16.mxu0 0
      %7919 = vmatpush1.bf16.xpose.msra.mxu0 0
      %7920 = vmatprep.subr.bf16.mxu0 0
      %7921 = vmatpush1.bf16.xpose.msra.mxu0 0
      %7922 = vmatprep.subr.bf16.mxu0 0
      %7923 = vmatpush1.bf16.xpose.msra.mxu0 0
      %7924 = vmatprep.subr.bf16.mxu0 0
      %7925 = vmatpush1.bf16.xpose.msra.mxu0 0
      %7926 = vmatprep.subr.bf16.mxu0 0
      %7927 = vmatpush1.bf16.xpose.msra.mxu0 0
      %7928 = vmatprep.subr.bf16.mxu0 0
      %7929 = vmatpush1.bf16.xpose.msra.mxu0 0
      %7930 = vmatprep.subr.bf16.mxu0 0
      %7931 = vmatpush1.bf16.xpose.msra.mxu0 %v7914
      %7932 = vmatprep.subr.bf16.mxu0 0
      %7933 = vmatpush2.bf16.xpose.msra.mxu0 0
      %7934 = vmatprep.subr.bf16.mxu0 0
      %7935 = vmatpush2.bf16.xpose.msra.mxu0 0
      %7936 = vmatprep.subr.bf16.mxu0 0
      %7937 = vmatpush2.bf16.xpose.msra.mxu0 0
      %7938 = vmatprep.subr.bf16.mxu0 0
      %7939 = vmatpush2.bf16.xpose.msra.mxu0 0
      %7940 = vmatprep.subr.bf16.mxu0 0
      %7941 = vmatpush2.bf16.xpose.msra.mxu0 0
      %7942 = vmatprep.subr.bf16.mxu0 0
      %7943 = vmatpush2.bf16.xpose.msra.mxu0 0
      %7944 = vmatprep.subr.bf16.mxu0 0
      %7945 = vmatpush2.bf16.xpose.msra.mxu0 0
      %7946 = vmatprep.subr.bf16.mxu0 0
      %7947 = vmatpush2.bf16.xpose.msra.mxu0 0
      %7948 = vmatprep.mubr.bf16.mxu0 0
      %7949 = vmatmul.mubr.bf16.gmra.mxu0 %v7911
      %v7950 = vpop.f32.mrf.mxu0
      %v7951 = vadd.f32 0.0, %v7950
      %v7952 = vpop.f32.mrf.mxu0
      %v7953 = vpop.f32.mrf.mxu0
      %v7954 = vpop.f32.mrf.mxu0
      %7955 = vdwg.mxu0
      %7956 = vrot.lane.b32.xlu0 %v1811, 80
      %v7957 = vpop.permute.xlu0 %7956
      %7958 = vrot.lane.b32.xlu0 %v1827, 80
      %v7959 = vpop.permute.xlu0 %7958
      %v7961 = vsel %vm1845, %v7957, 0
      %v7964 = vsel %vm1845, %v7959, 0
      %7966 = vmatprep.subr.bf16.mxu0 0
      %7967 = vmatpush1.bf16.xpose.msra.mxu0 0
      %7968 = vmatprep.subr.bf16.mxu0 0
      %7969 = vmatpush1.bf16.xpose.msra.mxu0 0
      %7970 = vmatprep.subr.bf16.mxu0 0
      %7971 = vmatpush1.bf16.xpose.msra.mxu0 0
      %7972 = vmatprep.subr.bf16.mxu0 0
      %7973 = vmatpush1.bf16.xpose.msra.mxu0 0
      %7974 = vmatprep.subr.bf16.mxu0 0
      %7975 = vmatpush1.bf16.xpose.msra.mxu0 0
      %7976 = vmatprep.subr.bf16.mxu0 0
      %7977 = vmatpush1.bf16.xpose.msra.mxu0 0
      %7978 = vmatprep.subr.bf16.mxu0 0
      %7979 = vmatpush1.bf16.xpose.msra.mxu0 0
      %7980 = vmatprep.subr.bf16.mxu0 0
      %7981 = vmatpush1.bf16.xpose.msra.mxu0 %v7964
      %7982 = vmatprep.subr.bf16.mxu0 0
      %7983 = vmatpush2.bf16.xpose.msra.mxu0 0
      %7984 = vmatprep.subr.bf16.mxu0 0
      %7985 = vmatpush2.bf16.xpose.msra.mxu0 0
      %7986 = vmatprep.subr.bf16.mxu0 0
      %7987 = vmatpush2.bf16.xpose.msra.mxu0 0
      %7988 = vmatprep.subr.bf16.mxu0 0
      %7989 = vmatpush2.bf16.xpose.msra.mxu0 0
      %7990 = vmatprep.subr.bf16.mxu0 0
      %7991 = vmatpush2.bf16.xpose.msra.mxu0 0
      %7992 = vmatprep.subr.bf16.mxu0 0
      %7993 = vmatpush2.bf16.xpose.msra.mxu0 0
      %7994 = vmatprep.subr.bf16.mxu0 0
      %7995 = vmatpush2.bf16.xpose.msra.mxu0 0
      %7996 = vmatprep.subr.bf16.mxu0 0
      %7997 = vmatpush2.bf16.xpose.msra.mxu0 0
      %7998 = vmatprep.mubr.bf16.mxu0 0
      %7999 = vmatmul.mubr.bf16.gmra.mxu0 %v7961
      %v8000 = vpop.f32.mrf.mxu0
      %v8001 = vadd.f32 0.0, %v8000
      %v8002 = vpop.f32.mrf.mxu0
      %v8003 = vpop.f32.mrf.mxu0
      %v8004 = vpop.f32.mrf.mxu0
      %8005 = vdwg.mxu0
      %8006 = vrot.lane.b32.xlu0 %v1812, 80
      %v8007 = vpop.permute.xlu0 %8006
      %8008 = vrot.lane.b32.xlu0 %v1828, 80
      %v8009 = vpop.permute.xlu0 %8008
      %v8011 = vsel %vm1845, %v8007, 0
      %v8014 = vsel %vm1845, %v8009, 0
      %8016 = vmatprep.subr.bf16.mxu0 0
      %8017 = vmatpush1.bf16.xpose.msra.mxu0 0
      %8018 = vmatprep.subr.bf16.mxu0 0
      %8019 = vmatpush1.bf16.xpose.msra.mxu0 0
      %8020 = vmatprep.subr.bf16.mxu0 0
      %8021 = vmatpush1.bf16.xpose.msra.mxu0 0
      %8022 = vmatprep.subr.bf16.mxu0 0
      %8023 = vmatpush1.bf16.xpose.msra.mxu0 0
      %8024 = vmatprep.subr.bf16.mxu0 0
      %8025 = vmatpush1.bf16.xpose.msra.mxu0 0
      %8026 = vmatprep.subr.bf16.mxu0 0
      %8027 = vmatpush1.bf16.xpose.msra.mxu0 0
      %8028 = vmatprep.subr.bf16.mxu0 0
      %8029 = vmatpush1.bf16.xpose.msra.mxu0 0
      %8030 = vmatprep.subr.bf16.mxu0 0
      %8031 = vmatpush1.bf16.xpose.msra.mxu0 %v8014
      %8032 = vmatprep.subr.bf16.mxu0 0
      %8033 = vmatpush2.bf16.xpose.msra.mxu0 0
      %8034 = vmatprep.subr.bf16.mxu0 0
      %8035 = vmatpush2.bf16.xpose.msra.mxu0 0
      %8036 = vmatprep.subr.bf16.mxu0 0
      %8037 = vmatpush2.bf16.xpose.msra.mxu0 0
      %8038 = vmatprep.subr.bf16.mxu0 0
      %8039 = vmatpush2.bf16.xpose.msra.mxu0 0
      %8040 = vmatprep.subr.bf16.mxu0 0
      %8041 = vmatpush2.bf16.xpose.msra.mxu0 0
      %8042 = vmatprep.subr.bf16.mxu0 0
      %8043 = vmatpush2.bf16.xpose.msra.mxu0 0
      %8044 = vmatprep.subr.bf16.mxu0 0
      %8045 = vmatpush2.bf16.xpose.msra.mxu0 0
      %8046 = vmatprep.subr.bf16.mxu0 0
      %8047 = vmatpush2.bf16.xpose.msra.mxu0 0
      %8048 = vmatprep.mubr.bf16.mxu0 0
      %8049 = vmatmul.mubr.bf16.gmra.mxu0 %v8011
      %v8050 = vpop.f32.mrf.mxu0
      %v8051 = vadd.f32 0.0, %v8050
      %v8052 = vpop.f32.mrf.mxu0
      %v8053 = vpop.f32.mrf.mxu0
      %v8054 = vpop.f32.mrf.mxu0
      %8055 = vdwg.mxu0
      %v8056 = vmul.f32 %v7301, 0.25
      %v8057 = vmul.f32 %v7351, 0.25
      %v8058 = vmul.f32 %v7401, 0.25
      %v8059 = vmul.f32 %v7451, 0.25
      %v8060 = vmul.f32 %v7501, 0.25
      %v8061 = vmul.f32 %v7551, 0.25
      %v8062 = vmul.f32 %v7601, 0.25
      %v8063 = vmul.f32 %v7651, 0.25
      %v8064 = vmul.f32 %v7701, 0.25
      %v8065 = vmul.f32 %v7751, 0.25
      %v8066 = vmul.f32 %v7801, 0.25
      %v8067 = vmul.f32 %v7851, 0.25
      %v8068 = vmul.f32 %v7901, 0.25
      %v8069 = vmul.f32 %v7951, 0.25
      %v8070 = vmul.f32 %v8001, 0.25
      %v8071 = vmul.f32 %v8051, 0.25
      %v8072 = vadd.f32 %v8056, %v2601
      %v8073 = vadd.f32 %v8057, %v2605
      %v8074 = vadd.f32 %v8058, %v2609
      %v8075 = vadd.f32 %v8059, %v2613
      %v8076 = vadd.f32 %v8060, %v2617
      %v8077 = vadd.f32 %v8061, %v2621
      %v8078 = vadd.f32 %v8062, %v2625
      %v8079 = vadd.f32 %v8063, %v2629
      %v8080 = vadd.f32 %v8064, %v2633
      %v8081 = vadd.f32 %v8065, %v2637
      %v8082 = vadd.f32 %v8066, %v2641
      %v8083 = vadd.f32 %v8067, %v2645
      %v8084 = vadd.f32 %v8068, %v2649
      %v8085 = vadd.f32 %v8069, %v2653
      %v8086 = vadd.f32 %v8070, %v2657
      %v8087 = vadd.f32 %v8071, %v2661
      %v8088 = vsel %vm2694, %v8072, -inf
      %8089 = vmax.xlane.f32.xlu0 %v8088
      %v8090 = vpop.xlane.xlu0 %8089
      %v8091 = vsel %vm2694, %v8073, -inf
      %8092 = vmax.xlane.f32.xlu0 %v8091
      %v8093 = vpop.xlane.xlu0 %8092
      %v8094 = vsel %vm2694, %v8074, -inf
      %8095 = vmax.xlane.f32.xlu0 %v8094
      %v8096 = vpop.xlane.xlu0 %8095
      %v8097 = vsel %vm2694, %v8075, -inf
      %8098 = vmax.xlane.f32.xlu0 %v8097
      %v8099 = vpop.xlane.xlu0 %8098
      %v8100 = vsel %vm2694, %v8076, -inf
      %8101 = vmax.xlane.f32.xlu0 %v8100
      %v8102 = vpop.xlane.xlu0 %8101
      %v8103 = vsel %vm2694, %v8077, -inf
      %8104 = vmax.xlane.f32.xlu0 %v8103
      %v8105 = vpop.xlane.xlu0 %8104
      %v8106 = vsel %vm2694, %v8078, -inf
      %8107 = vmax.xlane.f32.xlu0 %v8106
      %v8108 = vpop.xlane.xlu0 %8107
      %v8109 = vsel %vm2694, %v8079, -inf
      %8110 = vmax.xlane.f32.xlu0 %v8109
      %v8111 = vpop.xlane.xlu0 %8110
      %v8112 = vsel %vm2694, %v8080, -inf
      %8113 = vmax.xlane.f32.xlu0 %v8112
      %v8114 = vpop.xlane.xlu0 %8113
      %v8115 = vsel %vm2694, %v8081, -inf
      %8116 = vmax.xlane.f32.xlu0 %v8115
      %v8117 = vpop.xlane.xlu0 %8116
      %v8118 = vsel %vm2694, %v8082, -inf
      %8119 = vmax.xlane.f32.xlu0 %v8118
      %v8120 = vpop.xlane.xlu0 %8119
      %v8121 = vsel %vm2694, %v8083, -inf
      %8122 = vmax.xlane.f32.xlu0 %v8121
      %v8123 = vpop.xlane.xlu0 %8122
      %v8124 = vsel %vm2694, %v8084, -inf
      %8125 = vmax.xlane.f32.xlu0 %v8124
      %v8126 = vpop.xlane.xlu0 %8125
      %v8127 = vsel %vm2694, %v8085, -inf
      %8128 = vmax.xlane.f32.xlu0 %v8127
      %v8129 = vpop.xlane.xlu0 %8128
      %v8130 = vsel %vm2694, %v8086, -inf
      %8131 = vmax.xlane.f32.xlu0 %v8130
      %v8132 = vpop.xlane.xlu0 %8131
      %v8133 = vsel %vm2694, %v8087, -inf
      %8134 = vmax.xlane.f32.xlu0 %v8133
      %v8135 = vpop.xlane.xlu0 %8134
      %v8136 = vsub.f32 %v8072, %v8090
      %v8137 = vsub.f32 %v8073, %v8093
      %v8138 = vsub.f32 %v8074, %v8096
      %v8139 = vsub.f32 %v8075, %v8099
      %v8140 = vsub.f32 %v8076, %v8102
      %v8141 = vsub.f32 %v8077, %v8105
      %v8142 = vsub.f32 %v8078, %v8108
      %v8143 = vsub.f32 %v8079, %v8111
      %v8144 = vsub.f32 %v8080, %v8114
      %v8145 = vsub.f32 %v8081, %v8117
      %v8146 = vsub.f32 %v8082, %v8120
      %v8147 = vsub.f32 %v8083, %v8123
      %v8148 = vsub.f32 %v8084, %v8126
      %v8149 = vsub.f32 %v8085, %v8129
      %v8150 = vsub.f32 %v8086, %v8132
      %v8151 = vsub.f32 %v8087, %v8135
      %v8152 = vmul.f32 %v8136, 1.442695
      %v8153 = vpow.pop %v8152
      %v8154 = vmul.f32 %v8137, 1.442695
      %v8155 = vpow.pop %v8154
      %v8156 = vmul.f32 %v8138, 1.442695
      %v8157 = vpow.pop %v8156
      %v8158 = vmul.f32 %v8139, 1.442695
      %v8159 = vpow.pop %v8158
      %v8160 = vmul.f32 %v8140, 1.442695
      %v8161 = vpow.pop %v8160
      %v8162 = vmul.f32 %v8141, 1.442695
      %v8163 = vpow.pop %v8162
      %v8164 = vmul.f32 %v8142, 1.442695
      %v8165 = vpow.pop %v8164
      %v8166 = vmul.f32 %v8143, 1.442695
      %v8167 = vpow.pop %v8166
      %v8168 = vmul.f32 %v8144, 1.442695
      %v8169 = vpow.pop %v8168
      %v8170 = vmul.f32 %v8145, 1.442695
      %v8171 = vpow.pop %v8170
      %v8172 = vmul.f32 %v8146, 1.442695
      %v8173 = vpow.pop %v8172
      %v8174 = vmul.f32 %v8147, 1.442695
      %v8175 = vpow.pop %v8174
      %v8176 = vmul.f32 %v8148, 1.442695
      %v8177 = vpow.pop %v8176
      %v8178 = vmul.f32 %v8149, 1.442695
      %v8179 = vpow.pop %v8178
      %v8180 = vmul.f32 %v8150, 1.442695
      %v8181 = vpow.pop %v8180
      %v8182 = vmul.f32 %v8151, 1.442695
      %v8183 = vpow.pop %v8182
      %v8184 = vsel %vm2694, %v8153, 0.0
      %8185 = vadd.xlane.f32.xlu0 %v8184
      %v8186 = vpop.xlane.xlu0 %8185
      %v8187 = vsel %vm2694, %v8155, 0.0
      %8188 = vadd.xlane.f32.xlu0 %v8187
      %v8189 = vpop.xlane.xlu0 %8188
      %v8190 = vsel %vm2694, %v8157, 0.0
      %8191 = vadd.xlane.f32.xlu0 %v8190
      %v8192 = vpop.xlane.xlu0 %8191
      %v8193 = vsel %vm2694, %v8159, 0.0
      %8194 = vadd.xlane.f32.xlu0 %v8193
      %v8195 = vpop.xlane.xlu0 %8194
      %v8196 = vsel %vm2694, %v8161, 0.0
      %8197 = vadd.xlane.f32.xlu0 %v8196
      %v8198 = vpop.xlane.xlu0 %8197
      %v8199 = vsel %vm2694, %v8163, 0.0
      %8200 = vadd.xlane.f32.xlu0 %v8199
      %v8201 = vpop.xlane.xlu0 %8200
      %v8202 = vsel %vm2694, %v8165, 0.0
      %8203 = vadd.xlane.f32.xlu0 %v8202
      %v8204 = vpop.xlane.xlu0 %8203
      %v8205 = vsel %vm2694, %v8167, 0.0
      %8206 = vadd.xlane.f32.xlu0 %v8205
      %v8207 = vpop.xlane.xlu0 %8206
      %v8208 = vsel %vm2694, %v8169, 0.0
      %8209 = vadd.xlane.f32.xlu0 %v8208
      %v8210 = vpop.xlane.xlu0 %8209
      %v8211 = vsel %vm2694, %v8171, 0.0
      %8212 = vadd.xlane.f32.xlu0 %v8211
      %v8213 = vpop.xlane.xlu0 %8212
      %v8214 = vsel %vm2694, %v8173, 0.0
      %8215 = vadd.xlane.f32.xlu0 %v8214
      %v8216 = vpop.xlane.xlu0 %8215
      %v8217 = vsel %vm2694, %v8175, 0.0
      %8218 = vadd.xlane.f32.xlu0 %v8217
      %v8219 = vpop.xlane.xlu0 %8218
      %v8220 = vsel %vm2694, %v8177, 0.0
      %8221 = vadd.xlane.f32.xlu0 %v8220
      %v8222 = vpop.xlane.xlu0 %8221
      %v8223 = vsel %vm2694, %v8179, 0.0
      %8224 = vadd.xlane.f32.xlu0 %v8223
      %v8225 = vpop.xlane.xlu0 %8224
      %v8226 = vsel %vm2694, %v8181, 0.0
      %8227 = vadd.xlane.f32.xlu0 %v8226
      %v8228 = vpop.xlane.xlu0 %8227
      %v8229 = vsel %vm2694, %v8183, 0.0
      %8230 = vadd.xlane.f32.xlu0 %v8229
      %v8231 = vpop.xlane.xlu0 %8230
      %v8232 = vrcp.pop %v8186
      %v8233 = vrcp.pop %v8189
      %v8234 = vrcp.pop %v8192
      %v8235 = vrcp.pop %v8195
      %v8236 = vrcp.pop %v8198
      %v8237 = vrcp.pop %v8201
      %v8238 = vrcp.pop %v8204
      %v8239 = vrcp.pop %v8207
      %v8240 = vrcp.pop %v8210
      %v8241 = vrcp.pop %v8213
      %v8242 = vrcp.pop %v8216
      %v8243 = vrcp.pop %v8219
      %v8244 = vrcp.pop %v8222
      %v8245 = vrcp.pop %v8225
      %v8246 = vrcp.pop %v8228
      %v8247 = vrcp.pop %v8231
      %v8248 = vmul.f32 %v8153, %v8232
      %v8249 = vmul.f32 %v8155, %v8233
      %v8250 = vmul.f32 %v8157, %v8234
      %v8251 = vmul.f32 %v8159, %v8235
      %v8252 = vmul.f32 %v8161, %v8236
      %v8253 = vmul.f32 %v8163, %v8237
      %v8254 = vmul.f32 %v8165, %v8238
      %v8255 = vmul.f32 %v8167, %v8239
      %v8256 = vmul.f32 %v8169, %v8240
      %v8257 = vmul.f32 %v8171, %v8241
      %v8258 = vmul.f32 %v8173, %v8242
      %v8259 = vmul.f32 %v8175, %v8243
      %v8260 = vmul.f32 %v8177, %v8244
      %v8261 = vmul.f32 %v8179, %v8245
      %v8262 = vmul.f32 %v8181, %v8246
      %v8263 = vmul.f32 %v8183, %v8247
      %v8264 = vpack.c.bf16 %v8248, %v8248
      %v8265 = vpack.c.bf16 %v8249, %v8249
      %v8266 = vpack.c.bf16 %v8250, %v8250
      %v8267 = vpack.c.bf16 %v8251, %v8251
      %v8268 = vpack.c.bf16 %v8252, %v8252
      %v8269 = vpack.c.bf16 %v8253, %v8253
      %v8270 = vpack.c.bf16 %v8254, %v8254
      %v8271 = vpack.c.bf16 %v8255, %v8255
      %v8272 = vpack.c.bf16 %v8256, %v8256
      %v8273 = vpack.c.bf16 %v8257, %v8257
      %v8274 = vpack.c.bf16 %v8258, %v8258
      %v8275 = vpack.c.bf16 %v8259, %v8259
      %v8276 = vpack.c.bf16 %v8260, %v8260
      %v8277 = vpack.c.bf16 %v8261, %v8261
      %v8278 = vpack.c.bf16 %v8262, %v8262
      %v8279 = vpack.c.bf16 %v8263, %v8263
      %8280 = vrot.lane.b32.xlu0 %v1829, 80
      %v8281 = vpop.permute.xlu0 %8280
      %v8283 = vsel %vm2694, %v8264, 0
      %v8286 = vsel %vm2890, %v8281, 0
      %8288 = vmatprep.subr.bf16.mxu0 0
      %8289 = vmatpush1.bf16.msra.mxu0 0
      %8290 = vmatprep.subr.bf16.mxu0 0
      %8291 = vmatpush1.bf16.msra.mxu0 0
      %8292 = vmatprep.subr.bf16.mxu0 0
      %8293 = vmatpush1.bf16.msra.mxu0 0
      %8294 = vmatprep.subr.bf16.mxu0 0
      %8295 = vmatpush1.bf16.msra.mxu0 0
      %8296 = vmatprep.subr.bf16.mxu0 0
      %8297 = vmatpush1.bf16.msra.mxu0 0
      %8298 = vmatprep.subr.bf16.mxu0 0
      %8299 = vmatpush1.bf16.msra.mxu0 0
      %8300 = vmatprep.subr.bf16.mxu0 0
      %8301 = vmatpush1.bf16.msra.mxu0 0
      %8302 = vmatprep.subr.bf16.mxu0 0
      %8303 = vmatpush1.bf16.msra.mxu0 %v8286
      %8304 = vmatprep.subr.bf16.mxu0 0
      %8305 = vmatpush2.bf16.msra.mxu0 0
      %8306 = vmatprep.subr.bf16.mxu0 0
      %8307 = vmatpush2.bf16.msra.mxu0 0
      %8308 = vmatprep.subr.bf16.mxu0 0
      %8309 = vmatpush2.bf16.msra.mxu0 0
      %8310 = vmatprep.subr.bf16.mxu0 0
      %8311 = vmatpush2.bf16.msra.mxu0 0
      %8312 = vmatprep.subr.bf16.mxu0 0
      %8313 = vmatpush2.bf16.msra.mxu0 0
      %8314 = vmatprep.subr.bf16.mxu0 0
      %8315 = vmatpush2.bf16.msra.mxu0 0
      %8316 = vmatprep.subr.bf16.mxu0 0
      %8317 = vmatpush2.bf16.msra.mxu0 0
      %8318 = vmatprep.subr.bf16.mxu0 0
      %8319 = vmatpush2.bf16.msra.mxu0 0
      %8320 = vmatprep.mubr.bf16.mxu0 0
      %8321 = vmatmul.mubr.bf16.gmra.mxu0 %v8283
      %v8322 = vpop.f32.mrf.mxu0
      %v8323 = vadd.f32 0.0, %v8322
      %v8324 = vpop.f32.mrf.mxu0
      %v8325 = vpop.f32.mrf.mxu0
      %v8326 = vpop.f32.mrf.mxu0
      %8327 = vdwg.mxu0
      %8328 = vrot.lane.b32.xlu0 %v1830, 80
      %v8329 = vpop.permute.xlu0 %8328
      %v8331 = vsel %vm2694, %v8265, 0
      %v8334 = vsel %vm2890, %v8329, 0
      %8336 = vmatprep.subr.bf16.mxu0 0
      %8337 = vmatpush1.bf16.msra.mxu0 0
      %8338 = vmatprep.subr.bf16.mxu0 0
      %8339 = vmatpush1.bf16.msra.mxu0 0
      %8340 = vmatprep.subr.bf16.mxu0 0
      %8341 = vmatpush1.bf16.msra.mxu0 0
      %8342 = vmatprep.subr.bf16.mxu0 0
      %8343 = vmatpush1.bf16.msra.mxu0 0
      %8344 = vmatprep.subr.bf16.mxu0 0
      %8345 = vmatpush1.bf16.msra.mxu0 0
      %8346 = vmatprep.subr.bf16.mxu0 0
      %8347 = vmatpush1.bf16.msra.mxu0 0
      %8348 = vmatprep.subr.bf16.mxu0 0
      %8349 = vmatpush1.bf16.msra.mxu0 0
      %8350 = vmatprep.subr.bf16.mxu0 0
      %8351 = vmatpush1.bf16.msra.mxu0 %v8334
      %8352 = vmatprep.subr.bf16.mxu0 0
      %8353 = vmatpush2.bf16.msra.mxu0 0
      %8354 = vmatprep.subr.bf16.mxu0 0
      %8355 = vmatpush2.bf16.msra.mxu0 0
      %8356 = vmatprep.subr.bf16.mxu0 0
      %8357 = vmatpush2.bf16.msra.mxu0 0
      %8358 = vmatprep.subr.bf16.mxu0 0
      %8359 = vmatpush2.bf16.msra.mxu0 0
      %8360 = vmatprep.subr.bf16.mxu0 0
      %8361 = vmatpush2.bf16.msra.mxu0 0
      %8362 = vmatprep.subr.bf16.mxu0 0
      %8363 = vmatpush2.bf16.msra.mxu0 0
      %8364 = vmatprep.subr.bf16.mxu0 0
      %8365 = vmatpush2.bf16.msra.mxu0 0
      %8366 = vmatprep.subr.bf16.mxu0 0
      %8367 = vmatpush2.bf16.msra.mxu0 0
      %8368 = vmatprep.mubr.bf16.mxu0 0
      %8369 = vmatmul.mubr.bf16.gmra.mxu0 %v8331
      %v8370 = vpop.f32.mrf.mxu0
      %v8371 = vadd.f32 0.0, %v8370
      %v8372 = vpop.f32.mrf.mxu0
      %v8373 = vpop.f32.mrf.mxu0
      %v8374 = vpop.f32.mrf.mxu0
      %8375 = vdwg.mxu0
      %8376 = vrot.lane.b32.xlu0 %v1831, 80
      %v8377 = vpop.permute.xlu0 %8376
      %v8379 = vsel %vm2694, %v8266, 0
      %v8382 = vsel %vm2890, %v8377, 0
      %8384 = vmatprep.subr.bf16.mxu0 0
      %8385 = vmatpush1.bf16.msra.mxu0 0
      %8386 = vmatprep.subr.bf16.mxu0 0
      %8387 = vmatpush1.bf16.msra.mxu0 0
      %8388 = vmatprep.subr.bf16.mxu0 0
      %8389 = vmatpush1.bf16.msra.mxu0 0
      %8390 = vmatprep.subr.bf16.mxu0 0
      %8391 = vmatpush1.bf16.msra.mxu0 0
      %8392 = vmatprep.subr.bf16.mxu0 0
      %8393 = vmatpush1.bf16.msra.mxu0 0
      %8394 = vmatprep.subr.bf16.mxu0 0
      %8395 = vmatpush1.bf16.msra.mxu0 0
      %8396 = vmatprep.subr.bf16.mxu0 0
      %8397 = vmatpush1.bf16.msra.mxu0 0
      %8398 = vmatprep.subr.bf16.mxu0 0
      %8399 = vmatpush1.bf16.msra.mxu0 %v8382
      %8400 = vmatprep.subr.bf16.mxu0 0
      %8401 = vmatpush2.bf16.msra.mxu0 0
      %8402 = vmatprep.subr.bf16.mxu0 0
      %8403 = vmatpush2.bf16.msra.mxu0 0
      %8404 = vmatprep.subr.bf16.mxu0 0
      %8405 = vmatpush2.bf16.msra.mxu0 0
      %8406 = vmatprep.subr.bf16.mxu0 0
      %8407 = vmatpush2.bf16.msra.mxu0 0
      %8408 = vmatprep.subr.bf16.mxu0 0
      %8409 = vmatpush2.bf16.msra.mxu0 0
      %8410 = vmatprep.subr.bf16.mxu0 0
      %8411 = vmatpush2.bf16.msra.mxu0 0
      %8412 = vmatprep.subr.bf16.mxu0 0
      %8413 = vmatpush2.bf16.msra.mxu0 0
      %8414 = vmatprep.subr.bf16.mxu0 0
      %8415 = vmatpush2.bf16.msra.mxu0 0
      %8416 = vmatprep.mubr.bf16.mxu0 0
      %8417 = vmatmul.mubr.bf16.gmra.mxu0 %v8379
      %v8418 = vpop.f32.mrf.mxu0
      %v8419 = vadd.f32 0.0, %v8418
      %v8420 = vpop.f32.mrf.mxu0
      %v8421 = vpop.f32.mrf.mxu0
      %v8422 = vpop.f32.mrf.mxu0
      %8423 = vdwg.mxu0
      %8424 = vrot.lane.b32.xlu0 %v1832, 80
      %v8425 = vpop.permute.xlu0 %8424
      %v8427 = vsel %vm2694, %v8267, 0
      %v8430 = vsel %vm2890, %v8425, 0
      %8432 = vmatprep.subr.bf16.mxu0 0
      %8433 = vmatpush1.bf16.msra.mxu0 0
      %8434 = vmatprep.subr.bf16.mxu0 0
      %8435 = vmatpush1.bf16.msra.mxu0 0
      %8436 = vmatprep.subr.bf16.mxu0 0
      %8437 = vmatpush1.bf16.msra.mxu0 0
      %8438 = vmatprep.subr.bf16.mxu0 0
      %8439 = vmatpush1.bf16.msra.mxu0 0
      %8440 = vmatprep.subr.bf16.mxu0 0
      %8441 = vmatpush1.bf16.msra.mxu0 0
      %8442 = vmatprep.subr.bf16.mxu0 0
      %8443 = vmatpush1.bf16.msra.mxu0 0
      %8444 = vmatprep.subr.bf16.mxu0 0
      %8445 = vmatpush1.bf16.msra.mxu0 0
      %8446 = vmatprep.subr.bf16.mxu0 0
      %8447 = vmatpush1.bf16.msra.mxu0 %v8430
      %8448 = vmatprep.subr.bf16.mxu0 0
      %8449 = vmatpush2.bf16.msra.mxu0 0
      %8450 = vmatprep.subr.bf16.mxu0 0
      %8451 = vmatpush2.bf16.msra.mxu0 0
      %8452 = vmatprep.subr.bf16.mxu0 0
      %8453 = vmatpush2.bf16.msra.mxu0 0
      %8454 = vmatprep.subr.bf16.mxu0 0
      %8455 = vmatpush2.bf16.msra.mxu0 0
      %8456 = vmatprep.subr.bf16.mxu0 0
      %8457 = vmatpush2.bf16.msra.mxu0 0
      %8458 = vmatprep.subr.bf16.mxu0 0
      %8459 = vmatpush2.bf16.msra.mxu0 0
      %8460 = vmatprep.subr.bf16.mxu0 0
      %8461 = vmatpush2.bf16.msra.mxu0 0
      %8462 = vmatprep.subr.bf16.mxu0 0
      %8463 = vmatpush2.bf16.msra.mxu0 0
      %8464 = vmatprep.mubr.bf16.mxu0 0
      %8465 = vmatmul.mubr.bf16.gmra.mxu0 %v8427
      %v8466 = vpop.f32.mrf.mxu0
      %v8467 = vadd.f32 0.0, %v8466
      %v8468 = vpop.f32.mrf.mxu0
      %v8469 = vpop.f32.mrf.mxu0
      %v8470 = vpop.f32.mrf.mxu0
      %8471 = vdwg.mxu0
      %8472 = vrot.lane.b32.xlu0 %v1833, 80
      %v8473 = vpop.permute.xlu0 %8472
      %v8475 = vsel %vm2694, %v8268, 0
      %v8478 = vsel %vm2890, %v8473, 0
      %8480 = vmatprep.subr.bf16.mxu0 0
      %8481 = vmatpush1.bf16.msra.mxu0 0
      %8482 = vmatprep.subr.bf16.mxu0 0
      %8483 = vmatpush1.bf16.msra.mxu0 0
      %8484 = vmatprep.subr.bf16.mxu0 0
      %8485 = vmatpush1.bf16.msra.mxu0 0
      %8486 = vmatprep.subr.bf16.mxu0 0
      %8487 = vmatpush1.bf16.msra.mxu0 0
      %8488 = vmatprep.subr.bf16.mxu0 0
      %8489 = vmatpush1.bf16.msra.mxu0 0
      %8490 = vmatprep.subr.bf16.mxu0 0
      %8491 = vmatpush1.bf16.msra.mxu0 0
      %8492 = vmatprep.subr.bf16.mxu0 0
      %8493 = vmatpush1.bf16.msra.mxu0 0
      %8494 = vmatprep.subr.bf16.mxu0 0
      %8495 = vmatpush1.bf16.msra.mxu0 %v8478
      %8496 = vmatprep.subr.bf16.mxu0 0
      %8497 = vmatpush2.bf16.msra.mxu0 0
      %8498 = vmatprep.subr.bf16.mxu0 0
      %8499 = vmatpush2.bf16.msra.mxu0 0
      %8500 = vmatprep.subr.bf16.mxu0 0
      %8501 = vmatpush2.bf16.msra.mxu0 0
      %8502 = vmatprep.subr.bf16.mxu0 0
      %8503 = vmatpush2.bf16.msra.mxu0 0
      %8504 = vmatprep.subr.bf16.mxu0 0
      %8505 = vmatpush2.bf16.msra.mxu0 0
      %8506 = vmatprep.subr.bf16.mxu0 0
      %8507 = vmatpush2.bf16.msra.mxu0 0
      %8508 = vmatprep.subr.bf16.mxu0 0
      %8509 = vmatpush2.bf16.msra.mxu0 0
      %8510 = vmatprep.subr.bf16.mxu0 0
      %8511 = vmatpush2.bf16.msra.mxu0 0
      %8512 = vmatprep.mubr.bf16.mxu0 0
      %8513 = vmatmul.mubr.bf16.gmra.mxu0 %v8475
      %v8514 = vpop.f32.mrf.mxu0
      %v8515 = vadd.f32 0.0, %v8514
      %v8516 = vpop.f32.mrf.mxu0
      %v8517 = vpop.f32.mrf.mxu0
      %v8518 = vpop.f32.mrf.mxu0
      %8519 = vdwg.mxu0
      %8520 = vrot.lane.b32.xlu0 %v1834, 80
      %v8521 = vpop.permute.xlu0 %8520
      %v8523 = vsel %vm2694, %v8269, 0
      %v8526 = vsel %vm2890, %v8521, 0
      %8528 = vmatprep.subr.bf16.mxu0 0
      %8529 = vmatpush1.bf16.msra.mxu0 0
      %8530 = vmatprep.subr.bf16.mxu0 0
      %8531 = vmatpush1.bf16.msra.mxu0 0
      %8532 = vmatprep.subr.bf16.mxu0 0
      %8533 = vmatpush1.bf16.msra.mxu0 0
      %8534 = vmatprep.subr.bf16.mxu0 0
      %8535 = vmatpush1.bf16.msra.mxu0 0
      %8536 = vmatprep.subr.bf16.mxu0 0
      %8537 = vmatpush1.bf16.msra.mxu0 0
      %8538 = vmatprep.subr.bf16.mxu0 0
      %8539 = vmatpush1.bf16.msra.mxu0 0
      %8540 = vmatprep.subr.bf16.mxu0 0
      %8541 = vmatpush1.bf16.msra.mxu0 0
      %8542 = vmatprep.subr.bf16.mxu0 0
      %8543 = vmatpush1.bf16.msra.mxu0 %v8526
      %8544 = vmatprep.subr.bf16.mxu0 0
      %8545 = vmatpush2.bf16.msra.mxu0 0
      %8546 = vmatprep.subr.bf16.mxu0 0
      %8547 = vmatpush2.bf16.msra.mxu0 0
      %8548 = vmatprep.subr.bf16.mxu0 0
      %8549 = vmatpush2.bf16.msra.mxu0 0
      %8550 = vmatprep.subr.bf16.mxu0 0
      %8551 = vmatpush2.bf16.msra.mxu0 0
      %8552 = vmatprep.subr.bf16.mxu0 0
      %8553 = vmatpush2.bf16.msra.mxu0 0
      %8554 = vmatprep.subr.bf16.mxu0 0
      %8555 = vmatpush2.bf16.msra.mxu0 0
      %8556 = vmatprep.subr.bf16.mxu0 0
      %8557 = vmatpush2.bf16.msra.mxu0 0
      %8558 = vmatprep.subr.bf16.mxu0 0
      %8559 = vmatpush2.bf16.msra.mxu0 0
      %8560 = vmatprep.mubr.bf16.mxu0 0
      %8561 = vmatmul.mubr.bf16.gmra.mxu0 %v8523
      %v8562 = vpop.f32.mrf.mxu0
      %v8563 = vadd.f32 0.0, %v8562
      %v8564 = vpop.f32.mrf.mxu0
      %v8565 = vpop.f32.mrf.mxu0
      %v8566 = vpop.f32.mrf.mxu0
      %8567 = vdwg.mxu0
      %8568 = vrot.lane.b32.xlu0 %v1835, 80
      %v8569 = vpop.permute.xlu0 %8568
      %v8571 = vsel %vm2694, %v8270, 0
      %v8574 = vsel %vm2890, %v8569, 0
      %8576 = vmatprep.subr.bf16.mxu0 0
      %8577 = vmatpush1.bf16.msra.mxu0 0
      %8578 = vmatprep.subr.bf16.mxu0 0
      %8579 = vmatpush1.bf16.msra.mxu0 0
      %8580 = vmatprep.subr.bf16.mxu0 0
      %8581 = vmatpush1.bf16.msra.mxu0 0
      %8582 = vmatprep.subr.bf16.mxu0 0
      %8583 = vmatpush1.bf16.msra.mxu0 0
      %8584 = vmatprep.subr.bf16.mxu0 0
      %8585 = vmatpush1.bf16.msra.mxu0 0
      %8586 = vmatprep.subr.bf16.mxu0 0
      %8587 = vmatpush1.bf16.msra.mxu0 0
      %8588 = vmatprep.subr.bf16.mxu0 0
      %8589 = vmatpush1.bf16.msra.mxu0 0
      %8590 = vmatprep.subr.bf16.mxu0 0
      %8591 = vmatpush1.bf16.msra.mxu0 %v8574
      %8592 = vmatprep.subr.bf16.mxu0 0
      %8593 = vmatpush2.bf16.msra.mxu0 0
      %8594 = vmatprep.subr.bf16.mxu0 0
      %8595 = vmatpush2.bf16.msra.mxu0 0
      %8596 = vmatprep.subr.bf16.mxu0 0
      %8597 = vmatpush2.bf16.msra.mxu0 0
      %8598 = vmatprep.subr.bf16.mxu0 0
      %8599 = vmatpush2.bf16.msra.mxu0 0
      %8600 = vmatprep.subr.bf16.mxu0 0
      %8601 = vmatpush2.bf16.msra.mxu0 0
      %8602 = vmatprep.subr.bf16.mxu0 0
      %8603 = vmatpush2.bf16.msra.mxu0 0
      %8604 = vmatprep.subr.bf16.mxu0 0
      %8605 = vmatpush2.bf16.msra.mxu0 0
      %8606 = vmatprep.subr.bf16.mxu0 0
      %8607 = vmatpush2.bf16.msra.mxu0 0
      %8608 = vmatprep.mubr.bf16.mxu0 0
      %8609 = vmatmul.mubr.bf16.gmra.mxu0 %v8571
      %v8610 = vpop.f32.mrf.mxu0
      %v8611 = vadd.f32 0.0, %v8610
      %v8612 = vpop.f32.mrf.mxu0
      %v8613 = vpop.f32.mrf.mxu0
      %v8614 = vpop.f32.mrf.mxu0
      %8615 = vdwg.mxu0
      %8616 = vrot.lane.b32.xlu0 %v1836, 80
      %v8617 = vpop.permute.xlu0 %8616
      %v8619 = vsel %vm2694, %v8271, 0
      %v8622 = vsel %vm2890, %v8617, 0
      %8624 = vmatprep.subr.bf16.mxu0 0
      %8625 = vmatpush1.bf16.msra.mxu0 0
      %8626 = vmatprep.subr.bf16.mxu0 0
      %8627 = vmatpush1.bf16.msra.mxu0 0
      %8628 = vmatprep.subr.bf16.mxu0 0
      %8629 = vmatpush1.bf16.msra.mxu0 0
      %8630 = vmatprep.subr.bf16.mxu0 0
      %8631 = vmatpush1.bf16.msra.mxu0 0
      %8632 = vmatprep.subr.bf16.mxu0 0
      %8633 = vmatpush1.bf16.msra.mxu0 0
      %8634 = vmatprep.subr.bf16.mxu0 0
      %8635 = vmatpush1.bf16.msra.mxu0 0
      %8636 = vmatprep.subr.bf16.mxu0 0
      %8637 = vmatpush1.bf16.msra.mxu0 0
      %8638 = vmatprep.subr.bf16.mxu0 0
      %8639 = vmatpush1.bf16.msra.mxu0 %v8622
      %8640 = vmatprep.subr.bf16.mxu0 0
      %8641 = vmatpush2.bf16.msra.mxu0 0
      %8642 = vmatprep.subr.bf16.mxu0 0
      %8643 = vmatpush2.bf16.msra.mxu0 0
      %8644 = vmatprep.subr.bf16.mxu0 0
      %8645 = vmatpush2.bf16.msra.mxu0 0
      %8646 = vmatprep.subr.bf16.mxu0 0
      %8647 = vmatpush2.bf16.msra.mxu0 0
      %8648 = vmatprep.subr.bf16.mxu0 0
      %8649 = vmatpush2.bf16.msra.mxu0 0
      %8650 = vmatprep.subr.bf16.mxu0 0
      %8651 = vmatpush2.bf16.msra.mxu0 0
      %8652 = vmatprep.subr.bf16.mxu0 0
      %8653 = vmatpush2.bf16.msra.mxu0 0
      %8654 = vmatprep.subr.bf16.mxu0 0
      %8655 = vmatpush2.bf16.msra.mxu0 0
      %8656 = vmatprep.mubr.bf16.mxu0 0
      %8657 = vmatmul.mubr.bf16.gmra.mxu0 %v8619
      %v8658 = vpop.f32.mrf.mxu0
      %v8659 = vadd.f32 0.0, %v8658
      %v8660 = vpop.f32.mrf.mxu0
      %v8661 = vpop.f32.mrf.mxu0
      %v8662 = vpop.f32.mrf.mxu0
      %8663 = vdwg.mxu0
      %8664 = vrot.lane.b32.xlu0 %v1837, 80
      %v8665 = vpop.permute.xlu0 %8664
      %v8667 = vsel %vm2694, %v8272, 0
      %v8670 = vsel %vm2890, %v8665, 0
      %8672 = vmatprep.subr.bf16.mxu0 0
      %8673 = vmatpush1.bf16.msra.mxu0 0
      %8674 = vmatprep.subr.bf16.mxu0 0
      %8675 = vmatpush1.bf16.msra.mxu0 0
      %8676 = vmatprep.subr.bf16.mxu0 0
      %8677 = vmatpush1.bf16.msra.mxu0 0
      %8678 = vmatprep.subr.bf16.mxu0 0
      %8679 = vmatpush1.bf16.msra.mxu0 0
      %8680 = vmatprep.subr.bf16.mxu0 0
      %8681 = vmatpush1.bf16.msra.mxu0 0
      %8682 = vmatprep.subr.bf16.mxu0 0
      %8683 = vmatpush1.bf16.msra.mxu0 0
      %8684 = vmatprep.subr.bf16.mxu0 0
      %8685 = vmatpush1.bf16.msra.mxu0 0
      %8686 = vmatprep.subr.bf16.mxu0 0
      %8687 = vmatpush1.bf16.msra.mxu0 %v8670
      %8688 = vmatprep.subr.bf16.mxu0 0
      %8689 = vmatpush2.bf16.msra.mxu0 0
      %8690 = vmatprep.subr.bf16.mxu0 0
      %8691 = vmatpush2.bf16.msra.mxu0 0
      %8692 = vmatprep.subr.bf16.mxu0 0
      %8693 = vmatpush2.bf16.msra.mxu0 0
      %8694 = vmatprep.subr.bf16.mxu0 0
      %8695 = vmatpush2.bf16.msra.mxu0 0
      %8696 = vmatprep.subr.bf16.mxu0 0
      %8697 = vmatpush2.bf16.msra.mxu0 0
      %8698 = vmatprep.subr.bf16.mxu0 0
      %8699 = vmatpush2.bf16.msra.mxu0 0
      %8700 = vmatprep.subr.bf16.mxu0 0
      %8701 = vmatpush2.bf16.msra.mxu0 0
      %8702 = vmatprep.subr.bf16.mxu0 0
      %8703 = vmatpush2.bf16.msra.mxu0 0
      %8704 = vmatprep.mubr.bf16.mxu0 0
      %8705 = vmatmul.mubr.bf16.gmra.mxu0 %v8667
      %v8706 = vpop.f32.mrf.mxu0
      %v8707 = vadd.f32 0.0, %v8706
      %v8708 = vpop.f32.mrf.mxu0
      %v8709 = vpop.f32.mrf.mxu0
      %v8710 = vpop.f32.mrf.mxu0
      %8711 = vdwg.mxu0
      %8712 = vrot.lane.b32.xlu0 %v1838, 80
      %v8713 = vpop.permute.xlu0 %8712
      %v8715 = vsel %vm2694, %v8273, 0
      %v8718 = vsel %vm2890, %v8713, 0
      %8720 = vmatprep.subr.bf16.mxu0 0
      %8721 = vmatpush1.bf16.msra.mxu0 0
      %8722 = vmatprep.subr.bf16.mxu0 0
      %8723 = vmatpush1.bf16.msra.mxu0 0
      %8724 = vmatprep.subr.bf16.mxu0 0
      %8725 = vmatpush1.bf16.msra.mxu0 0
      %8726 = vmatprep.subr.bf16.mxu0 0
      %8727 = vmatpush1.bf16.msra.mxu0 0
      %8728 = vmatprep.subr.bf16.mxu0 0
      %8729 = vmatpush1.bf16.msra.mxu0 0
      %8730 = vmatprep.subr.bf16.mxu0 0
      %8731 = vmatpush1.bf16.msra.mxu0 0
      %8732 = vmatprep.subr.bf16.mxu0 0
      %8733 = vmatpush1.bf16.msra.mxu0 0
      %8734 = vmatprep.subr.bf16.mxu0 0
      %8735 = vmatpush1.bf16.msra.mxu0 %v8718
      %8736 = vmatprep.subr.bf16.mxu0 0
      %8737 = vmatpush2.bf16.msra.mxu0 0
      %8738 = vmatprep.subr.bf16.mxu0 0
      %8739 = vmatpush2.bf16.msra.mxu0 0
      %8740 = vmatprep.subr.bf16.mxu0 0
      %8741 = vmatpush2.bf16.msra.mxu0 0
      %8742 = vmatprep.subr.bf16.mxu0 0
      %8743 = vmatpush2.bf16.msra.mxu0 0
      %8744 = vmatprep.subr.bf16.mxu0 0
      %8745 = vmatpush2.bf16.msra.mxu0 0
      %8746 = vmatprep.subr.bf16.mxu0 0
      %8747 = vmatpush2.bf16.msra.mxu0 0
      %8748 = vmatprep.subr.bf16.mxu0 0
      %8749 = vmatpush2.bf16.msra.mxu0 0
      %8750 = vmatprep.subr.bf16.mxu0 0
      %8751 = vmatpush2.bf16.msra.mxu0 0
      %8752 = vmatprep.mubr.bf16.mxu0 0
      %8753 = vmatmul.mubr.bf16.gmra.mxu0 %v8715
      %v8754 = vpop.f32.mrf.mxu0
      %v8755 = vadd.f32 0.0, %v8754
      %v8756 = vpop.f32.mrf.mxu0
      %v8757 = vpop.f32.mrf.mxu0
      %v8758 = vpop.f32.mrf.mxu0
      %8759 = vdwg.mxu0
      %8760 = vrot.lane.b32.xlu0 %v1839, 80
      %v8761 = vpop.permute.xlu0 %8760
      %v8763 = vsel %vm2694, %v8274, 0
      %v8766 = vsel %vm2890, %v8761, 0
      %8768 = vmatprep.subr.bf16.mxu0 0
      %8769 = vmatpush1.bf16.msra.mxu0 0
      %8770 = vmatprep.subr.bf16.mxu0 0
      %8771 = vmatpush1.bf16.msra.mxu0 0
      %8772 = vmatprep.subr.bf16.mxu0 0
      %8773 = vmatpush1.bf16.msra.mxu0 0
      %8774 = vmatprep.subr.bf16.mxu0 0
      %8775 = vmatpush1.bf16.msra.mxu0 0
      %8776 = vmatprep.subr.bf16.mxu0 0
      %8777 = vmatpush1.bf16.msra.mxu0 0
      %8778 = vmatprep.subr.bf16.mxu0 0
      %8779 = vmatpush1.bf16.msra.mxu0 0
      %8780 = vmatprep.subr.bf16.mxu0 0
      %8781 = vmatpush1.bf16.msra.mxu0 0
      %8782 = vmatprep.subr.bf16.mxu0 0
      %8783 = vmatpush1.bf16.msra.mxu0 %v8766
      %8784 = vmatprep.subr.bf16.mxu0 0
      %8785 = vmatpush2.bf16.msra.mxu0 0
      %8786 = vmatprep.subr.bf16.mxu0 0
      %8787 = vmatpush2.bf16.msra.mxu0 0
      %8788 = vmatprep.subr.bf16.mxu0 0
      %8789 = vmatpush2.bf16.msra.mxu0 0
      %8790 = vmatprep.subr.bf16.mxu0 0
      %8791 = vmatpush2.bf16.msra.mxu0 0
      %8792 = vmatprep.subr.bf16.mxu0 0
      %8793 = vmatpush2.bf16.msra.mxu0 0
      %8794 = vmatprep.subr.bf16.mxu0 0
      %8795 = vmatpush2.bf16.msra.mxu0 0
      %8796 = vmatprep.subr.bf16.mxu0 0
      %8797 = vmatpush2.bf16.msra.mxu0 0
      %8798 = vmatprep.subr.bf16.mxu0 0
      %8799 = vmatpush2.bf16.msra.mxu0 0
      %8800 = vmatprep.mubr.bf16.mxu0 0
      %8801 = vmatmul.mubr.bf16.gmra.mxu0 %v8763
      %v8802 = vpop.f32.mrf.mxu0
      %v8803 = vadd.f32 0.0, %v8802
      %v8804 = vpop.f32.mrf.mxu0
      %v8805 = vpop.f32.mrf.mxu0
      %v8806 = vpop.f32.mrf.mxu0
      %8807 = vdwg.mxu0
      %8808 = vrot.lane.b32.xlu0 %v1840, 80
      %v8809 = vpop.permute.xlu0 %8808
      %v8811 = vsel %vm2694, %v8275, 0
      %v8814 = vsel %vm2890, %v8809, 0
      %8816 = vmatprep.subr.bf16.mxu0 0
      %8817 = vmatpush1.bf16.msra.mxu0 0
      %8818 = vmatprep.subr.bf16.mxu0 0
      %8819 = vmatpush1.bf16.msra.mxu0 0
      %8820 = vmatprep.subr.bf16.mxu0 0
      %8821 = vmatpush1.bf16.msra.mxu0 0
      %8822 = vmatprep.subr.bf16.mxu0 0
      %8823 = vmatpush1.bf16.msra.mxu0 0
      %8824 = vmatprep.subr.bf16.mxu0 0
      %8825 = vmatpush1.bf16.msra.mxu0 0
      %8826 = vmatprep.subr.bf16.mxu0 0
      %8827 = vmatpush1.bf16.msra.mxu0 0
      %8828 = vmatprep.subr.bf16.mxu0 0
      %8829 = vmatpush1.bf16.msra.mxu0 0
      %8830 = vmatprep.subr.bf16.mxu0 0
      %8831 = vmatpush1.bf16.msra.mxu0 %v8814
      %8832 = vmatprep.subr.bf16.mxu0 0
      %8833 = vmatpush2.bf16.msra.mxu0 0
      %8834 = vmatprep.subr.bf16.mxu0 0
      %8835 = vmatpush2.bf16.msra.mxu0 0
      %8836 = vmatprep.subr.bf16.mxu0 0
      %8837 = vmatpush2.bf16.msra.mxu0 0
      %8838 = vmatprep.subr.bf16.mxu0 0
      %8839 = vmatpush2.bf16.msra.mxu0 0
      %8840 = vmatprep.subr.bf16.mxu0 0
      %8841 = vmatpush2.bf16.msra.mxu0 0
      %8842 = vmatprep.subr.bf16.mxu0 0
      %8843 = vmatpush2.bf16.msra.mxu0 0
      %8844 = vmatprep.subr.bf16.mxu0 0
      %8845 = vmatpush2.bf16.msra.mxu0 0
      %8846 = vmatprep.subr.bf16.mxu0 0
      %8847 = vmatpush2.bf16.msra.mxu0 0
      %8848 = vmatprep.mubr.bf16.mxu0 0
      %8849 = vmatmul.mubr.bf16.gmra.mxu0 %v8811
      %v8850 = vpop.f32.mrf.mxu0
      %v8851 = vadd.f32 0.0, %v8850
      %v8852 = vpop.f32.mrf.mxu0
      %v8853 = vpop.f32.mrf.mxu0
      %v8854 = vpop.f32.mrf.mxu0
      %8855 = vdwg.mxu0
      %8856 = vrot.lane.b32.xlu0 %v1841, 80
      %v8857 = vpop.permute.xlu0 %8856
      %v8859 = vsel %vm2694, %v8276, 0
      %v8862 = vsel %vm2890, %v8857, 0
      %8864 = vmatprep.subr.bf16.mxu0 0
      %8865 = vmatpush1.bf16.msra.mxu0 0
      %8866 = vmatprep.subr.bf16.mxu0 0
      %8867 = vmatpush1.bf16.msra.mxu0 0
      %8868 = vmatprep.subr.bf16.mxu0 0
      %8869 = vmatpush1.bf16.msra.mxu0 0
      %8870 = vmatprep.subr.bf16.mxu0 0
      %8871 = vmatpush1.bf16.msra.mxu0 0
      %8872 = vmatprep.subr.bf16.mxu0 0
      %8873 = vmatpush1.bf16.msra.mxu0 0
      %8874 = vmatprep.subr.bf16.mxu0 0
      %8875 = vmatpush1.bf16.msra.mxu0 0
      %8876 = vmatprep.subr.bf16.mxu0 0
      %8877 = vmatpush1.bf16.msra.mxu0 0
      %8878 = vmatprep.subr.bf16.mxu0 0
      %8879 = vmatpush1.bf16.msra.mxu0 %v8862
      %8880 = vmatprep.subr.bf16.mxu0 0
      %8881 = vmatpush2.bf16.msra.mxu0 0
      %8882 = vmatprep.subr.bf16.mxu0 0
      %8883 = vmatpush2.bf16.msra.mxu0 0
      %8884 = vmatprep.subr.bf16.mxu0 0
      %8885 = vmatpush2.bf16.msra.mxu0 0
      %8886 = vmatprep.subr.bf16.mxu0 0
      %8887 = vmatpush2.bf16.msra.mxu0 0
      %8888 = vmatprep.subr.bf16.mxu0 0
      %8889 = vmatpush2.bf16.msra.mxu0 0
      %8890 = vmatprep.subr.bf16.mxu0 0
      %8891 = vmatpush2.bf16.msra.mxu0 0
      %8892 = vmatprep.subr.bf16.mxu0 0
      %8893 = vmatpush2.bf16.msra.mxu0 0
      %8894 = vmatprep.subr.bf16.mxu0 0
      %8895 = vmatpush2.bf16.msra.mxu0 0
      %8896 = vmatprep.mubr.bf16.mxu0 0
      %8897 = vmatmul.mubr.bf16.gmra.mxu0 %v8859
      %v8898 = vpop.f32.mrf.mxu0
      %v8899 = vadd.f32 0.0, %v8898
      %v8900 = vpop.f32.mrf.mxu0
      %v8901 = vpop.f32.mrf.mxu0
      %v8902 = vpop.f32.mrf.mxu0
      %8903 = vdwg.mxu0
      %8904 = vrot.lane.b32.xlu0 %v1842, 80
      %v8905 = vpop.permute.xlu0 %8904
      %v8907 = vsel %vm2694, %v8277, 0
      %v8910 = vsel %vm2890, %v8905, 0
      %8912 = vmatprep.subr.bf16.mxu0 0
      %8913 = vmatpush1.bf16.msra.mxu0 0
      %8914 = vmatprep.subr.bf16.mxu0 0
      %8915 = vmatpush1.bf16.msra.mxu0 0
      %8916 = vmatprep.subr.bf16.mxu0 0
      %8917 = vmatpush1.bf16.msra.mxu0 0
      %8918 = vmatprep.subr.bf16.mxu0 0
      %8919 = vmatpush1.bf16.msra.mxu0 0
      %8920 = vmatprep.subr.bf16.mxu0 0
      %8921 = vmatpush1.bf16.msra.mxu0 0
      %8922 = vmatprep.subr.bf16.mxu0 0
      %8923 = vmatpush1.bf16.msra.mxu0 0
      %8924 = vmatprep.subr.bf16.mxu0 0
      %8925 = vmatpush1.bf16.msra.mxu0 0
      %8926 = vmatprep.subr.bf16.mxu0 0
      %8927 = vmatpush1.bf16.msra.mxu0 %v8910
      %8928 = vmatprep.subr.bf16.mxu0 0
      %8929 = vmatpush2.bf16.msra.mxu0 0
      %8930 = vmatprep.subr.bf16.mxu0 0
      %8931 = vmatpush2.bf16.msra.mxu0 0
      %8932 = vmatprep.subr.bf16.mxu0 0
      %8933 = vmatpush2.bf16.msra.mxu0 0
      %8934 = vmatprep.subr.bf16.mxu0 0
      %8935 = vmatpush2.bf16.msra.mxu0 0
      %8936 = vmatprep.subr.bf16.mxu0 0
      %8937 = vmatpush2.bf16.msra.mxu0 0
      %8938 = vmatprep.subr.bf16.mxu0 0
      %8939 = vmatpush2.bf16.msra.mxu0 0
      %8940 = vmatprep.subr.bf16.mxu0 0
      %8941 = vmatpush2.bf16.msra.mxu0 0
      %8942 = vmatprep.subr.bf16.mxu0 0
      %8943 = vmatpush2.bf16.msra.mxu0 0
      %8944 = vmatprep.mubr.bf16.mxu0 0
      %8945 = vmatmul.mubr.bf16.gmra.mxu0 %v8907
      %v8946 = vpop.f32.mrf.mxu0
      %v8947 = vadd.f32 0.0, %v8946
      %v8948 = vpop.f32.mrf.mxu0
      %v8949 = vpop.f32.mrf.mxu0
      %v8950 = vpop.f32.mrf.mxu0
      %8951 = vdwg.mxu0
      %8952 = vrot.lane.b32.xlu0 %v1843, 80
      %v8953 = vpop.permute.xlu0 %8952
      %v8955 = vsel %vm2694, %v8278, 0
      %v8958 = vsel %vm2890, %v8953, 0
      %8960 = vmatprep.subr.bf16.mxu0 0
      %8961 = vmatpush1.bf16.msra.mxu0 0
      %8962 = vmatprep.subr.bf16.mxu0 0
      %8963 = vmatpush1.bf16.msra.mxu0 0
      %8964 = vmatprep.subr.bf16.mxu0 0
      %8965 = vmatpush1.bf16.msra.mxu0 0
      %8966 = vmatprep.subr.bf16.mxu0 0
      %8967 = vmatpush1.bf16.msra.mxu0 0
      %8968 = vmatprep.subr.bf16.mxu0 0
      %8969 = vmatpush1.bf16.msra.mxu0 0
      %8970 = vmatprep.subr.bf16.mxu0 0
      %8971 = vmatpush1.bf16.msra.mxu0 0
      %8972 = vmatprep.subr.bf16.mxu0 0
      %8973 = vmatpush1.bf16.msra.mxu0 0
      %8974 = vmatprep.subr.bf16.mxu0 0
      %8975 = vmatpush1.bf16.msra.mxu0 %v8958
      %8976 = vmatprep.subr.bf16.mxu0 0
      %8977 = vmatpush2.bf16.msra.mxu0 0
      %8978 = vmatprep.subr.bf16.mxu0 0
      %8979 = vmatpush2.bf16.msra.mxu0 0
      %8980 = vmatprep.subr.bf16.mxu0 0
      %8981 = vmatpush2.bf16.msra.mxu0 0
      %8982 = vmatprep.subr.bf16.mxu0 0
      %8983 = vmatpush2.bf16.msra.mxu0 0
      %8984 = vmatprep.subr.bf16.mxu0 0
      %8985 = vmatpush2.bf16.msra.mxu0 0
      %8986 = vmatprep.subr.bf16.mxu0 0
      %8987 = vmatpush2.bf16.msra.mxu0 0
      %8988 = vmatprep.subr.bf16.mxu0 0
      %8989 = vmatpush2.bf16.msra.mxu0 0
      %8990 = vmatprep.subr.bf16.mxu0 0
      %8991 = vmatpush2.bf16.msra.mxu0 0
      %8992 = vmatprep.mubr.bf16.mxu0 0
      %8993 = vmatmul.mubr.bf16.gmra.mxu0 %v8955
      %v8994 = vpop.f32.mrf.mxu0
      %v8995 = vadd.f32 0.0, %v8994
      %v8996 = vpop.f32.mrf.mxu0
      %v8997 = vpop.f32.mrf.mxu0
      %v8998 = vpop.f32.mrf.mxu0
      %8999 = vdwg.mxu0
      %9000 = vrot.lane.b32.xlu0 %v1844, 80
      %v9001 = vpop.permute.xlu0 %9000
      %v9003 = vsel %vm2694, %v8279, 0
      %v9006 = vsel %vm2890, %v9001, 0
      %9008 = vmatprep.subr.bf16.mxu0 0
      %9009 = vmatpush1.bf16.msra.mxu0 0
      %9010 = vmatprep.subr.bf16.mxu0 0
      %9011 = vmatpush1.bf16.msra.mxu0 0
      %9012 = vmatprep.subr.bf16.mxu0 0
      %9013 = vmatpush1.bf16.msra.mxu0 0
      %9014 = vmatprep.subr.bf16.mxu0 0
      %9015 = vmatpush1.bf16.msra.mxu0 0
      %9016 = vmatprep.subr.bf16.mxu0 0
      %9017 = vmatpush1.bf16.msra.mxu0 0
      %9018 = vmatprep.subr.bf16.mxu0 0
      %9019 = vmatpush1.bf16.msra.mxu0 0
      %9020 = vmatprep.subr.bf16.mxu0 0
      %9021 = vmatpush1.bf16.msra.mxu0 0
      %9022 = vmatprep.subr.bf16.mxu0 0
      %9023 = vmatpush1.bf16.msra.mxu0 %v9006
      %9024 = vmatprep.subr.bf16.mxu0 0
      %9025 = vmatpush2.bf16.msra.mxu0 0
      %9026 = vmatprep.subr.bf16.mxu0 0
      %9027 = vmatpush2.bf16.msra.mxu0 0
      %9028 = vmatprep.subr.bf16.mxu0 0
      %9029 = vmatpush2.bf16.msra.mxu0 0
      %9030 = vmatprep.subr.bf16.mxu0 0
      %9031 = vmatpush2.bf16.msra.mxu0 0
      %9032 = vmatprep.subr.bf16.mxu0 0
      %9033 = vmatpush2.bf16.msra.mxu0 0
      %9034 = vmatprep.subr.bf16.mxu0 0
      %9035 = vmatpush2.bf16.msra.mxu0 0
      %9036 = vmatprep.subr.bf16.mxu0 0
      %9037 = vmatpush2.bf16.msra.mxu0 0
      %9038 = vmatprep.subr.bf16.mxu0 0
      %9039 = vmatpush2.bf16.msra.mxu0 0
      %9040 = vmatprep.mubr.bf16.mxu0 0
      %9041 = vmatmul.mubr.bf16.gmra.mxu0 %v9003
      %v9042 = vpop.f32.mrf.mxu0
      %v9043 = vadd.f32 0.0, %v9042
      %v9044 = vpop.f32.mrf.mxu0
      %v9045 = vpop.f32.mrf.mxu0
      %v9046 = vpop.f32.mrf.mxu0
      %9047 = vdwg.mxu0
      %9064 = vrot.lane.b32.xlu0 %v4724, 16
      %v9065 = vpop.permute.xlu0 %9064
      %9066 = vrot.lane.b32.xlu0 %v4773, 16
      %v9067 = vpop.permute.xlu0 %9066
      %9068 = vrot.lane.b32.xlu0 %v4822, 16
      %v9069 = vpop.permute.xlu0 %9068
      %9070 = vrot.lane.b32.xlu0 %v4871, 16
      %v9071 = vpop.permute.xlu0 %9070
      %9072 = vrot.lane.b32.xlu0 %v4920, 16
      %v9073 = vpop.permute.xlu0 %9072
      %9074 = vrot.lane.b32.xlu0 %v4969, 16
      %v9075 = vpop.permute.xlu0 %9074
      %9076 = vrot.lane.b32.xlu0 %v5018, 16
      %v9077 = vpop.permute.xlu0 %9076
      %9078 = vrot.lane.b32.xlu0 %v5067, 16
      %v9079 = vpop.permute.xlu0 %9078
      %9080 = vrot.lane.b32.xlu0 %v5116, 16
      %v9081 = vpop.permute.xlu0 %9080
      %9082 = vrot.lane.b32.xlu0 %v5165, 16
      %v9083 = vpop.permute.xlu0 %9082
      %9084 = vrot.lane.b32.xlu0 %v5214, 16
      %v9085 = vpop.permute.xlu0 %9084
      %9086 = vrot.lane.b32.xlu0 %v5263, 16
      %v9087 = vpop.permute.xlu0 %9086
      %9088 = vrot.lane.b32.xlu0 %v5312, 16
      %v9089 = vpop.permute.xlu0 %9088
      %9090 = vrot.lane.b32.xlu0 %v5361, 16
      %v9091 = vpop.permute.xlu0 %9090
      %9092 = vrot.lane.b32.xlu0 %v5410, 16
      %v9093 = vpop.permute.xlu0 %9092
      %9094 = vrot.lane.b32.xlu0 %v5459, 16
      %v9095 = vpop.permute.xlu0 %9094
      %9128 = vrot.lane.b32.xlu0 %v6531, 32
      %v9129 = vpop.permute.xlu0 %9128
      %9130 = vrot.lane.b32.xlu0 %v6579, 32
      %v9131 = vpop.permute.xlu0 %9130
      %9132 = vrot.lane.b32.xlu0 %v6627, 32
      %v9133 = vpop.permute.xlu0 %9132
      %9134 = vrot.lane.b32.xlu0 %v6675, 32
      %v9135 = vpop.permute.xlu0 %9134
      %9136 = vrot.lane.b32.xlu0 %v6723, 32
      %v9137 = vpop.permute.xlu0 %9136
      %9138 = vrot.lane.b32.xlu0 %v6771, 32
      %v9139 = vpop.permute.xlu0 %9138
      %9140 = vrot.lane.b32.xlu0 %v6819, 32
      %v9141 = vpop.permute.xlu0 %9140
      %9142 = vrot.lane.b32.xlu0 %v6867, 32
      %v9143 = vpop.permute.xlu0 %9142
      %9144 = vrot.lane.b32.xlu0 %v6915, 32
      %v9145 = vpop.permute.xlu0 %9144
      %9146 = vrot.lane.b32.xlu0 %v6963, 32
      %v9147 = vpop.permute.xlu0 %9146
      %9148 = vrot.lane.b32.xlu0 %v7011, 32
      %v9149 = vpop.permute.xlu0 %9148
      %9150 = vrot.lane.b32.xlu0 %v7059, 32
      %v9151 = vpop.permute.xlu0 %9150
      %9152 = vrot.lane.b32.xlu0 %v7107, 32
      %v9153 = vpop.permute.xlu0 %9152
      %9154 = vrot.lane.b32.xlu0 %v7155, 32
      %v9155 = vpop.permute.xlu0 %9154
      %9156 = vrot.lane.b32.xlu0 %v7203, 32
      %v9157 = vpop.permute.xlu0 %9156
      %9158 = vrot.lane.b32.xlu0 %v7251, 32
      %v9159 = vpop.permute.xlu0 %9158
      %9192 = vrot.lane.b32.xlu0 %v8323, 48
      %v9193 = vpop.permute.xlu0 %9192
      %9194 = vrot.lane.b32.xlu0 %v8371, 48
      %v9195 = vpop.permute.xlu0 %9194
      %9196 = vrot.lane.b32.xlu0 %v8419, 48
      %v9197 = vpop.permute.xlu0 %9196
      %9198 = vrot.lane.b32.xlu0 %v8467, 48
      %v9199 = vpop.permute.xlu0 %9198
      %9200 = vrot.lane.b32.xlu0 %v8515, 48
      %v9201 = vpop.permute.xlu0 %9200
      %9202 = vrot.lane.b32.xlu0 %v8563, 48
      %v9203 = vpop.permute.xlu0 %9202
      %9204 = vrot.lane.b32.xlu0 %v8611, 48
      %v9205 = vpop.permute.xlu0 %9204
      %9206 = vrot.lane.b32.xlu0 %v8659, 48
      %v9207 = vpop.permute.xlu0 %9206
      %9208 = vrot.lane.b32.xlu0 %v8707, 48
      %v9209 = vpop.permute.xlu0 %9208
      %9210 = vrot.lane.b32.xlu0 %v8755, 48
      %v9211 = vpop.permute.xlu0 %9210
      %9212 = vrot.lane.b32.xlu0 %v8803, 48
      %v9213 = vpop.permute.xlu0 %9212
      %9214 = vrot.lane.b32.xlu0 %v8851, 48
      %v9215 = vpop.permute.xlu0 %9214
      %9216 = vrot.lane.b32.xlu0 %v8899, 48
      %v9217 = vpop.permute.xlu0 %9216
      %9218 = vrot.lane.b32.xlu0 %v8947, 48
      %v9219 = vpop.permute.xlu0 %9218
      %9220 = vrot.lane.b32.xlu0 %v8995, 48
      %v9221 = vpop.permute.xlu0 %9220
      %9222 = vrot.lane.b32.xlu0 %v9043, 48
      %v9223 = vpop.permute.xlu0 %9222
      %v9240 = vsel %vm1845, %v2929, %v9065
      %v9241 = vsel %vm1845, %v2975, %v9067
      %v9242 = vsel %vm1845, %v3021, %v9069
      %v9243 = vsel %vm1845, %v3067, %v9071
      %v9244 = vsel %vm1845, %v3113, %v9073
      %v9245 = vsel %vm1845, %v3159, %v9075
      %v9246 = vsel %vm1845, %v3205, %v9077
      %v9247 = vsel %vm1845, %v3251, %v9079
      %v9248 = vsel %vm1845, %v3297, %v9081
      %v9249 = vsel %vm1845, %v3343, %v9083
      %v9250 = vsel %vm1845, %v3389, %v9085
      %v9251 = vsel %vm1845, %v3435, %v9087
      %v9252 = vsel %vm1845, %v3481, %v9089
      %v9253 = vsel %vm1845, %v3527, %v9091
      %v9254 = vsel %vm1845, %v3573, %v9093
      %v9255 = vsel %vm1845, %v3619, %v9095
      %vm9256 = vcmask 261120
      %v9257 = vsel %vm9256, %v9240, %v9129
      %v9258 = vsel %vm9256, %v9241, %v9131
      %v9259 = vsel %vm9256, %v9242, %v9133
      %v9260 = vsel %vm9256, %v9243, %v9135
      %v9261 = vsel %vm9256, %v9244, %v9137
      %v9262 = vsel %vm9256, %v9245, %v9139
      %v9263 = vsel %vm9256, %v9246, %v9141
      %v9264 = vsel %vm9256, %v9247, %v9143
      %v9265 = vsel %vm9256, %v9248, %v9145
      %v9266 = vsel %vm9256, %v9249, %v9147
      %v9267 = vsel %vm9256, %v9250, %v9149
      %v9268 = vsel %vm9256, %v9251, %v9151
      %v9269 = vsel %vm9256, %v9252, %v9153
      %v9270 = vsel %vm9256, %v9253, %v9155
      %v9271 = vsel %vm9256, %v9254, %v9157
      %v9272 = vsel %vm9256, %v9255, %v9159
      %vm9273 = vcmask 392192
      %v9274 = vsel %vm9273, %v9257, %v9193
      %v9275 = vsel %vm9273, %v9258, %v9195
      %v9276 = vsel %vm9273, %v9259, %v9197
      %v9277 = vsel %vm9273, %v9260, %v9199
      %v9278 = vsel %vm9273, %v9261, %v9201
      %v9279 = vsel %vm9273, %v9262, %v9203
      %v9280 = vsel %vm9273, %v9263, %v9205
      %v9281 = vsel %vm9273, %v9264, %v9207
      %v9282 = vsel %vm9273, %v9265, %v9209
      %v9283 = vsel %vm9273, %v9266, %v9211
      %v9284 = vsel %vm9273, %v9267, %v9213
      %v9285 = vsel %vm9273, %v9268, %v9215
      %v9286 = vsel %vm9273, %v9269, %v9217
      %v9287 = vsel %vm9273, %v9270, %v9219
      %v9288 = vsel %vm9273, %v9271, %v9221
      %v9289 = vsel %vm9273, %v9272, %v9223
      %v9290 = vpack.c.bf16 %v9275, %v9274
      %v9291 = vpack.c.bf16 %v9277, %v9276
      %v9292 = vpack.c.bf16 %v9279, %v9278
      %v9293 = vpack.c.bf16 %v9281, %v9280
      %v9294 = vpack.c.bf16 %v9283, %v9282
      %v9295 = vpack.c.bf16 %v9285, %v9284
      %v9296 = vpack.c.bf16 %v9287, %v9286
      %v9297 = vpack.c.bf16 %v9289, %v9288
      %v9298 = vld [vmem:[%s23] sm:$0xf]
      %v9299 = vld [vmem:[%s23 + $0x4] sm:$0xf]
      %v9300 = vld [vmem:[%s23 + $0x8] sm:$0xf]
      %v9301 = vld [vmem:[%s23 + $0xc] sm:$0xf]
      %v9302 = vld [vmem:[%s23 + $0x10] sm:$0xf]
      %v9303 = vld [vmem:[%s23 + $0x14] sm:$0xf]
      %v9304 = vld [vmem:[%s23 + $0x18] sm:$0xf]
      %v9305 = vld [vmem:[%s23 + $0x1c] sm:$0xf]
      %v9306 = vld [vmem:[%s25] sm:$0x1]
      %v9308 = vlaneseq
      %v9309 = vshrl.u32 %v9308, 7
      %v9310 = vsub.s32 0, %v9309
      %v9311 = vrot.slane %v9306, %v9310
      %v9321 = vunpack.c.l.b16 %v9298
      %v9322 = vunpack.c.l.b16 %v9299
      %v9323 = vunpack.c.l.b16 %v9300
      %v9324 = vunpack.c.l.b16 %v9301
      %v9325 = vunpack.c.l.b16 %v9302
      %v9326 = vunpack.c.l.b16 %v9303
      %v9327 = vunpack.c.l.b16 %v9304
      %v9328 = vunpack.c.l.b16 %v9305
      %v9329 = vpack.c.b16 %v9322, %v9321
      %v9330 = vpack.c.b16 %v9324, %v9323
      %v9331 = vpack.c.b16 %v9326, %v9325
      %v9332 = vpack.c.b16 %v9328, %v9327
      %v9338 = vsel %vm997, %v9290, 0
      %v9341 = vsel %vm997, %v9291, 0
      %v9344 = vsel %vm997, %v9292, 0
      %v9347 = vsel %vm997, %v9293, 0
      %v9350 = vsel %vm997, %v9294, 0
      %v9353 = vsel %vm997, %v9295, 0
      %v9356 = vsel %vm997, %v9296, 0
      %v9359 = vsel %vm997, %v9297, 0
      %9361 = vmatprep.subr.bf16.mxu0 0
      %9362 = vmatpush1.bf16.msra.mxu0 0
      %9363 = vmatprep.subr.bf16.mxu0 0
      %9364 = vmatpush1.bf16.msra.mxu0 0
      %9365 = vmatprep.subr.bf16.mxu0 0
      %9366 = vmatpush1.bf16.msra.mxu0 0
      %9367 = vmatprep.subr.bf16.mxu0 0
      %9368 = vmatpush1.bf16.msra.mxu0 0
      %9369 = vmatprep.subr.bf16.mxu0 0
      %9370 = vmatpush1.bf16.msra.mxu0 %v9332
      %9371 = vmatprep.subr.bf16.mxu0 0
      %9372 = vmatpush1.bf16.msra.mxu0 %v9331
      %9373 = vmatprep.subr.bf16.mxu0 0
      %9374 = vmatpush1.bf16.msra.mxu0 %v9330
      %9375 = vmatprep.subr.bf16.mxu0 0
      %9376 = vmatpush1.bf16.msra.mxu0 %v9329
      %9377 = vmatprep.subr.bf16.mxu0 0
      %9378 = vmatpush2.bf16.msra.mxu0 0
      %9379 = vmatprep.subr.bf16.mxu0 0
      %9380 = vmatpush2.bf16.msra.mxu0 0
      %9381 = vmatprep.subr.bf16.mxu0 0
      %9382 = vmatpush2.bf16.msra.mxu0 0
      %9383 = vmatprep.subr.bf16.mxu0 0
      %9384 = vmatpush2.bf16.msra.mxu0 0
      %9385 = vmatprep.subr.bf16.mxu0 0
      %9386 = vmatpush2.bf16.msra.mxu0 0
      %9387 = vmatprep.subr.bf16.mxu0 0
      %9388 = vmatpush2.bf16.msra.mxu0 0
      %9389 = vmatprep.subr.bf16.mxu0 0
      %9390 = vmatpush2.bf16.msra.mxu0 0
      %9391 = vmatprep.subr.bf16.mxu0 0
      %9392 = vmatpush2.bf16.msra.mxu0 0
      %9393 = vmatprep.mubr.bf16.mxu0 0
      %9394 = vmatmul.mubr.bf16.gmra.mxu0 %v9338
      %v9395 = vpop.f32.mrf.mxu0
      %v9396 = vadd.f32 %v9311, %v9395
      %v9397 = vpop.f32.mrf.mxu0
      %v9398 = vpop.f32.mrf.mxu0
      %v9399 = vadd.f32 %v9311, %v9398
      %v9400 = vpop.f32.mrf.mxu0
      %9401 = vmatprep.mubr.bf16.mxu0 0
      %9402 = vmatmul.mubr.bf16.gmra.mxu0 %v9341
      %v9403 = vpop.f32.mrf.mxu0
      %v9404 = vadd.f32 %v9311, %v9403
      %v9405 = vpop.f32.mrf.mxu0
      %v9406 = vpop.f32.mrf.mxu0
      %v9407 = vadd.f32 %v9311, %v9406
      %v9408 = vpop.f32.mrf.mxu0
      %9409 = vmatprep.mubr.bf16.mxu0 0
      %9410 = vmatmul.mubr.bf16.gmra.mxu0 %v9344
      %v9411 = vpop.f32.mrf.mxu0
      %v9412 = vadd.f32 %v9311, %v9411
      %v9413 = vpop.f32.mrf.mxu0
      %v9414 = vpop.f32.mrf.mxu0
      %v9415 = vadd.f32 %v9311, %v9414
      %v9416 = vpop.f32.mrf.mxu0
      %9417 = vmatprep.mubr.bf16.mxu0 0
      %9418 = vmatmul.mubr.bf16.gmra.mxu0 %v9347
      %v9419 = vpop.f32.mrf.mxu0
      %v9420 = vadd.f32 %v9311, %v9419
      %v9421 = vpop.f32.mrf.mxu0
      %v9422 = vpop.f32.mrf.mxu0
      %v9423 = vadd.f32 %v9311, %v9422
      %v9424 = vpop.f32.mrf.mxu0
      %9425 = vmatprep.mubr.bf16.mxu0 0
      %9426 = vmatmul.mubr.bf16.gmra.mxu0 %v9350
      %v9427 = vpop.f32.mrf.mxu0
      %v9428 = vadd.f32 %v9311, %v9427
      %v9429 = vpop.f32.mrf.mxu0
      %v9430 = vpop.f32.mrf.mxu0
      %v9431 = vadd.f32 %v9311, %v9430
      %v9432 = vpop.f32.mrf.mxu0
      %9433 = vmatprep.mubr.bf16.mxu0 0
      %9434 = vmatmul.mubr.bf16.gmra.mxu0 %v9353
      %v9435 = vpop.f32.mrf.mxu0
      %v9436 = vadd.f32 %v9311, %v9435
      %v9437 = vpop.f32.mrf.mxu0
      %v9438 = vpop.f32.mrf.mxu0
      %v9439 = vadd.f32 %v9311, %v9438
      %v9440 = vpop.f32.mrf.mxu0
      %9441 = vmatprep.mubr.bf16.mxu0 0
      %9442 = vmatmul.mubr.bf16.gmra.mxu0 %v9356
      %v9443 = vpop.f32.mrf.mxu0
      %v9444 = vadd.f32 %v9311, %v9443
      %v9445 = vpop.f32.mrf.mxu0
      %v9446 = vpop.f32.mrf.mxu0
      %v9447 = vadd.f32 %v9311, %v9446
      %v9448 = vpop.f32.mrf.mxu0
      %9449 = vmatprep.mubr.bf16.mxu0 0
      %9450 = vmatmul.mubr.bf16.gmra.mxu0 %v9359
      %v9451 = vpop.f32.mrf.mxu0
      %v9452 = vadd.f32 %v9311, %v9451
      %v9453 = vpop.f32.mrf.mxu0
      %v9454 = vpop.f32.mrf.mxu0
      %v9455 = vadd.f32 %v9311, %v9454
      %v9456 = vpop.f32.mrf.mxu0
      %9457 = vdwg.mxu0
      %v9458 = vadd.f32 %v1235, %v9396
      %v9459 = vadd.f32 %v1236, %v9399
      %v9460 = vadd.f32 %v1237, %v9404
      %v9461 = vadd.f32 %v1238, %v9407
      %v9462 = vadd.f32 %v1239, %v9412
      %v9463 = vadd.f32 %v1240, %v9415
      %v9464 = vadd.f32 %v1241, %v9420
      %v9465 = vadd.f32 %v1242, %v9423
      %v9466 = vadd.f32 %v1243, %v9428
      %v9467 = vadd.f32 %v1244, %v9431
      %v9468 = vadd.f32 %v1245, %v9436
      %v9469 = vadd.f32 %v1246, %v9439
      %v9470 = vadd.f32 %v1247, %v9444
      %v9471 = vadd.f32 %v1248, %v9447
      %v9472 = vadd.f32 %v1249, %v9452
      %v9473 = vadd.f32 %v1250, %v9455
      %v9474 = vld [vmem:[%s27] sm:$0x1]
      %v9475 = vld [vmem:[%s29] sm:$0x1]
      %v9476 = vsel %vm997, %v9458, 0.0
      %9477 = vadd.xlane.f32.xlu0 %v9476
      %v9478 = vpop.xlane.xlu0 %9477
      %v9479 = vsel %vm997, %v9459, 0.0
      %9480 = vadd.xlane.f32.xlu0 %v9479
      %v9481 = vpop.xlane.xlu0 %9480
      %v9482 = vsel %vm997, %v9460, 0.0
      %9483 = vadd.xlane.f32.xlu0 %v9482
      %v9484 = vpop.xlane.xlu0 %9483
      %v9485 = vsel %vm997, %v9461, 0.0
      %9486 = vadd.xlane.f32.xlu0 %v9485
      %v9487 = vpop.xlane.xlu0 %9486
      %v9488 = vsel %vm997, %v9462, 0.0
      %9489 = vadd.xlane.f32.xlu0 %v9488
      %v9490 = vpop.xlane.xlu0 %9489
      %v9491 = vsel %vm997, %v9463, 0.0
      %9492 = vadd.xlane.f32.xlu0 %v9491
      %v9493 = vpop.xlane.xlu0 %9492
      %v9494 = vsel %vm997, %v9464, 0.0
      %9495 = vadd.xlane.f32.xlu0 %v9494
      %v9496 = vpop.xlane.xlu0 %9495
      %v9497 = vsel %vm997, %v9465, 0.0
      %9498 = vadd.xlane.f32.xlu0 %v9497
      %v9499 = vpop.xlane.xlu0 %9498
      %v9500 = vsel %vm997, %v9466, 0.0
      %9501 = vadd.xlane.f32.xlu0 %v9500
      %v9502 = vpop.xlane.xlu0 %9501
      %v9503 = vsel %vm997, %v9467, 0.0
      %9504 = vadd.xlane.f32.xlu0 %v9503
      %v9505 = vpop.xlane.xlu0 %9504
      %v9506 = vsel %vm997, %v9468, 0.0
      %9507 = vadd.xlane.f32.xlu0 %v9506
      %v9508 = vpop.xlane.xlu0 %9507
      %v9509 = vsel %vm997, %v9469, 0.0
      %9510 = vadd.xlane.f32.xlu0 %v9509
      %v9511 = vpop.xlane.xlu0 %9510
      %v9512 = vsel %vm997, %v9470, 0.0
      %9513 = vadd.xlane.f32.xlu0 %v9512
      %v9514 = vpop.xlane.xlu0 %9513
      %v9515 = vsel %vm997, %v9471, 0.0
      %9516 = vadd.xlane.f32.xlu0 %v9515
      %v9517 = vpop.xlane.xlu0 %9516
      %v9518 = vsel %vm997, %v9472, 0.0
      %9519 = vadd.xlane.f32.xlu0 %v9518
      %v9520 = vpop.xlane.xlu0 %9519
      %v9521 = vsel %vm997, %v9473, 0.0
      %9522 = vadd.xlane.f32.xlu0 %v9521
      %v9523 = vpop.xlane.xlu0 %9522
      %v9524 = vmul.f32 %v9478, %v1046
      %v9525 = vmul.f32 %v9481, %v1046
      %v9526 = vmul.f32 %v9484, %v1046
      %v9527 = vmul.f32 %v9487, %v1046
      %v9528 = vmul.f32 %v9490, %v1046
      %v9529 = vmul.f32 %v9493, %v1046
      %v9530 = vmul.f32 %v9496, %v1046
      %v9531 = vmul.f32 %v9499, %v1046
      %v9532 = vmul.f32 %v9502, %v1046
      %v9533 = vmul.f32 %v9505, %v1046
      %v9534 = vmul.f32 %v9508, %v1046
      %v9535 = vmul.f32 %v9511, %v1046
      %v9536 = vmul.f32 %v9514, %v1046
      %v9537 = vmul.f32 %v9517, %v1046
      %v9538 = vmul.f32 %v9520, %v1046
      %v9539 = vmul.f32 %v9523, %v1046
      %v9540 = vsub.f32 %v9458, %v9524
      %v9541 = vsub.f32 %v9459, %v9525
      %v9542 = vsub.f32 %v9460, %v9526
      %v9543 = vsub.f32 %v9461, %v9527
      %v9544 = vsub.f32 %v9462, %v9528
      %v9545 = vsub.f32 %v9463, %v9529
      %v9546 = vsub.f32 %v9464, %v9530
      %v9547 = vsub.f32 %v9465, %v9531
      %v9548 = vsub.f32 %v9466, %v9532
      %v9549 = vsub.f32 %v9467, %v9533
      %v9550 = vsub.f32 %v9468, %v9534
      %v9551 = vsub.f32 %v9469, %v9535
      %v9552 = vsub.f32 %v9470, %v9536
      %v9553 = vsub.f32 %v9471, %v9537
      %v9554 = vsub.f32 %v9472, %v9538
      %v9555 = vsub.f32 %v9473, %v9539
      %v9556 = vmul.f32 %v9540, %v9540
      %v9557 = vmul.f32 %v9541, %v9541
      %v9558 = vmul.f32 %v9542, %v9542
      %v9559 = vmul.f32 %v9543, %v9543
      %v9560 = vmul.f32 %v9544, %v9544
      %v9561 = vmul.f32 %v9545, %v9545
      %v9562 = vmul.f32 %v9546, %v9546
      %v9563 = vmul.f32 %v9547, %v9547
      %v9564 = vmul.f32 %v9548, %v9548
      %v9565 = vmul.f32 %v9549, %v9549
      %v9566 = vmul.f32 %v9550, %v9550
      %v9567 = vmul.f32 %v9551, %v9551
      %v9568 = vmul.f32 %v9552, %v9552
      %v9569 = vmul.f32 %v9553, %v9553
      %v9570 = vmul.f32 %v9554, %v9554
      %v9571 = vmul.f32 %v9555, %v9555
      %v9572 = vsel %vm997, %v9556, 0.0
      %9573 = vadd.xlane.f32.xlu0 %v9572
      %v9574 = vpop.xlane.xlu0 %9573
      %v9575 = vsel %vm997, %v9557, 0.0
      %9576 = vadd.xlane.f32.xlu0 %v9575
      %v9577 = vpop.xlane.xlu0 %9576
      %v9578 = vsel %vm997, %v9558, 0.0
      %9579 = vadd.xlane.f32.xlu0 %v9578
      %v9580 = vpop.xlane.xlu0 %9579
      %v9581 = vsel %vm997, %v9559, 0.0
      %9582 = vadd.xlane.f32.xlu0 %v9581
      %v9583 = vpop.xlane.xlu0 %9582
      %v9584 = vsel %vm997, %v9560, 0.0
      %9585 = vadd.xlane.f32.xlu0 %v9584
      %v9586 = vpop.xlane.xlu0 %9585
      %v9587 = vsel %vm997, %v9561, 0.0
      %9588 = vadd.xlane.f32.xlu0 %v9587
      %v9589 = vpop.xlane.xlu0 %9588
      %v9590 = vsel %vm997, %v9562, 0.0
      %9591 = vadd.xlane.f32.xlu0 %v9590
      %v9592 = vpop.xlane.xlu0 %9591
      %v9593 = vsel %vm997, %v9563, 0.0
      %9594 = vadd.xlane.f32.xlu0 %v9593
      %v9595 = vpop.xlane.xlu0 %9594
      %v9596 = vsel %vm997, %v9564, 0.0
      %9597 = vadd.xlane.f32.xlu0 %v9596
      %v9598 = vpop.xlane.xlu0 %9597
      %v9599 = vsel %vm997, %v9565, 0.0
      %9600 = vadd.xlane.f32.xlu0 %v9599
      %v9601 = vpop.xlane.xlu0 %9600
      %v9602 = vsel %vm997, %v9566, 0.0
      %9603 = vadd.xlane.f32.xlu0 %v9602
      %v9604 = vpop.xlane.xlu0 %9603
      %v9605 = vsel %vm997, %v9567, 0.0
      %9606 = vadd.xlane.f32.xlu0 %v9605
      %v9607 = vpop.xlane.xlu0 %9606
      %v9608 = vsel %vm997, %v9568, 0.0
      %9609 = vadd.xlane.f32.xlu0 %v9608
      %v9610 = vpop.xlane.xlu0 %9609
      %v9611 = vsel %vm997, %v9569, 0.0
      %9612 = vadd.xlane.f32.xlu0 %v9611
      %v9613 = vpop.xlane.xlu0 %9612
      %v9614 = vsel %vm997, %v9570, 0.0
      %9615 = vadd.xlane.f32.xlu0 %v9614
      %v9616 = vpop.xlane.xlu0 %9615
      %v9617 = vsel %vm997, %v9571, 0.0
      %9618 = vadd.xlane.f32.xlu0 %v9617
      %v9619 = vpop.xlane.xlu0 %9618
      %v9620 = vmul.f32 %v9574, %v1046
      %v9621 = vmul.f32 %v9577, %v1046
      %v9622 = vmul.f32 %v9580, %v1046
      %v9623 = vmul.f32 %v9583, %v1046
      %v9624 = vmul.f32 %v9586, %v1046
      %v9625 = vmul.f32 %v9589, %v1046
      %v9626 = vmul.f32 %v9592, %v1046
      %v9627 = vmul.f32 %v9595, %v1046
      %v9628 = vmul.f32 %v9598, %v1046
      %v9629 = vmul.f32 %v9601, %v1046
      %v9630 = vmul.f32 %v9604, %v1046
      %v9631 = vmul.f32 %v9607, %v1046
      %v9632 = vmul.f32 %v9610, %v1046
      %v9633 = vmul.f32 %v9613, %v1046
      %v9634 = vmul.f32 %v9616, %v1046
      %v9635 = vmul.f32 %v9619, %v1046
      %v9636 = vadd.f32 %v9620, 1e-05
      %v9637 = vadd.f32 %v9621, 1e-05
      %v9638 = vadd.f32 %v9622, 1e-05
      %v9639 = vadd.f32 %v9623, 1e-05
      %v9640 = vadd.f32 %v9624, 1e-05
      %v9641 = vadd.f32 %v9625, 1e-05
      %v9642 = vadd.f32 %v9626, 1e-05
      %v9643 = vadd.f32 %v9627, 1e-05
      %v9644 = vadd.f32 %v9628, 1e-05
      %v9645 = vadd.f32 %v9629, 1e-05
      %v9646 = vadd.f32 %v9630, 1e-05
      %v9647 = vadd.f32 %v9631, 1e-05
      %v9648 = vadd.f32 %v9632, 1e-05
      %v9649 = vadd.f32 %v9633, 1e-05
      %v9650 = vadd.f32 %v9634, 1e-05
      %v9651 = vadd.f32 %v9635, 1e-05
      %v9652 = vrsqrt.pop %v9636
      %v9653 = vrsqrt.pop %v9637
      %v9654 = vrsqrt.pop %v9638
      %v9655 = vrsqrt.pop %v9639
      %v9656 = vrsqrt.pop %v9640
      %v9657 = vrsqrt.pop %v9641
      %v9658 = vrsqrt.pop %v9642
      %v9659 = vrsqrt.pop %v9643
      %v9660 = vrsqrt.pop %v9644
      %v9661 = vrsqrt.pop %v9645
      %v9662 = vrsqrt.pop %v9646
      %v9663 = vrsqrt.pop %v9647
      %v9664 = vrsqrt.pop %v9648
      %v9665 = vrsqrt.pop %v9649
      %v9666 = vrsqrt.pop %v9650
      %v9667 = vrsqrt.pop %v9651
      %v9668 = vmul.f32 %v9540, %v9652
      %v9669 = vmul.f32 %v9541, %v9653
      %v9670 = vmul.f32 %v9542, %v9654
      %v9671 = vmul.f32 %v9543, %v9655
      %v9672 = vmul.f32 %v9544, %v9656
      %v9673 = vmul.f32 %v9545, %v9657
      %v9674 = vmul.f32 %v9546, %v9658
      %v9675 = vmul.f32 %v9547, %v9659
      %v9676 = vmul.f32 %v9548, %v9660
      %v9677 = vmul.f32 %v9549, %v9661
      %v9678 = vmul.f32 %v9550, %v9662
      %v9679 = vmul.f32 %v9551, %v9663
      %v9680 = vmul.f32 %v9552, %v9664
      %v9681 = vmul.f32 %v9553, %v9665
      %v9682 = vmul.f32 %v9554, %v9666
      %v9683 = vmul.f32 %v9555, %v9667
      %v9685 = vlaneseq
      %v9686 = vshrl.u32 %v9685, 7
      %v9687 = vsub.s32 0, %v9686
      %v9688 = vrot.slane %v9474, %v9687
      %v9690 = vmul.f32 %v9668, %v9688
      %v9691 = vmul.f32 %v9669, %v9688
      %v9692 = vmul.f32 %v9670, %v9688
      %v9693 = vmul.f32 %v9671, %v9688
      %v9694 = vmul.f32 %v9672, %v9688
      %v9695 = vmul.f32 %v9673, %v9688
      %v9696 = vmul.f32 %v9674, %v9688
      %v9697 = vmul.f32 %v9675, %v9688
      %v9698 = vmul.f32 %v9676, %v9688
      %v9699 = vmul.f32 %v9677, %v9688
      %v9700 = vmul.f32 %v9678, %v9688
      %v9701 = vmul.f32 %v9679, %v9688
      %v9702 = vmul.f32 %v9680, %v9688
      %v9703 = vmul.f32 %v9681, %v9688
      %v9704 = vmul.f32 %v9682, %v9688
      %v9705 = vmul.f32 %v9683, %v9688
      %v9707 = vlaneseq
      %v9708 = vshrl.u32 %v9707, 7
      %v9709 = vsub.s32 0, %v9708
      %v9710 = vrot.slane %v9475, %v9709
      %v9712 = vadd.f32 %v9690, %v9710
      %v9713 = vadd.f32 %v9691, %v9710
      %v9714 = vadd.f32 %v9692, %v9710
      %v9715 = vadd.f32 %v9693, %v9710
      %v9716 = vadd.f32 %v9694, %v9710
      %v9717 = vadd.f32 %v9695, %v9710
      %v9718 = vadd.f32 %v9696, %v9710
      %v9719 = vadd.f32 %v9697, %v9710
      %v9720 = vadd.f32 %v9698, %v9710
      %v9721 = vadd.f32 %v9699, %v9710
      %v9722 = vadd.f32 %v9700, %v9710
      %v9723 = vadd.f32 %v9701, %v9710
      %v9724 = vadd.f32 %v9702, %v9710
      %v9725 = vadd.f32 %v9703, %v9710
      %v9726 = vadd.f32 %v9704, %v9710
      %v9727 = vadd.f32 %v9705, %v9710
      %v9728 = vpack.c.bf16 %v9713, %v9712
      %v9729 = vpack.c.bf16 %v9715, %v9714
      %v9730 = vpack.c.bf16 %v9717, %v9716
      %v9731 = vpack.c.bf16 %v9719, %v9718
      %v9732 = vpack.c.bf16 %v9721, %v9720
      %v9733 = vpack.c.bf16 %v9723, %v9722
      %v9734 = vpack.c.bf16 %v9725, %v9724
      %v9735 = vpack.c.bf16 %v9727, %v9726
      %v9736 = vld [vmem:[%s31] sm:$0xff]
      %v9737 = vld [vmem:[%s31 + $0x8] sm:$0xff]
      %v9738 = vld [vmem:[%s31 + $0x10] sm:$0xff]
      %v9739 = vld [vmem:[%s31 + $0x18] sm:$0xff]
      %v9740 = vld [vmem:[%s31 + $0x20] sm:$0xff]
      %v9741 = vld [vmem:[%s31 + $0x28] sm:$0xff]
      %v9742 = vld [vmem:[%s31 + $0x30] sm:$0xff]
      %v9743 = vld [vmem:[%s31 + $0x38] sm:$0xff]
      %v9744 = vld [vmem:[%s33] sm:$0x3]
      %v9746 = vlaneseq
      %v9747 = vshrl.u32 %v9746, 7
      %v9748 = vsub.s32 0, %v9747
      %v9749 = vrot.slane %v9744, %v9748
      %v9750 = vlaneseq
      %v9751 = vshrl.u32 %v9750, 7
      %v9752 = vsub.s32 1, %v9751
      %v9753 = vrot.slane %v9744, %v9752
      %v9764 = vunpack.c.l.b16 %v9736
      %v9765 = vunpack.c.h.b16 %v9736
      %v9766 = vunpack.c.l.b16 %v9737
      %v9767 = vunpack.c.h.b16 %v9737
      %v9768 = vunpack.c.l.b16 %v9738
      %v9769 = vunpack.c.h.b16 %v9738
      %v9770 = vunpack.c.l.b16 %v9739
      %v9771 = vunpack.c.h.b16 %v9739
      %v9772 = vunpack.c.l.b16 %v9740
      %v9773 = vunpack.c.h.b16 %v9740
      %v9774 = vunpack.c.l.b16 %v9741
      %v9775 = vunpack.c.h.b16 %v9741
      %v9776 = vunpack.c.l.b16 %v9742
      %v9777 = vunpack.c.h.b16 %v9742
      %v9778 = vunpack.c.l.b16 %v9743
      %v9779 = vunpack.c.h.b16 %v9743
      %v9780 = vpack.c.b16 %v9766, %v9764
      %v9781 = vpack.c.b16 %v9767, %v9765
      %v9782 = vpack.c.b16 %v9770, %v9768
      %v9783 = vpack.c.b16 %v9771, %v9769
      %v9784 = vpack.c.b16 %v9774, %v9772
      %v9785 = vpack.c.b16 %v9775, %v9773
      %v9786 = vpack.c.b16 %v9778, %v9776
      %v9787 = vpack.c.b16 %v9779, %v9777
      %v9797 = vsel %vm997, %v9728, 0
      %v9800 = vsel %vm997, %v9729, 0
      %v9803 = vsel %vm997, %v9730, 0
      %v9806 = vsel %vm997, %v9731, 0
      %v9809 = vsel %vm997, %v9732, 0
      %v9812 = vsel %vm997, %v9733, 0
      %v9815 = vsel %vm997, %v9734, 0
      %v9818 = vsel %vm997, %v9735, 0
      %9820 = vmatprep.subr.bf16.mxu0 0
      %9821 = vmatpush1.bf16.msra.mxu0 0
      %9822 = vmatprep.subr.bf16.mxu0 0
      %9823 = vmatpush1.bf16.msra.mxu0 0
      %9824 = vmatprep.subr.bf16.mxu0 0
      %9825 = vmatpush1.bf16.msra.mxu0 0
      %9826 = vmatprep.subr.bf16.mxu0 0
      %9827 = vmatpush1.bf16.msra.mxu0 0
      %9828 = vmatprep.subr.bf16.mxu0 %v9787
      %9829 = vmatpush1.bf16.msra.mxu0 %v9786
      %9830 = vmatprep.subr.bf16.mxu0 %v9785
      %9831 = vmatpush1.bf16.msra.mxu0 %v9784
      %9832 = vmatprep.subr.bf16.mxu0 %v9783
      %9833 = vmatpush1.bf16.msra.mxu0 %v9782
      %9834 = vmatprep.subr.bf16.mxu0 %v9781
      %9835 = vmatpush1.bf16.msra.mxu0 %v9780
      %9836 = vmatprep.subr.bf16.mxu0 0
      %9837 = vmatpush2.bf16.msra.mxu0 0
      %9838 = vmatprep.subr.bf16.mxu0 0
      %9839 = vmatpush2.bf16.msra.mxu0 0
      %9840 = vmatprep.subr.bf16.mxu0 0
      %9841 = vmatpush2.bf16.msra.mxu0 0
      %9842 = vmatprep.subr.bf16.mxu0 0
      %9843 = vmatpush2.bf16.msra.mxu0 0
      %9844 = vmatprep.subr.bf16.mxu0 0
      %9845 = vmatpush2.bf16.msra.mxu0 0
      %9846 = vmatprep.subr.bf16.mxu0 0
      %9847 = vmatpush2.bf16.msra.mxu0 0
      %9848 = vmatprep.subr.bf16.mxu0 0
      %9849 = vmatpush2.bf16.msra.mxu0 0
      %9850 = vmatprep.subr.bf16.mxu0 0
      %9851 = vmatpush2.bf16.msra.mxu0 0
      %9852 = vmatprep.mubr.bf16.mxu0 0
      %9853 = vmatmul.mubr.bf16.gmra.mxu0 %v9797
      %v9854 = vpop.f32.mrf.mxu0
      %v9855 = vadd.f32 %v9749, %v9854
      %v9856 = vpop.f32.mrf.mxu0
      %v9857 = vadd.f32 %v9753, %v9856
      %v9858 = vpop.f32.mrf.mxu0
      %v9859 = vadd.f32 %v9749, %v9858
      %v9860 = vpop.f32.mrf.mxu0
      %v9861 = vadd.f32 %v9753, %v9860
      %9862 = vmatprep.mubr.bf16.mxu0 0
      %9863 = vmatmul.mubr.bf16.gmra.mxu0 %v9800
      %v9864 = vpop.f32.mrf.mxu0
      %v9865 = vadd.f32 %v9749, %v9864
      %v9866 = vpop.f32.mrf.mxu0
      %v9867 = vadd.f32 %v9753, %v9866
      %v9868 = vpop.f32.mrf.mxu0
      %v9869 = vadd.f32 %v9749, %v9868
      %v9870 = vpop.f32.mrf.mxu0
      %v9871 = vadd.f32 %v9753, %v9870
      %9872 = vmatprep.mubr.bf16.mxu0 0
      %9873 = vmatmul.mubr.bf16.gmra.mxu0 %v9803
      %v9874 = vpop.f32.mrf.mxu0
      %v9875 = vadd.f32 %v9749, %v9874
      %v9876 = vpop.f32.mrf.mxu0
      %v9877 = vadd.f32 %v9753, %v9876
      %v9878 = vpop.f32.mrf.mxu0
      %v9879 = vadd.f32 %v9749, %v9878
      %v9880 = vpop.f32.mrf.mxu0
      %v9881 = vadd.f32 %v9753, %v9880
      %9882 = vmatprep.mubr.bf16.mxu0 0
      %9883 = vmatmul.mubr.bf16.gmra.mxu0 %v9806
      %v9884 = vpop.f32.mrf.mxu0
      %v9885 = vadd.f32 %v9749, %v9884
      %v9886 = vpop.f32.mrf.mxu0
      %v9887 = vadd.f32 %v9753, %v9886
      %v9888 = vpop.f32.mrf.mxu0
      %v9889 = vadd.f32 %v9749, %v9888
      %v9890 = vpop.f32.mrf.mxu0
      %v9891 = vadd.f32 %v9753, %v9890
      %9892 = vmatprep.mubr.bf16.mxu0 0
      %9893 = vmatmul.mubr.bf16.gmra.mxu0 %v9809
      %v9894 = vpop.f32.mrf.mxu0
      %v9895 = vadd.f32 %v9749, %v9894
      %v9896 = vpop.f32.mrf.mxu0
      %v9897 = vadd.f32 %v9753, %v9896
      %v9898 = vpop.f32.mrf.mxu0
      %v9899 = vadd.f32 %v9749, %v9898
      %v9900 = vpop.f32.mrf.mxu0
      %v9901 = vadd.f32 %v9753, %v9900
      %9902 = vmatprep.mubr.bf16.mxu0 0
      %9903 = vmatmul.mubr.bf16.gmra.mxu0 %v9812
      %v9904 = vpop.f32.mrf.mxu0
      %v9905 = vadd.f32 %v9749, %v9904
      %v9906 = vpop.f32.mrf.mxu0
      %v9907 = vadd.f32 %v9753, %v9906
      %v9908 = vpop.f32.mrf.mxu0
      %v9909 = vadd.f32 %v9749, %v9908
      %v9910 = vpop.f32.mrf.mxu0
      %v9911 = vadd.f32 %v9753, %v9910
      %9912 = vmatprep.mubr.bf16.mxu0 0
      %9913 = vmatmul.mubr.bf16.gmra.mxu0 %v9815
      %v9914 = vpop.f32.mrf.mxu0
      %v9915 = vadd.f32 %v9749, %v9914
      %v9916 = vpop.f32.mrf.mxu0
      %v9917 = vadd.f32 %v9753, %v9916
      %v9918 = vpop.f32.mrf.mxu0
      %v9919 = vadd.f32 %v9749, %v9918
      %v9920 = vpop.f32.mrf.mxu0
      %v9921 = vadd.f32 %v9753, %v9920
      %9922 = vmatprep.mubr.bf16.mxu0 0
      %9923 = vmatmul.mubr.bf16.gmra.mxu0 %v9818
      %v9924 = vpop.f32.mrf.mxu0
      %v9925 = vadd.f32 %v9749, %v9924
      %v9926 = vpop.f32.mrf.mxu0
      %v9927 = vadd.f32 %v9753, %v9926
      %v9928 = vpop.f32.mrf.mxu0
      %v9929 = vadd.f32 %v9749, %v9928
      %v9930 = vpop.f32.mrf.mxu0
      %v9931 = vadd.f32 %v9753, %v9930
      %9932 = vdwg.mxu0
      %v9933 = vmul.f32 %v9855, %v9855
      %v9934 = vmul.f32 %v9857, %v9857
      %v9935 = vmul.f32 %v9859, %v9859
      %v9936 = vmul.f32 %v9861, %v9861
      %v9937 = vmul.f32 %v9865, %v9865
      %v9938 = vmul.f32 %v9867, %v9867
      %v9939 = vmul.f32 %v9869, %v9869
      %v9940 = vmul.f32 %v9871, %v9871
      %v9941 = vmul.f32 %v9875, %v9875
      %v9942 = vmul.f32 %v9877, %v9877
      %v9943 = vmul.f32 %v9879, %v9879
      %v9944 = vmul.f32 %v9881, %v9881
      %v9945 = vmul.f32 %v9885, %v9885
      %v9946 = vmul.f32 %v9887, %v9887
      %v9947 = vmul.f32 %v9889, %v9889
      %v9948 = vmul.f32 %v9891, %v9891
      %v9949 = vmul.f32 %v9895, %v9895
      %v9950 = vmul.f32 %v9897, %v9897
      %v9951 = vmul.f32 %v9899, %v9899
      %v9952 = vmul.f32 %v9901, %v9901
      %v9953 = vmul.f32 %v9905, %v9905
      %v9954 = vmul.f32 %v9907, %v9907
      %v9955 = vmul.f32 %v9909, %v9909
      %v9956 = vmul.f32 %v9911, %v9911
      %v9957 = vmul.f32 %v9915, %v9915
      %v9958 = vmul.f32 %v9917, %v9917
      %v9959 = vmul.f32 %v9919, %v9919
      %v9960 = vmul.f32 %v9921, %v9921
      %v9961 = vmul.f32 %v9925, %v9925
      %v9962 = vmul.f32 %v9927, %v9927
      %v9963 = vmul.f32 %v9929, %v9929
      %v9964 = vmul.f32 %v9931, %v9931
      %v9965 = vmul.f32 %v9855, %v9933
      %v9966 = vmul.f32 %v9857, %v9934
      %v9967 = vmul.f32 %v9859, %v9935
      %v9968 = vmul.f32 %v9861, %v9936
      %v9969 = vmul.f32 %v9865, %v9937
      %v9970 = vmul.f32 %v9867, %v9938
      %v9971 = vmul.f32 %v9869, %v9939
      %v9972 = vmul.f32 %v9871, %v9940
      %v9973 = vmul.f32 %v9875, %v9941
      %v9974 = vmul.f32 %v9877, %v9942
      %v9975 = vmul.f32 %v9879, %v9943
      %v9976 = vmul.f32 %v9881, %v9944
      %v9977 = vmul.f32 %v9885, %v9945
      %v9978 = vmul.f32 %v9887, %v9946
      %v9979 = vmul.f32 %v9889, %v9947
      %v9980 = vmul.f32 %v9891, %v9948
      %v9981 = vmul.f32 %v9895, %v9949
      %v9982 = vmul.f32 %v9897, %v9950
      %v9983 = vmul.f32 %v9899, %v9951
      %v9984 = vmul.f32 %v9901, %v9952
      %v9985 = vmul.f32 %v9905, %v9953
      %v9986 = vmul.f32 %v9907, %v9954
      %v9987 = vmul.f32 %v9909, %v9955
      %v9988 = vmul.f32 %v9911, %v9956
      %v9989 = vmul.f32 %v9915, %v9957
      %v9990 = vmul.f32 %v9917, %v9958
      %v9991 = vmul.f32 %v9919, %v9959
      %v9992 = vmul.f32 %v9921, %v9960
      %v9993 = vmul.f32 %v9925, %v9961
      %v9994 = vmul.f32 %v9927, %v9962
      %v9995 = vmul.f32 %v9929, %v9963
      %v9996 = vmul.f32 %v9931, %v9964
      %v9997 = vmul.f32 %v9965, 0.044715
      %v9998 = vmul.f32 %v9966, 0.044715
      %v9999 = vmul.f32 %v9967, 0.044715
      %v10000 = vmul.f32 %v9968, 0.044715
      %v10001 = vmul.f32 %v9969, 0.044715
      %v10002 = vmul.f32 %v9970, 0.044715
      %v10003 = vmul.f32 %v9971, 0.044715
      %v10004 = vmul.f32 %v9972, 0.044715
      %v10005 = vmul.f32 %v9973, 0.044715
      %v10006 = vmul.f32 %v9974, 0.044715
      %v10007 = vmul.f32 %v9975, 0.044715
      %v10008 = vmul.f32 %v9976, 0.044715
      %v10009 = vmul.f32 %v9977, 0.044715
      %v10010 = vmul.f32 %v9978, 0.044715
      %v10011 = vmul.f32 %v9979, 0.044715
      %v10012 = vmul.f32 %v9980, 0.044715
      %v10013 = vmul.f32 %v9981, 0.044715
      %v10014 = vmul.f32 %v9982, 0.044715
      %v10015 = vmul.f32 %v9983, 0.044715
      %v10016 = vmul.f32 %v9984, 0.044715
      %v10017 = vmul.f32 %v9985, 0.044715
      %v10018 = vmul.f32 %v9986, 0.044715
      %v10019 = vmul.f32 %v9987, 0.044715
      %v10020 = vmul.f32 %v9988, 0.044715
      %v10021 = vmul.f32 %v9989, 0.044715
      %v10022 = vmul.f32 %v9990, 0.044715
      %v10023 = vmul.f32 %v9991, 0.044715
      %v10024 = vmul.f32 %v9992, 0.044715
      %v10025 = vmul.f32 %v9993, 0.044715
      %v10026 = vmul.f32 %v9994, 0.044715
      %v10027 = vmul.f32 %v9995, 0.044715
      %v10028 = vmul.f32 %v9996, 0.044715
      %v10029 = vadd.f32 %v9855, %v9997
      %v10030 = vadd.f32 %v9857, %v9998
      %v10031 = vadd.f32 %v9859, %v9999
      %v10032 = vadd.f32 %v9861, %v10000
      %v10033 = vadd.f32 %v9865, %v10001
      %v10034 = vadd.f32 %v9867, %v10002
      %v10035 = vadd.f32 %v9869, %v10003
      %v10036 = vadd.f32 %v9871, %v10004
      %v10037 = vadd.f32 %v9875, %v10005
      %v10038 = vadd.f32 %v9877, %v10006
      %v10039 = vadd.f32 %v9879, %v10007
      %v10040 = vadd.f32 %v9881, %v10008
      %v10041 = vadd.f32 %v9885, %v10009
      %v10042 = vadd.f32 %v9887, %v10010
      %v10043 = vadd.f32 %v9889, %v10011
      %v10044 = vadd.f32 %v9891, %v10012
      %v10045 = vadd.f32 %v9895, %v10013
      %v10046 = vadd.f32 %v9897, %v10014
      %v10047 = vadd.f32 %v9899, %v10015
      %v10048 = vadd.f32 %v9901, %v10016
      %v10049 = vadd.f32 %v9905, %v10017
      %v10050 = vadd.f32 %v9907, %v10018
      %v10051 = vadd.f32 %v9909, %v10019
      %v10052 = vadd.f32 %v9911, %v10020
      %v10053 = vadd.f32 %v9915, %v10021
      %v10054 = vadd.f32 %v9917, %v10022
      %v10055 = vadd.f32 %v9919, %v10023
      %v10056 = vadd.f32 %v9921, %v10024
      %v10057 = vadd.f32 %v9925, %v10025
      %v10058 = vadd.f32 %v9927, %v10026
      %v10059 = vadd.f32 %v9929, %v10027
      %v10060 = vadd.f32 %v9931, %v10028
      %v10061 = vmul.f32 %v10029, 0.7978846
      %v10062 = vmul.f32 %v10030, 0.7978846
      %v10063 = vmul.f32 %v10031, 0.7978846
      %v10064 = vmul.f32 %v10032, 0.7978846
      %v10065 = vmul.f32 %v10033, 0.7978846
      %v10066 = vmul.f32 %v10034, 0.7978846
      %v10067 = vmul.f32 %v10035, 0.7978846
      %v10068 = vmul.f32 %v10036, 0.7978846
      %v10069 = vmul.f32 %v10037, 0.7978846
      %v10070 = vmul.f32 %v10038, 0.7978846
      %v10071 = vmul.f32 %v10039, 0.7978846
      %v10072 = vmul.f32 %v10040, 0.7978846
      %v10073 = vmul.f32 %v10041, 0.7978846
      %v10074 = vmul.f32 %v10042, 0.7978846
      %v10075 = vmul.f32 %v10043, 0.7978846
      %v10076 = vmul.f32 %v10044, 0.7978846
      %v10077 = vmul.f32 %v10045, 0.7978846
      %v10078 = vmul.f32 %v10046, 0.7978846
      %v10079 = vmul.f32 %v10047, 0.7978846
      %v10080 = vmul.f32 %v10048, 0.7978846
      %v10081 = vmul.f32 %v10049, 0.7978846
      %v10082 = vmul.f32 %v10050, 0.7978846
      %v10083 = vmul.f32 %v10051, 0.7978846
      %v10084 = vmul.f32 %v10052, 0.7978846
      %v10085 = vmul.f32 %v10053, 0.7978846
      %v10086 = vmul.f32 %v10054, 0.7978846
      %v10087 = vmul.f32 %v10055, 0.7978846
      %v10088 = vmul.f32 %v10056, 0.7978846
      %v10089 = vmul.f32 %v10057, 0.7978846
      %v10090 = vmul.f32 %v10058, 0.7978846
      %v10091 = vmul.f32 %v10059, 0.7978846
      %v10092 = vmul.f32 %v10060, 0.7978846
      %v10093 = vtanh.pop %v10061
      %v10094 = vtanh.pop %v10062
      %v10095 = vtanh.pop %v10063
      %v10096 = vtanh.pop %v10064
      %v10097 = vtanh.pop %v10065
      %v10098 = vtanh.pop %v10066
      %v10099 = vtanh.pop %v10067
      %v10100 = vtanh.pop %v10068
      %v10101 = vtanh.pop %v10069
      %v10102 = vtanh.pop %v10070
      %v10103 = vtanh.pop %v10071
      %v10104 = vtanh.pop %v10072
      %v10105 = vtanh.pop %v10073
      %v10106 = vtanh.pop %v10074
      %v10107 = vtanh.pop %v10075
      %v10108 = vtanh.pop %v10076
      %v10109 = vtanh.pop %v10077
      %v10110 = vtanh.pop %v10078
      %v10111 = vtanh.pop %v10079
      %v10112 = vtanh.pop %v10080
      %v10113 = vtanh.pop %v10081
      %v10114 = vtanh.pop %v10082
      %v10115 = vtanh.pop %v10083
      %v10116 = vtanh.pop %v10084
      %v10117 = vtanh.pop %v10085
      %v10118 = vtanh.pop %v10086
      %v10119 = vtanh.pop %v10087
      %v10120 = vtanh.pop %v10088
      %v10121 = vtanh.pop %v10089
      %v10122 = vtanh.pop %v10090
      %v10123 = vtanh.pop %v10091
      %v10124 = vtanh.pop %v10092
      %v10125 = vadd.f32 %v10093, 1.0
      %v10126 = vadd.f32 %v10094, 1.0
      %v10127 = vadd.f32 %v10095, 1.0
      %v10128 = vadd.f32 %v10096, 1.0
      %v10129 = vadd.f32 %v10097, 1.0
      %v10130 = vadd.f32 %v10098, 1.0
      %v10131 = vadd.f32 %v10099, 1.0
      %v10132 = vadd.f32 %v10100, 1.0
      %v10133 = vadd.f32 %v10101, 1.0
      %v10134 = vadd.f32 %v10102, 1.0
      %v10135 = vadd.f32 %v10103, 1.0
      %v10136 = vadd.f32 %v10104, 1.0
      %v10137 = vadd.f32 %v10105, 1.0
      %v10138 = vadd.f32 %v10106, 1.0
      %v10139 = vadd.f32 %v10107, 1.0
      %v10140 = vadd.f32 %v10108, 1.0
      %v10141 = vadd.f32 %v10109, 1.0
      %v10142 = vadd.f32 %v10110, 1.0
      %v10143 = vadd.f32 %v10111, 1.0
      %v10144 = vadd.f32 %v10112, 1.0
      %v10145 = vadd.f32 %v10113, 1.0
      %v10146 = vadd.f32 %v10114, 1.0
      %v10147 = vadd.f32 %v10115, 1.0
      %v10148 = vadd.f32 %v10116, 1.0
      %v10149 = vadd.f32 %v10117, 1.0
      %v10150 = vadd.f32 %v10118, 1.0
      %v10151 = vadd.f32 %v10119, 1.0
      %v10152 = vadd.f32 %v10120, 1.0
      %v10153 = vadd.f32 %v10121, 1.0
      %v10154 = vadd.f32 %v10122, 1.0
      %v10155 = vadd.f32 %v10123, 1.0
      %v10156 = vadd.f32 %v10124, 1.0
      %v10157 = vmul.f32 %v10125, 0.5
      %v10158 = vmul.f32 %v10126, 0.5
      %v10159 = vmul.f32 %v10127, 0.5
      %v10160 = vmul.f32 %v10128, 0.5
      %v10161 = vmul.f32 %v10129, 0.5
      %v10162 = vmul.f32 %v10130, 0.5
      %v10163 = vmul.f32 %v10131, 0.5
      %v10164 = vmul.f32 %v10132, 0.5
      %v10165 = vmul.f32 %v10133, 0.5
      %v10166 = vmul.f32 %v10134, 0.5
      %v10167 = vmul.f32 %v10135, 0.5
      %v10168 = vmul.f32 %v10136, 0.5
      %v10169 = vmul.f32 %v10137, 0.5
      %v10170 = vmul.f32 %v10138, 0.5
      %v10171 = vmul.f32 %v10139, 0.5
      %v10172 = vmul.f32 %v10140, 0.5
      %v10173 = vmul.f32 %v10141, 0.5
      %v10174 = vmul.f32 %v10142, 0.5
      %v10175 = vmul.f32 %v10143, 0.5
      %v10176 = vmul.f32 %v10144, 0.5
      %v10177 = vmul.f32 %v10145, 0.5
      %v10178 = vmul.f32 %v10146, 0.5
      %v10179 = vmul.f32 %v10147, 0.5
      %v10180 = vmul.f32 %v10148, 0.5
      %v10181 = vmul.f32 %v10149, 0.5
      %v10182 = vmul.f32 %v10150, 0.5
      %v10183 = vmul.f32 %v10151, 0.5
      %v10184 = vmul.f32 %v10152, 0.5
      %v10185 = vmul.f32 %v10153, 0.5
      %v10186 = vmul.f32 %v10154, 0.5
      %v10187 = vmul.f32 %v10155, 0.5
      %v10188 = vmul.f32 %v10156, 0.5
      %v10189 = vmul.f32 %v9855, %v10157
      %v10190 = vmul.f32 %v9857, %v10158
      %v10191 = vmul.f32 %v9859, %v10159
      %v10192 = vmul.f32 %v9861, %v10160
      %v10193 = vmul.f32 %v9865, %v10161
      %v10194 = vmul.f32 %v9867, %v10162
      %v10195 = vmul.f32 %v9869, %v10163
      %v10196 = vmul.f32 %v9871, %v10164
      %v10197 = vmul.f32 %v9875, %v10165
      %v10198 = vmul.f32 %v9877, %v10166
      %v10199 = vmul.f32 %v9879, %v10167
      %v10200 = vmul.f32 %v9881, %v10168
      %v10201 = vmul.f32 %v9885, %v10169
      %v10202 = vmul.f32 %v9887, %v10170
      %v10203 = vmul.f32 %v9889, %v10171
      %v10204 = vmul.f32 %v9891, %v10172
      %v10205 = vmul.f32 %v9895, %v10173
      %v10206 = vmul.f32 %v9897, %v10174
      %v10207 = vmul.f32 %v9899, %v10175
      %v10208 = vmul.f32 %v9901, %v10176
      %v10209 = vmul.f32 %v9905, %v10177
      %v10210 = vmul.f32 %v9907, %v10178
      %v10211 = vmul.f32 %v9909, %v10179
      %v10212 = vmul.f32 %v9911, %v10180
      %v10213 = vmul.f32 %v9915, %v10181
      %v10214 = vmul.f32 %v9917, %v10182
      %v10215 = vmul.f32 %v9919, %v10183
      %v10216 = vmul.f32 %v9921, %v10184
      %v10217 = vmul.f32 %v9925, %v10185
      %v10218 = vmul.f32 %v9927, %v10186
      %v10219 = vmul.f32 %v9929, %v10187
      %v10220 = vmul.f32 %v9931, %v10188
      %v10221 = vpack.c.bf16 %v10191, %v10189
      %v10222 = vpack.c.bf16 %v10192, %v10190
      %v10223 = vpack.c.bf16 %v10195, %v10193
      %v10224 = vpack.c.bf16 %v10196, %v10194
      %v10225 = vpack.c.bf16 %v10199, %v10197
      %v10226 = vpack.c.bf16 %v10200, %v10198
      %v10227 = vpack.c.bf16 %v10203, %v10201
      %v10228 = vpack.c.bf16 %v10204, %v10202
      %v10229 = vpack.c.bf16 %v10207, %v10205
      %v10230 = vpack.c.bf16 %v10208, %v10206
      %v10231 = vpack.c.bf16 %v10211, %v10209
      %v10232 = vpack.c.bf16 %v10212, %v10210
      %v10233 = vpack.c.bf16 %v10215, %v10213
      %v10234 = vpack.c.bf16 %v10216, %v10214
      %v10235 = vpack.c.bf16 %v10219, %v10217
      %v10236 = vpack.c.bf16 %v10220, %v10218
      %v10237 = vld [vmem:[%s35] sm:$0xf]
      %v10238 = vld [vmem:[%s35 + $0x4] sm:$0xf]
      %v10239 = vld [vmem:[%s35 + $0x8] sm:$0xf]
      %v10240 = vld [vmem:[%s35 + $0xc] sm:$0xf]
      %v10241 = vld [vmem:[%s35 + $0x10] sm:$0xf]
      %v10242 = vld [vmem:[%s35 + $0x14] sm:$0xf]
      %v10243 = vld [vmem:[%s35 + $0x18] sm:$0xf]
      %v10244 = vld [vmem:[%s35 + $0x1c] sm:$0xf]
      %v10245 = vld [vmem:[%s35 + $0x20] sm:$0xf]
      %v10246 = vld [vmem:[%s35 + $0x24] sm:$0xf]
      %v10247 = vld [vmem:[%s35 + $0x28] sm:$0xf]
      %v10248 = vld [vmem:[%s35 + $0x2c] sm:$0xf]
      %v10249 = vld [vmem:[%s35 + $0x30] sm:$0xf]
      %v10250 = vld [vmem:[%s35 + $0x34] sm:$0xf]
      %v10251 = vld [vmem:[%s35 + $0x38] sm:$0xf]
      %v10252 = vld [vmem:[%s35 + $0x3c] sm:$0xf]
      %v10253 = vld [vmem:[%s35 + $0x40] sm:$0xf]
      %v10254 = vld [vmem:[%s35 + $0x44] sm:$0xf]
      %v10255 = vld [vmem:[%s35 + $0x48] sm:$0xf]
      %v10256 = vld [vmem:[%s35 + $0x4c] sm:$0xf]
      %v10257 = vld [vmem:[%s35 + $0x50] sm:$0xf]
      %v10258 = vld [vmem:[%s35 + $0x54] sm:$0xf]
      %v10259 = vld [vmem:[%s35 + $0x58] sm:$0xf]
      %v10260 = vld [vmem:[%s35 + $0x5c] sm:$0xf]
      %v10261 = vld [vmem:[%s35 + $0x60] sm:$0xf]
      %v10262 = vld [vmem:[%s35 + $0x64] sm:$0xf]
      %v10263 = vld [vmem:[%s35 + $0x68] sm:$0xf]
      %v10264 = vld [vmem:[%s35 + $0x6c] sm:$0xf]
      %v10265 = vld [vmem:[%s35 + $0x70] sm:$0xf]
      %v10266 = vld [vmem:[%s35 + $0x74] sm:$0xf]
      %v10267 = vld [vmem:[%s35 + $0x78] sm:$0xf]
      %v10268 = vld [vmem:[%s35 + $0x7c] sm:$0xf]
      %v10269 = vld [vmem:[%s37] sm:$0x1]
      %v10271 = vlaneseq
      %v10272 = vshrl.u32 %v10271, 7
      %v10273 = vsub.s32 0, %v10272
      %v10274 = vrot.slane %v10269, %v10273
      %v10308 = vunpack.c.l.b16 %v10237
      %v10309 = vunpack.c.l.b16 %v10238
      %v10310 = vunpack.c.l.b16 %v10239
      %v10311 = vunpack.c.l.b16 %v10240
      %v10312 = vunpack.c.l.b16 %v10241
      %v10313 = vunpack.c.l.b16 %v10242
      %v10314 = vunpack.c.l.b16 %v10243
      %v10315 = vunpack.c.l.b16 %v10244
      %v10316 = vunpack.c.l.b16 %v10245
      %v10317 = vunpack.c.l.b16 %v10246
      %v10318 = vunpack.c.l.b16 %v10247
      %v10319 = vunpack.c.l.b16 %v10248
      %v10320 = vunpack.c.l.b16 %v10249
      %v10321 = vunpack.c.l.b16 %v10250
      %v10322 = vunpack.c.l.b16 %v10251
      %v10323 = vunpack.c.l.b16 %v10252
      %v10324 = vunpack.c.l.b16 %v10253
      %v10325 = vunpack.c.l.b16 %v10254
      %v10326 = vunpack.c.l.b16 %v10255
      %v10327 = vunpack.c.l.b16 %v10256
      %v10328 = vunpack.c.l.b16 %v10257
      %v10329 = vunpack.c.l.b16 %v10258
      %v10330 = vunpack.c.l.b16 %v10259
      %v10331 = vunpack.c.l.b16 %v10260
      %v10332 = vunpack.c.l.b16 %v10261
      %v10333 = vunpack.c.l.b16 %v10262
      %v10334 = vunpack.c.l.b16 %v10263
      %v10335 = vunpack.c.l.b16 %v10264
      %v10336 = vunpack.c.l.b16 %v10265
      %v10337 = vunpack.c.l.b16 %v10266
      %v10338 = vunpack.c.l.b16 %v10267
      %v10339 = vunpack.c.l.b16 %v10268
      %v10340 = vpack.c.b16 %v10309, %v10308
      %v10341 = vpack.c.b16 %v10311, %v10310
      %v10342 = vpack.c.b16 %v10313, %v10312
      %v10343 = vpack.c.b16 %v10315, %v10314
      %v10344 = vpack.c.b16 %v10317, %v10316
      %v10345 = vpack.c.b16 %v10319, %v10318
      %v10346 = vpack.c.b16 %v10321, %v10320
      %v10347 = vpack.c.b16 %v10323, %v10322
      %v10348 = vpack.c.b16 %v10325, %v10324
      %v10349 = vpack.c.b16 %v10327, %v10326
      %v10350 = vpack.c.b16 %v10329, %v10328
      %v10351 = vpack.c.b16 %v10331, %v10330
      %v10352 = vpack.c.b16 %v10333, %v10332
      %v10353 = vpack.c.b16 %v10335, %v10334
      %v10354 = vpack.c.b16 %v10337, %v10336
      %v10355 = vpack.c.b16 %v10339, %v10338
      %10372 = vmatprep.subr.bf16.mxu0 0
      %10373 = vmatpush1.bf16.msra.mxu0 %v10347
      %10374 = vmatprep.subr.bf16.mxu0 0
      %10375 = vmatpush1.bf16.msra.mxu0 %v10346
      %10376 = vmatprep.subr.bf16.mxu0 0
      %10377 = vmatpush1.bf16.msra.mxu0 %v10345
      %10378 = vmatprep.subr.bf16.mxu0 0
      %10379 = vmatpush1.bf16.msra.mxu0 %v10344
      %10380 = vmatprep.subr.bf16.mxu0 0
      %10381 = vmatpush1.bf16.msra.mxu0 %v10343
      %10382 = vmatprep.subr.bf16.mxu0 0
      %10383 = vmatpush1.bf16.msra.mxu0 %v10342
      %10384 = vmatprep.subr.bf16.mxu0 0
      %10385 = vmatpush1.bf16.msra.mxu0 %v10341
      %10386 = vmatprep.subr.bf16.mxu0 0
      %10387 = vmatpush1.bf16.msra.mxu0 %v10340
      %10388 = vmatprep.subr.bf16.mxu0 0
      %10389 = vmatpush2.bf16.msra.mxu0 %v10355
      %10390 = vmatprep.subr.bf16.mxu0 0
      %10391 = vmatpush2.bf16.msra.mxu0 %v10354
      %10392 = vmatprep.subr.bf16.mxu0 0
      %10393 = vmatpush2.bf16.msra.mxu0 %v10353
      %10394 = vmatprep.subr.bf16.mxu0 0
      %10395 = vmatpush2.bf16.msra.mxu0 %v10352
      %10396 = vmatprep.subr.bf16.mxu0 0
      %10397 = vmatpush2.bf16.msra.mxu0 %v10351
      %10398 = vmatprep.subr.bf16.mxu0 0
      %10399 = vmatpush2.bf16.msra.mxu0 %v10350
      %10400 = vmatprep.subr.bf16.mxu0 0
      %10401 = vmatpush2.bf16.msra.mxu0 %v10349
      %10402 = vmatprep.subr.bf16.mxu0 0
      %10403 = vmatpush2.bf16.msra.mxu0 %v10348
      %10404 = vmatprep.mubr.bf16.mxu0 %v10222
      %10405 = vmatmul.mubr.bf16.gmra.mxu0 %v10221
      %v10406 = vpop.f32.mrf.mxu0
      %v10407 = vadd.f32 %v10274, %v10406
      %v10408 = vpop.f32.mrf.mxu0
      %v10409 = vpop.f32.mrf.mxu0
      %v10410 = vadd.f32 %v10274, %v10409
      %v10411 = vpop.f32.mrf.mxu0
      %10412 = vmatprep.mubr.bf16.mxu0 %v10224
      %10413 = vmatmul.mubr.bf16.gmra.mxu0 %v10223
      %v10414 = vpop.f32.mrf.mxu0
      %v10415 = vadd.f32 %v10274, %v10414
      %v10416 = vpop.f32.mrf.mxu0
      %v10417 = vpop.f32.mrf.mxu0
      %v10418 = vadd.f32 %v10274, %v10417
      %v10419 = vpop.f32.mrf.mxu0
      %10420 = vmatprep.mubr.bf16.mxu0 %v10226
      %10421 = vmatmul.mubr.bf16.gmra.mxu0 %v10225
      %v10422 = vpop.f32.mrf.mxu0
      %v10423 = vadd.f32 %v10274, %v10422
      %v10424 = vpop.f32.mrf.mxu0
      %v10425 = vpop.f32.mrf.mxu0
      %v10426 = vadd.f32 %v10274, %v10425
      %v10427 = vpop.f32.mrf.mxu0
      %10428 = vmatprep.mubr.bf16.mxu0 %v10228
      %10429 = vmatmul.mubr.bf16.gmra.mxu0 %v10227
      %v10430 = vpop.f32.mrf.mxu0
      %v10431 = vadd.f32 %v10274, %v10430
      %v10432 = vpop.f32.mrf.mxu0
      %v10433 = vpop.f32.mrf.mxu0
      %v10434 = vadd.f32 %v10274, %v10433
      %v10435 = vpop.f32.mrf.mxu0
      %10436 = vmatprep.mubr.bf16.mxu0 %v10230
      %10437 = vmatmul.mubr.bf16.gmra.mxu0 %v10229
      %v10438 = vpop.f32.mrf.mxu0
      %v10439 = vadd.f32 %v10274, %v10438
      %v10440 = vpop.f32.mrf.mxu0
      %v10441 = vpop.f32.mrf.mxu0
      %v10442 = vadd.f32 %v10274, %v10441
      %v10443 = vpop.f32.mrf.mxu0
      %10444 = vmatprep.mubr.bf16.mxu0 %v10232
      %10445 = vmatmul.mubr.bf16.gmra.mxu0 %v10231
      %v10446 = vpop.f32.mrf.mxu0
      %v10447 = vadd.f32 %v10274, %v10446
      %v10448 = vpop.f32.mrf.mxu0
      %v10449 = vpop.f32.mrf.mxu0
      %v10450 = vadd.f32 %v10274, %v10449
      %v10451 = vpop.f32.mrf.mxu0
      %10452 = vmatprep.mubr.bf16.mxu0 %v10234
      %10453 = vmatmul.mubr.bf16.gmra.mxu0 %v10233
      %v10454 = vpop.f32.mrf.mxu0
      %v10455 = vadd.f32 %v10274, %v10454
      %v10456 = vpop.f32.mrf.mxu0
      %v10457 = vpop.f32.mrf.mxu0
      %v10458 = vadd.f32 %v10274, %v10457
      %v10459 = vpop.f32.mrf.mxu0
      %10460 = vmatprep.mubr.bf16.mxu0 %v10236
      %10461 = vmatmul.mubr.bf16.gmra.mxu0 %v10235
      %v10462 = vpop.f32.mrf.mxu0
      %v10463 = vadd.f32 %v10274, %v10462
      %v10464 = vpop.f32.mrf.mxu0
      %v10465 = vpop.f32.mrf.mxu0
      %v10466 = vadd.f32 %v10274, %v10465
      %v10467 = vpop.f32.mrf.mxu0
      %10468 = vdwg.mxu0
      %v10469 = vadd.f32 %v9712, %v10407
      %v10470 = vadd.f32 %v9713, %v10410
      %v10471 = vadd.f32 %v9714, %v10415
      %v10472 = vadd.f32 %v9715, %v10418
      %v10473 = vadd.f32 %v9716, %v10423
      %v10474 = vadd.f32 %v9717, %v10426
      %v10475 = vadd.f32 %v9718, %v10431
      %v10476 = vadd.f32 %v9719, %v10434
      %v10477 = vadd.f32 %v9720, %v10439
      %v10478 = vadd.f32 %v9721, %v10442
      %v10479 = vadd.f32 %v9722, %v10447
      %v10480 = vadd.f32 %v9723, %v10450
      %v10481 = vadd.f32 %v9724, %v10455
      %v10482 = vadd.f32 %v9725, %v10458
      %v10483 = vadd.f32 %v9726, %v10463
      %v10484 = vadd.f32 %v9727, %v10466
      %v10485 = vld [vmem:[%s39] sm:$0x1]
      %v10486 = vld [vmem:[%s41] sm:$0x1]
      %v10487 = vsel %vm997, %v10469, 0.0
      %10488 = vadd.xlane.f32.xlu0 %v10487
      %v10489 = vpop.xlane.xlu0 %10488
      %v10490 = vsel %vm997, %v10470, 0.0
      %10491 = vadd.xlane.f32.xlu0 %v10490
      %v10492 = vpop.xlane.xlu0 %10491
      %v10493 = vsel %vm997, %v10471, 0.0
      %10494 = vadd.xlane.f32.xlu0 %v10493
      %v10495 = vpop.xlane.xlu0 %10494
      %v10496 = vsel %vm997, %v10472, 0.0
      %10497 = vadd.xlane.f32.xlu0 %v10496
      %v10498 = vpop.xlane.xlu0 %10497
      %v10499 = vsel %vm997, %v10473, 0.0
      %10500 = vadd.xlane.f32.xlu0 %v10499
      %v10501 = vpop.xlane.xlu0 %10500
      %v10502 = vsel %vm997, %v10474, 0.0
      %10503 = vadd.xlane.f32.xlu0 %v10502
      %v10504 = vpop.xlane.xlu0 %10503
      %v10505 = vsel %vm997, %v10475, 0.0
      %10506 = vadd.xlane.f32.xlu0 %v10505
      %v10507 = vpop.xlane.xlu0 %10506
      %v10508 = vsel %vm997, %v10476, 0.0
      %10509 = vadd.xlane.f32.xlu0 %v10508
      %v10510 = vpop.xlane.xlu0 %10509
      %v10511 = vsel %vm997, %v10477, 0.0
      %10512 = vadd.xlane.f32.xlu0 %v10511
      %v10513 = vpop.xlane.xlu0 %10512
      %v10514 = vsel %vm997, %v10478, 0.0
      %10515 = vadd.xlane.f32.xlu0 %v10514
      %v10516 = vpop.xlane.xlu0 %10515
      %v10517 = vsel %vm997, %v10479, 0.0
      %10518 = vadd.xlane.f32.xlu0 %v10517
      %v10519 = vpop.xlane.xlu0 %10518
      %v10520 = vsel %vm997, %v10480, 0.0
      %10521 = vadd.xlane.f32.xlu0 %v10520
      %v10522 = vpop.xlane.xlu0 %10521
      %v10523 = vsel %vm997, %v10481, 0.0
      %10524 = vadd.xlane.f32.xlu0 %v10523
      %v10525 = vpop.xlane.xlu0 %10524
      %v10526 = vsel %vm997, %v10482, 0.0
      %10527 = vadd.xlane.f32.xlu0 %v10526
      %v10528 = vpop.xlane.xlu0 %10527
      %v10529 = vsel %vm997, %v10483, 0.0
      %10530 = vadd.xlane.f32.xlu0 %v10529
      %v10531 = vpop.xlane.xlu0 %10530
      %v10532 = vsel %vm997, %v10484, 0.0
      %10533 = vadd.xlane.f32.xlu0 %v10532
      %v10534 = vpop.xlane.xlu0 %10533
      %v10535 = vmul.f32 %v10489, %v1046
      %v10536 = vmul.f32 %v10492, %v1046
      %v10537 = vmul.f32 %v10495, %v1046
      %v10538 = vmul.f32 %v10498, %v1046
      %v10539 = vmul.f32 %v10501, %v1046
      %v10540 = vmul.f32 %v10504, %v1046
      %v10541 = vmul.f32 %v10507, %v1046
      %v10542 = vmul.f32 %v10510, %v1046
      %v10543 = vmul.f32 %v10513, %v1046
      %v10544 = vmul.f32 %v10516, %v1046
      %v10545 = vmul.f32 %v10519, %v1046
      %v10546 = vmul.f32 %v10522, %v1046
      %v10547 = vmul.f32 %v10525, %v1046
      %v10548 = vmul.f32 %v10528, %v1046
      %v10549 = vmul.f32 %v10531, %v1046
      %v10550 = vmul.f32 %v10534, %v1046
      %v10551 = vsub.f32 %v10469, %v10535
      %v10552 = vsub.f32 %v10470, %v10536
      %v10553 = vsub.f32 %v10471, %v10537
      %v10554 = vsub.f32 %v10472, %v10538
      %v10555 = vsub.f32 %v10473, %v10539
      %v10556 = vsub.f32 %v10474, %v10540
      %v10557 = vsub.f32 %v10475, %v10541
      %v10558 = vsub.f32 %v10476, %v10542
      %v10559 = vsub.f32 %v10477, %v10543
      %v10560 = vsub.f32 %v10478, %v10544
      %v10561 = vsub.f32 %v10479, %v10545
      %v10562 = vsub.f32 %v10480, %v10546
      %v10563 = vsub.f32 %v10481, %v10547
      %v10564 = vsub.f32 %v10482, %v10548
      %v10565 = vsub.f32 %v10483, %v10549
      %v10566 = vsub.f32 %v10484, %v10550
      %v10567 = vmul.f32 %v10551, %v10551
      %v10568 = vmul.f32 %v10552, %v10552
      %v10569 = vmul.f32 %v10553, %v10553
      %v10570 = vmul.f32 %v10554, %v10554
      %v10571 = vmul.f32 %v10555, %v10555
      %v10572 = vmul.f32 %v10556, %v10556
      %v10573 = vmul.f32 %v10557, %v10557
      %v10574 = vmul.f32 %v10558, %v10558
      %v10575 = vmul.f32 %v10559, %v10559
      %v10576 = vmul.f32 %v10560, %v10560
      %v10577 = vmul.f32 %v10561, %v10561
      %v10578 = vmul.f32 %v10562, %v10562
      %v10579 = vmul.f32 %v10563, %v10563
      %v10580 = vmul.f32 %v10564, %v10564
      %v10581 = vmul.f32 %v10565, %v10565
      %v10582 = vmul.f32 %v10566, %v10566
      %v10583 = vsel %vm997, %v10567, 0.0
      %10584 = vadd.xlane.f32.xlu0 %v10583
      %v10585 = vpop.xlane.xlu0 %10584
      %v10586 = vsel %vm997, %v10568, 0.0
      %10587 = vadd.xlane.f32.xlu0 %v10586
      %v10588 = vpop.xlane.xlu0 %10587
      %v10589 = vsel %vm997, %v10569, 0.0
      %10590 = vadd.xlane.f32.xlu0 %v10589
      %v10591 = vpop.xlane.xlu0 %10590
      %v10592 = vsel %vm997, %v10570, 0.0
      %10593 = vadd.xlane.f32.xlu0 %v10592
      %v10594 = vpop.xlane.xlu0 %10593
      %v10595 = vsel %vm997, %v10571, 0.0
      %10596 = vadd.xlane.f32.xlu0 %v10595
      %v10597 = vpop.xlane.xlu0 %10596
      %v10598 = vsel %vm997, %v10572, 0.0
      %10599 = vadd.xlane.f32.xlu0 %v10598
      %v10600 = vpop.xlane.xlu0 %10599
      %v10601 = vsel %vm997, %v10573, 0.0
      %10602 = vadd.xlane.f32.xlu0 %v10601
      %v10603 = vpop.xlane.xlu0 %10602
      %v10604 = vsel %vm997, %v10574, 0.0
      %10605 = vadd.xlane.f32.xlu0 %v10604
      %v10606 = vpop.xlane.xlu0 %10605
      %v10607 = vsel %vm997, %v10575, 0.0
      %10608 = vadd.xlane.f32.xlu0 %v10607
      %v10609 = vpop.xlane.xlu0 %10608
      %v10610 = vsel %vm997, %v10576, 0.0
      %10611 = vadd.xlane.f32.xlu0 %v10610
      %v10612 = vpop.xlane.xlu0 %10611
      %v10613 = vsel %vm997, %v10577, 0.0
      %10614 = vadd.xlane.f32.xlu0 %v10613
      %v10615 = vpop.xlane.xlu0 %10614
      %v10616 = vsel %vm997, %v10578, 0.0
      %10617 = vadd.xlane.f32.xlu0 %v10616
      %v10618 = vpop.xlane.xlu0 %10617
      %v10619 = vsel %vm997, %v10579, 0.0
      %10620 = vadd.xlane.f32.xlu0 %v10619
      %v10621 = vpop.xlane.xlu0 %10620
      %v10622 = vsel %vm997, %v10580, 0.0
      %10623 = vadd.xlane.f32.xlu0 %v10622
      %v10624 = vpop.xlane.xlu0 %10623
      %v10625 = vsel %vm997, %v10581, 0.0
      %10626 = vadd.xlane.f32.xlu0 %v10625
      %v10627 = vpop.xlane.xlu0 %10626
      %v10628 = vsel %vm997, %v10582, 0.0
      %10629 = vadd.xlane.f32.xlu0 %v10628
      %v10630 = vpop.xlane.xlu0 %10629
      %v10631 = vmul.f32 %v10585, %v1046
      %v10632 = vmul.f32 %v10588, %v1046
      %v10633 = vmul.f32 %v10591, %v1046
      %v10634 = vmul.f32 %v10594, %v1046
      %v10635 = vmul.f32 %v10597, %v1046
      %v10636 = vmul.f32 %v10600, %v1046
      %v10637 = vmul.f32 %v10603, %v1046
      %v10638 = vmul.f32 %v10606, %v1046
      %v10639 = vmul.f32 %v10609, %v1046
      %v10640 = vmul.f32 %v10612, %v1046
      %v10641 = vmul.f32 %v10615, %v1046
      %v10642 = vmul.f32 %v10618, %v1046
      %v10643 = vmul.f32 %v10621, %v1046
      %v10644 = vmul.f32 %v10624, %v1046
      %v10645 = vmul.f32 %v10627, %v1046
      %v10646 = vmul.f32 %v10630, %v1046
      %v10647 = vadd.f32 %v10631, 1e-05
      %v10648 = vadd.f32 %v10632, 1e-05
      %v10649 = vadd.f32 %v10633, 1e-05
      %v10650 = vadd.f32 %v10634, 1e-05
      %v10651 = vadd.f32 %v10635, 1e-05
      %v10652 = vadd.f32 %v10636, 1e-05
      %v10653 = vadd.f32 %v10637, 1e-05
      %v10654 = vadd.f32 %v10638, 1e-05
      %v10655 = vadd.f32 %v10639, 1e-05
      %v10656 = vadd.f32 %v10640, 1e-05
      %v10657 = vadd.f32 %v10641, 1e-05
      %v10658 = vadd.f32 %v10642, 1e-05
      %v10659 = vadd.f32 %v10643, 1e-05
      %v10660 = vadd.f32 %v10644, 1e-05
      %v10661 = vadd.f32 %v10645, 1e-05
      %v10662 = vadd.f32 %v10646, 1e-05
      %v10663 = vrsqrt.pop %v10647
      %v10664 = vrsqrt.pop %v10648
      %v10665 = vrsqrt.pop %v10649
      %v10666 = vrsqrt.pop %v10650
      %v10667 = vrsqrt.pop %v10651
      %v10668 = vrsqrt.pop %v10652
      %v10669 = vrsqrt.pop %v10653
      %v10670 = vrsqrt.pop %v10654
      %v10671 = vrsqrt.pop %v10655
      %v10672 = vrsqrt.pop %v10656
      %v10673 = vrsqrt.pop %v10657
      %v10674 = vrsqrt.pop %v10658
      %v10675 = vrsqrt.pop %v10659
      %v10676 = vrsqrt.pop %v10660
      %v10677 = vrsqrt.pop %v10661
      %v10678 = vrsqrt.pop %v10662
      %v10679 = vmul.f32 %v10551, %v10663
      %v10680 = vmul.f32 %v10552, %v10664
      %v10681 = vmul.f32 %v10553, %v10665
      %v10682 = vmul.f32 %v10554, %v10666
      %v10683 = vmul.f32 %v10555, %v10667
      %v10684 = vmul.f32 %v10556, %v10668
      %v10685 = vmul.f32 %v10557, %v10669
      %v10686 = vmul.f32 %v10558, %v10670
      %v10687 = vmul.f32 %v10559, %v10671
      %v10688 = vmul.f32 %v10560, %v10672
      %v10689 = vmul.f32 %v10561, %v10673
      %v10690 = vmul.f32 %v10562, %v10674
      %v10691 = vmul.f32 %v10563, %v10675
      %v10692 = vmul.f32 %v10564, %v10676
      %v10693 = vmul.f32 %v10565, %v10677
      %v10694 = vmul.f32 %v10566, %v10678
      %v10696 = vlaneseq
      %v10697 = vshrl.u32 %v10696, 7
      %v10698 = vsub.s32 0, %v10697
      %v10699 = vrot.slane %v10485, %v10698
      %v10701 = vmul.f32 %v10679, %v10699
      %v10702 = vmul.f32 %v10680, %v10699
      %v10703 = vmul.f32 %v10681, %v10699
      %v10704 = vmul.f32 %v10682, %v10699
      %v10705 = vmul.f32 %v10683, %v10699
      %v10706 = vmul.f32 %v10684, %v10699
      %v10707 = vmul.f32 %v10685, %v10699
      %v10708 = vmul.f32 %v10686, %v10699
      %v10709 = vmul.f32 %v10687, %v10699
      %v10710 = vmul.f32 %v10688, %v10699
      %v10711 = vmul.f32 %v10689, %v10699
      %v10712 = vmul.f32 %v10690, %v10699
      %v10713 = vmul.f32 %v10691, %v10699
      %v10714 = vmul.f32 %v10692, %v10699
      %v10715 = vmul.f32 %v10693, %v10699
      %v10716 = vmul.f32 %v10694, %v10699
      %v10718 = vlaneseq
      %v10719 = vshrl.u32 %v10718, 7
      %v10720 = vsub.s32 0, %v10719
      %v10721 = vrot.slane %v10486, %v10720
      %v10723 = vadd.f32 %v10701, %v10721
      %v10724 = vadd.f32 %v10702, %v10721
      %v10725 = vadd.f32 %v10703, %v10721
      %v10726 = vadd.f32 %v10704, %v10721
      %v10727 = vadd.f32 %v10705, %v10721
      %v10728 = vadd.f32 %v10706, %v10721
      %v10729 = vadd.f32 %v10707, %v10721
      %v10730 = vadd.f32 %v10708, %v10721
      %v10731 = vadd.f32 %v10709, %v10721
      %v10732 = vadd.f32 %v10710, %v10721
      %v10733 = vadd.f32 %v10711, %v10721
      %v10734 = vadd.f32 %v10712, %v10721
      %v10735 = vadd.f32 %v10713, %v10721
      %v10736 = vadd.f32 %v10714, %v10721
      %v10737 = vadd.f32 %v10715, %v10721
      %v10738 = vadd.f32 %v10716, %v10721
      %v10739 = vld [vmem:[%s970] sm:$0xff]
      %v10740 = vld [vmem:[%s970 + $0x8] sm:$0xff]
      %v10741 = vpack.c.bf16 %v10740, %v10739
      %v10742 = vld [vmem:[%s43] sm:$0xf]
      %v10743 = vld [vmem:[%s43 + $0x4] sm:$0xf]
      %v10744 = vld [vmem:[%s43 + $0x8] sm:$0xf]
      %v10745 = vld [vmem:[%s43 + $0xc] sm:$0xf]
      %v10746 = vld [vmem:[%s45] sm:$0x1]
      %v10748 = vlaneseq
      %v10749 = vshrl.u32 %v10748, 7
      %v10750 = vsub.s32 0, %v10749
      %v10751 = vrot.slane %v10746, %v10750
      %v10757 = vunpack.c.l.b16 %v10742
      %v10758 = vunpack.c.l.b16 %v10743
      %v10759 = vunpack.c.l.b16 %v10744
      %v10760 = vunpack.c.l.b16 %v10745
      %v10761 = vpack.c.b16 %v10758, %v10757
      %v10762 = vpack.c.b16 %v10760, %v10759
      %v10766 = vsel %vm9256, %v10741, 0
      %10768 = vmatprep.subr.bf16.mxu0 0
      %10769 = vmatpush1.bf16.msra.mxu0 0
      %10770 = vmatprep.subr.bf16.mxu0 0
      %10771 = vmatpush1.bf16.msra.mxu0 0
      %10772 = vmatprep.subr.bf16.mxu0 0
      %10773 = vmatpush1.bf16.msra.mxu0 0
      %10774 = vmatprep.subr.bf16.mxu0 0
      %10775 = vmatpush1.bf16.msra.mxu0 0
      %10776 = vmatprep.subr.bf16.mxu0 0
      %10777 = vmatpush1.bf16.msra.mxu0 0
      %10778 = vmatprep.subr.bf16.mxu0 0
      %10779 = vmatpush1.bf16.msra.mxu0 0
      %10780 = vmatprep.subr.bf16.mxu0 0
      %10781 = vmatpush1.bf16.msra.mxu0 %v10762
      %10782 = vmatprep.subr.bf16.mxu0 0
      %10783 = vmatpush1.bf16.msra.mxu0 %v10761
      %10784 = vmatprep.subr.bf16.mxu0 0
      %10785 = vmatpush2.bf16.msra.mxu0 0
      %10786 = vmatprep.subr.bf16.mxu0 0
      %10787 = vmatpush2.bf16.msra.mxu0 0
      %10788 = vmatprep.subr.bf16.mxu0 0
      %10789 = vmatpush2.bf16.msra.mxu0 0
      %10790 = vmatprep.subr.bf16.mxu0 0
      %10791 = vmatpush2.bf16.msra.mxu0 0
      %10792 = vmatprep.subr.bf16.mxu0 0
      %10793 = vmatpush2.bf16.msra.mxu0 0
      %10794 = vmatprep.subr.bf16.mxu0 0
      %10795 = vmatpush2.bf16.msra.mxu0 0
      %10796 = vmatprep.subr.bf16.mxu0 0
      %10797 = vmatpush2.bf16.msra.mxu0 0
      %10798 = vmatprep.subr.bf16.mxu0 0
      %10799 = vmatpush2.bf16.msra.mxu0 0
      %10800 = vmatprep.mubr.bf16.mxu0 0
      %10801 = vmatmul.mubr.bf16.gmra.mxu0 %v10766
      %v10802 = vpop.f32.mrf.mxu0
      %v10803 = vadd.f32 %v10751, %v10802
      %v10804 = vpop.f32.mrf.mxu0
      %v10805 = vpop.f32.mrf.mxu0
      %v10806 = vadd.f32 %v10751, %v10805
      %v10807 = vpop.f32.mrf.mxu0
      %10808 = vdwg.mxu0
      %v10809 = vmax.f32 %v10803, 0.0
      %v10810 = vmax.f32 %v10806, 0.0
      %v10811 = vpack.c.bf16 %v10723, %v10723
      %v10812 = vpack.c.bf16 %v10724, %v10724
      %v10813 = vpack.c.bf16 %v10725, %v10725
      %v10814 = vpack.c.bf16 %v10726, %v10726
      %v10815 = vpack.c.bf16 %v10727, %v10727
      %v10816 = vpack.c.bf16 %v10728, %v10728
      %v10817 = vpack.c.bf16 %v10729, %v10729
      %v10818 = vpack.c.bf16 %v10730, %v10730
      %v10819 = vpack.c.bf16 %v10731, %v10731
      %v10820 = vpack.c.bf16 %v10732, %v10732
      %v10821 = vpack.c.bf16 %v10733, %v10733
      %v10822 = vpack.c.bf16 %v10734, %v10734
      %v10823 = vpack.c.bf16 %v10735, %v10735
      %v10824 = vpack.c.bf16 %v10736, %v10736
      %v10825 = vpack.c.bf16 %v10737, %v10737
      %v10826 = vpack.c.bf16 %v10738, %v10738
      %v10827 = vld [vmem:[%s47] sm:$0xff]
      %v10828 = vld [vmem:[%s47 + $0x8] sm:$0xff]
      %v10829 = vld [vmem:[%s47 + $0x10] sm:$0xff]
      %v10830 = vld [vmem:[%s47 + $0x18] sm:$0xff]
      %v10831 = vld [vmem:[%s47 + $0x20] sm:$0xff]
      %v10832 = vld [vmem:[%s47 + $0x28] sm:$0xff]
      %v10833 = vld [vmem:[%s47 + $0x30] sm:$0xff]
      %v10834 = vld [vmem:[%s47 + $0x38] sm:$0xff]
      %v10835 = vpack.c.bf16 %v10810, %v10809
      %v10836 = vld [vmem:[%s49] sm:$0xff]
      %v10837 = vld [vmem:[%s49 + $0x8] sm:$0xff]
      %v10838 = vld [vmem:[%s49 + $0x10] sm:$0xff]
      %v10839 = vld [vmem:[%s49 + $0x18] sm:$0xff]
      %v10840 = vld [vmem:[%s49 + $0x20] sm:$0xff]
      %v10841 = vld [vmem:[%s49 + $0x28] sm:$0xff]
      %v10842 = vld [vmem:[%s49 + $0x30] sm:$0xff]
      %v10843 = vld [vmem:[%s49 + $0x38] sm:$0xff]
      %v10844 = vld [vmem:[%s49 + $0x40] sm:$0xff]
      %v10845 = vld [vmem:[%s49 + $0x48] sm:$0xff]
      %v10846 = vld [vmem:[%s49 + $0x50] sm:$0xff]
      %v10847 = vld [vmem:[%s49 + $0x58] sm:$0xff]
      %v10848 = vld [vmem:[%s49 + $0x60] sm:$0xff]
      %v10849 = vld [vmem:[%s49 + $0x68] sm:$0xff]
      %v10850 = vld [vmem:[%s49 + $0x70] sm:$0xff]
      %v10851 = vld [vmem:[%s49 + $0x78] sm:$0xff]
      %v10868 = vunpack.c.l.b16 %v10836
      %v10869 = vunpack.c.h.b16 %v10836
      %v10870 = vunpack.c.l.b16 %v10837
      %v10871 = vunpack.c.h.b16 %v10837
      %v10872 = vunpack.c.l.b16 %v10838
      %v10873 = vunpack.c.h.b16 %v10838
      %v10874 = vunpack.c.l.b16 %v10839
      %v10875 = vunpack.c.h.b16 %v10839
      %v10876 = vunpack.c.l.b16 %v10840
      %v10877 = vunpack.c.h.b16 %v10840
      %v10878 = vunpack.c.l.b16 %v10841
      %v10879 = vunpack.c.h.b16 %v10841
      %v10880 = vunpack.c.l.b16 %v10842
      %v10881 = vunpack.c.h.b16 %v10842
      %v10882 = vunpack.c.l.b16 %v10843
      %v10883 = vunpack.c.h.b16 %v10843
      %v10884 = vunpack.c.l.b16 %v10844
      %v10885 = vunpack.c.h.b16 %v10844
      %v10886 = vunpack.c.l.b16 %v10845
      %v10887 = vunpack.c.h.b16 %v10845
      %v10888 = vunpack.c.l.b16 %v10846
      %v10889 = vunpack.c.h.b16 %v10846
      %v10890 = vunpack.c.l.b16 %v10847
      %v10891 = vunpack.c.h.b16 %v10847
      %v10892 = vunpack.c.l.b16 %v10848
      %v10893 = vunpack.c.h.b16 %v10848
      %v10894 = vunpack.c.l.b16 %v10849
      %v10895 = vunpack.c.h.b16 %v10849
      %v10896 = vunpack.c.l.b16 %v10850
      %v10897 = vunpack.c.h.b16 %v10850
      %v10898 = vunpack.c.l.b16 %v10851
      %v10899 = vunpack.c.h.b16 %v10851
      %v10900 = vpack.c.b16 %v10870, %v10868
      %v10901 = vpack.c.b16 %v10871, %v10869
      %v10902 = vpack.c.b16 %v10874, %v10872
      %v10903 = vpack.c.b16 %v10875, %v10873
      %v10904 = vpack.c.b16 %v10878, %v10876
      %v10905 = vpack.c.b16 %v10879, %v10877
      %v10906 = vpack.c.b16 %v10882, %v10880
      %v10907 = vpack.c.b16 %v10883, %v10881
      %v10908 = vpack.c.b16 %v10886, %v10884
      %v10909 = vpack.c.b16 %v10887, %v10885
      %v10910 = vpack.c.b16 %v10890, %v10888
      %v10911 = vpack.c.b16 %v10891, %v10889
      %v10912 = vpack.c.b16 %v10894, %v10892
      %v10913 = vpack.c.b16 %v10895, %v10893
      %v10914 = vpack.c.b16 %v10898, %v10896
      %v10915 = vpack.c.b16 %v10899, %v10897
      %10932 = vmatprep.subr.bf16.mxu0 %v10915
      %10933 = vmatpush1.bf16.msra.mxu0 %v10914
      %10934 = vmatprep.subr.bf16.mxu0 %v10913
      %10935 = vmatpush1.bf16.msra.mxu0 %v10912
      %10936 = vmatprep.subr.bf16.mxu0 %v10911
      %10937 = vmatpush1.bf16.msra.mxu0 %v10910
      %10938 = vmatprep.subr.bf16.mxu0 %v10909
      %10939 = vmatpush1.bf16.msra.mxu0 %v10908
      %10940 = vmatprep.subr.bf16.mxu0 %v10907
      %10941 = vmatpush1.bf16.msra.mxu0 %v10906
      %10942 = vmatprep.subr.bf16.mxu0 %v10905
      %10943 = vmatpush1.bf16.msra.mxu0 %v10904
      %10944 = vmatprep.subr.bf16.mxu0 %v10903
      %10945 = vmatpush1.bf16.msra.mxu0 %v10902
      %10946 = vmatprep.subr.bf16.mxu0 %v10901
      %10947 = vmatpush1.bf16.msra.mxu0 %v10900
      %10948 = vmatprep.subr.bf16.mxu0 0
      %10949 = vmatpush2.bf16.msra.mxu0 0
      %10950 = vmatprep.subr.bf16.mxu0 0
      %10951 = vmatpush2.bf16.msra.mxu0 0
      %10952 = vmatprep.subr.bf16.mxu0 0
      %10953 = vmatpush2.bf16.msra.mxu0 0
      %10954 = vmatprep.subr.bf16.mxu0 0
      %10955 = vmatpush2.bf16.msra.mxu0 0
      %10956 = vmatprep.subr.bf16.mxu0 0
      %10957 = vmatpush2.bf16.msra.mxu0 0
      %10958 = vmatprep.subr.bf16.mxu0 0
      %10959 = vmatpush2.bf16.msra.mxu0 0
      %10960 = vmatprep.subr.bf16.mxu0 0
      %10961 = vmatpush2.bf16.msra.mxu0 0
      %10962 = vmatprep.subr.bf16.mxu0 0
      %10963 = vmatpush2.bf16.msra.mxu0 0
      %10964 = vmatprep.mubr.bf16.mxu0 0
      %10965 = vmatmul.mubr.bf16.gmra.mxu0 %v10835
      %v10966 = vpop.f32.mrf.mxu0
      %v10967 = vadd.f32 0.0, %v10966
      %v10968 = vpop.f32.mrf.mxu0
      %v10969 = vadd.f32 0.0, %v10968
      %v10970 = vpop.f32.mrf.mxu0
      %v10971 = vadd.f32 0.0, %v10970
      %v10972 = vpop.f32.mrf.mxu0
      %v10973 = vadd.f32 0.0, %v10972
      %10974 = vdwg.mxu0
      %v10991 = vunpack.c.l.b16 %v10811
      %v10992 = vunpack.c.l.b16 %v10812
      %v10993 = vunpack.c.l.b16 %v10813
      %v10994 = vunpack.c.l.b16 %v10814
      %v10995 = vunpack.c.l.b16 %v10815
      %v10996 = vunpack.c.l.b16 %v10816
      %v10997 = vunpack.c.l.b16 %v10817
      %v10998 = vunpack.c.l.b16 %v10818
      %v10999 = vunpack.c.l.b16 %v10819
      %v11000 = vunpack.c.l.b16 %v10820
      %v11001 = vunpack.c.l.b16 %v10821
      %v11002 = vunpack.c.l.b16 %v10822
      %v11003 = vunpack.c.l.b16 %v10823
      %v11004 = vunpack.c.l.b16 %v10824
      %v11005 = vunpack.c.l.b16 %v10825
      %v11006 = vunpack.c.l.b16 %v10826
      %v11007 = vrot.slane %v10992, 7
      %vm11008 = vcmask 1041409
      %v11009 = vsel %vm11008, %v11007, %v10991
      %v11010 = vrot.slane %v10993, 6
      %vm11011 = vcmask 1042434
      %v11012 = vsel %vm11011, %v11010, %v11009
      %v11013 = vrot.slane %v10994, 5
      %vm11014 = vcmask 1043459
      %v11015 = vsel %vm11014, %v11013, %v11012
      %v11016 = vrot.slane %v10995, 4
      %vm11017 = vcmask 1044484
      %v11018 = vsel %vm11017, %v11016, %v11015
      %v11019 = vrot.slane %v10996, 3
      %vm11020 = vcmask 1045509
      %v11021 = vsel %vm11020, %v11019, %v11018
      %v11022 = vrot.slane %v10997, 2
      %vm11023 = vcmask 1046534
      %v11024 = vsel %vm11023, %v11022, %v11021
      %v11025 = vrot.slane %v10998, 1
      %vm11026 = vcmask 1047559
      %v11027 = vsel %vm11026, %v11025, %v11024
      %v11028 = vrot.slane %v11000, 7
      %v11029 = vsel %vm11008, %v11028, %v10999
      %v11030 = vrot.slane %v11001, 6
      %v11031 = vsel %vm11011, %v11030, %v11029
      %v11032 = vrot.slane %v11002, 5
      %v11033 = vsel %vm11014, %v11032, %v11031
      %v11034 = vrot.slane %v11003, 4
      %v11035 = vsel %vm11017, %v11034, %v11033
      %v11036 = vrot.slane %v11004, 3
      %v11037 = vsel %vm11020, %v11036, %v11035
      %v11038 = vrot.slane %v11005, 2
      %v11039 = vsel %vm11023, %v11038, %v11037
      %v11040 = vrot.slane %v11006, 1
      %v11041 = vsel %vm11026, %v11040, %v11039
      %v11042 = vpack.c.b16 %v11041, %v11027
      %v11051 = vunpack.c.l.b16 %v10827
      %v11052 = vunpack.c.h.b16 %v10827
      %v11053 = vunpack.c.l.b16 %v10828
      %v11054 = vunpack.c.h.b16 %v10828
      %v11055 = vunpack.c.l.b16 %v10829
      %v11056 = vunpack.c.h.b16 %v10829
      %v11057 = vunpack.c.l.b16 %v10830
      %v11058 = vunpack.c.h.b16 %v10830
      %v11059 = vunpack.c.l.b16 %v10831
      %v11060 = vunpack.c.h.b16 %v10831
      %v11061 = vunpack.c.l.b16 %v10832
      %v11062 = vunpack.c.h.b16 %v10832
      %v11063 = vunpack.c.l.b16 %v10833
      %v11064 = vunpack.c.h.b16 %v10833
      %v11065 = vunpack.c.l.b16 %v10834
      %v11066 = vunpack.c.h.b16 %v10834
      %v11067 = vpack.c.b16 %v11053, %v11051
      %v11068 = vpack.c.b16 %v11054, %v11052
      %v11069 = vpack.c.b16 %v11057, %v11055
      %v11070 = vpack.c.b16 %v11058, %v11056
      %v11071 = vpack.c.b16 %v11061, %v11059
      %v11072 = vpack.c.b16 %v11062, %v11060
      %v11073 = vpack.c.b16 %v11065, %v11063
      %v11074 = vpack.c.b16 %v11066, %v11064
      %v11084 = vsel %vm997, %v11042, 0
      %11086 = vmatprep.subr.bf16.mxu0 0
      %11087 = vmatpush1.bf16.msra.mxu0 0
      %11088 = vmatprep.subr.bf16.mxu0 0
      %11089 = vmatpush1.bf16.msra.mxu0 0
      %11090 = vmatprep.subr.bf16.mxu0 0
      %11091 = vmatpush1.bf16.msra.mxu0 0
      %11092 = vmatprep.subr.bf16.mxu0 0
      %11093 = vmatpush1.bf16.msra.mxu0 0
      %11094 = vmatprep.subr.bf16.mxu0 %v11074
      %11095 = vmatpush1.bf16.msra.mxu0 %v11073
      %11096 = vmatprep.subr.bf16.mxu0 %v11072
      %11097 = vmatpush1.bf16.msra.mxu0 %v11071
      %11098 = vmatprep.subr.bf16.mxu0 %v11070
      %11099 = vmatpush1.bf16.msra.mxu0 %v11069
      %11100 = vmatprep.subr.bf16.mxu0 %v11068
      %11101 = vmatpush1.bf16.msra.mxu0 %v11067
      %11102 = vmatprep.subr.bf16.mxu0 0
      %11103 = vmatpush2.bf16.msra.mxu0 0
      %11104 = vmatprep.subr.bf16.mxu0 0
      %11105 = vmatpush2.bf16.msra.mxu0 0
      %11106 = vmatprep.subr.bf16.mxu0 0
      %11107 = vmatpush2.bf16.msra.mxu0 0
      %11108 = vmatprep.subr.bf16.mxu0 0
      %11109 = vmatpush2.bf16.msra.mxu0 0
      %11110 = vmatprep.subr.bf16.mxu0 0
      %11111 = vmatpush2.bf16.msra.mxu0 0
      %11112 = vmatprep.subr.bf16.mxu0 0
      %11113 = vmatpush2.bf16.msra.mxu0 0
      %11114 = vmatprep.subr.bf16.mxu0 0
      %11115 = vmatpush2.bf16.msra.mxu0 0
      %11116 = vmatprep.subr.bf16.mxu0 0
      %11117 = vmatpush2.bf16.msra.mxu0 0
      %11118 = vmatprep.mubr.bf16.mxu0 0
      %11119 = vmatmul.mubr.bf16.gmra.mxu0 %v11084
      %v11120 = vpop.f32.mrf.mxu0
      %v11121 = vadd.f32 %v10967, %v11120
      %v11122 = vpop.f32.mrf.mxu0
      %v11123 = vadd.f32 %v10969, %v11122
      %v11124 = vpop.f32.mrf.mxu0
      %v11125 = vadd.f32 %v10971, %v11124
      %v11126 = vpop.f32.mrf.mxu0
      %v11127 = vadd.f32 %v10973, %v11126
      %11128 = vdwg.mxu0
      %v11129 = vld [vmem:[%s51] sm:$0x3]
      %v11131 = vlaneseq
      %v11132 = vshrl.u32 %v11131, 7
      %v11133 = vsub.s32 0, %v11132
      %v11134 = vrot.slane %v11129, %v11133
      %v11135 = vlaneseq
      %v11136 = vshrl.u32 %v11135, 7
      %v11137 = vsub.s32 1, %v11136
      %v11138 = vrot.slane %v11129, %v11137
      %v11141 = vadd.f32 %v11121, %v11134
      %v11142 = vadd.f32 %v11123, %v11138
      %v11143 = vadd.f32 %v11125, %v11134
      %v11144 = vadd.f32 %v11127, %v11138
      %v11145 = vmax.f32 %v11141, 0.0
      %v11146 = vmax.f32 %v11142, 0.0
      %v11147 = vmax.f32 %v11143, 0.0
      %v11148 = vmax.f32 %v11144, 0.0
      %v11149 = vpack.c.bf16 %v11147, %v11145
      %v11150 = vpack.c.bf16 %v11148, %v11146
      %v11151 = vld [vmem:[%s53] sm:$0xf]
      %v11152 = vld [vmem:[%s53 + $0x4] sm:$0xf]
      %v11153 = vld [vmem:[%s53 + $0x8] sm:$0xf]
      %v11154 = vld [vmem:[%s53 + $0xc] sm:$0xf]
      %v11155 = vld [vmem:[%s53 + $0x10] sm:$0xf]
      %v11156 = vld [vmem:[%s53 + $0x14] sm:$0xf]
      %v11157 = vld [vmem:[%s53 + $0x18] sm:$0xf]
      %v11158 = vld [vmem:[%s53 + $0x1c] sm:$0xf]
      %v11159 = vld [vmem:[%s53 + $0x20] sm:$0xf]
      %v11160 = vld [vmem:[%s53 + $0x24] sm:$0xf]
      %v11161 = vld [vmem:[%s53 + $0x28] sm:$0xf]
      %v11162 = vld [vmem:[%s53 + $0x2c] sm:$0xf]
      %v11163 = vld [vmem:[%s53 + $0x30] sm:$0xf]
      %v11164 = vld [vmem:[%s53 + $0x34] sm:$0xf]
      %v11165 = vld [vmem:[%s53 + $0x38] sm:$0xf]
      %v11166 = vld [vmem:[%s53 + $0x3c] sm:$0xf]
      %v11167 = vld [vmem:[%s53 + $0x40] sm:$0xf]
      %v11168 = vld [vmem:[%s53 + $0x44] sm:$0xf]
      %v11169 = vld [vmem:[%s53 + $0x48] sm:$0xf]
      %v11170 = vld [vmem:[%s53 + $0x4c] sm:$0xf]
      %v11171 = vld [vmem:[%s53 + $0x50] sm:$0xf]
      %v11172 = vld [vmem:[%s53 + $0x54] sm:$0xf]
      %v11173 = vld [vmem:[%s53 + $0x58] sm:$0xf]
      %v11174 = vld [vmem:[%s53 + $0x5c] sm:$0xf]
      %v11175 = vld [vmem:[%s53 + $0x60] sm:$0xf]
      %v11176 = vld [vmem:[%s53 + $0x64] sm:$0xf]
      %v11177 = vld [vmem:[%s53 + $0x68] sm:$0xf]
      %v11178 = vld [vmem:[%s53 + $0x6c] sm:$0xf]
      %v11179 = vld [vmem:[%s53 + $0x70] sm:$0xf]
      %v11180 = vld [vmem:[%s53 + $0x74] sm:$0xf]
      %v11181 = vld [vmem:[%s53 + $0x78] sm:$0xf]
      %v11182 = vld [vmem:[%s53 + $0x7c] sm:$0xf]
      %v11183 = vld [vmem:[%s55] sm:$0x1]
      %v11185 = vlaneseq
      %v11186 = vshrl.u32 %v11185, 7
      %v11187 = vsub.s32 0, %v11186
      %v11188 = vrot.slane %v11183, %v11187
      %v11222 = vunpack.c.l.b16 %v11151
      %v11223 = vunpack.c.l.b16 %v11152
      %v11224 = vunpack.c.l.b16 %v11153
      %v11225 = vunpack.c.l.b16 %v11154
      %v11226 = vunpack.c.l.b16 %v11155
      %v11227 = vunpack.c.l.b16 %v11156
      %v11228 = vunpack.c.l.b16 %v11157
      %v11229 = vunpack.c.l.b16 %v11158
      %v11230 = vunpack.c.l.b16 %v11159
      %v11231 = vunpack.c.l.b16 %v11160
      %v11232 = vunpack.c.l.b16 %v11161
      %v11233 = vunpack.c.l.b16 %v11162
      %v11234 = vunpack.c.l.b16 %v11163
      %v11235 = vunpack.c.l.b16 %v11164
      %v11236 = vunpack.c.l.b16 %v11165
      %v11237 = vunpack.c.l.b16 %v11166
      %v11238 = vunpack.c.l.b16 %v11167
      %v11239 = vunpack.c.l.b16 %v11168
      %v11240 = vunpack.c.l.b16 %v11169
      %v11241 = vunpack.c.l.b16 %v11170
      %v11242 = vunpack.c.l.b16 %v11171
      %v11243 = vunpack.c.l.b16 %v11172
      %v11244 = vunpack.c.l.b16 %v11173
      %v11245 = vunpack.c.l.b16 %v11174
      %v11246 = vunpack.c.l.b16 %v11175
      %v11247 = vunpack.c.l.b16 %v11176
      %v11248 = vunpack.c.l.b16 %v11177
      %v11249 = vunpack.c.l.b16 %v11178
      %v11250 = vunpack.c.l.b16 %v11179
      %v11251 = vunpack.c.l.b16 %v11180
      %v11252 = vunpack.c.l.b16 %v11181
      %v11253 = vunpack.c.l.b16 %v11182
      %v11254 = vpack.c.b16 %v11223, %v11222
      %v11255 = vpack.c.b16 %v11225, %v11224
      %v11256 = vpack.c.b16 %v11227, %v11226
      %v11257 = vpack.c.b16 %v11229, %v11228
      %v11258 = vpack.c.b16 %v11231, %v11230
      %v11259 = vpack.c.b16 %v11233, %v11232
      %v11260 = vpack.c.b16 %v11235, %v11234
      %v11261 = vpack.c.b16 %v11237, %v11236
      %v11262 = vpack.c.b16 %v11239, %v11238
      %v11263 = vpack.c.b16 %v11241, %v11240
      %v11264 = vpack.c.b16 %v11243, %v11242
      %v11265 = vpack.c.b16 %v11245, %v11244
      %v11266 = vpack.c.b16 %v11247, %v11246
      %v11267 = vpack.c.b16 %v11249, %v11248
      %v11268 = vpack.c.b16 %v11251, %v11250
      %v11269 = vpack.c.b16 %v11253, %v11252
      %11286 = vmatprep.subr.bf16.mxu0 0
      %11287 = vmatpush1.bf16.msra.mxu0 %v11261
      %11288 = vmatprep.subr.bf16.mxu0 0
      %11289 = vmatpush1.bf16.msra.mxu0 %v11260
      %11290 = vmatprep.subr.bf16.mxu0 0
      %11291 = vmatpush1.bf16.msra.mxu0 %v11259
      %11292 = vmatprep.subr.bf16.mxu0 0
      %11293 = vmatpush1.bf16.msra.mxu0 %v11258
      %11294 = vmatprep.subr.bf16.mxu0 0
      %11295 = vmatpush1.bf16.msra.mxu0 %v11257
      %11296 = vmatprep.subr.bf16.mxu0 0
      %11297 = vmatpush1.bf16.msra.mxu0 %v11256
      %11298 = vmatprep.subr.bf16.mxu0 0
      %11299 = vmatpush1.bf16.msra.mxu0 %v11255
      %11300 = vmatprep.subr.bf16.mxu0 0
      %11301 = vmatpush1.bf16.msra.mxu0 %v11254
      %11302 = vmatprep.subr.bf16.mxu0 0
      %11303 = vmatpush2.bf16.msra.mxu0 %v11269
      %11304 = vmatprep.subr.bf16.mxu0 0
      %11305 = vmatpush2.bf16.msra.mxu0 %v11268
      %11306 = vmatprep.subr.bf16.mxu0 0
      %11307 = vmatpush2.bf16.msra.mxu0 %v11267
      %11308 = vmatprep.subr.bf16.mxu0 0
      %11309 = vmatpush2.bf16.msra.mxu0 %v11266
      %11310 = vmatprep.subr.bf16.mxu0 0
      %11311 = vmatpush2.bf16.msra.mxu0 %v11265
      %11312 = vmatprep.subr.bf16.mxu0 0
      %11313 = vmatpush2.bf16.msra.mxu0 %v11264
      %11314 = vmatprep.subr.bf16.mxu0 0
      %11315 = vmatpush2.bf16.msra.mxu0 %v11263
      %11316 = vmatprep.subr.bf16.mxu0 0
      %11317 = vmatpush2.bf16.msra.mxu0 %v11262
      %11318 = vmatprep.mubr.bf16.mxu0 %v11150
      %11319 = vmatmul.mubr.bf16.gmra.mxu0 %v11149
      %v11320 = vpop.f32.mrf.mxu0
      %v11321 = vadd.f32 %v11188, %v11320
      %v11322 = vpop.f32.mrf.mxu0
      %v11323 = vpop.f32.mrf.mxu0
      %v11324 = vadd.f32 %v11188, %v11323
      %v11325 = vpop.f32.mrf.mxu0
      %11326 = vdwg.mxu0
      %v11327 = vmax.f32 %v11321, 0.0
      %v11328 = vmax.f32 %v11324, 0.0
      %v11329 = vpack.c.bf16 %v11328, %v11327
      %v11330 = vld [vmem:[%s57] sm:$0xf]
      %v11331 = vld [vmem:[%s57 + $0x4] sm:$0xf]
      %v11332 = vld [vmem:[%s57 + $0x8] sm:$0xf]
      %v11333 = vld [vmem:[%s57 + $0xc] sm:$0xf]
      %v11334 = vld [vmem:[%s57 + $0x10] sm:$0xf]
      %v11335 = vld [vmem:[%s57 + $0x14] sm:$0xf]
      %v11336 = vld [vmem:[%s57 + $0x18] sm:$0xf]
      %v11337 = vld [vmem:[%s57 + $0x1c] sm:$0xf]
      %v11338 = vld [vmem:[%s57 + $0x20] sm:$0xf]
      %v11339 = vld [vmem:[%s57 + $0x24] sm:$0xf]
      %v11340 = vld [vmem:[%s57 + $0x28] sm:$0xf]
      %v11341 = vld [vmem:[%s57 + $0x2c] sm:$0xf]
      %v11342 = vld [vmem:[%s57 + $0x30] sm:$0xf]
      %v11343 = vld [vmem:[%s57 + $0x34] sm:$0xf]
      %v11344 = vld [vmem:[%s57 + $0x38] sm:$0xf]
      %v11345 = vld [vmem:[%s57 + $0x3c] sm:$0xf]
      %v11346 = vld [vmem:[%s59] sm:$0x1]
      %v11348 = vlaneseq
      %v11349 = vshrl.u32 %v11348, 7
      %v11350 = vsub.s32 0, %v11349
      %v11351 = vrot.slane %v11346, %v11350
      %v11369 = vunpack.c.l.b16 %v11330
      %v11370 = vunpack.c.l.b16 %v11331
      %v11371 = vunpack.c.l.b16 %v11332
      %v11372 = vunpack.c.l.b16 %v11333
      %v11373 = vunpack.c.l.b16 %v11334
      %v11374 = vunpack.c.l.b16 %v11335
      %v11375 = vunpack.c.l.b16 %v11336
      %v11376 = vunpack.c.l.b16 %v11337
      %v11377 = vunpack.c.l.b16 %v11338
      %v11378 = vunpack.c.l.b16 %v11339
      %v11379 = vunpack.c.l.b16 %v11340
      %v11380 = vunpack.c.l.b16 %v11341
      %v11381 = vunpack.c.l.b16 %v11342
      %v11382 = vunpack.c.l.b16 %v11343
      %v11383 = vunpack.c.l.b16 %v11344
      %v11384 = vunpack.c.l.b16 %v11345
      %v11385 = vpack.c.b16 %v11370, %v11369
      %v11386 = vpack.c.b16 %v11372, %v11371
      %v11387 = vpack.c.b16 %v11374, %v11373
      %v11388 = vpack.c.b16 %v11376, %v11375
      %v11389 = vpack.c.b16 %v11378, %v11377
      %v11390 = vpack.c.b16 %v11380, %v11379
      %v11391 = vpack.c.b16 %v11382, %v11381
      %v11392 = vpack.c.b16 %v11384, %v11383
      %11401 = vmatprep.subr.bf16.mxu0 0
      %11402 = vmatpush1.bf16.msra.mxu0 %v11392
      %11403 = vmatprep.subr.bf16.mxu0 0
      %11404 = vmatpush1.bf16.msra.mxu0 %v11391
      %11405 = vmatprep.subr.bf16.mxu0 0
      %11406 = vmatpush1.bf16.msra.mxu0 %v11390
      %11407 = vmatprep.subr.bf16.mxu0 0
      %11408 = vmatpush1.bf16.msra.mxu0 %v11389
      %11409 = vmatprep.subr.bf16.mxu0 0
      %11410 = vmatpush1.bf16.msra.mxu0 %v11388
      %11411 = vmatprep.subr.bf16.mxu0 0
      %11412 = vmatpush1.bf16.msra.mxu0 %v11387
      %11413 = vmatprep.subr.bf16.mxu0 0
      %11414 = vmatpush1.bf16.msra.mxu0 %v11386
      %11415 = vmatprep.subr.bf16.mxu0 0
      %11416 = vmatpush1.bf16.msra.mxu0 %v11385
      %11417 = vmatprep.subr.bf16.mxu0 0
      %11418 = vmatpush2.bf16.msra.mxu0 0
      %11419 = vmatprep.subr.bf16.mxu0 0
      %11420 = vmatpush2.bf16.msra.mxu0 0
      %11421 = vmatprep.subr.bf16.mxu0 0
      %11422 = vmatpush2.bf16.msra.mxu0 0
      %11423 = vmatprep.subr.bf16.mxu0 0
      %11424 = vmatpush2.bf16.msra.mxu0 0
      %11425 = vmatprep.subr.bf16.mxu0 0
      %11426 = vmatpush2.bf16.msra.mxu0 0
      %11427 = vmatprep.subr.bf16.mxu0 0
      %11428 = vmatpush2.bf16.msra.mxu0 0
      %11429 = vmatprep.subr.bf16.mxu0 0
      %11430 = vmatpush2.bf16.msra.mxu0 0
      %11431 = vmatprep.subr.bf16.mxu0 0
      %11432 = vmatpush2.bf16.msra.mxu0 0
      %11433 = vmatprep.mubr.bf16.mxu0 0
      %11434 = vmatmul.mubr.bf16.gmra.mxu0 %v11329
      %v11435 = vpop.f32.mrf.mxu0
      %v11436 = vadd.f32 %v11351, %v11435
      %v11437 = vpop.f32.mrf.mxu0
      %v11438 = vpop.f32.mrf.mxu0
      %v11439 = vadd.f32 %v11351, %v11438
      %v11440 = vpop.f32.mrf.mxu0
      %11441 = vdwg.mxu0
      %11442 = vst [vmem:[%s976] sm:$0xff] %v11436
      %11443 = vst [vmem:[%s976 + $0x8] sm:$0xff] %v11439
      %s11444 = smul.u32 2, %s72
      %p11445 = scmp.lt.s32.totalorder %s11444, 3
      %s11446 = scalar_select %p11445, %s11444, 3
      %s11447 = smul.addr %s11446, 8
      %s11448 = scalar_lea.vmem %s61, %s11447
      // Predicated region
      $region141: #{forward.1} parent=139 // pred_check
        %p11449 = pneg %p735
      $region142: #{forward.1} parent=139 // pred_check_branch
        %11451 = sbr.rel (%p11449) target = $region144
      $region143: #{forward.1} parent=139 // pred_region
        %s11452 = smul.u32 2, %s72
      $region144: #{forward.1} parent=139 // pred_fallthru
        _
    $region140: #{forward.1} parent=5 // pred_fallthru
      _
    %p11453 = scmp.le.s32.totalorder 2, %s67
    // Predicated region
    $region145: #{forward.1} parent=5 // pred_check
      %p11454 = pneg %p11453
    $region146: #{forward.1} parent=5 // pred_check_branch
      %11456 = sbr.rel (%p11454) target = $region148
    $region147: #{forward.1} parent=5 // pred_region
      %s11457 = ssub.s32 %s67, 2
      // Predicated region
      $region149: #{forward.1} parent=147 // pred_check
        %p11458 = pneg %p741
      $region150: #{forward.1} parent=147 // pred_check_branch
        %11460 = sbr.rel (%p11458) target = $region152
      $region151: #{forward.1} parent=147 // pred_region
        %s11461 = smul.u32 2, %s73
        %p11462 = scmp.lt.s32.totalorder %s11461, 3
        %s11463 = scalar_select %p11462, %s11461, 3
        %s11464 = smul.addr %s11463, 8
        %s11465 = scalar_lea.vmem %s61, %s11464
      $region152: #{forward.1} parent=147 // pred_fallthru
        _
    $region148: #{forward.1} parent=5 // pred_fallthru
      _
  $region6: #{forward.1} parent=0 // loop_footer
    %s71 = sadd.s32 1, %s67
  $region7: #{forward.1} parent=0 // loop_footer_branch
    %66 = sbr.rel target = $region3
  $region8: #{forward.1} parent=0 // loop_exit
    _

</llo_original>
